<compile_context>
chip_gen: v7x
topology: tpu7x:2x2x1
jax: 0.10.0
libtpu: 0.0.40
codegen_flags: <defaults>
</compile_context>

<pallas_src>
import functools

import jax
import jax.numpy as jnp
from jax.experimental import pallas as pl
from jax.experimental.pallas import tpu as pltpu


def _round_up(x, m):
    return ((x + m - 1) // m) * m


def _cdiv(a, b):
    return -(-a // b)


@functools.lru_cache(maxsize=None)
def _num_tensorcores():
    # TODO(synk): v7x has 2 TensorCores per chip; v5e/v6e have 1. Detected via
    # the device_kind string for robustness across jaxlib versions.
    try:
        kind = jax.devices()[0].device_kind.lower()
    except Exception:
        return 1
    return 2 if ("v7" in kind or "tpu7" in kind) else 1


def _linear_tiling(output_dims, input_dims, max_tn=8192):
    """Static (Kp, tn, Np) for the predictor Linear.

    tn capped at 8192 (lane-dense, ~2 MiB bf16 tile -> ~4 MiB double buffered,
    inside the v5e 16 MiB scoped-VMEM default); >= 2 N blocks on multi-TC
    parts so the "parallel" grid axis can split across TensorCores.
    """
    kp = _round_up(input_dims, 128)
    np0 = _round_up(output_dims, 128)
    min_blocks = 2 if (_num_tensorcores() > 1 and np0 >= 256) else 1
    nb = max(_cdiv(np0, max_tn), min_blocks)
    tn = _round_up(_cdiv(np0, nb), 128)
    return kp, tn, tn * nb


# ----------------------------------------------------------------------------
# Pallas kernels
# ----------------------------------------------------------------------------
def _conv_chain_kernel(*refs, stages):
    """Chained (matmul + folded-BN bias + ReLU) stages on one activation tile."""
    o_ref = refs[-1]
    wb = refs[1:-1]
    y = refs[0][...]
    for s in range(stages):
        w = wb[2 * s][...]
        b = wb[2 * s + 1][...]
        y = jnp.dot(y.astype(w.dtype), w, preferred_element_type=jnp.float32)
        y = jnp.maximum(y + b, 0.0)          # conv -> folded BN -> ReLU
    o_ref[...] = y.astype(o_ref.dtype)


def _tail_kernel(*refs):
    """conv1(2x2) -> conv2(2x2) -> maxpool(2,2) -> conv3(1x1) -> conv4(1x1).

    Spatial work is pre-factored into 16 strided views of the (B,12,12,32)
    activation, each aligned to the 5x5 pool-output grid; every 2x2 conv is a
    sum of per-tap matmuls over those views, so the whole map_conv_net tail is
    a single launch with no im2col concat and no intermediate HBM traffic.
    """
    v = refs[:16]                                         # views, index u*4+vv
    (w1_ref, b1_ref, w2_ref, b2_ref,
     w3_ref, b3_ref, w4_ref, b4_ref, o_ref) = refs[16:]
    b1, b2, b3, b4 = b1_ref[...], b2_ref[...], b3_ref[...], b4_ref[...]

    def view(u, vv):
        return v[u * 4 + vv][...]

    # conv1 (2x2, 32->16) at the 9 phase offsets that conv2 + the pool need.
    c1 = {}
    for r in range(3):
        for s in range(3):
            acc = b1
            for di in range(2):
                for dj in range(2):
                    t = di * 2 + dj
                    acc = acc + jnp.dot(view(r + di, s + dj),
                                        w1_ref[t * 32:(t + 1) * 32, :],
                                        preferred_element_type=jnp.float32)
            c1[(r, s)] = jnp.maximum(acc, 0.0).astype(jnp.bfloat16)

    # conv2 (2x2, 16->8) at the 4 maxpool phases, then the pool itself.
    c2 = {}
    for p in range(2):
        for q in range(2):
            acc = b2
            for a in range(2):
                for b_ in range(2):
                    t = a * 2 + b_
                    acc = acc + jnp.dot(c1[(p + a, q + b_)],
                                        w2_ref[t * 16:(t + 1) * 16, :],
                                        preferred_element_type=jnp.float32)
            c2[(p, q)] = jnp.maximum(acc, 0.0)
    pooled = jnp.maximum(jnp.maximum(c2[(0, 0)], c2[(0, 1)]),
                         jnp.maximum(c2[(1, 0)], c2[(1, 1)]))

    # conv3 (1x1, 8->8) + conv4 (1x1, 8->4), folded-BN + ReLU.
    y = jnp.dot(pooled.astype(jnp.bfloat16), w3_ref[...],
                preferred_element_type=jnp.float32)
    y = jnp.maximum(y + b3, 0.0)
    y = jnp.dot(y.astype(jnp.bfloat16), w4_ref[...],
                preferred_element_type=jnp.float32)
    y = jnp.maximum(y + b4, 0.0)
    o_ref[...] = y.astype(o_ref.dtype)


def _linear_kernel(x_ref, w_ref, b_ref, o_ref):
    y = jnp.dot(x_ref[...], w_ref[...], preferred_element_type=jnp.float32)
    o_ref[...] = (y + b_ref[...]).astype(o_ref.dtype)


# ----------------------------------------------------------------------------
# Kernel wrappers
# ----------------------------------------------------------------------------
_VMEM_SPEC = pl.BlockSpec(memory_space=pltpu.MemorySpace.VMEM)


def conv_mm(x, stage_params, *, blocks_m=1, out_dtype=jnp.bfloat16):
    """Fused conv-as-matmul chain on one activation matrix (M, K)."""
    M, K = x.shape
    N = stage_params[-1][0].shape[1]
    flat_wb = [a for wb in stage_params for a in wb]
    kernel = functools.partial(_conv_chain_kernel, stages=len(stage_params))

    if blocks_m <= 1:
        # Single TensorCore: whole operands live in VMEM; no grid, no padding.
        return pl.pallas_call(
            kernel,
            out_shape=jax.ShapeDtypeStruct((M, N), out_dtype),
            in_specs=[_VMEM_SPEC] * (1 + len(flat_wb)),
            out_specs=_VMEM_SPEC,
        )(x, *flat_wb)

    tm = _round_up(_cdiv(M, blocks_m), 16)               # bf16 sublane packing
    Mp = tm * blocks_m
    if Mp != M:
        x = jnp.pad(x, ((0, Mp - M), (0, 0)))
    wb_specs = [pl.BlockSpec(a.shape, lambda i: (0, 0)) for a in flat_wb]
    out = pl.pallas_call(
        kernel,
        out_shape=jax.ShapeDtypeStruct((Mp, N), out_dtype),
        grid=(blocks_m,),
        in_specs=[pl.BlockSpec((tm, K), lambda i: (i, 0))] + wb_specs,
        out_specs=pl.BlockSpec((tm, N), lambda i: (i, 0)),
        compiler_params=pltpu.CompilerParams(
            dimension_semantics=("parallel",)),
    )(x, *flat_wb)
    return out if Mp == M else out[:M]


def conv_tail(x_bhwc, params, out_dtype=jnp.bfloat16):
    """conv1 -> conv2 -> maxpool -> conv3 -> conv4 in one pallas_call."""
    B, H, W, C = x_bhwc.shape                            # (B, 12, 12, 32)
    Hp, Wp = (H - 2) // 2, (W - 2) // 2                  # 5, 5
    views = [x_bhwc[:, u:u + 2 * Hp - 1:2, v:v + 2 * Wp - 1:2, :]
             .reshape(B * Hp * Wp, C)
             for u in range(4) for v in range(4)]
    wb = [params["c1"]["w"], params["c1"]["b"],
          params["c2"]["w"], params["c2"]["b"],
          params["c3"]["w"], params["c3"]["b"],
          params["c4"]["w"], params["c4"]["b"]]
    out = pl.pallas_call(
        _tail_kernel,
        out_shape=jax.ShapeDtypeStruct((B * Hp * Wp, 4), out_dtype),
        in_specs=[_VMEM_SPEC] * (len(views) + len(wb)),
        out_specs=_VMEM_SPEC,
    )(*views, *wb)
    return out.reshape(B, Hp, Wp, 4)


def linear_forward(features, p, n_out):
    """features: (B, K) bf16. p['w']: (Kp, Np) bf16 padded at init, p['b']: (1, Np)."""
    M, K = features.shape
    Kp, Np = p["w"].shape
    _, tn, np_chk = _linear_tiling(n_out, K)
    assert np_chk == Np, (np_chk, Np)
    Mp = _round_up(M, 8)                                 # do NOT pad batch to 128
    x = jnp.pad(features, ((0, Mp - M), (0, Kp - K)))
    cost = pl.CostEstimate(
        flops=2 * Mp * Kp * Np,
        transcendentals=0,
        bytes_accessed=Mp * Kp * 2 + Kp * Np * 2 + 4 * Np + Mp * Np * 4,
    )
    out = pl.pallas_call(
        _linear_kernel,
        out_shape=jax.ShapeDtypeStruct((Mp, Np), jnp.float32),
        grid=(Np // tn,),
        in_specs=[
            pl.BlockSpec((Mp, Kp), lambda j: (0, 0)),
            pl.BlockSpec((Kp, tn), lambda j: (0, j)),    # lane-dense bf16 stream
            pl.BlockSpec((1, tn), lambda j: (0, j)),
        ],
        out_specs=pl.BlockSpec((Mp, tn), lambda j: (0, j)),
        compiler_params=pltpu.CompilerParams(
            dimension_semantics=("parallel",)),
        cost_estimate=cost,
    )(x, p["w"], p["b"])
    # TODO(synk): logits are kept f32 for fidelity to the PyTorch head; a bf16
    # writeback would halve the (already small) HBM write if tolerated.
    return out[:M, :n_out]


# ----------------------------------------------------------------------------
# Plain-JAX glue: im2col for the two 3x3 strided encoder convs (fused by XLA)
# ----------------------------------------------------------------------------
def im2col(x, k, s, p):
    """x: NHWC -> (B*Ho*Wo, k*k*C) patches, column order = (kh, kw, Cin)."""
    if p:
        x = jnp.pad(x, ((0, 0), (p, p), (p, p), (0, 0)))
    B, H, W, C = x.shape
    Ho = (H - k) // s + 1
    Wo = (W - k) // s + 1
    cols = []
    for di in range(k):
        for dj in range(k):
            cols.append(x[:, di:di + (Ho - 1) * s + 1:s,
                          dj:dj + (Wo - 1) * s + 1:s, :])
    patches = jnp.concatenate(cols, axis=-1)             # (B, Ho, Wo, k*k*C)
    return patches.reshape(B * Ho * Wo, k * k * C), (B, Ho, Wo)


# ----------------------------------------------------------------------------
# Parameter construction (deterministic, synthetic)
# ----------------------------------------------------------------------------
_BN_EPS = 1e-5


def _conv_params(key, cin, cout, k, with_bn):
    kw, kb = jax.random.split(key)
    fan_in = cin * k * k
    w = jax.random.normal(kw, (cout, cin, k, k), jnp.float32) * jnp.sqrt(2.0 / fan_in)
    b = (jax.random.uniform(kb, (cout,), jnp.float32, -1.0, 1.0)
         / jnp.sqrt(float(fan_in)))
    # im2col weight matrix: (kh, kw, Cin, Cout) -> (k*k*Cin, Cout); tap t's
    # rows are [t*Cin, (t+1)*Cin), which the fused tail kernel slices directly.
    wmat = jnp.transpose(w, (2, 3, 1, 0)).reshape(k * k * cin, cout)
    if with_bn:
        # eval-mode BN (gamma=1, beta=0, identity running stats) folded in.
        sc = 1.0 / jnp.sqrt(1.0 + _BN_EPS)
        wmat = wmat * sc
        b = b * sc
    return {"w": wmat.astype(jnp.bfloat16),
            "b": b[None, :].astype(jnp.float32)}


def init_params(key, input_dims=124, output_dims=900):
    ks = jax.random.split(key, 8)
    params = {
        # synthetic Encoder (1 -> 32 -> 64 channels, /4 spatial)
        "enc0": _conv_params(ks[0], 1, 32, 3, with_bn=False),
        "enc1": _conv_params(ks[1], 32, 64, 3, with_bn=False),
        # map_conv_net
        "c0": _conv_params(ks[2], 64, 32, 1, with_bn=True),
        "c1": _conv_params(ks[3], 32, 16, 2, with_bn=True),
        "c2": _conv_params(ks[4], 16, 8, 2, with_bn=True),
        "c3": _conv_params(ks[5], 8, 8, 1, with_bn=True),
        "c4": _conv_params(ks[6], 8, 4, 1, with_bn=True),
    }
    # predictor: Linear(input_dims, output_dims), weight ~ N(0, 0.001), bias 0.
    lw = jax.random.normal(ks[7], (output_dims, input_dims), jnp.float32) * 0.001
    kp, _, np_ = _linear_tiling(output_dims, input_dims)
    wmat = jnp.zeros((kp, np_), jnp.float32).at[:input_dims, :output_dims].set(lw.T)
    params["lin"] = {"w": wmat.astype(jnp.bfloat16),
                     "b": jnp.zeros((1, np_), jnp.float32)}
    return params


# ----------------------------------------------------------------------------
# Forward pass
# ----------------------------------------------------------------------------
def state_tracker_forward(params, local_map_nchw, trajectory, *, output_dims):
    # NCHW -> NHWC, bf16 activations throughout the conv stack.
    x = jnp.transpose(local_map_nchw, (0, 2, 3, 1)).astype(jnp.bfloat16)
    blocks_m = 2 if _num_tensorcores() > 1 else 1        # M split only on v7x

    # encoder layer 0: 3x3 s2 p1, 1 -> 32
    cols, (B, Ho, Wo) = im2col(x, 3, 2, 1)
    x = conv_mm(cols, [(params["enc0"]["w"], params["enc0"]["b"])],
                blocks_m=blocks_m).reshape(B, Ho, Wo, -1)           # (B,24,24,32)

    # encoder layer 1 (3x3 s2 p1, 32->64) fused with map_conv_net conv0 (1x1, 64->32)
    cols, (B, Ho, Wo) = im2col(x, 3, 2, 1)
    x = conv_mm(cols, [(params["enc1"]["w"], params["enc1"]["b"]),
                       (params["c0"]["w"], params["c0"]["b"])],
                blocks_m=blocks_m).reshape(B, Ho, Wo, -1)           # (B,12,12,32)

    # conv1 + conv2 + maxpool + conv3 + conv4: one fused pallas_call
    x = conv_tail(x, params)                                        # (B,5,5,4)

    # PyTorch's .view(B, -1) flattens in (C, H, W) order.
    B = x.shape[0]
    map_feat = jnp.transpose(x, (0, 3, 1, 2)).reshape(B, -1)        # (B,100)

    feats = jnp.concatenate(
        [map_feat, trajectory.astype(jnp.bfloat16)], axis=1)        # (B,124)

    # predictor_net: single Linear (no ReLU), f32 logits.
    return linear_forward(feats, params["lin"], output_dims)


if __name__ == "__main__":
    key = jax.random.PRNGKey(0)
    kparam, km, kt = jax.random.split(key, 3)

    B = 2
    OUTPUT_DIMS = 30 * 30   # small stand-in for the default 300*300
    INPUT_DIMS = 124        # 4*5*5 map features + 24 trajectory dims

    params = init_params(kparam, input_dims=INPUT_DIMS, output_dims=OUTPUT_DIMS)

    local_map = jax.random.normal(km, (B, 1, 48, 48), jnp.float32)   # NCHW
    trajectory = jax.random.normal(kt, (B, 24), jnp.float32)

    fwd = jax.jit(functools.partial(state_tracker_forward,
                                    output_dims=OUTPUT_DIMS))
    out = jax.block_until_ready(fwd(params, local_map, trajectory))

    assert out.shape == (B, OUTPUT_DIMS), out.shape
    assert bool(jnp.all(jnp.isfinite(out)))
    print("KERNEL_OK")
</pallas_src>

<mosaic_0001>
module attributes {stable_mosaic.version = 11 : i64} {
  func.func @_conv_chain_kernel(%arg0: memref<1152x9xbf16, #tpu.memory_space<vmem>>, %arg1: memref<9x32xbf16, #tpu.memory_space<vmem>>, %arg2: memref<1x32xf32, #tpu.memory_space<vmem>>, %arg3: memref<1152x32xbf16, #tpu.memory_space<vmem>>) attributes {dimension_semantics = [], scalar_prefetch = 0 : i64, scratch_operands = 0 : i64, tpu.core_type = #tpu.core_type<tc>} {
    %c0 = arith.constant 0 : index
    %c0_0 = arith.constant 0 : index
    %0 = vector.load %arg0[%c0, %c0_0] : memref<1152x9xbf16, #tpu.memory_space<vmem>>, vector<1152x9xbf16>
    %c0_1 = arith.constant 0 : index
    %c0_2 = arith.constant 0 : index
    %1 = vector.load %arg1[%c0_1, %c0_2] : memref<9x32xbf16, #tpu.memory_space<vmem>>, vector<9x32xbf16>
    %c0_3 = arith.constant 0 : index
    %c0_4 = arith.constant 0 : index
    %2 = vector.load %arg2[%c0_3, %c0_4] : memref<1x32xf32, #tpu.memory_space<vmem>>, vector<1x32xf32>
    %cst = arith.constant dense<0.000000e+00> : vector<1152x32xf32>
    %3 = tpu.matmul %0, %1, %cst {dimension_numbers = #tpu.dot_dimension_numbers<[1], [0], [0], [1], [0, 0, 1, 1], [], []>} : vector<1152x9xbf16>, vector<9x32xbf16>, vector<1152x32xf32> -> vector<1152x32xf32>
    %4 = vector.broadcast %2 : vector<1x32xf32> to vector<1152x32xf32>
    %5 = arith.addf %3, %4 : vector<1152x32xf32>
    %cst_5 = arith.constant 0.000000e+00 : f32
    %6 = vector.broadcast %cst_5 : f32 to vector<1152x32xf32>
    %7 = arith.maximumf %5, %6 : vector<1152x32xf32>
    %8 = arith.truncf %7 : vector<1152x32xf32> to vector<1152x32xbf16>
    %c0_6 = arith.constant 0 : index
    %c0_7 = arith.constant 0 : index
    %9 = vector.load %arg3[%c0_6, %c0_7] : memref<1152x32xbf16, #tpu.memory_space<vmem>>, vector<1152x32xbf16>
    tpu.vector_store %arg3[%c0_6, %c0_7], %8 {strides = array<i32>} : memref<1152x32xbf16, #tpu.memory_space<vmem>>, vector<1152x32xbf16>,
    return
  }
}

module attributes {stable_mosaic.version = 11 : i64} {
  func.func @_conv_chain_kernel(%arg0: memref<288x288xbf16, #tpu.memory_space<vmem>>, %arg1: memref<288x64xbf16, #tpu.memory_space<vmem>>, %arg2: memref<1x64xf32, #tpu.memory_space<vmem>>, %arg3: memref<64x32xbf16, #tpu.memory_space<vmem>>, %arg4: memref<1x32xf32, #tpu.memory_space<vmem>>, %arg5: memref<288x32xbf16, #tpu.memory_space<vmem>>) attributes {dimension_semantics = [], scalar_prefetch = 0 : i64, scratch_operands = 0 : i64, tpu.core_type = #tpu.core_type<tc>} {
    %c0 = arith.constant 0 : index
    %c0_0 = arith.constant 0 : index
    %0 = vector.load %arg0[%c0, %c0_0] : memref<288x288xbf16, #tpu.memory_space<vmem>>, vector<288x288xbf16>
    %c0_1 = arith.constant 0 : index
    %c0_2 = arith.constant 0 : index
    %1 = vector.load %arg1[%c0_1, %c0_2] : memref<288x64xbf16, #tpu.memory_space<vmem>>, vector<288x64xbf16>
    %c0_3 = arith.constant 0 : index
    %c0_4 = arith.constant 0 : index
    %2 = vector.load %arg2[%c0_3, %c0_4] : memref<1x64xf32, #tpu.memory_space<vmem>>, vector<1x64xf32>
    %cst = arith.constant dense<0.000000e+00> : vector<288x64xf32>
    %3 = tpu.matmul %0, %1, %cst {dimension_numbers = #tpu.dot_dimension_numbers<[1], [0], [0], [1], [0, 0, 1, 1], [], []>} : vector<288x288xbf16>, vector<288x64xbf16>, vector<288x64xf32> -> vector<288x64xf32>
    %4 = vector.broadcast %2 : vector<1x64xf32> to vector<288x64xf32>
    %5 = arith.addf %3, %4 : vector<288x64xf32>
    %cst_5 = arith.constant 0.000000e+00 : f32
    %6 = vector.broadcast %cst_5 : f32 to vector<288x64xf32>
    %7 = arith.maximumf %5, %6 : vector<288x64xf32>
    %c0_6 = arith.constant 0 : index
    %c0_7 = arith.constant 0 : index
    %8 = vector.load %arg3[%c0_6, %c0_7] : memref<64x32xbf16, #tpu.memory_space<vmem>>, vector<64x32xbf16>
    %c0_8 = arith.constant 0 : index
    %c0_9 = arith.constant 0 : index
    %9 = vector.load %arg4[%c0_8, %c0_9] : memref<1x32xf32, #tpu.memory_space<vmem>>, vector<1x32xf32>
    %10 = arith.truncf %7 : vector<288x64xf32> to vector<288x64xbf16>
    %cst_10 = arith.constant dense<0.000000e+00> : vector<288x32xf32>
    %11 = tpu.matmul %10, %8, %cst_10 {dimension_numbers = #tpu.dot_dimension_numbers<[1], [0], [0], [1], [0, 0, 1, 1], [], []>} : vector<288x64xbf16>, vector<64x32xbf16>, vector<288x32xf32> -> vector<288x32xf32>
    %12 = vector.broadcast %9 : vector<1x32xf32> to vector<288x32xf32>
    %13 = arith.addf %11, %12 : vector<288x32xf32>
    %cst_11 = arith.constant 0.000000e+00 : f32
    %14 = vector.broadcast %cst_11 : f32 to vector<288x32xf32>
    %15 = arith.maximumf %13, %14 : vector<288x32xf32>
    %16 = arith.truncf %15 : vector<288x32xf32> to vector<288x32xbf16>
    %c0_12 = arith.constant 0 : index
    %c0_13 = arith.constant 0 : index
    %17 = vector.load %arg5[%c0_12, %c0_13] : memref<288x32xbf16, #tpu.memory_space<vmem>>, vector<288x32xbf16>
    tpu.vector_store %arg5[%c0_12, %c0_13], %16 {strides = array<i32>} : memref<288x32xbf16, #tpu.memory_space<vmem>>, vector<288x32xbf16>,
    return
  }
}

module attributes {stable_mosaic.version = 11 : i64} {
  func.func @_linear_kernel(%arg0: i32, %arg1: memref<8x128xbf16, #tpu.memory_space<vmem>>, %arg2: memref<128x1024xbf16, #tpu.memory_space<vmem>>, %arg3: memref<1x1024xf32, #tpu.memory_space<vmem>>, %arg4: memref<8x1024xf32, #tpu.memory_space<vmem>>) attributes {dimension_semantics = [#tpu.dimension_semantics<parallel>], iteration_bounds = array<i64: 1>, scalar_prefetch = 0 : i64, scratch_operands = 0 : i64, tpu.core_type = #tpu.core_type<tc>, window_params = [{pipeline_mode = #tpu.pipeline_mode<synchronous>, transform_indices = @transform_0, window_bounds = array<i64: 8, 128>}, {transform_indices = @transform_1, window_bounds = array<i64: 128, 1024>}, {transform_indices = @transform_2, window_bounds = array<i64: 1, 1024>}, {transform_indices = @transform_3, window_bounds = array<i64: 8, 1024>}]} {
    %c0 = arith.constant 0 : index
    %c0_0 = arith.constant 0 : index
    %0 = vector.load %arg1[%c0, %c0_0] : memref<8x128xbf16, #tpu.memory_space<vmem>>, vector<8x128xbf16>
    %c0_1 = arith.constant 0 : index
    %c0_2 = arith.constant 0 : index
    %1 = vector.load %arg2[%c0_1, %c0_2] : memref<128x1024xbf16, #tpu.memory_space<vmem>>, vector<128x1024xbf16>
    %cst = arith.constant dense<0.000000e+00> : vector<8x1024xf32>
    %2 = tpu.matmul %0, %1, %cst {dimension_numbers = #tpu.dot_dimension_numbers<[1], [0], [0], [1], [0, 0, 1, 1], [], []>} : vector<8x128xbf16>, vector<128x1024xbf16>, vector<8x1024xf32> -> vector<8x1024xf32>
    %c0_3 = arith.constant 0 : index
    %c0_4 = arith.constant 0 : index
    %3 = vector.load %arg3[%c0_3, %c0_4] : memref<1x1024xf32, #tpu.memory_space<vmem>>, vector<1x1024xf32>
    %4 = vector.broadcast %3 : vector<1x1024xf32> to vector<8x1024xf32>
    %5 = arith.addf %2, %4 : vector<8x1024xf32>
    %c0_5 = arith.constant 0 : index
    %c0_6 = arith.constant 0 : index
    %6 = vector.load %arg4[%c0_5, %c0_6] : memref<8x1024xf32, #tpu.memory_space<vmem>>, vector<8x1024xf32>
    tpu.vector_store %arg4[%c0_5, %c0_6], %5 {strides = array<i32>} : memref<8x1024xf32, #tpu.memory_space<vmem>>, vector<8x1024xf32>,
    return
  }
  func.func @transform_0(%arg0: i32) -> (i32, i32) {
    %c0_i32 = arith.constant 0 : i32
    %c0_i32_0 = arith.constant 0 : i32
    %c0_i32_1 = arith.constant 0 : i32
    return %c0_i32, %c0_i32_0 : i32, i32
  }
  func.func @transform_1(%arg0: i32) -> (i32, i32) {
    %c0_i32 = arith.constant 0 : i32
    %c0_i32_0 = arith.constant 0 : i32
    return %c0_i32, %arg0 : i32, i32
  }
  func.func @transform_2(%arg0: i32) -> (i32, i32) {
    %c0_i32 = arith.constant 0 : i32
    %c0_i32_0 = arith.constant 0 : i32
    return %c0_i32, %arg0 : i32, i32
  }
  func.func @transform_3(%arg0: i32) -> (i32, i32) {
    %c0_i32 = arith.constant 0 : i32
    %c0_i32_0 = arith.constant 0 : i32
    return %c0_i32, %arg0 : i32, i32
  }
}

module attributes {stable_mosaic.version = 11 : i64} {
  func.func @_tail_kernel(%arg0: memref<50x32xbf16, #tpu.memory_space<vmem>>, %arg1: memref<50x32xbf16, #tpu.memory_space<vmem>>, %arg2: memref<50x32xbf16, #tpu.memory_space<vmem>>, %arg3: memref<50x32xbf16, #tpu.memory_space<vmem>>, %arg4: memref<50x32xbf16, #tpu.memory_space<vmem>>, %arg5: memref<50x32xbf16, #tpu.memory_space<vmem>>, %arg6: memref<50x32xbf16, #tpu.memory_space<vmem>>, %arg7: memref<50x32xbf16, #tpu.memory_space<vmem>>, %arg8: memref<50x32xbf16, #tpu.memory_space<vmem>>, %arg9: memref<50x32xbf16, #tpu.memory_space<vmem>>, %arg10: memref<50x32xbf16, #tpu.memory_space<vmem>>, %arg11: memref<50x32xbf16, #tpu.memory_space<vmem>>, %arg12: memref<50x32xbf16, #tpu.memory_space<vmem>>, %arg13: memref<50x32xbf16, #tpu.memory_space<vmem>>, %arg14: memref<50x32xbf16, #tpu.memory_space<vmem>>, %arg15: memref<50x32xbf16, #tpu.memory_space<vmem>>, %arg16: memref<128x16xbf16, #tpu.memory_space<vmem>>, %arg17: memref<1x16xf32, #tpu.memory_space<vmem>>, %arg18: memref<64x8xbf16, #tpu.memory_space<vmem>>, %arg19: memref<1x8xf32, #tpu.memory_space<vmem>>, %arg20: memref<8x8xbf16, #tpu.memory_space<vmem>>, %arg21: memref<1x8xf32, #tpu.memory_space<vmem>>, %arg22: memref<8x4xbf16, #tpu.memory_space<vmem>>, %arg23: memref<1x4xf32, #tpu.memory_space<vmem>>, %arg24: memref<50x4xbf16, #tpu.memory_space<vmem>>) attributes {dimension_semantics = [], scalar_prefetch = 0 : i64, scratch_operands = 0 : i64, tpu.core_type = #tpu.core_type<tc>} {
    %c0 = arith.constant 0 : index
    %c0_0 = arith.constant 0 : index
    %0 = vector.load %arg17[%c0, %c0_0] : memref<1x16xf32, #tpu.memory_space<vmem>>, vector<1x16xf32>
    %c0_1 = arith.constant 0 : index
    %c0_2 = arith.constant 0 : index
    %1 = vector.load %arg19[%c0_1, %c0_2] : memref<1x8xf32, #tpu.memory_space<vmem>>, vector<1x8xf32>
    %c0_3 = arith.constant 0 : index
    %c0_4 = arith.constant 0 : index
    %2 = vector.load %arg21[%c0_3, %c0_4] : memref<1x8xf32, #tpu.memory_space<vmem>>, vector<1x8xf32>
    %c0_5 = arith.constant 0 : index
    %c0_6 = arith.constant 0 : index
    %3 = vector.load %arg23[%c0_5, %c0_6] : memref<1x4xf32, #tpu.memory_space<vmem>>, vector<1x4xf32>
    %c0_7 = arith.constant 0 : index
    %c0_8 = arith.constant 0 : index
    %4 = vector.load %arg0[%c0_7, %c0_8] : memref<50x32xbf16, #tpu.memory_space<vmem>>, vector<50x32xbf16>
    %c0_9 = arith.constant 0 : index
    %c0_10 = arith.constant 0 : index
    %5 = vector.load %arg16[%c0_9, %c0_10] : memref<128x16xbf16, #tpu.memory_space<vmem>>, vector<32x16xbf16>
    %cst = arith.constant dense<0.000000e+00> : vector<50x16xf32>
    %6 = tpu.matmul %4, %5, %cst {dimension_numbers = #tpu.dot_dimension_numbers<[1], [0], [0], [1], [0, 0, 1, 1], [], []>} : vector<50x32xbf16>, vector<32x16xbf16>, vector<50x16xf32> -> vector<50x16xf32>
    %7 = vector.broadcast %0 : vector<1x16xf32> to vector<50x16xf32>
    %8 = arith.addf %7, %6 : vector<50x16xf32>
    %c0_11 = arith.constant 0 : index
    %c0_12 = arith.constant 0 : index
    %9 = vector.load %arg1[%c0_11, %c0_12] : memref<50x32xbf16, #tpu.memory_space<vmem>>, vector<50x32xbf16>
    %c32 = arith.constant 32 : index
    %c0_13 = arith.constant 0 : index
    %10 = vector.load %arg16[%c32, %c0_13] : memref<128x16xbf16, #tpu.memory_space<vmem>>, vector<32x16xbf16>
    %cst_14 = arith.constant dense<0.000000e+00> : vector<50x16xf32>
    %11 = tpu.matmul %9, %10, %cst_14 {dimension_numbers = #tpu.dot_dimension_numbers<[1], [0], [0], [1], [0, 0, 1, 1], [], []>} : vector<50x32xbf16>, vector<32x16xbf16>, vector<50x16xf32> -> vector<50x16xf32>
    %12 = arith.addf %8, %11 : vector<50x16xf32>
    %c0_15 = arith.constant 0 : index
    %c0_16 = arith.constant 0 : index
    %13 = vector.load %arg4[%c0_15, %c0_16] : memref<50x32xbf16, #tpu.memory_space<vmem>>, vector<50x32xbf16>
    %c64 = arith.constant 64 : index
    %c0_17 = arith.constant 0 : index
    %14 = vector.load %arg16[%c64, %c0_17] : memref<128x16xbf16, #tpu.memory_space<vmem>>, vector<32x16xbf16>
    %cst_18 = arith.constant dense<0.000000e+00> : vector<50x16xf32>
    %15 = tpu.matmul %13, %14, %cst_18 {dimension_numbers = #tpu.dot_dimension_numbers<[1], [0], [0], [1], [0, 0, 1, 1], [], []>} : vector<50x32xbf16>, vector<32x16xbf16>, vector<50x16xf32> -> vector<50x16xf32>
    %16 = arith.addf %12, %15 : vector<50x16xf32>
    %c0_19 = arith.constant 0 : index
    %c0_20 = arith.constant 0 : index
    %17 = vector.load %arg5[%c0_19, %c0_20] : memref<50x32xbf16, #tpu.memory_space<vmem>>, vector<50x32xbf16>
    %c96 = arith.constant 96 : index
    %c0_21 = arith.constant 0 : index
    %18 = vector.load %arg16[%c96, %c0_21] : memref<128x16xbf16, #tpu.memory_space<vmem>>, vector<32x16xbf16>
    %cst_22 = arith.constant dense<0.000000e+00> : vector<50x16xf32>
    %19 = tpu.matmul %17, %18, %cst_22 {dimension_numbers = #tpu.dot_dimension_numbers<[1], [0], [0], [1], [0, 0, 1, 1], [], []>} : vector<50x32xbf16>, vector<32x16xbf16>, vector<50x16xf32> -> vector<50x16xf32>
    %20 = arith.addf %16, %19 : vector<50x16xf32>
    %cst_23 = arith.constant 0.000000e+00 : f32
    %21 = vector.broadcast %cst_23 : f32 to vector<50x16xf32>
    %22 = arith.maximumf %20, %21 : vector<50x16xf32>
    %23 = arith.truncf %22 : vector<50x16xf32> to vector<50x16xbf16>
    %c0_24 = arith.constant 0 : index
    %c0_25 = arith.constant 0 : index
    %24 = vector.load %arg1[%c0_24, %c0_25] : memref<50x32xbf16, #tpu.memory_space<vmem>>, vector<50x32xbf16>
    %c0_26 = arith.constant 0 : index
    %c0_27 = arith.constant 0 : index
    %25 = vector.load %arg16[%c0_26, %c0_27] : memref<128x16xbf16, #tpu.memory_space<vmem>>, vector<32x16xbf16>
    %cst_28 = arith.constant dense<0.000000e+00> : vector<50x16xf32>
    %26 = tpu.matmul %24, %25, %cst_28 {dimension_numbers = #tpu.dot_dimension_numbers<[1], [0], [0], [1], [0, 0, 1, 1], [], []>} : vector<50x32xbf16>, vector<32x16xbf16>, vector<50x16xf32> -> vector<50x16xf32>
    %27 = vector.broadcast %0 : vector<1x16xf32> to vector<50x16xf32>
    %28 = arith.addf %27, %26 : vector<50x16xf32>
    %c0_29 = arith.constant 0 : index
    %c0_30 = arith.constant 0 : index
    %29 = vector.load %arg2[%c0_29, %c0_30] : memref<50x32xbf16, #tpu.memory_space<vmem>>, vector<50x32xbf16>
    %c32_31 = arith.constant 32 : index
    %c0_32 = arith.constant 0 : index
    %30 = vector.load %arg16[%c32_31, %c0_32] : memref<128x16xbf16, #tpu.memory_space<vmem>>, vector<32x16xbf16>
    %cst_33 = arith.constant dense<0.000000e+00> : vector<50x16xf32>
    %31 = tpu.matmul %29, %30, %cst_33 {dimension_numbers = #tpu.dot_dimension_numbers<[1], [0], [0], [1], [0, 0, 1, 1], [], []>} : vector<50x32xbf16>, vector<32x16xbf16>, vector<50x16xf32> -> vector<50x16xf32>
    %32 = arith.addf %28, %31 : vector<50x16xf32>
    %c0_34 = arith.constant 0 : index
    %c0_35 = arith.constant 0 : index
    %33 = vector.load %arg5[%c0_34, %c0_35] : memref<50x32xbf16, #tpu.memory_space<vmem>>, vector<50x32xbf16>
    %c64_36 = arith.constant 64 : index
    %c0_37 = arith.constant 0 : index
    %34 = vector.load %arg16[%c64_36, %c0_37] : memref<128x16xbf16, #tpu.memory_space<vmem>>, vector<32x16xbf16>
    %cst_38 = arith.constant dense<0.000000e+00> : vector<50x16xf32>
    %35 = tpu.matmul %33, %34, %cst_38 {dimension_numbers = #tpu.dot_dimension_numbers<[1], [0], [0], [1], [0, 0, 1, 1], [], []>} : vector<50x32xbf16>, vector<32x16xbf16>, vector<50x16xf32> -> vector<50x16xf32>
    %36 = arith.addf %32, %35 : vector<50x16xf32>
    %c0_39 = arith.constant 0 : index
    %c0_40 = arith.constant 0 : index
    %37 = vector.load %arg6[%c0_39, %c0_40] : memref<50x32xbf16, #tpu.memory_space<vmem>>, vector<50x32xbf16>
    %c96_41 = arith.constant 96 : index
    %c0_42 = arith.constant 0 : index
    %38 = vector.load %arg16[%c96_41, %c0_42] : memref<128x16xbf16, #tpu.memory_space<vmem>>, vector<32x16xbf16>
    %cst_43 = arith.constant dense<0.000000e+00> : vector<50x16xf32>
    %39 = tpu.matmul %37, %38, %cst_43 {dimension_numbers = #tpu.dot_dimension_numbers<[1], [0], [0], [1], [0, 0, 1, 1], [], []>} : vector<50x32xbf16>, vector<32x16xbf16>, vector<50x16xf32> -> vector<50x16xf32>
    %40 = arith.addf %36, %39 : vector<50x16xf32>
    %cst_44 = arith.constant 0.000000e+00 : f32
    %41 = vector.broadcast %cst_44 : f32 to vector<50x16xf32>
    %42 = arith.maximumf %40, %41 : vector<50x16xf32>
    %43 = arith.truncf %42 : vector<50x16xf32> to vector<50x16xbf16>
    %c0_45 = arith.constant 0 : index
    %c0_46 = arith.constant 0 : index
    %44 = vector.load %arg2[%c0_45, %c0_46] : memref<50x32xbf16, #tpu.memory_space<vmem>>, vector<50x32xbf16>
    %c0_47 = arith.constant 0 : index
    %c0_48 = arith.constant 0 : index
    %45 = vector.load %arg16[%c0_47, %c0_48] : memref<128x16xbf16, #tpu.memory_space<vmem>>, vector<32x16xbf16>
    %cst_49 = arith.constant dense<0.000000e+00> : vector<50x16xf32>
    %46 = tpu.matmul %44, %45, %cst_49 {dimension_numbers = #tpu.dot_dimension_numbers<[1], [0], [0], [1], [0, 0, 1, 1], [], []>} : vector<50x32xbf16>, vector<32x16xbf16>, vector<50x16xf32> -> vector<50x16xf32>
    %47 = vector.broadcast %0 : vector<1x16xf32> to vector<50x16xf32>
    %48 = arith.addf %47, %46 : vector<50x16xf32>
    %c0_50 = arith.constant 0 : index
    %c0_51 = arith.constant 0 : index
    %49 = vector.load %arg3[%c0_50, %c0_51] : memref<50x32xbf16, #tpu.memory_space<vmem>>, vector<50x32xbf16>
    %c32_52 = arith.constant 32 : index
    %c0_53 = arith.constant 0 : index
    %50 = vector.load %arg16[%c32_52, %c0_53] : memref<128x16xbf16, #tpu.memory_space<vmem>>, vector<32x16xbf16>
    %cst_54 = arith.constant dense<0.000000e+00> : vector<50x16xf32>
    %51 = tpu.matmul %49, %50, %cst_54 {dimension_numbers = #tpu.dot_dimension_numbers<[1], [0], [0], [1], [0, 0, 1, 1], [], []>} : vector<50x32xbf16>, vector<32x16xbf16>, vector<50x16xf32> -> vector<50x16xf32>
    %52 = arith.addf %48, %51 : vector<50x16xf32>
    %c0_55 = arith.constant 0 : index
    %c0_56 = arith.constant 0 : index
    %53 = vector.load %arg6[%c0_55, %c0_56] : memref<50x32xbf16, #tpu.memory_space<vmem>>, vector<50x32xbf16>
    %c64_57 = arith.constant 64 : index
    %c0_58 = arith.constant 0 : index
    %54 = vector.load %arg16[%c64_57, %c0_58] : memref<128x16xbf16, #tpu.memory_space<vmem>>, vector<32x16xbf16>
    %cst_59 = arith.constant dense<0.000000e+00> : vector<50x16xf32>
    %55 = tpu.matmul %53, %54, %cst_59 {dimension_numbers = #tpu.dot_dimension_numbers<[1], [0], [0], [1], [0, 0, 1, 1], [], []>} : vector<50x32xbf16>, vector<32x16xbf16>, vector<50x16xf32> -> vector<50x16xf32>
    %56 = arith.addf %52, %55 : vector<50x16xf32>
    %c0_60 = arith.constant 0 : index
    %c0_61 = arith.constant 0 : index
    %57 = vector.load %arg7[%c0_60, %c0_61] : memref<50x32xbf16, #tpu.memory_space<vmem>>, vector<50x32xbf16>
    %c96_62 = arith.constant 96 : index
    %c0_63 = arith.constant 0 : index
    %58 = vector.load %arg16[%c96_62, %c0_63] : memref<128x16xbf16, #tpu.memory_space<vmem>>, vector<32x16xbf16>
    %cst_64 = arith.constant dense<0.000000e+00> : vector<50x16xf32>
    %59 = tpu.matmul %57, %58, %cst_64 {dimension_numbers = #tpu.dot_dimension_numbers<[1], [0], [0], [1], [0, 0, 1, 1], [], []>} : vector<50x32xbf16>, vector<32x16xbf16>, vector<50x16xf32> -> vector<50x16xf32>
    %60 = arith.addf %56, %59 : vector<50x16xf32>
    %cst_65 = arith.constant 0.000000e+00 : f32
    %61 = vector.broadcast %cst_65 : f32 to vector<50x16xf32>
    %62 = arith.maximumf %60, %61 : vector<50x16xf32>
    %63 = arith.truncf %62 : vector<50x16xf32> to vector<50x16xbf16>
    %c0_66 = arith.constant 0 : index
    %c0_67 = arith.constant 0 : index
    %64 = vector.load %arg4[%c0_66, %c0_67] : memref<50x32xbf16, #tpu.memory_space<vmem>>, vector<50x32xbf16>
    %c0_68 = arith.constant 0 : index
    %c0_69 = arith.constant 0 : index
    %65 = vector.load %arg16[%c0_68, %c0_69] : memref<128x16xbf16, #tpu.memory_space<vmem>>, vector<32x16xbf16>
    %cst_70 = arith.constant dense<0.000000e+00> : vector<50x16xf32>
    %66 = tpu.matmul %64, %65, %cst_70 {dimension_numbers = #tpu.dot_dimension_numbers<[1], [0], [0], [1], [0, 0, 1, 1], [], []>} : vector<50x32xbf16>, vector<32x16xbf16>, vector<50x16xf32> -> vector<50x16xf32>
    %67 = vector.broadcast %0 : vector<1x16xf32> to vector<50x16xf32>
    %68 = arith.addf %67, %66 : vector<50x16xf32>
    %c0_71 = arith.constant 0 : index
    %c0_72 = arith.constant 0 : index
    %69 = vector.load %arg5[%c0_71, %c0_72] : memref<50x32xbf16, #tpu.memory_space<vmem>>, vector<50x32xbf16>
    %c32_73 = arith.constant 32 : index
    %c0_74 = arith.constant 0 : index
    %70 = vector.load %arg16[%c32_73, %c0_74] : memref<128x16xbf16, #tpu.memory_space<vmem>>, vector<32x16xbf16>
    %cst_75 = arith.constant dense<0.000000e+00> : vector<50x16xf32>
    %71 = tpu.matmul %69, %70, %cst_75 {dimension_numbers = #tpu.dot_dimension_numbers<[1], [0], [0], [1], [0, 0, 1, 1], [], []>} : vector<50x32xbf16>, vector<32x16xbf16>, vector<50x16xf32> -> vector<50x16xf32>
    %72 = arith.addf %68, %71 : vector<50x16xf32>
    %c0_76 = arith.constant 0 : index
    %c0_77 = arith.constant 0 : index
    %73 = vector.load %arg8[%c0_76, %c0_77] : memref<50x32xbf16, #tpu.memory_space<vmem>>, vector<50x32xbf16>
    %c64_78 = arith.constant 64 : index
    %c0_79 = arith.constant 0 : index
    %74 = vector.load %arg16[%c64_78, %c0_79] : memref<128x16xbf16, #tpu.memory_space<vmem>>, vector<32x16xbf16>
    %cst_80 = arith.constant dense<0.000000e+00> : vector<50x16xf32>
    %75 = tpu.matmul %73, %74, %cst_80 {dimension_numbers = #tpu.dot_dimension_numbers<[1], [0], [0], [1], [0, 0, 1, 1], [], []>} : vector<50x32xbf16>, vector<32x16xbf16>, vector<50x16xf32> -> vector<50x16xf32>
    %76 = arith.addf %72, %75 : vector<50x16xf32>
    %c0_81 = arith.constant 0 : index
    %c0_82 = arith.constant 0 : index
    %77 = vector.load %arg9[%c0_81, %c0_82] : memref<50x32xbf16, #tpu.memory_space<vmem>>, vector<50x32xbf16>
    %c96_83 = arith.constant 96 : index
    %c0_84 = arith.constant 0 : index
    %78 = vector.load %arg16[%c96_83, %c0_84] : memref<128x16xbf16, #tpu.memory_space<vmem>>, vector<32x16xbf16>
    %cst_85 = arith.constant dense<0.000000e+00> : vector<50x16xf32>
    %79 = tpu.matmul %77, %78, %cst_85 {dimension_numbers = #tpu.dot_dimension_numbers<[1], [0], [0], [1], [0, 0, 1, 1], [], []>} : vector<50x32xbf16>, vector<32x16xbf16>, vector<50x16xf32> -> vector<50x16xf32>
    %80 = arith.addf %76, %79 : vector<50x16xf32>
    %cst_86 = arith.constant 0.000000e+00 : f32
    %81 = vector.broadcast %cst_86 : f32 to vector<50x16xf32>
    %82 = arith.maximumf %80, %81 : vector<50x16xf32>
    %83 = arith.truncf %82 : vector<50x16xf32> to vector<50x16xbf16>
    %c0_87 = arith.constant 0 : index
    %c0_88 = arith.constant 0 : index
    %84 = vector.load %arg5[%c0_87, %c0_88] : memref<50x32xbf16, #tpu.memory_space<vmem>>, vector<50x32xbf16>
    %c0_89 = arith.constant 0 : index
    %c0_90 = arith.constant 0 : index
    %85 = vector.load %arg16[%c0_89, %c0_90] : memref<128x16xbf16, #tpu.memory_space<vmem>>, vector<32x16xbf16>
    %cst_91 = arith.constant dense<0.000000e+00> : vector<50x16xf32>
    %86 = tpu.matmul %84, %85, %cst_91 {dimension_numbers = #tpu.dot_dimension_numbers<[1], [0], [0], [1], [0, 0, 1, 1], [], []>} : vector<50x32xbf16>, vector<32x16xbf16>, vector<50x16xf32> -> vector<50x16xf32>
    %87 = vector.broadcast %0 : vector<1x16xf32> to vector<50x16xf32>
    %88 = arith.addf %87, %86 : vector<50x16xf32>
    %c0_92 = arith.constant 0 : index
    %c0_93 = arith.constant 0 : index
    %89 = vector.load %arg6[%c0_92, %c0_93] : memref<50x32xbf16, #tpu.memory_space<vmem>>, vector<50x32xbf16>
    %c32_94 = arith.constant 32 : index
    %c0_95 = arith.constant 0 : index
    %90 = vector.load %arg16[%c32_94, %c0_95] : memref<128x16xbf16, #tpu.memory_space<vmem>>, vector<32x16xbf16>
    %cst_96 = arith.constant dense<0.000000e+00> : vector<50x16xf32>
    %91 = tpu.matmul %89, %90, %cst_96 {dimension_numbers = #tpu.dot_dimension_numbers<[1], [0], [0], [1], [0, 0, 1, 1], [], []>} : vector<50x32xbf16>, vector<32x16xbf16>, vector<50x16xf32> -> vector<50x16xf32>
    %92 = arith.addf %88, %91 : vector<50x16xf32>
    %c0_97 = arith.constant 0 : index
    %c0_98 = arith.constant 0 : index
    %93 = vector.load %arg9[%c0_97, %c0_98] : memref<50x32xbf16, #tpu.memory_space<vmem>>, vector<50x32xbf16>
    %c64_99 = arith.constant 64 : index
    %c0_100 = arith.constant 0 : index
    %94 = vector.load %arg16[%c64_99, %c0_100] : memref<128x16xbf16, #tpu.memory_space<vmem>>, vector<32x16xbf16>
    %cst_101 = arith.constant dense<0.000000e+00> : vector<50x16xf32>
    %95 = tpu.matmul %93, %94, %cst_101 {dimension_numbers = #tpu.dot_dimension_numbers<[1], [0], [0], [1], [0, 0, 1, 1], [], []>} : vector<50x32xbf16>, vector<32x16xbf16>, vector<50x16xf32> -> vector<50x16xf32>
    %96 = arith.addf %92, %95 : vector<50x16xf32>
    %c0_102 = arith.constant 0 : index
    %c0_103 = arith.constant 0 : index
    %97 = vector.load %arg10[%c0_102, %c0_103] : memref<50x32xbf16, #tpu.memory_space<vmem>>, vector<50x32xbf16>
    %c96_104 = arith.constant 96 : index
    %c0_105 = arith.constant 0 : index
    %98 = vector.load %arg16[%c96_104, %c0_105] : memref<128x16xbf16, #tpu.memory_space<vmem>>, vector<32x16xbf16>
    %cst_106 = arith.constant dense<0.000000e+00> : vector<50x16xf32>
    %99 = tpu.matmul %97, %98, %cst_106 {dimension_numbers = #tpu.dot_dimension_numbers<[1], [0], [0], [1], [0, 0, 1, 1], [], []>} : vector<50x32xbf16>, vector<32x16xbf16>, vector<50x16xf32> -> vector<50x16xf32>
    %100 = arith.addf %96, %99 : vector<50x16xf32>
    %cst_107 = arith.constant 0.000000e+00 : f32
    %101 = vector.broadcast %cst_107 : f32 to vector<50x16xf32>
    %102 = arith.maximumf %100, %101 : vector<50x16xf32>
    %103 = arith.truncf %102 : vector<50x16xf32> to vector<50x16xbf16>
    %c0_108 = arith.constant 0 : index
    %c0_109 = arith.constant 0 : index
    %104 = vector.load %arg6[%c0_108, %c0_109] : memref<50x32xbf16, #tpu.memory_space<vmem>>, vector<50x32xbf16>
    %c0_110 = arith.constant 0 : index
    %c0_111 = arith.constant 0 : index
    %105 = vector.load %arg16[%c0_110, %c0_111] : memref<128x16xbf16, #tpu.memory_space<vmem>>, vector<32x16xbf16>
    %cst_112 = arith.constant dense<0.000000e+00> : vector<50x16xf32>
    %106 = tpu.matmul %104, %105, %cst_112 {dimension_numbers = #tpu.dot_dimension_numbers<[1], [0], [0], [1], [0, 0, 1, 1], [], []>} : vector<50x32xbf16>, vector<32x16xbf16>, vector<50x16xf32> -> vector<50x16xf32>
    %107 = vector.broadcast %0 : vector<1x16xf32> to vector<50x16xf32>
    %108 = arith.addf %107, %106 : vector<50x16xf32>
    %c0_113 = arith.constant 0 : index
    %c0_114 = arith.constant 0 : index
    %109 = vector.load %arg7[%c0_113, %c0_114] : memref<50x32xbf16, #tpu.memory_space<vmem>>, vector<50x32xbf16>
    %c32_115 = arith.constant 32 : index
    %c0_116 = arith.constant 0 : index
    %110 = vector.load %arg16[%c32_115, %c0_116] : memref<128x16xbf16, #tpu.memory_space<vmem>>, vector<32x16xbf16>
    %cst_117 = arith.constant dense<0.000000e+00> : vector<50x16xf32>
    %111 = tpu.matmul %109, %110, %cst_117 {dimension_numbers = #tpu.dot_dimension_numbers<[1], [0], [0], [1], [0, 0, 1, 1], [], []>} : vector<50x32xbf16>, vector<32x16xbf16>, vector<50x16xf32> -> vector<50x16xf32>
    %112 = arith.addf %108, %111 : vector<50x16xf32>
    %c0_118 = arith.constant 0 : index
    %c0_119 = arith.constant 0 : index
    %113 = vector.load %arg10[%c0_118, %c0_119] : memref<50x32xbf16, #tpu.memory_space<vmem>>, vector<50x32xbf16>
    %c64_120 = arith.constant 64 : index
    %c0_121 = arith.constant 0 : index
    %114 = vector.load %arg16[%c64_120, %c0_121] : memref<128x16xbf16, #tpu.memory_space<vmem>>, vector<32x16xbf16>
    %cst_122 = arith.constant dense<0.000000e+00> : vector<50x16xf32>
    %115 = tpu.matmul %113, %114, %cst_122 {dimension_numbers = #tpu.dot_dimension_numbers<[1], [0], [0], [1], [0, 0, 1, 1], [], []>} : vector<50x32xbf16>, vector<32x16xbf16>, vector<50x16xf32> -> vector<50x16xf32>
    %116 = arith.addf %112, %115 : vector<50x16xf32>
    %c0_123 = arith.constant 0 : index
    %c0_124 = arith.constant 0 : index
    %117 = vector.load %arg11[%c0_123, %c0_124] : memref<50x32xbf16, #tpu.memory_space<vmem>>, vector<50x32xbf16>
    %c96_125 = arith.constant 96 : index
    %c0_126 = arith.constant 0 : index
    %118 = vector.load %arg16[%c96_125, %c0_126] : memref<128x16xbf16, #tpu.memory_space<vmem>>, vector<32x16xbf16>
    %cst_127 = arith.constant dense<0.000000e+00> : vector<50x16xf32>
    %119 = tpu.matmul %117, %118, %cst_127 {dimension_numbers = #tpu.dot_dimension_numbers<[1], [0], [0], [1], [0, 0, 1, 1], [], []>} : vector<50x32xbf16>, vector<32x16xbf16>, vector<50x16xf32> -> vector<50x16xf32>
    %120 = arith.addf %116, %119 : vector<50x16xf32>
    %cst_128 = arith.constant 0.000000e+00 : f32
    %121 = vector.broadcast %cst_128 : f32 to vector<50x16xf32>
    %122 = arith.maximumf %120, %121 : vector<50x16xf32>
    %123 = arith.truncf %122 : vector<50x16xf32> to vector<50x16xbf16>
    %c0_129 = arith.constant 0 : index
    %c0_130 = arith.constant 0 : index
    %124 = vector.load %arg8[%c0_129, %c0_130] : memref<50x32xbf16, #tpu.memory_space<vmem>>, vector<50x32xbf16>
    %c0_131 = arith.constant 0 : index
    %c0_132 = arith.constant 0 : index
    %125 = vector.load %arg16[%c0_131, %c0_132] : memref<128x16xbf16, #tpu.memory_space<vmem>>, vector<32x16xbf16>
    %cst_133 = arith.constant dense<0.000000e+00> : vector<50x16xf32>
    %126 = tpu.matmul %124, %125, %cst_133 {dimension_numbers = #tpu.dot_dimension_numbers<[1], [0], [0], [1], [0, 0, 1, 1], [], []>} : vector<50x32xbf16>, vector<32x16xbf16>, vector<50x16xf32> -> vector<50x16xf32>
    %127 = vector.broadcast %0 : vector<1x16xf32> to vector<50x16xf32>
    %128 = arith.addf %127, %126 : vector<50x16xf32>
    %c0_134 = arith.constant 0 : index
    %c0_135 = arith.constant 0 : index
    %129 = vector.load %arg9[%c0_134, %c0_135] : memref<50x32xbf16, #tpu.memory_space<vmem>>, vector<50x32xbf16>
    %c32_136 = arith.constant 32 : index
    %c0_137 = arith.constant 0 : index
    %130 = vector.load %arg16[%c32_136, %c0_137] : memref<128x16xbf16, #tpu.memory_space<vmem>>, vector<32x16xbf16>
    %cst_138 = arith.constant dense<0.000000e+00> : vector<50x16xf32>
    %131 = tpu.matmul %129, %130, %cst_138 {dimension_numbers = #tpu.dot_dimension_numbers<[1], [0], [0], [1], [0, 0, 1, 1], [], []>} : vector<50x32xbf16>, vector<32x16xbf16>, vector<50x16xf32> -> vector<50x16xf32>
    %132 = arith.addf %128, %131 : vector<50x16xf32>
    %c0_139 = arith.constant 0 : index
    %c0_140 = arith.constant 0 : index
    %133 = vector.load %arg12[%c0_139, %c0_140] : memref<50x32xbf16, #tpu.memory_space<vmem>>, vector<50x32xbf16>
    %c64_141 = arith.constant 64 : index
    %c0_142 = arith.constant 0 : index
    %134 = vector.load %arg16[%c64_141, %c0_142] : memref<128x16xbf16, #tpu.memory_space<vmem>>, vector<32x16xbf16>
    %cst_143 = arith.constant dense<0.000000e+00> : vector<50x16xf32>
    %135 = tpu.matmul %133, %134, %cst_143 {dimension_numbers = #tpu.dot_dimension_numbers<[1], [0], [0], [1], [0, 0, 1, 1], [], []>} : vector<50x32xbf16>, vector<32x16xbf16>, vector<50x16xf32> -> vector<50x16xf32>
    %136 = arith.addf %132, %135 : vector<50x16xf32>
    %c0_144 = arith.constant 0 : index
    %c0_145 = arith.constant 0 : index
    %137 = vector.load %arg13[%c0_144, %c0_145] : memref<50x32xbf16, #tpu.memory_space<vmem>>, vector<50x32xbf16>
    %c96_146 = arith.constant 96 : index
    %c0_147 = arith.constant 0 : index
    %138 = vector.load %arg16[%c96_146, %c0_147] : memref<128x16xbf16, #tpu.memory_space<vmem>>, vector<32x16xbf16>
    %cst_148 = arith.constant dense<0.000000e+00> : vector<50x16xf32>
    %139 = tpu.matmul %137, %138, %cst_148 {dimension_numbers = #tpu.dot_dimension_numbers<[1], [0], [0], [1], [0, 0, 1, 1], [], []>} : vector<50x32xbf16>, vector<32x16xbf16>, vector<50x16xf32> -> vector<50x16xf32>
    %140 = arith.addf %136, %139 : vector<50x16xf32>
    %cst_149 = arith.constant 0.000000e+00 : f32
    %141 = vector.broadcast %cst_149 : f32 to vector<50x16xf32>
    %142 = arith.maximumf %140, %141 : vector<50x16xf32>
    %143 = arith.truncf %142 : vector<50x16xf32> to vector<50x16xbf16>
    %c0_150 = arith.constant 0 : index
    %c0_151 = arith.constant 0 : index
    %144 = vector.load %arg9[%c0_150, %c0_151] : memref<50x32xbf16, #tpu.memory_space<vmem>>, vector<50x32xbf16>
    %c0_152 = arith.constant 0 : index
    %c0_153 = arith.constant 0 : index
    %145 = vector.load %arg16[%c0_152, %c0_153] : memref<128x16xbf16, #tpu.memory_space<vmem>>, vector<32x16xbf16>
    %cst_154 = arith.constant dense<0.000000e+00> : vector<50x16xf32>
    %146 = tpu.matmul %144, %145, %cst_154 {dimension_numbers = #tpu.dot_dimension_numbers<[1], [0], [0], [1], [0, 0, 1, 1], [], []>} : vector<50x32xbf16>, vector<32x16xbf16>, vector<50x16xf32> -> vector<50x16xf32>
    %147 = vector.broadcast %0 : vector<1x16xf32> to vector<50x16xf32>
    %148 = arith.addf %147, %146 : vector<50x16xf32>
    %c0_155 = arith.constant 0 : index
    %c0_156 = arith.constant 0 : index
    %149 = vector.load %arg10[%c0_155, %c0_156] : memref<50x32xbf16, #tpu.memory_space<vmem>>, vector<50x32xbf16>
    %c32_157 = arith.constant 32 : index
    %c0_158 = arith.constant 0 : index
    %150 = vector.load %arg16[%c32_157, %c0_158] : memref<128x16xbf16, #tpu.memory_space<vmem>>, vector<32x16xbf16>
    %cst_159 = arith.constant dense<0.000000e+00> : vector<50x16xf32>
    %151 = tpu.matmul %149, %150, %cst_159 {dimension_numbers = #tpu.dot_dimension_numbers<[1], [0], [0], [1], [0, 0, 1, 1], [], []>} : vector<50x32xbf16>, vector<32x16xbf16>, vector<50x16xf32> -> vector<50x16xf32>
    %152 = arith.addf %148, %151 : vector<50x16xf32>
    %c0_160 = arith.constant 0 : index
    %c0_161 = arith.constant 0 : index
    %153 = vector.load %arg13[%c0_160, %c0_161] : memref<50x32xbf16, #tpu.memory_space<vmem>>, vector<50x32xbf16>
    %c64_162 = arith.constant 64 : index
    %c0_163 = arith.constant 0 : index
    %154 = vector.load %arg16[%c64_162, %c0_163] : memref<128x16xbf16, #tpu.memory_space<vmem>>, vector<32x16xbf16>
    %cst_164 = arith.constant dense<0.000000e+00> : vector<50x16xf32>
    %155 = tpu.matmul %153, %154, %cst_164 {dimension_numbers = #tpu.dot_dimension_numbers<[1], [0], [0], [1], [0, 0, 1, 1], [], []>} : vector<50x32xbf16>, vector<32x16xbf16>, vector<50x16xf32> -> vector<50x16xf32>
    %156 = arith.addf %152, %155 : vector<50x16xf32>
    %c0_165 = arith.constant 0 : index
    %c0_166 = arith.constant 0 : index
    %157 = vector.load %arg14[%c0_165, %c0_166] : memref<50x32xbf16, #tpu.memory_space<vmem>>, vector<50x32xbf16>
    %c96_167 = arith.constant 96 : index
    %c0_168 = arith.constant 0 : index
    %158 = vector.load %arg16[%c96_167, %c0_168] : memref<128x16xbf16, #tpu.memory_space<vmem>>, vector<32x16xbf16>
    %cst_169 = arith.constant dense<0.000000e+00> : vector<50x16xf32>
    %159 = tpu.matmul %157, %158, %cst_169 {dimension_numbers = #tpu.dot_dimension_numbers<[1], [0], [0], [1], [0, 0, 1, 1], [], []>} : vector<50x32xbf16>, vector<32x16xbf16>, vector<50x16xf32> -> vector<50x16xf32>
    %160 = arith.addf %156, %159 : vector<50x16xf32>
    %cst_170 = arith.constant 0.000000e+00 : f32
    %161 = vector.broadcast %cst_170 : f32 to vector<50x16xf32>
    %162 = arith.maximumf %160, %161 : vector<50x16xf32>
    %163 = arith.truncf %162 : vector<50x16xf32> to vector<50x16xbf16>
    %c0_171 = arith.constant 0 : index
    %c0_172 = arith.constant 0 : index
    %164 = vector.load %arg10[%c0_171, %c0_172] : memref<50x32xbf16, #tpu.memory_space<vmem>>, vector<50x32xbf16>
    %c0_173 = arith.constant 0 : index
    %c0_174 = arith.constant 0 : index
    %165 = vector.load %arg16[%c0_173, %c0_174] : memref<128x16xbf16, #tpu.memory_space<vmem>>, vector<32x16xbf16>
    %cst_175 = arith.constant dense<0.000000e+00> : vector<50x16xf32>
    %166 = tpu.matmul %164, %165, %cst_175 {dimension_numbers = #tpu.dot_dimension_numbers<[1], [0], [0], [1], [0, 0, 1, 1], [], []>} : vector<50x32xbf16>, vector<32x16xbf16>, vector<50x16xf32> -> vector<50x16xf32>
    %167 = vector.broadcast %0 : vector<1x16xf32> to vector<50x16xf32>
    %168 = arith.addf %167, %166 : vector<50x16xf32>
    %c0_176 = arith.constant 0 : index
    %c0_177 = arith.constant 0 : index
    %169 = vector.load %arg11[%c0_176, %c0_177] : memref<50x32xbf16, #tpu.memory_space<vmem>>, vector<50x32xbf16>
    %c32_178 = arith.constant 32 : index
    %c0_179 = arith.constant 0 : index
    %170 = vector.load %arg16[%c32_178, %c0_179] : memref<128x16xbf16, #tpu.memory_space<vmem>>, vector<32x16xbf16>
    %cst_180 = arith.constant dense<0.000000e+00> : vector<50x16xf32>
    %171 = tpu.matmul %169, %170, %cst_180 {dimension_numbers = #tpu.dot_dimension_numbers<[1], [0], [0], [1], [0, 0, 1, 1], [], []>} : vector<50x32xbf16>, vector<32x16xbf16>, vector<50x16xf32> -> vector<50x16xf32>
    %172 = arith.addf %168, %171 : vector<50x16xf32>
    %c0_181 = arith.constant 0 : index
    %c0_182 = arith.constant 0 : index
    %173 = vector.load %arg14[%c0_181, %c0_182] : memref<50x32xbf16, #tpu.memory_space<vmem>>, vector<50x32xbf16>
    %c64_183 = arith.constant 64 : index
    %c0_184 = arith.constant 0 : index
    %174 = vector.load %arg16[%c64_183, %c0_184] : memref<128x16xbf16, #tpu.memory_space<vmem>>, vector<32x16xbf16>
    %cst_185 = arith.constant dense<0.000000e+00> : vector<50x16xf32>
    %175 = tpu.matmul %173, %174, %cst_185 {dimension_numbers = #tpu.dot_dimension_numbers<[1], [0], [0], [1], [0, 0, 1, 1], [], []>} : vector<50x32xbf16>, vector<32x16xbf16>, vector<50x16xf32> -> vector<50x16xf32>
    %176 = arith.addf %172, %175 : vector<50x16xf32>
    %c0_186 = arith.constant 0 : index
    %c0_187 = arith.constant 0 : index
    %177 = vector.load %arg15[%c0_186, %c0_187] : memref<50x32xbf16, #tpu.memory_space<vmem>>, vector<50x32xbf16>
    %c96_188 = arith.constant 96 : index
    %c0_189 = arith.constant 0 : index
    %178 = vector.load %arg16[%c96_188, %c0_189] : memref<128x16xbf16, #tpu.memory_space<vmem>>, vector<32x16xbf16>
    %cst_190 = arith.constant dense<0.000000e+00> : vector<50x16xf32>
    %179 = tpu.matmul %177, %178, %cst_190 {dimension_numbers = #tpu.dot_dimension_numbers<[1], [0], [0], [1], [0, 0, 1, 1], [], []>} : vector<50x32xbf16>, vector<32x16xbf16>, vector<50x16xf32> -> vector<50x16xf32>
    %180 = arith.addf %176, %179 : vector<50x16xf32>
    %cst_191 = arith.constant 0.000000e+00 : f32
    %181 = vector.broadcast %cst_191 : f32 to vector<50x16xf32>
    %182 = arith.maximumf %180, %181 : vector<50x16xf32>
    %183 = arith.truncf %182 : vector<50x16xf32> to vector<50x16xbf16>
    %c0_192 = arith.constant 0 : index
    %c0_193 = arith.constant 0 : index
    %184 = vector.load %arg18[%c0_192, %c0_193] : memref<64x8xbf16, #tpu.memory_space<vmem>>, vector<16x8xbf16>
    %cst_194 = arith.constant dense<0.000000e+00> : vector<50x8xf32>
    %185 = tpu.matmul %23, %184, %cst_194 {dimension_numbers = #tpu.dot_dimension_numbers<[1], [0], [0], [1], [0, 0, 1, 1], [], []>} : vector<50x16xbf16>, vector<16x8xbf16>, vector<50x8xf32> -> vector<50x8xf32>
    %186 = vector.broadcast %1 : vector<1x8xf32> to vector<50x8xf32>
    %187 = arith.addf %186, %185 : vector<50x8xf32>
    %c16 = arith.constant 16 : index
    %c0_195 = arith.constant 0 : index
    %188 = vector.load %arg18[%c16, %c0_195] : memref<64x8xbf16, #tpu.memory_space<vmem>>, vector<16x8xbf16>
    %cst_196 = arith.constant dense<0.000000e+00> : vector<50x8xf32>
    %189 = tpu.matmul %43, %188, %cst_196 {dimension_numbers = #tpu.dot_dimension_numbers<[1], [0], [0], [1], [0, 0, 1, 1], [], []>} : vector<50x16xbf16>, vector<16x8xbf16>, vector<50x8xf32> -> vector<50x8xf32>
    %190 = arith.addf %187, %189 : vector<50x8xf32>
    %c32_197 = arith.constant 32 : index
    %c0_198 = arith.constant 0 : index
    %191 = vector.load %arg18[%c32_197, %c0_198] : memref<64x8xbf16, #tpu.memory_space<vmem>>, vector<16x8xbf16>
    %cst_199 = arith.constant dense<0.000000e+00> : vector<50x8xf32>
    %192 = tpu.matmul %83, %191, %cst_199 {dimension_numbers = #tpu.dot_dimension_numbers<[1], [0], [0], [1], [0, 0, 1, 1], [], []>} : vector<50x16xbf16>, vector<16x8xbf16>, vector<50x8xf32> -> vector<50x8xf32>
    %193 = arith.addf %190, %192 : vector<50x8xf32>
    %c48 = arith.constant 48 : index
    %c0_200 = arith.constant 0 : index
    %194 = vector.load %arg18[%c48, %c0_200] : memref<64x8xbf16, #tpu.memory_space<vmem>>, vector<16x8xbf16>
    %cst_201 = arith.constant dense<0.000000e+00> : vector<50x8xf32>
    %195 = tpu.matmul %103, %194, %cst_201 {dimension_numbers = #tpu.dot_dimension_numbers<[1], [0], [0], [1], [0, 0, 1, 1], [], []>} : vector<50x16xbf16>, vector<16x8xbf16>, vector<50x8xf32> -> vector<50x8xf32>
    %196 = arith.addf %193, %195 : vector<50x8xf32>
    %cst_202 = arith.constant 0.000000e+00 : f32
    %197 = vector.broadcast %cst_202 : f32 to vector<50x8xf32>
    %198 = arith.maximumf %196, %197 : vector<50x8xf32>
    %c0_203 = arith.constant 0 : index
    %c0_204 = arith.constant 0 : index
    %199 = vector.load %arg18[%c0_203, %c0_204] : memref<64x8xbf16, #tpu.memory_space<vmem>>, vector<16x8xbf16>
    %cst_205 = arith.constant dense<0.000000e+00> : vector<50x8xf32>
    %200 = tpu.matmul %43, %199, %cst_205 {dimension_numbers = #tpu.dot_dimension_numbers<[1], [0], [0], [1], [0, 0, 1, 1], [], []>} : vector<50x16xbf16>, vector<16x8xbf16>, vector<50x8xf32> -> vector<50x8xf32>
    %201 = vector.broadcast %1 : vector<1x8xf32> to vector<50x8xf32>
    %202 = arith.addf %201, %200 : vector<50x8xf32>
    %c16_206 = arith.constant 16 : index
    %c0_207 = arith.constant 0 : index
    %203 = vector.load %arg18[%c16_206, %c0_207] : memref<64x8xbf16, #tpu.memory_space<vmem>>, vector<16x8xbf16>
    %cst_208 = arith.constant dense<0.000000e+00> : vector<50x8xf32>
    %204 = tpu.matmul %63, %203, %cst_208 {dimension_numbers = #tpu.dot_dimension_numbers<[1], [0], [0], [1], [0, 0, 1, 1], [], []>} : vector<50x16xbf16>, vector<16x8xbf16>, vector<50x8xf32> -> vector<50x8xf32>
    %205 = arith.addf %202, %204 : vector<50x8xf32>
    %c32_209 = arith.constant 32 : index
    %c0_210 = arith.constant 0 : index
    %206 = vector.load %arg18[%c32_209, %c0_210] : memref<64x8xbf16, #tpu.memory_space<vmem>>, vector<16x8xbf16>
    %cst_211 = arith.constant dense<0.000000e+00> : vector<50x8xf32>
    %207 = tpu.matmul %103, %206, %cst_211 {dimension_numbers = #tpu.dot_dimension_numbers<[1], [0], [0], [1], [0, 0, 1, 1], [], []>} : vector<50x16xbf16>, vector<16x8xbf16>, vector<50x8xf32> -> vector<50x8xf32>
    %208 = arith.addf %205, %207 : vector<50x8xf32>
    %c48_212 = arith.constant 48 : index
    %c0_213 = arith.constant 0 : index
    %209 = vector.load %arg18[%c48_212, %c0_213] : memref<64x8xbf16, #tpu.memory_space<vmem>>, vector<16x8xbf16>
    %cst_214 = arith.constant dense<0.000000e+00> : vector<50x8xf32>
    %210 = tpu.matmul %123, %209, %cst_214 {dimension_numbers = #tpu.dot_dimension_numbers<[1], [0], [0], [1], [0, 0, 1, 1], [], []>} : vector<50x16xbf16>, vector<16x8xbf16>, vector<50x8xf32> -> vector<50x8xf32>
    %211 = arith.addf %208, %210 : vector<50x8xf32>
    %cst_215 = arith.constant 0.000000e+00 : f32
    %212 = vector.broadcast %cst_215 : f32 to vector<50x8xf32>
    %213 = arith.maximumf %211, %212 : vector<50x8xf32>
    %c0_216 = arith.constant 0 : index
    %c0_217 = arith.constant 0 : index
    %214 = vector.load %arg18[%c0_216, %c0_217] : memref<64x8xbf16, #tpu.memory_space<vmem>>, vector<16x8xbf16>
    %cst_218 = arith.constant dense<0.000000e+00> : vector<50x8xf32>
    %215 = tpu.matmul %83, %214, %cst_218 {dimension_numbers = #tpu.dot_dimension_numbers<[1], [0], [0], [1], [0, 0, 1, 1], [], []>} : vector<50x16xbf16>, vector<16x8xbf16>, vector<50x8xf32> -> vector<50x8xf32>
    %216 = vector.broadcast %1 : vector<1x8xf32> to vector<50x8xf32>
    %217 = arith.addf %216, %215 : vector<50x8xf32>
    %c16_219 = arith.constant 16 : index
    %c0_220 = arith.constant 0 : index
    %218 = vector.load %arg18[%c16_219, %c0_220] : memref<64x8xbf16, #tpu.memory_space<vmem>>, vector<16x8xbf16>
    %cst_221 = arith.constant dense<0.000000e+00> : vector<50x8xf32>
    %219 = tpu.matmul %103, %218, %cst_221 {dimension_numbers = #tpu.dot_dimension_numbers<[1], [0], [0], [1], [0, 0, 1, 1], [], []>} : vector<50x16xbf16>, vector<16x8xbf16>, vector<50x8xf32> -> vector<50x8xf32>
    %220 = arith.addf %217, %219 : vector<50x8xf32>
    %c32_222 = arith.constant 32 : index
    %c0_223 = arith.constant 0 : index
    %221 = vector.load %arg18[%c32_222, %c0_223] : memref<64x8xbf16, #tpu.memory_space<vmem>>, vector<16x8xbf16>
    %cst_224 = arith.constant dense<0.000000e+00> : vector<50x8xf32>
    %222 = tpu.matmul %143, %221, %cst_224 {dimension_numbers = #tpu.dot_dimension_numbers<[1], [0], [0], [1], [0, 0, 1, 1], [], []>} : vector<50x16xbf16>, vector<16x8xbf16>, vector<50x8xf32> -> vector<50x8xf32>
    %223 = arith.addf %220, %222 : vector<50x8xf32>
    %c48_225 = arith.constant 48 : index
    %c0_226 = arith.constant 0 : index
    %224 = vector.load %arg18[%c48_225, %c0_226] : memref<64x8xbf16, #tpu.memory_space<vmem>>, vector<16x8xbf16>
    %cst_227 = arith.constant dense<0.000000e+00> : vector<50x8xf32>
    %225 = tpu.matmul %163, %224, %cst_227 {dimension_numbers = #tpu.dot_dimension_numbers<[1], [0], [0], [1], [0, 0, 1, 1], [], []>} : vector<50x16xbf16>, vector<16x8xbf16>, vector<50x8xf32> -> vector<50x8xf32>
    %226 = arith.addf %223, %225 : vector<50x8xf32>
    %cst_228 = arith.constant 0.000000e+00 : f32
    %227 = vector.broadcast %cst_228 : f32 to vector<50x8xf32>
    %228 = arith.maximumf %226, %227 : vector<50x8xf32>
    %c0_229 = arith.constant 0 : index
    %c0_230 = arith.constant 0 : index
    %229 = vector.load %arg18[%c0_229, %c0_230] : memref<64x8xbf16, #tpu.memory_space<vmem>>, vector<16x8xbf16>
    %cst_231 = arith.constant dense<0.000000e+00> : vector<50x8xf32>
    %230 = tpu.matmul %103, %229, %cst_231 {dimension_numbers = #tpu.dot_dimension_numbers<[1], [0], [0], [1], [0, 0, 1, 1], [], []>} : vector<50x16xbf16>, vector<16x8xbf16>, vector<50x8xf32> -> vector<50x8xf32>
    %231 = vector.broadcast %1 : vector<1x8xf32> to vector<50x8xf32>
    %232 = arith.addf %231, %230 : vector<50x8xf32>
    %c16_232 = arith.constant 16 : index
    %c0_233 = arith.constant 0 : index
    %233 = vector.load %arg18[%c16_232, %c0_233] : memref<64x8xbf16, #tpu.memory_space<vmem>>, vector<16x8xbf16>
    %cst_234 = arith.constant dense<0.000000e+00> : vector<50x8xf32>
    %234 = tpu.matmul %123, %233, %cst_234 {dimension_numbers = #tpu.dot_dimension_numbers<[1], [0], [0], [1], [0, 0, 1, 1], [], []>} : vector<50x16xbf16>, vector<16x8xbf16>, vector<50x8xf32> -> vector<50x8xf32>
    %235 = arith.addf %232, %234 : vector<50x8xf32>
    %c32_235 = arith.constant 32 : index
    %c0_236 = arith.constant 0 : index
    %236 = vector.load %arg18[%c32_235, %c0_236] : memref<64x8xbf16, #tpu.memory_space<vmem>>, vector<16x8xbf16>
    %cst_237 = arith.constant dense<0.000000e+00> : vector<50x8xf32>
    %237 = tpu.matmul %163, %236, %cst_237 {dimension_numbers = #tpu.dot_dimension_numbers<[1], [0], [0], [1], [0, 0, 1, 1], [], []>} : vector<50x16xbf16>, vector<16x8xbf16>, vector<50x8xf32> -> vector<50x8xf32>
    %238 = arith.addf %235, %237 : vector<50x8xf32>
    %c48_238 = arith.constant 48 : index
    %c0_239 = arith.constant 0 : index
    %239 = vector.load %arg18[%c48_238, %c0_239] : memref<64x8xbf16, #tpu.memory_space<vmem>>, vector<16x8xbf16>
    %cst_240 = arith.constant dense<0.000000e+00> : vector<50x8xf32>
    %240 = tpu.matmul %183, %239, %cst_240 {dimension_numbers = #tpu.dot_dimension_numbers<[1], [0], [0], [1], [0, 0, 1, 1], [], []>} : vector<50x16xbf16>, vector<16x8xbf16>, vector<50x8xf32> -> vector<50x8xf32>
    %241 = arith.addf %238, %240 : vector<50x8xf32>
    %cst_241 = arith.constant 0.000000e+00 : f32
    %242 = vector.broadcast %cst_241 : f32 to vector<50x8xf32>
    %243 = arith.maximumf %241, %242 : vector<50x8xf32>
    %244 = arith.maximumf %198, %213 : vector<50x8xf32>
    %245 = arith.maximumf %228, %243 : vector<50x8xf32>
    %246 = arith.maximumf %244, %245 : vector<50x8xf32>
    %247 = arith.truncf %246 : vector<50x8xf32> to vector<50x8xbf16>
    %c0_242 = arith.constant 0 : index
    %c0_243 = arith.constant 0 : index
    %248 = vector.load %arg20[%c0_242, %c0_243] : memref<8x8xbf16, #tpu.memory_space<vmem>>, vector<8x8xbf16>
    %cst_244 = arith.constant dense<0.000000e+00> : vector<50x8xf32>
    %249 = tpu.matmul %247, %248, %cst_244 {dimension_numbers = #tpu.dot_dimension_numbers<[1], [0], [0], [1], [0, 0, 1, 1], [], []>} : vector<50x8xbf16>, vector<8x8xbf16>, vector<50x8xf32> -> vector<50x8xf32>
    %250 = vector.broadcast %2 : vector<1x8xf32> to vector<50x8xf32>
    %251 = arith.addf %249, %250 : vector<50x8xf32>
    %cst_245 = arith.constant 0.000000e+00 : f32
    %252 = vector.broadcast %cst_245 : f32 to vector<50x8xf32>
    %253 = arith.maximumf %251, %252 : vector<50x8xf32>
    %254 = arith.truncf %253 : vector<50x8xf32> to vector<50x8xbf16>
    %c0_246 = arith.constant 0 : index
    %c0_247 = arith.constant 0 : index
    %255 = vector.load %arg22[%c0_246, %c0_247] : memref<8x4xbf16, #tpu.memory_space<vmem>>, vector<8x4xbf16>
    %cst_248 = arith.constant dense<0.000000e+00> : vector<50x4xf32>
    %256 = tpu.matmul %254, %255, %cst_248 {dimension_numbers = #tpu.dot_dimension_numbers<[1], [0], [0], [1], [0, 0, 1, 1], [], []>} : vector<50x8xbf16>, vector<8x4xbf16>, vector<50x4xf32> -> vector<50x4xf32>
    %257 = vector.broadcast %3 : vector<1x4xf32> to vector<50x4xf32>
    %258 = arith.addf %256, %257 : vector<50x4xf32>
    %cst_249 = arith.constant 0.000000e+00 : f32
    %259 = vector.broadcast %cst_249 : f32 to vector<50x4xf32>
    %260 = arith.maximumf %258, %259 : vector<50x4xf32>
    %261 = arith.truncf %260 : vector<50x4xf32> to vector<50x4xbf16>
    %c0_250 = arith.constant 0 : index
    %c0_251 = arith.constant 0 : index
    %262 = vector.load %arg24[%c0_250, %c0_251] : memref<50x4xbf16, #tpu.memory_space<vmem>>, vector<50x4xbf16>
    tpu.vector_store %arg24[%c0_250, %c0_251], %261 {strides = array<i32>} : memref<50x4xbf16, #tpu.memory_space<vmem>>, vector<50x4xbf16>,
    return
  }
}

</mosaic_0001>

<llo_original>
// kernel: state_tracker_forward.4
$region0: #{state_tracker_forward.4}
  #allocation0 [shape = 'u32[]', space=smem, size = 0x4, offset = 0x4, fixed_abs, tag = 'smem constant byte address 0x4 - core index']
  #allocation1 [shape = 'u32[144,128]{1,0:T(1,128)}', space=vmem, size = 0x12000, scoped, tag = 'internal scratch']
  %s0 = inlined_call_operand.vmem [shape: bf16[1152,9], index: 0, kind: input, shape index: {}]
  %s1 = inlined_call_operand.vmem [shape: bf16[9,32], index: 1, kind: input, shape index: {}]
  %s2 = inlined_call_operand.vmem [shape: f32[1,32], index: 2, kind: input, shape index: {}]
  %s3 = inlined_call_operand.vmem [shape: bf16[1152,32], index: 3, kind: output, shape index: {}]
  %s4 = sld [smem:[#allocation0]]
  $region22: #{state_tracker_forward.4} parent=0
    _
  %s6 = ssub.s32 1, %s4
  %s7 = scalar_select 0, %s6, %s4
  // Predicated region
  $region2: #{state_tracker_forward.4} parent=0 // pred_check
    _
  $region3: #{state_tracker_forward.4} parent=0 // pred_check_branch
    %9 = sbr.rel (0) target = $region5
  $region4: #{state_tracker_forward.4} parent=0 // pred_region
    _
  $region5: #{state_tracker_forward.4} parent=0 // pred_fallthru
    _
  // Predicated region
  $region6: #{state_tracker_forward.4} parent=0 // pred_check
    _
  $region7: #{state_tracker_forward.4} parent=0 // pred_check_branch
    %11 = sbr.rel (0) target = $region9
  $region8: #{state_tracker_forward.4} parent=0 // pred_region
    _
  $region9: #{state_tracker_forward.4} parent=0 // pred_fallthru
    _
  // Predicated region
  $region10: #{state_tracker_forward.4} parent=0 // pred_check
    _
  $region11: #{state_tracker_forward.4} parent=0 // pred_check_branch
    %13 = sbr.rel (0) target = $region13
  $region12: #{state_tracker_forward.4} parent=0 // pred_region
    _
  $region13: #{state_tracker_forward.4} parent=0 // pred_fallthru
    _
  %v15 = vld [vmem:[%s0] sm:$0xf]
  %v16 = vld [vmem:[%s0 + $0x4] sm:$0xf]
  %v17 = vld [vmem:[%s0 + $0x8] sm:$0xf]
  %v18 = vld [vmem:[%s0 + $0xc] sm:$0xf]
  %v19 = vld [vmem:[%s0 + $0x10] sm:$0xf]
  %v20 = vld [vmem:[%s0 + $0x14] sm:$0xf]
  %v21 = vld [vmem:[%s0 + $0x18] sm:$0xf]
  %v22 = vld [vmem:[%s0 + $0x1c] sm:$0xf]
  %v23 = vld [vmem:[%s0 + $0x20] sm:$0xf]
  %v24 = vld [vmem:[%s0 + $0x24] sm:$0xf]
  %v25 = vld [vmem:[%s0 + $0x28] sm:$0xf]
  %v26 = vld [vmem:[%s0 + $0x2c] sm:$0xf]
  %v27 = vld [vmem:[%s0 + $0x30] sm:$0xf]
  %v28 = vld [vmem:[%s0 + $0x34] sm:$0xf]
  %v29 = vld [vmem:[%s0 + $0x38] sm:$0xf]
  %v30 = vld [vmem:[%s0 + $0x3c] sm:$0xf]
  %v31 = vld [vmem:[%s0 + $0x40] sm:$0xf]
  %v32 = vld [vmem:[%s0 + $0x44] sm:$0xf]
  %v33 = vld [vmem:[%s0 + $0x48] sm:$0xf]
  %v34 = vld [vmem:[%s0 + $0x4c] sm:$0xf]
  %v35 = vld [vmem:[%s0 + $0x50] sm:$0xf]
  %v36 = vld [vmem:[%s0 + $0x54] sm:$0xf]
  %v37 = vld [vmem:[%s0 + $0x58] sm:$0xf]
  %v38 = vld [vmem:[%s0 + $0x5c] sm:$0xf]
  %v39 = vld [vmem:[%s0 + $0x60] sm:$0xf]
  %v40 = vld [vmem:[%s0 + $0x64] sm:$0xf]
  %v41 = vld [vmem:[%s0 + $0x68] sm:$0xf]
  %v42 = vld [vmem:[%s0 + $0x6c] sm:$0xf]
  %v43 = vld [vmem:[%s0 + $0x70] sm:$0xf]
  %v44 = vld [vmem:[%s0 + $0x74] sm:$0xf]
  %v45 = vld [vmem:[%s0 + $0x78] sm:$0xf]
  %v46 = vld [vmem:[%s0 + $0x7c] sm:$0xf]
  %v47 = vld [vmem:[%s0 + $0x80] sm:$0xf]
  %v48 = vld [vmem:[%s0 + $0x84] sm:$0xf]
  %v49 = vld [vmem:[%s0 + $0x88] sm:$0xf]
  %v50 = vld [vmem:[%s0 + $0x8c] sm:$0xf]
  %v51 = vld [vmem:[%s0 + $0x90] sm:$0xf]
  %v52 = vld [vmem:[%s0 + $0x94] sm:$0xf]
  %v53 = vld [vmem:[%s0 + $0x98] sm:$0xf]
  %v54 = vld [vmem:[%s0 + $0x9c] sm:$0xf]
  %v55 = vld [vmem:[%s0 + $0xa0] sm:$0xf]
  %v56 = vld [vmem:[%s0 + $0xa4] sm:$0xf]
  %v57 = vld [vmem:[%s0 + $0xa8] sm:$0xf]
  %v58 = vld [vmem:[%s0 + $0xac] sm:$0xf]
  %v59 = vld [vmem:[%s0 + $0xb0] sm:$0xf]
  %v60 = vld [vmem:[%s0 + $0xb4] sm:$0xf]
  %v61 = vld [vmem:[%s0 + $0xb8] sm:$0xf]
  %v62 = vld [vmem:[%s0 + $0xbc] sm:$0xf]
  %v63 = vld [vmem:[%s0 + $0xc0] sm:$0xf]
  %v64 = vld [vmem:[%s0 + $0xc4] sm:$0xf]
  %v65 = vld [vmem:[%s0 + $0xc8] sm:$0xf]
  %v66 = vld [vmem:[%s0 + $0xcc] sm:$0xf]
  %v67 = vld [vmem:[%s0 + $0xd0] sm:$0xf]
  %v68 = vld [vmem:[%s0 + $0xd4] sm:$0xf]
  %v69 = vld [vmem:[%s0 + $0xd8] sm:$0xf]
  %v70 = vld [vmem:[%s0 + $0xdc] sm:$0xf]
  %v71 = vld [vmem:[%s0 + $0xe0] sm:$0xf]
  %v72 = vld [vmem:[%s0 + $0xe4] sm:$0xf]
  %v73 = vld [vmem:[%s0 + $0xe8] sm:$0xf]
  %v74 = vld [vmem:[%s0 + $0xec] sm:$0xf]
  %v75 = vld [vmem:[%s0 + $0xf0] sm:$0xf]
  %v76 = vld [vmem:[%s0 + $0xf4] sm:$0xf]
  %v77 = vld [vmem:[%s0 + $0xf8] sm:$0xf]
  %v78 = vld [vmem:[%s0 + $0xfc] sm:$0xf]
  %v79 = vld [vmem:[%s0 + $0x100] sm:$0xf]
  %v80 = vld [vmem:[%s0 + $0x104] sm:$0xf]
  %v81 = vld [vmem:[%s0 + $0x108] sm:$0xf]
  %v82 = vld [vmem:[%s0 + $0x10c] sm:$0xf]
  %v83 = vld [vmem:[%s0 + $0x110] sm:$0xf]
  %v84 = vld [vmem:[%s0 + $0x114] sm:$0xf]
  %v85 = vld [vmem:[%s0 + $0x118] sm:$0xf]
  %v86 = vld [vmem:[%s0 + $0x11c] sm:$0xf]
  %v87 = vld [vmem:[%s0 + $0x120] sm:$0xf]
  %v88 = vld [vmem:[%s0 + $0x124] sm:$0xf]
  %v89 = vld [vmem:[%s0 + $0x128] sm:$0xf]
  %v90 = vld [vmem:[%s0 + $0x12c] sm:$0xf]
  %v91 = vld [vmem:[%s0 + $0x130] sm:$0xf]
  %v92 = vld [vmem:[%s0 + $0x134] sm:$0xf]
  %v93 = vld [vmem:[%s0 + $0x138] sm:$0xf]
  %v94 = vld [vmem:[%s0 + $0x13c] sm:$0xf]
  %v95 = vld [vmem:[%s0 + $0x140] sm:$0xf]
  %v96 = vld [vmem:[%s0 + $0x144] sm:$0xf]
  %v97 = vld [vmem:[%s0 + $0x148] sm:$0xf]
  %v98 = vld [vmem:[%s0 + $0x14c] sm:$0xf]
  %v99 = vld [vmem:[%s0 + $0x150] sm:$0xf]
  %v100 = vld [vmem:[%s0 + $0x154] sm:$0xf]
  %v101 = vld [vmem:[%s0 + $0x158] sm:$0xf]
  %v102 = vld [vmem:[%s0 + $0x15c] sm:$0xf]
  %v103 = vld [vmem:[%s0 + $0x160] sm:$0xf]
  %v104 = vld [vmem:[%s0 + $0x164] sm:$0xf]
  %v105 = vld [vmem:[%s0 + $0x168] sm:$0xf]
  %v106 = vld [vmem:[%s0 + $0x16c] sm:$0xf]
  %v107 = vld [vmem:[%s0 + $0x170] sm:$0xf]
  %v108 = vld [vmem:[%s0 + $0x174] sm:$0xf]
  %v109 = vld [vmem:[%s0 + $0x178] sm:$0xf]
  %v110 = vld [vmem:[%s0 + $0x17c] sm:$0xf]
  %v111 = vld [vmem:[%s0 + $0x180] sm:$0xf]
  %v112 = vld [vmem:[%s0 + $0x184] sm:$0xf]
  %v113 = vld [vmem:[%s0 + $0x188] sm:$0xf]
  %v114 = vld [vmem:[%s0 + $0x18c] sm:$0xf]
  %v115 = vld [vmem:[%s0 + $0x190] sm:$0xf]
  %v116 = vld [vmem:[%s0 + $0x194] sm:$0xf]
  %v117 = vld [vmem:[%s0 + $0x198] sm:$0xf]
  %v118 = vld [vmem:[%s0 + $0x19c] sm:$0xf]
  %v119 = vld [vmem:[%s0 + $0x1a0] sm:$0xf]
  %v120 = vld [vmem:[%s0 + $0x1a4] sm:$0xf]
  %v121 = vld [vmem:[%s0 + $0x1a8] sm:$0xf]
  %v122 = vld [vmem:[%s0 + $0x1ac] sm:$0xf]
  %v123 = vld [vmem:[%s0 + $0x1b0] sm:$0xf]
  %v124 = vld [vmem:[%s0 + $0x1b4] sm:$0xf]
  %v125 = vld [vmem:[%s0 + $0x1b8] sm:$0xf]
  %v126 = vld [vmem:[%s0 + $0x1bc] sm:$0xf]
  %v127 = vld [vmem:[%s0 + $0x1c0] sm:$0xf]
  %v128 = vld [vmem:[%s0 + $0x1c4] sm:$0xf]
  %v129 = vld [vmem:[%s0 + $0x1c8] sm:$0xf]
  %v130 = vld [vmem:[%s0 + $0x1cc] sm:$0xf]
  %v131 = vld [vmem:[%s0 + $0x1d0] sm:$0xf]
  %v132 = vld [vmem:[%s0 + $0x1d4] sm:$0xf]
  %v133 = vld [vmem:[%s0 + $0x1d8] sm:$0xf]
  %v134 = vld [vmem:[%s0 + $0x1dc] sm:$0xf]
  %v135 = vld [vmem:[%s0 + $0x1e0] sm:$0xf]
  %v136 = vld [vmem:[%s0 + $0x1e4] sm:$0xf]
  %v137 = vld [vmem:[%s0 + $0x1e8] sm:$0xf]
  %v138 = vld [vmem:[%s0 + $0x1ec] sm:$0xf]
  %v139 = vld [vmem:[%s0 + $0x1f0] sm:$0xf]
  %v140 = vld [vmem:[%s0 + $0x1f4] sm:$0xf]
  %v141 = vld [vmem:[%s0 + $0x1f8] sm:$0xf]
  %v142 = vld [vmem:[%s0 + $0x1fc] sm:$0xf]
  %v143 = vld [vmem:[%s0 + $0x200] sm:$0xf]
  %v144 = vld [vmem:[%s0 + $0x204] sm:$0xf]
  %v145 = vld [vmem:[%s0 + $0x208] sm:$0xf]
  %v146 = vld [vmem:[%s0 + $0x20c] sm:$0xf]
  %v147 = vld [vmem:[%s0 + $0x210] sm:$0xf]
  %v148 = vld [vmem:[%s0 + $0x214] sm:$0xf]
  %v149 = vld [vmem:[%s0 + $0x218] sm:$0xf]
  %v150 = vld [vmem:[%s0 + $0x21c] sm:$0xf]
  %v151 = vld [vmem:[%s0 + $0x220] sm:$0xf]
  %v152 = vld [vmem:[%s0 + $0x224] sm:$0xf]
  %v153 = vld [vmem:[%s0 + $0x228] sm:$0xf]
  %v154 = vld [vmem:[%s0 + $0x22c] sm:$0xf]
  %v155 = vld [vmem:[%s0 + $0x230] sm:$0xf]
  %v156 = vld [vmem:[%s0 + $0x234] sm:$0xf]
  %v157 = vld [vmem:[%s0 + $0x238] sm:$0xf]
  %v158 = vld [vmem:[%s0 + $0x23c] sm:$0xf]
  %v159 = vld [vmem:[%s1] sm:$0xf]
  %v160 = vld [vmem:[%s1 + $0x4] sm:$0x1]
  %v161 = vld [vmem:[%s2] sm:$0x1]
  %v163 = vlaneseq
  %v164 = vshrl.u32 %v163, 7
  %v165 = vsub.s32 0, %v164
  %v166 = vrot.slane %v161, %v165
  %v312 = vunpack.c.l.b16 %v15
  %v313 = vunpack.c.l.b16 %v16
  %v314 = vunpack.c.l.b16 %v17
  %v315 = vunpack.c.l.b16 %v18
  %v316 = vunpack.c.l.b16 %v19
  %v317 = vunpack.c.l.b16 %v20
  %v318 = vunpack.c.l.b16 %v21
  %v319 = vunpack.c.l.b16 %v22
  %v320 = vunpack.c.l.b16 %v23
  %v321 = vunpack.c.l.b16 %v24
  %v322 = vunpack.c.l.b16 %v25
  %v323 = vunpack.c.l.b16 %v26
  %v324 = vunpack.c.l.b16 %v27
  %v325 = vunpack.c.l.b16 %v28
  %v326 = vunpack.c.l.b16 %v29
  %v327 = vunpack.c.l.b16 %v30
  %v328 = vunpack.c.l.b16 %v31
  %v329 = vunpack.c.l.b16 %v32
  %v330 = vunpack.c.l.b16 %v33
  %v331 = vunpack.c.l.b16 %v34
  %v332 = vunpack.c.l.b16 %v35
  %v333 = vunpack.c.l.b16 %v36
  %v334 = vunpack.c.l.b16 %v37
  %v335 = vunpack.c.l.b16 %v38
  %v336 = vunpack.c.l.b16 %v39
  %v337 = vunpack.c.l.b16 %v40
  %v338 = vunpack.c.l.b16 %v41
  %v339 = vunpack.c.l.b16 %v42
  %v340 = vunpack.c.l.b16 %v43
  %v341 = vunpack.c.l.b16 %v44
  %v342 = vunpack.c.l.b16 %v45
  %v343 = vunpack.c.l.b16 %v46
  %v344 = vunpack.c.l.b16 %v47
  %v345 = vunpack.c.l.b16 %v48
  %v346 = vunpack.c.l.b16 %v49
  %v347 = vunpack.c.l.b16 %v50
  %v348 = vunpack.c.l.b16 %v51
  %v349 = vunpack.c.l.b16 %v52
  %v350 = vunpack.c.l.b16 %v53
  %v351 = vunpack.c.l.b16 %v54
  %v352 = vunpack.c.l.b16 %v55
  %v353 = vunpack.c.l.b16 %v56
  %v354 = vunpack.c.l.b16 %v57
  %v355 = vunpack.c.l.b16 %v58
  %v356 = vunpack.c.l.b16 %v59
  %v357 = vunpack.c.l.b16 %v60
  %v358 = vunpack.c.l.b16 %v61
  %v359 = vunpack.c.l.b16 %v62
  %v360 = vunpack.c.l.b16 %v63
  %v361 = vunpack.c.l.b16 %v64
  %v362 = vunpack.c.l.b16 %v65
  %v363 = vunpack.c.l.b16 %v66
  %v364 = vunpack.c.l.b16 %v67
  %v365 = vunpack.c.l.b16 %v68
  %v366 = vunpack.c.l.b16 %v69
  %v367 = vunpack.c.l.b16 %v70
  %v368 = vunpack.c.l.b16 %v71
  %v369 = vunpack.c.l.b16 %v72
  %v370 = vunpack.c.l.b16 %v73
  %v371 = vunpack.c.l.b16 %v74
  %v372 = vunpack.c.l.b16 %v75
  %v373 = vunpack.c.l.b16 %v76
  %v374 = vunpack.c.l.b16 %v77
  %v375 = vunpack.c.l.b16 %v78
  %v376 = vunpack.c.l.b16 %v79
  %v377 = vunpack.c.l.b16 %v80
  %v378 = vunpack.c.l.b16 %v81
  %v379 = vunpack.c.l.b16 %v82
  %v380 = vunpack.c.l.b16 %v83
  %v381 = vunpack.c.l.b16 %v84
  %v382 = vunpack.c.l.b16 %v85
  %v383 = vunpack.c.l.b16 %v86
  %v384 = vunpack.c.l.b16 %v87
  %v385 = vunpack.c.l.b16 %v88
  %v386 = vunpack.c.l.b16 %v89
  %v387 = vunpack.c.l.b16 %v90
  %v388 = vunpack.c.l.b16 %v91
  %v389 = vunpack.c.l.b16 %v92
  %v390 = vunpack.c.l.b16 %v93
  %v391 = vunpack.c.l.b16 %v94
  %v392 = vunpack.c.l.b16 %v95
  %v393 = vunpack.c.l.b16 %v96
  %v394 = vunpack.c.l.b16 %v97
  %v395 = vunpack.c.l.b16 %v98
  %v396 = vunpack.c.l.b16 %v99
  %v397 = vunpack.c.l.b16 %v100
  %v398 = vunpack.c.l.b16 %v101
  %v399 = vunpack.c.l.b16 %v102
  %v400 = vunpack.c.l.b16 %v103
  %v401 = vunpack.c.l.b16 %v104
  %v402 = vunpack.c.l.b16 %v105
  %v403 = vunpack.c.l.b16 %v106
  %v404 = vunpack.c.l.b16 %v107
  %v405 = vunpack.c.l.b16 %v108
  %v406 = vunpack.c.l.b16 %v109
  %v407 = vunpack.c.l.b16 %v110
  %v408 = vunpack.c.l.b16 %v111
  %v409 = vunpack.c.l.b16 %v112
  %v410 = vunpack.c.l.b16 %v113
  %v411 = vunpack.c.l.b16 %v114
  %v412 = vunpack.c.l.b16 %v115
  %v413 = vunpack.c.l.b16 %v116
  %v414 = vunpack.c.l.b16 %v117
  %v415 = vunpack.c.l.b16 %v118
  %v416 = vunpack.c.l.b16 %v119
  %v417 = vunpack.c.l.b16 %v120
  %v418 = vunpack.c.l.b16 %v121
  %v419 = vunpack.c.l.b16 %v122
  %v420 = vunpack.c.l.b16 %v123
  %v421 = vunpack.c.l.b16 %v124
  %v422 = vunpack.c.l.b16 %v125
  %v423 = vunpack.c.l.b16 %v126
  %v424 = vunpack.c.l.b16 %v127
  %v425 = vunpack.c.l.b16 %v128
  %v426 = vunpack.c.l.b16 %v129
  %v427 = vunpack.c.l.b16 %v130
  %v428 = vunpack.c.l.b16 %v131
  %v429 = vunpack.c.l.b16 %v132
  %v430 = vunpack.c.l.b16 %v133
  %v431 = vunpack.c.l.b16 %v134
  %v432 = vunpack.c.l.b16 %v135
  %v433 = vunpack.c.l.b16 %v136
  %v434 = vunpack.c.l.b16 %v137
  %v435 = vunpack.c.l.b16 %v138
  %v436 = vunpack.c.l.b16 %v139
  %v437 = vunpack.c.l.b16 %v140
  %v438 = vunpack.c.l.b16 %v141
  %v439 = vunpack.c.l.b16 %v142
  %v440 = vunpack.c.l.b16 %v143
  %v441 = vunpack.c.l.b16 %v144
  %v442 = vunpack.c.l.b16 %v145
  %v443 = vunpack.c.l.b16 %v146
  %v444 = vunpack.c.l.b16 %v147
  %v445 = vunpack.c.l.b16 %v148
  %v446 = vunpack.c.l.b16 %v149
  %v447 = vunpack.c.l.b16 %v150
  %v448 = vunpack.c.l.b16 %v151
  %v449 = vunpack.c.l.b16 %v152
  %v450 = vunpack.c.l.b16 %v153
  %v451 = vunpack.c.l.b16 %v154
  %v452 = vunpack.c.l.b16 %v155
  %v453 = vunpack.c.l.b16 %v156
  %v454 = vunpack.c.l.b16 %v157
  %v455 = vunpack.c.l.b16 %v158
  %v456 = vpack.c.b16 %v313, %v312
  %v457 = vpack.c.b16 %v315, %v314
  %v458 = vpack.c.b16 %v317, %v316
  %v459 = vpack.c.b16 %v319, %v318
  %v460 = vpack.c.b16 %v321, %v320
  %v461 = vpack.c.b16 %v323, %v322
  %v462 = vpack.c.b16 %v325, %v324
  %v463 = vpack.c.b16 %v327, %v326
  %v464 = vpack.c.b16 %v329, %v328
  %v465 = vpack.c.b16 %v331, %v330
  %v466 = vpack.c.b16 %v333, %v332
  %v467 = vpack.c.b16 %v335, %v334
  %v468 = vpack.c.b16 %v337, %v336
  %v469 = vpack.c.b16 %v339, %v338
  %v470 = vpack.c.b16 %v341, %v340
  %v471 = vpack.c.b16 %v343, %v342
  %v472 = vpack.c.b16 %v345, %v344
  %v473 = vpack.c.b16 %v347, %v346
  %v474 = vpack.c.b16 %v349, %v348
  %v475 = vpack.c.b16 %v351, %v350
  %v476 = vpack.c.b16 %v353, %v352
  %v477 = vpack.c.b16 %v355, %v354
  %v478 = vpack.c.b16 %v357, %v356
  %v479 = vpack.c.b16 %v359, %v358
  %v480 = vpack.c.b16 %v361, %v360
  %v481 = vpack.c.b16 %v363, %v362
  %v482 = vpack.c.b16 %v365, %v364
  %v483 = vpack.c.b16 %v367, %v366
  %v484 = vpack.c.b16 %v369, %v368
  %v485 = vpack.c.b16 %v371, %v370
  %v486 = vpack.c.b16 %v373, %v372
  %v487 = vpack.c.b16 %v375, %v374
  %v488 = vpack.c.b16 %v377, %v376
  %v489 = vpack.c.b16 %v379, %v378
  %v490 = vpack.c.b16 %v381, %v380
  %v491 = vpack.c.b16 %v383, %v382
  %v492 = vpack.c.b16 %v385, %v384
  %v493 = vpack.c.b16 %v387, %v386
  %v494 = vpack.c.b16 %v389, %v388
  %v495 = vpack.c.b16 %v391, %v390
  %v496 = vpack.c.b16 %v393, %v392
  %v497 = vpack.c.b16 %v395, %v394
  %v498 = vpack.c.b16 %v397, %v396
  %v499 = vpack.c.b16 %v399, %v398
  %v500 = vpack.c.b16 %v401, %v400
  %v501 = vpack.c.b16 %v403, %v402
  %v502 = vpack.c.b16 %v405, %v404
  %v503 = vpack.c.b16 %v407, %v406
  %v504 = vpack.c.b16 %v409, %v408
  %v505 = vpack.c.b16 %v411, %v410
  %v506 = vpack.c.b16 %v413, %v412
  %v507 = vpack.c.b16 %v415, %v414
  %v508 = vpack.c.b16 %v417, %v416
  %v509 = vpack.c.b16 %v419, %v418
  %v510 = vpack.c.b16 %v421, %v420
  %v511 = vpack.c.b16 %v423, %v422
  %v512 = vpack.c.b16 %v425, %v424
  %v513 = vpack.c.b16 %v427, %v426
  %v514 = vpack.c.b16 %v429, %v428
  %v515 = vpack.c.b16 %v431, %v430
  %v516 = vpack.c.b16 %v433, %v432
  %v517 = vpack.c.b16 %v435, %v434
  %v518 = vpack.c.b16 %v437, %v436
  %v519 = vpack.c.b16 %v439, %v438
  %v520 = vpack.c.b16 %v441, %v440
  %v521 = vpack.c.b16 %v443, %v442
  %v522 = vpack.c.b16 %v445, %v444
  %v523 = vpack.c.b16 %v447, %v446
  %v524 = vpack.c.b16 %v449, %v448
  %v525 = vpack.c.b16 %v451, %v450
  %v526 = vpack.c.b16 %v453, %v452
  %v527 = vpack.c.b16 %v455, %v454
  %v530 = vunpack.c.l.b16 %v159
  %v531 = vunpack.c.l.b16 %v160
  %v532 = vpack.c.b16 %v531, %v530
  %vm533 = vcmask 72704
  %v535 = vsel %vm533, %v456, 0
  %v538 = vsel %vm533, %v457, 0
  %v541 = vsel %vm533, %v458, 0
  %v544 = vsel %vm533, %v459, 0
  %v547 = vsel %vm533, %v460, 0
  %v550 = vsel %vm533, %v461, 0
  %v553 = vsel %vm533, %v462, 0
  %v556 = vsel %vm533, %v463, 0
  %v559 = vsel %vm533, %v464, 0
  %v562 = vsel %vm533, %v465, 0
  %v565 = vsel %vm533, %v466, 0
  %v568 = vsel %vm533, %v467, 0
  %v571 = vsel %vm533, %v468, 0
  %v574 = vsel %vm533, %v469, 0
  %v577 = vsel %vm533, %v470, 0
  %v580 = vsel %vm533, %v471, 0
  %v583 = vsel %vm533, %v472, 0
  %v586 = vsel %vm533, %v473, 0
  %v589 = vsel %vm533, %v474, 0
  %v592 = vsel %vm533, %v475, 0
  %v595 = vsel %vm533, %v476, 0
  %v598 = vsel %vm533, %v477, 0
  %v601 = vsel %vm533, %v478, 0
  %v604 = vsel %vm533, %v479, 0
  %v607 = vsel %vm533, %v480, 0
  %v610 = vsel %vm533, %v481, 0
  %v613 = vsel %vm533, %v482, 0
  %v616 = vsel %vm533, %v483, 0
  %v619 = vsel %vm533, %v484, 0
  %v622 = vsel %vm533, %v485, 0
  %v625 = vsel %vm533, %v486, 0
  %v628 = vsel %vm533, %v487, 0
  %v631 = vsel %vm533, %v488, 0
  %v634 = vsel %vm533, %v489, 0
  %v637 = vsel %vm533, %v490, 0
  %v640 = vsel %vm533, %v491, 0
  %v643 = vsel %vm533, %v492, 0
  %v646 = vsel %vm533, %v493, 0
  %v649 = vsel %vm533, %v494, 0
  %v652 = vsel %vm533, %v495, 0
  %v655 = vsel %vm533, %v496, 0
  %v658 = vsel %vm533, %v497, 0
  %v661 = vsel %vm533, %v498, 0
  %v664 = vsel %vm533, %v499, 0
  %v667 = vsel %vm533, %v500, 0
  %v670 = vsel %vm533, %v501, 0
  %v673 = vsel %vm533, %v502, 0
  %v676 = vsel %vm533, %v503, 0
  %v679 = vsel %vm533, %v504, 0
  %v682 = vsel %vm533, %v505, 0
  %v685 = vsel %vm533, %v506, 0
  %v688 = vsel %vm533, %v507, 0
  %v691 = vsel %vm533, %v508, 0
  %v694 = vsel %vm533, %v509, 0
  %v697 = vsel %vm533, %v510, 0
  %v700 = vsel %vm533, %v511, 0
  %v703 = vsel %vm533, %v512, 0
  %v706 = vsel %vm533, %v513, 0
  %v709 = vsel %vm533, %v514, 0
  %v712 = vsel %vm533, %v515, 0
  %v715 = vsel %vm533, %v516, 0
  %v718 = vsel %vm533, %v517, 0
  %v721 = vsel %vm533, %v518, 0
  %v724 = vsel %vm533, %v519, 0
  %v727 = vsel %vm533, %v520, 0
  %v730 = vsel %vm533, %v521, 0
  %v733 = vsel %vm533, %v522, 0
  %v736 = vsel %vm533, %v523, 0
  %v739 = vsel %vm533, %v524, 0
  %v742 = vsel %vm533, %v525, 0
  %v745 = vsel %vm533, %v526, 0
  %v748 = vsel %vm533, %v527, 0
  %vm750 = vcmask 1043456
  %vm751 = vcmask 1044480
  %v752 = vsel %vm750, 4294967295, 65535
  %v753 = vsel %vm751, %v752, 0
  %v755 = vand.u32 %v532, %v753
  %757 = vmatprep.subr.bf16.mxu0 0
  %758 = vmatpush1.bf16.msra.mxu0 %v755
  %759 = vmatprep.subr.bf16.mxu0 0
  %760 = vmatpush1.bf16.msra.mxu0 0
  %761 = vmatprep.subr.bf16.mxu0 0
  %762 = vmatpush1.bf16.msra.mxu0 0
  %763 = vmatprep.subr.bf16.mxu0 0
  %764 = vmatpush1.bf16.msra.mxu0 0
  %765 = vmatprep.subr.bf16.mxu0 0
  %766 = vmatpush1.bf16.msra.mxu0 0
  %767 = vmatprep.subr.bf16.mxu0 0
  %768 = vmatpush1.bf16.msra.mxu0 0
  %769 = vmatprep.subr.bf16.mxu0 0
  %770 = vmatpush1.bf16.msra.mxu0 0
  %771 = vmatprep.subr.bf16.mxu0 0
  %772 = vmatpush1.bf16.msra.mxu0 0
  %773 = vmatprep.subr.bf16.mxu0 0
  %774 = vmatpush1.bf16.msra.mxu0 0
  %775 = vmatprep.subr.bf16.mxu0 0
  %776 = vmatpush1.bf16.msra.mxu0 0
  %777 = vmatprep.subr.bf16.mxu0 0
  %778 = vmatpush1.bf16.msra.mxu0 0
  %779 = vmatprep.subr.bf16.mxu0 0
  %780 = vmatpush1.bf16.msra.mxu0 0
  %781 = vmatprep.subr.bf16.mxu0 0
  %782 = vmatpush1.bf16.msra.mxu0 0
  %783 = vmatprep.subr.bf16.mxu0 0
  %784 = vmatpush1.bf16.msra.mxu0 0
  %785 = vmatprep.subr.bf16.mxu0 0
  %786 = vmatpush1.bf16.msra.mxu0 0
  %787 = vmatprep.subr.bf16.mxu0 0
  %788 = vmatpush1.bf16.msra.mxu0 0
  %789 = vmatprep.mubr.bf16.mxu0 0
  %790 = vmatmul.mubr.bf16.gmra.mrb[0].mxu0 %v535
  %v791 = vpop.f32.mrb[0].mxu0
  %v792 = vadd.f32 %v166, %v791
  %v793 = vpop.f32.mrb[0].mxu0
  %v794 = vpop.f32.mrb[0].mxu0
  %v795 = vadd.f32 %v166, %v794
  %v796 = vpop.f32.mrb[0].mxu0
  %797 = vmatprep.mubr.bf16.mxu0 0
  %798 = vmatmul.mubr.bf16.gmra.mrb[0].mxu0 %v538
  %v799 = vpop.f32.mrb[0].mxu0
  %v800 = vadd.f32 %v166, %v799
  %v801 = vpop.f32.mrb[0].mxu0
  %v802 = vpop.f32.mrb[0].mxu0
  %v803 = vadd.f32 %v166, %v802
  %v804 = vpop.f32.mrb[0].mxu0
  %805 = vmatprep.mubr.bf16.mxu0 0
  %806 = vmatmul.mubr.bf16.gmra.mrb[0].mxu0 %v541
  %v807 = vpop.f32.mrb[0].mxu0
  %v808 = vadd.f32 %v166, %v807
  %v809 = vpop.f32.mrb[0].mxu0
  %v810 = vpop.f32.mrb[0].mxu0
  %v811 = vadd.f32 %v166, %v810
  %v812 = vpop.f32.mrb[0].mxu0
  %813 = vmatprep.mubr.bf16.mxu0 0
  %814 = vmatmul.mubr.bf16.gmra.mrb[0].mxu0 %v544
  %v815 = vpop.f32.mrb[0].mxu0
  %v816 = vadd.f32 %v166, %v815
  %v817 = vpop.f32.mrb[0].mxu0
  %v818 = vpop.f32.mrb[0].mxu0
  %v819 = vadd.f32 %v166, %v818
  %v820 = vpop.f32.mrb[0].mxu0
  %821 = vmatprep.mubr.bf16.mxu0 0
  %822 = vmatmul.mubr.bf16.gmra.mrb[0].mxu0 %v547
  %v823 = vpop.f32.mrb[0].mxu0
  %v824 = vadd.f32 %v166, %v823
  %v825 = vpop.f32.mrb[0].mxu0
  %v826 = vpop.f32.mrb[0].mxu0
  %v827 = vadd.f32 %v166, %v826
  %v828 = vpop.f32.mrb[0].mxu0
  %829 = vmatprep.mubr.bf16.mxu0 0
  %830 = vmatmul.mubr.bf16.gmra.mrb[0].mxu0 %v550
  %v831 = vpop.f32.mrb[0].mxu0
  %v832 = vadd.f32 %v166, %v831
  %v833 = vpop.f32.mrb[0].mxu0
  %v834 = vpop.f32.mrb[0].mxu0
  %v835 = vadd.f32 %v166, %v834
  %v836 = vpop.f32.mrb[0].mxu0
  %837 = vmatprep.mubr.bf16.mxu0 0
  %838 = vmatmul.mubr.bf16.gmra.mrb[0].mxu0 %v553
  %v839 = vpop.f32.mrb[0].mxu0
  %v840 = vadd.f32 %v166, %v839
  %v841 = vpop.f32.mrb[0].mxu0
  %v842 = vpop.f32.mrb[0].mxu0
  %v843 = vadd.f32 %v166, %v842
  %v844 = vpop.f32.mrb[0].mxu0
  %845 = vmatprep.mubr.bf16.mxu0 0
  %846 = vmatmul.mubr.bf16.gmra.mrb[0].mxu0 %v556
  %v847 = vpop.f32.mrb[0].mxu0
  %v848 = vadd.f32 %v166, %v847
  %v849 = vpop.f32.mrb[0].mxu0
  %v850 = vpop.f32.mrb[0].mxu0
  %v851 = vadd.f32 %v166, %v850
  %v852 = vpop.f32.mrb[0].mxu0
  %853 = vmatprep.mubr.bf16.mxu0 0
  %854 = vmatmul.mubr.bf16.gmra.mrb[0].mxu0 %v559
  %v855 = vpop.f32.mrb[0].mxu0
  %v856 = vadd.f32 %v166, %v855
  %v857 = vpop.f32.mrb[0].mxu0
  %v858 = vpop.f32.mrb[0].mxu0
  %v859 = vadd.f32 %v166, %v858
  %v860 = vpop.f32.mrb[0].mxu0
  %861 = vmatprep.mubr.bf16.mxu0 0
  %862 = vmatmul.mubr.bf16.gmra.mrb[0].mxu0 %v562
  %v863 = vpop.f32.mrb[0].mxu0
  %v864 = vadd.f32 %v166, %v863
  %v865 = vpop.f32.mrb[0].mxu0
  %v866 = vpop.f32.mrb[0].mxu0
  %v867 = vadd.f32 %v166, %v866
  %v868 = vpop.f32.mrb[0].mxu0
  %869 = vmatprep.mubr.bf16.mxu0 0
  %870 = vmatmul.mubr.bf16.gmra.mrb[0].mxu0 %v565
  %v871 = vpop.f32.mrb[0].mxu0
  %v872 = vadd.f32 %v166, %v871
  %v873 = vpop.f32.mrb[0].mxu0
  %v874 = vpop.f32.mrb[0].mxu0
  %v875 = vadd.f32 %v166, %v874
  %v876 = vpop.f32.mrb[0].mxu0
  %877 = vmatprep.mubr.bf16.mxu0 0
  %878 = vmatmul.mubr.bf16.gmra.mrb[0].mxu0 %v568
  %v879 = vpop.f32.mrb[0].mxu0
  %v880 = vadd.f32 %v166, %v879
  %v881 = vpop.f32.mrb[0].mxu0
  %v882 = vpop.f32.mrb[0].mxu0
  %v883 = vadd.f32 %v166, %v882
  %v884 = vpop.f32.mrb[0].mxu0
  %885 = vmatprep.mubr.bf16.mxu0 0
  %886 = vmatmul.mubr.bf16.gmra.mrb[0].mxu0 %v571
  %v887 = vpop.f32.mrb[0].mxu0
  %v888 = vadd.f32 %v166, %v887
  %v889 = vpop.f32.mrb[0].mxu0
  %v890 = vpop.f32.mrb[0].mxu0
  %v891 = vadd.f32 %v166, %v890
  %v892 = vpop.f32.mrb[0].mxu0
  %893 = vmatprep.mubr.bf16.mxu0 0
  %894 = vmatmul.mubr.bf16.gmra.mrb[0].mxu0 %v574
  %v895 = vpop.f32.mrb[0].mxu0
  %v896 = vadd.f32 %v166, %v895
  %v897 = vpop.f32.mrb[0].mxu0
  %v898 = vpop.f32.mrb[0].mxu0
  %v899 = vadd.f32 %v166, %v898
  %v900 = vpop.f32.mrb[0].mxu0
  %901 = vmatprep.mubr.bf16.mxu0 0
  %902 = vmatmul.mubr.bf16.gmra.mrb[0].mxu0 %v577
  %v903 = vpop.f32.mrb[0].mxu0
  %v904 = vadd.f32 %v166, %v903
  %v905 = vpop.f32.mrb[0].mxu0
  %v906 = vpop.f32.mrb[0].mxu0
  %v907 = vadd.f32 %v166, %v906
  %v908 = vpop.f32.mrb[0].mxu0
  %909 = vmatprep.mubr.bf16.mxu0 0
  %910 = vmatmul.mubr.bf16.gmra.mrb[0].mxu0 %v580
  %v911 = vpop.f32.mrb[0].mxu0
  %v912 = vadd.f32 %v166, %v911
  %v913 = vpop.f32.mrb[0].mxu0
  %v914 = vpop.f32.mrb[0].mxu0
  %v915 = vadd.f32 %v166, %v914
  %v916 = vpop.f32.mrb[0].mxu0
  %917 = vmatprep.mubr.bf16.mxu0 0
  %918 = vmatmul.mubr.bf16.gmra.mrb[0].mxu0 %v583
  %v919 = vpop.f32.mrb[0].mxu0
  %v920 = vadd.f32 %v166, %v919
  %v921 = vpop.f32.mrb[0].mxu0
  %v922 = vpop.f32.mrb[0].mxu0
  %v923 = vadd.f32 %v166, %v922
  %v924 = vpop.f32.mrb[0].mxu0
  %925 = vmatprep.mubr.bf16.mxu0 0
  %926 = vmatmul.mubr.bf16.gmra.mrb[0].mxu0 %v586
  %v927 = vpop.f32.mrb[0].mxu0
  %v928 = vadd.f32 %v166, %v927
  %v929 = vpop.f32.mrb[0].mxu0
  %v930 = vpop.f32.mrb[0].mxu0
  %v931 = vadd.f32 %v166, %v930
  %v932 = vpop.f32.mrb[0].mxu0
  %933 = vmatprep.mubr.bf16.mxu0 0
  %934 = vmatmul.mubr.bf16.gmra.mrb[0].mxu0 %v589
  %v935 = vpop.f32.mrb[0].mxu0
  %v936 = vadd.f32 %v166, %v935
  %v937 = vpop.f32.mrb[0].mxu0
  %v938 = vpop.f32.mrb[0].mxu0
  %v939 = vadd.f32 %v166, %v938
  %v940 = vpop.f32.mrb[0].mxu0
  %941 = vmatprep.mubr.bf16.mxu0 0
  %942 = vmatmul.mubr.bf16.gmra.mrb[0].mxu0 %v592
  %v943 = vpop.f32.mrb[0].mxu0
  %v944 = vadd.f32 %v166, %v943
  %v945 = vpop.f32.mrb[0].mxu0
  %v946 = vpop.f32.mrb[0].mxu0
  %v947 = vadd.f32 %v166, %v946
  %v948 = vpop.f32.mrb[0].mxu0
  %949 = vmatprep.mubr.bf16.mxu0 0
  %950 = vmatmul.mubr.bf16.gmra.mrb[0].mxu0 %v595
  %v951 = vpop.f32.mrb[0].mxu0
  %v952 = vadd.f32 %v166, %v951
  %v953 = vpop.f32.mrb[0].mxu0
  %v954 = vpop.f32.mrb[0].mxu0
  %v955 = vadd.f32 %v166, %v954
  %v956 = vpop.f32.mrb[0].mxu0
  %957 = vmatprep.mubr.bf16.mxu0 0
  %958 = vmatmul.mubr.bf16.gmra.mrb[0].mxu0 %v598
  %v959 = vpop.f32.mrb[0].mxu0
  %v960 = vadd.f32 %v166, %v959
  %v961 = vpop.f32.mrb[0].mxu0
  %v962 = vpop.f32.mrb[0].mxu0
  %v963 = vadd.f32 %v166, %v962
  %v964 = vpop.f32.mrb[0].mxu0
  %965 = vmatprep.mubr.bf16.mxu0 0
  %966 = vmatmul.mubr.bf16.gmra.mrb[0].mxu0 %v601
  %v967 = vpop.f32.mrb[0].mxu0
  %v968 = vadd.f32 %v166, %v967
  %v969 = vpop.f32.mrb[0].mxu0
  %v970 = vpop.f32.mrb[0].mxu0
  %v971 = vadd.f32 %v166, %v970
  %v972 = vpop.f32.mrb[0].mxu0
  %973 = vmatprep.mubr.bf16.mxu0 0
  %974 = vmatmul.mubr.bf16.gmra.mrb[0].mxu0 %v604
  %v975 = vpop.f32.mrb[0].mxu0
  %v976 = vadd.f32 %v166, %v975
  %v977 = vpop.f32.mrb[0].mxu0
  %v978 = vpop.f32.mrb[0].mxu0
  %v979 = vadd.f32 %v166, %v978
  %v980 = vpop.f32.mrb[0].mxu0
  %981 = vmatprep.mubr.bf16.mxu0 0
  %982 = vmatmul.mubr.bf16.gmra.mrb[0].mxu0 %v607
  %v983 = vpop.f32.mrb[0].mxu0
  %v984 = vadd.f32 %v166, %v983
  %v985 = vpop.f32.mrb[0].mxu0
  %v986 = vpop.f32.mrb[0].mxu0
  %v987 = vadd.f32 %v166, %v986
  %v988 = vpop.f32.mrb[0].mxu0
  %989 = vmatprep.mubr.bf16.mxu0 0
  %990 = vmatmul.mubr.bf16.gmra.mrb[0].mxu0 %v610
  %v991 = vpop.f32.mrb[0].mxu0
  %v992 = vadd.f32 %v166, %v991
  %v993 = vpop.f32.mrb[0].mxu0
  %v994 = vpop.f32.mrb[0].mxu0
  %v995 = vadd.f32 %v166, %v994
  %v996 = vpop.f32.mrb[0].mxu0
  %997 = vmatprep.mubr.bf16.mxu0 0
  %998 = vmatmul.mubr.bf16.gmra.mrb[0].mxu0 %v613
  %v999 = vpop.f32.mrb[0].mxu0
  %v1000 = vadd.f32 %v166, %v999
  %v1001 = vpop.f32.mrb[0].mxu0
  %v1002 = vpop.f32.mrb[0].mxu0
  %v1003 = vadd.f32 %v166, %v1002
  %v1004 = vpop.f32.mrb[0].mxu0
  %1005 = vmatprep.mubr.bf16.mxu0 0
  %1006 = vmatmul.mubr.bf16.gmra.mrb[0].mxu0 %v616
  %v1007 = vpop.f32.mrb[0].mxu0
  %v1008 = vadd.f32 %v166, %v1007
  %v1009 = vpop.f32.mrb[0].mxu0
  %v1010 = vpop.f32.mrb[0].mxu0
  %v1011 = vadd.f32 %v166, %v1010
  %v1012 = vpop.f32.mrb[0].mxu0
  %1013 = vmatprep.mubr.bf16.mxu0 0
  %1014 = vmatmul.mubr.bf16.gmra.mrb[0].mxu0 %v619
  %v1015 = vpop.f32.mrb[0].mxu0
  %v1016 = vadd.f32 %v166, %v1015
  %v1017 = vpop.f32.mrb[0].mxu0
  %v1018 = vpop.f32.mrb[0].mxu0
  %v1019 = vadd.f32 %v166, %v1018
  %v1020 = vpop.f32.mrb[0].mxu0
  %1021 = vmatprep.mubr.bf16.mxu0 0
  %1022 = vmatmul.mubr.bf16.gmra.mrb[0].mxu0 %v622
  %v1023 = vpop.f32.mrb[0].mxu0
  %v1024 = vadd.f32 %v166, %v1023
  %v1025 = vpop.f32.mrb[0].mxu0
  %v1026 = vpop.f32.mrb[0].mxu0
  %v1027 = vadd.f32 %v166, %v1026
  %v1028 = vpop.f32.mrb[0].mxu0
  %1029 = vmatprep.mubr.bf16.mxu0 0
  %1030 = vmatmul.mubr.bf16.gmra.mrb[0].mxu0 %v625
  %v1031 = vpop.f32.mrb[0].mxu0
  %v1032 = vadd.f32 %v166, %v1031
  %v1033 = vpop.f32.mrb[0].mxu0
  %v1034 = vpop.f32.mrb[0].mxu0
  %v1035 = vadd.f32 %v166, %v1034
  %v1036 = vpop.f32.mrb[0].mxu0
  %1037 = vmatprep.mubr.bf16.mxu0 0
  %1038 = vmatmul.mubr.bf16.gmra.mrb[0].mxu0 %v628
  %v1039 = vpop.f32.mrb[0].mxu0
  %v1040 = vadd.f32 %v166, %v1039
  %v1041 = vpop.f32.mrb[0].mxu0
  %v1042 = vpop.f32.mrb[0].mxu0
  %v1043 = vadd.f32 %v166, %v1042
  %v1044 = vpop.f32.mrb[0].mxu0
  %1045 = vmatprep.mubr.bf16.mxu0 0
  %1046 = vmatmul.mubr.bf16.gmra.mrb[0].mxu0 %v631
  %v1047 = vpop.f32.mrb[0].mxu0
  %v1048 = vadd.f32 %v166, %v1047
  %v1049 = vpop.f32.mrb[0].mxu0
  %v1050 = vpop.f32.mrb[0].mxu0
  %v1051 = vadd.f32 %v166, %v1050
  %v1052 = vpop.f32.mrb[0].mxu0
  %1053 = vmatprep.mubr.bf16.mxu0 0
  %1054 = vmatmul.mubr.bf16.gmra.mrb[0].mxu0 %v634
  %v1055 = vpop.f32.mrb[0].mxu0
  %v1056 = vadd.f32 %v166, %v1055
  %v1057 = vpop.f32.mrb[0].mxu0
  %v1058 = vpop.f32.mrb[0].mxu0
  %v1059 = vadd.f32 %v166, %v1058
  %v1060 = vpop.f32.mrb[0].mxu0
  %1061 = vmatprep.mubr.bf16.mxu0 0
  %1062 = vmatmul.mubr.bf16.gmra.mrb[0].mxu0 %v637
  %v1063 = vpop.f32.mrb[0].mxu0
  %v1064 = vadd.f32 %v166, %v1063
  %v1065 = vpop.f32.mrb[0].mxu0
  %v1066 = vpop.f32.mrb[0].mxu0
  %v1067 = vadd.f32 %v166, %v1066
  %v1068 = vpop.f32.mrb[0].mxu0
  %1069 = vmatprep.mubr.bf16.mxu0 0
  %1070 = vmatmul.mubr.bf16.gmra.mrb[0].mxu0 %v640
  %v1071 = vpop.f32.mrb[0].mxu0
  %v1072 = vadd.f32 %v166, %v1071
  %v1073 = vpop.f32.mrb[0].mxu0
  %v1074 = vpop.f32.mrb[0].mxu0
  %v1075 = vadd.f32 %v166, %v1074
  %v1076 = vpop.f32.mrb[0].mxu0
  %1077 = vmatprep.mubr.bf16.mxu0 0
  %1078 = vmatmul.mubr.bf16.gmra.mrb[0].mxu0 %v643
  %v1079 = vpop.f32.mrb[0].mxu0
  %v1080 = vadd.f32 %v166, %v1079
  %v1081 = vpop.f32.mrb[0].mxu0
  %v1082 = vpop.f32.mrb[0].mxu0
  %v1083 = vadd.f32 %v166, %v1082
  %v1084 = vpop.f32.mrb[0].mxu0
  %1085 = vmatprep.mubr.bf16.mxu0 0
  %1086 = vmatmul.mubr.bf16.gmra.mrb[0].mxu0 %v646
  %v1087 = vpop.f32.mrb[0].mxu0
  %v1088 = vadd.f32 %v166, %v1087
  %v1089 = vpop.f32.mrb[0].mxu0
  %v1090 = vpop.f32.mrb[0].mxu0
  %v1091 = vadd.f32 %v166, %v1090
  %v1092 = vpop.f32.mrb[0].mxu0
  %1093 = vmatprep.mubr.bf16.mxu0 0
  %1094 = vmatmul.mubr.bf16.gmra.mrb[0].mxu0 %v649
  %v1095 = vpop.f32.mrb[0].mxu0
  %v1096 = vadd.f32 %v166, %v1095
  %v1097 = vpop.f32.mrb[0].mxu0
  %v1098 = vpop.f32.mrb[0].mxu0
  %v1099 = vadd.f32 %v166, %v1098
  %v1100 = vpop.f32.mrb[0].mxu0
  %1101 = vmatprep.mubr.bf16.mxu0 0
  %1102 = vmatmul.mubr.bf16.gmra.mrb[0].mxu0 %v652
  %v1103 = vpop.f32.mrb[0].mxu0
  %v1104 = vadd.f32 %v166, %v1103
  %v1105 = vpop.f32.mrb[0].mxu0
  %v1106 = vpop.f32.mrb[0].mxu0
  %v1107 = vadd.f32 %v166, %v1106
  %v1108 = vpop.f32.mrb[0].mxu0
  %1109 = vmatprep.mubr.bf16.mxu0 0
  %1110 = vmatmul.mubr.bf16.gmra.mrb[0].mxu0 %v655
  %v1111 = vpop.f32.mrb[0].mxu0
  %v1112 = vadd.f32 %v166, %v1111
  %v1113 = vpop.f32.mrb[0].mxu0
  %v1114 = vpop.f32.mrb[0].mxu0
  %v1115 = vadd.f32 %v166, %v1114
  %v1116 = vpop.f32.mrb[0].mxu0
  %1117 = vmatprep.mubr.bf16.mxu0 0
  %1118 = vmatmul.mubr.bf16.gmra.mrb[0].mxu0 %v658
  %v1119 = vpop.f32.mrb[0].mxu0
  %v1120 = vadd.f32 %v166, %v1119
  %v1121 = vpop.f32.mrb[0].mxu0
  %v1122 = vpop.f32.mrb[0].mxu0
  %v1123 = vadd.f32 %v166, %v1122
  %v1124 = vpop.f32.mrb[0].mxu0
  %1125 = vmatprep.mubr.bf16.mxu0 0
  %1126 = vmatmul.mubr.bf16.gmra.mrb[0].mxu0 %v661
  %v1127 = vpop.f32.mrb[0].mxu0
  %v1128 = vadd.f32 %v166, %v1127
  %v1129 = vpop.f32.mrb[0].mxu0
  %v1130 = vpop.f32.mrb[0].mxu0
  %v1131 = vadd.f32 %v166, %v1130
  %v1132 = vpop.f32.mrb[0].mxu0
  %1133 = vmatprep.mubr.bf16.mxu0 0
  %1134 = vmatmul.mubr.bf16.gmra.mrb[0].mxu0 %v664
  %v1135 = vpop.f32.mrb[0].mxu0
  %v1136 = vadd.f32 %v166, %v1135
  %v1137 = vpop.f32.mrb[0].mxu0
  %v1138 = vpop.f32.mrb[0].mxu0
  %v1139 = vadd.f32 %v166, %v1138
  %v1140 = vpop.f32.mrb[0].mxu0
  %1141 = vmatprep.mubr.bf16.mxu0 0
  %1142 = vmatmul.mubr.bf16.gmra.mrb[0].mxu0 %v667
  %v1143 = vpop.f32.mrb[0].mxu0
  %v1144 = vadd.f32 %v166, %v1143
  %v1145 = vpop.f32.mrb[0].mxu0
  %v1146 = vpop.f32.mrb[0].mxu0
  %v1147 = vadd.f32 %v166, %v1146
  %v1148 = vpop.f32.mrb[0].mxu0
  %1149 = vmatprep.mubr.bf16.mxu0 0
  %1150 = vmatmul.mubr.bf16.gmra.mrb[0].mxu0 %v670
  %v1151 = vpop.f32.mrb[0].mxu0
  %v1152 = vadd.f32 %v166, %v1151
  %v1153 = vpop.f32.mrb[0].mxu0
  %v1154 = vpop.f32.mrb[0].mxu0
  %v1155 = vadd.f32 %v166, %v1154
  %v1156 = vpop.f32.mrb[0].mxu0
  %1157 = vmatprep.mubr.bf16.mxu0 0
  %1158 = vmatmul.mubr.bf16.gmra.mrb[0].mxu0 %v673
  %v1159 = vpop.f32.mrb[0].mxu0
  %v1160 = vadd.f32 %v166, %v1159
  %v1161 = vpop.f32.mrb[0].mxu0
  %v1162 = vpop.f32.mrb[0].mxu0
  %v1163 = vadd.f32 %v166, %v1162
  %v1164 = vpop.f32.mrb[0].mxu0
  %1165 = vmatprep.mubr.bf16.mxu0 0
  %1166 = vmatmul.mubr.bf16.gmra.mrb[0].mxu0 %v676
  %v1167 = vpop.f32.mrb[0].mxu0
  %v1168 = vadd.f32 %v166, %v1167
  %v1169 = vpop.f32.mrb[0].mxu0
  %v1170 = vpop.f32.mrb[0].mxu0
  %v1171 = vadd.f32 %v166, %v1170
  %v1172 = vpop.f32.mrb[0].mxu0
  %1173 = vmatprep.mubr.bf16.mxu0 0
  %1174 = vmatmul.mubr.bf16.gmra.mrb[0].mxu0 %v679
  %v1175 = vpop.f32.mrb[0].mxu0
  %v1176 = vadd.f32 %v166, %v1175
  %v1177 = vpop.f32.mrb[0].mxu0
  %v1178 = vpop.f32.mrb[0].mxu0
  %v1179 = vadd.f32 %v166, %v1178
  %v1180 = vpop.f32.mrb[0].mxu0
  %1181 = vmatprep.mubr.bf16.mxu0 0
  %1182 = vmatmul.mubr.bf16.gmra.mrb[0].mxu0 %v682
  %v1183 = vpop.f32.mrb[0].mxu0
  %v1184 = vadd.f32 %v166, %v1183
  %v1185 = vpop.f32.mrb[0].mxu0
  %v1186 = vpop.f32.mrb[0].mxu0
  %v1187 = vadd.f32 %v166, %v1186
  %v1188 = vpop.f32.mrb[0].mxu0
  %1189 = vmatprep.mubr.bf16.mxu0 0
  %1190 = vmatmul.mubr.bf16.gmra.mrb[0].mxu0 %v685
  %v1191 = vpop.f32.mrb[0].mxu0
  %v1192 = vadd.f32 %v166, %v1191
  %v1193 = vpop.f32.mrb[0].mxu0
  %v1194 = vpop.f32.mrb[0].mxu0
  %v1195 = vadd.f32 %v166, %v1194
  %v1196 = vpop.f32.mrb[0].mxu0
  %1197 = vmatprep.mubr.bf16.mxu0 0
  %1198 = vmatmul.mubr.bf16.gmra.mrb[0].mxu0 %v688
  %v1199 = vpop.f32.mrb[0].mxu0
  %v1200 = vadd.f32 %v166, %v1199
  %v1201 = vpop.f32.mrb[0].mxu0
  %v1202 = vpop.f32.mrb[0].mxu0
  %v1203 = vadd.f32 %v166, %v1202
  %v1204 = vpop.f32.mrb[0].mxu0
  %1205 = vmatprep.mubr.bf16.mxu0 0
  %1206 = vmatmul.mubr.bf16.gmra.mrb[0].mxu0 %v691
  %v1207 = vpop.f32.mrb[0].mxu0
  %v1208 = vadd.f32 %v166, %v1207
  %v1209 = vpop.f32.mrb[0].mxu0
  %v1210 = vpop.f32.mrb[0].mxu0
  %v1211 = vadd.f32 %v166, %v1210
  %v1212 = vpop.f32.mrb[0].mxu0
  %1213 = vmatprep.mubr.bf16.mxu0 0
  %1214 = vmatmul.mubr.bf16.gmra.mrb[0].mxu0 %v694
  %v1215 = vpop.f32.mrb[0].mxu0
  %v1216 = vadd.f32 %v166, %v1215
  %v1217 = vpop.f32.mrb[0].mxu0
  %v1218 = vpop.f32.mrb[0].mxu0
  %v1219 = vadd.f32 %v166, %v1218
  %v1220 = vpop.f32.mrb[0].mxu0
  %1221 = vmatprep.mubr.bf16.mxu0 0
  %1222 = vmatmul.mubr.bf16.gmra.mrb[0].mxu0 %v697
  %v1223 = vpop.f32.mrb[0].mxu0
  %v1224 = vadd.f32 %v166, %v1223
  %v1225 = vpop.f32.mrb[0].mxu0
  %v1226 = vpop.f32.mrb[0].mxu0
  %v1227 = vadd.f32 %v166, %v1226
  %v1228 = vpop.f32.mrb[0].mxu0
  %1229 = vmatprep.mubr.bf16.mxu0 0
  %1230 = vmatmul.mubr.bf16.gmra.mrb[0].mxu0 %v700
  %v1231 = vpop.f32.mrb[0].mxu0
  %v1232 = vadd.f32 %v166, %v1231
  %v1233 = vpop.f32.mrb[0].mxu0
  %v1234 = vpop.f32.mrb[0].mxu0
  %v1235 = vadd.f32 %v166, %v1234
  %v1236 = vpop.f32.mrb[0].mxu0
  %1237 = vmatprep.mubr.bf16.mxu0 0
  %1238 = vmatmul.mubr.bf16.gmra.mrb[0].mxu0 %v703
  %v1239 = vpop.f32.mrb[0].mxu0
  %v1240 = vadd.f32 %v166, %v1239
  %v1241 = vpop.f32.mrb[0].mxu0
  %v1242 = vpop.f32.mrb[0].mxu0
  %v1243 = vadd.f32 %v166, %v1242
  %v1244 = vpop.f32.mrb[0].mxu0
  %1245 = vmatprep.mubr.bf16.mxu0 0
  %1246 = vmatmul.mubr.bf16.gmra.mrb[0].mxu0 %v706
  %v1247 = vpop.f32.mrb[0].mxu0
  %v1248 = vadd.f32 %v166, %v1247
  %v1249 = vpop.f32.mrb[0].mxu0
  %v1250 = vpop.f32.mrb[0].mxu0
  %v1251 = vadd.f32 %v166, %v1250
  %v1252 = vpop.f32.mrb[0].mxu0
  %1253 = vmatprep.mubr.bf16.mxu0 0
  %1254 = vmatmul.mubr.bf16.gmra.mrb[0].mxu0 %v709
  %v1255 = vpop.f32.mrb[0].mxu0
  %v1256 = vadd.f32 %v166, %v1255
  %v1257 = vpop.f32.mrb[0].mxu0
  %v1258 = vpop.f32.mrb[0].mxu0
  %v1259 = vadd.f32 %v166, %v1258
  %v1260 = vpop.f32.mrb[0].mxu0
  %1261 = vmatprep.mubr.bf16.mxu0 0
  %1262 = vmatmul.mubr.bf16.gmra.mrb[0].mxu0 %v712
  %v1263 = vpop.f32.mrb[0].mxu0
  %v1264 = vadd.f32 %v166, %v1263
  %v1265 = vpop.f32.mrb[0].mxu0
  %v1266 = vpop.f32.mrb[0].mxu0
  %v1267 = vadd.f32 %v166, %v1266
  %v1268 = vpop.f32.mrb[0].mxu0
  %1269 = vmatprep.mubr.bf16.mxu0 0
  %1270 = vmatmul.mubr.bf16.gmra.mrb[0].mxu0 %v715
  %v1271 = vpop.f32.mrb[0].mxu0
  %v1272 = vadd.f32 %v166, %v1271
  %v1273 = vpop.f32.mrb[0].mxu0
  %v1274 = vpop.f32.mrb[0].mxu0
  %v1275 = vadd.f32 %v166, %v1274
  %v1276 = vpop.f32.mrb[0].mxu0
  %1277 = vmatprep.mubr.bf16.mxu0 0
  %1278 = vmatmul.mubr.bf16.gmra.mrb[0].mxu0 %v718
  %v1279 = vpop.f32.mrb[0].mxu0
  %v1280 = vadd.f32 %v166, %v1279
  %v1281 = vpop.f32.mrb[0].mxu0
  %v1282 = vpop.f32.mrb[0].mxu0
  %v1283 = vadd.f32 %v166, %v1282
  %v1284 = vpop.f32.mrb[0].mxu0
  %1285 = vmatprep.mubr.bf16.mxu0 0
  %1286 = vmatmul.mubr.bf16.gmra.mrb[0].mxu0 %v721
  %v1287 = vpop.f32.mrb[0].mxu0
  %v1288 = vadd.f32 %v166, %v1287
  %v1289 = vpop.f32.mrb[0].mxu0
  %v1290 = vpop.f32.mrb[0].mxu0
  %v1291 = vadd.f32 %v166, %v1290
  %v1292 = vpop.f32.mrb[0].mxu0
  %1293 = vmatprep.mubr.bf16.mxu0 0
  %1294 = vmatmul.mubr.bf16.gmra.mrb[0].mxu0 %v724
  %v1295 = vpop.f32.mrb[0].mxu0
  %v1296 = vadd.f32 %v166, %v1295
  %v1297 = vpop.f32.mrb[0].mxu0
  %v1298 = vpop.f32.mrb[0].mxu0
  %v1299 = vadd.f32 %v166, %v1298
  %v1300 = vpop.f32.mrb[0].mxu0
  %1301 = vmatprep.mubr.bf16.mxu0 0
  %1302 = vmatmul.mubr.bf16.gmra.mrb[0].mxu0 %v727
  %v1303 = vpop.f32.mrb[0].mxu0
  %v1304 = vadd.f32 %v166, %v1303
  %v1305 = vpop.f32.mrb[0].mxu0
  %v1306 = vpop.f32.mrb[0].mxu0
  %v1307 = vadd.f32 %v166, %v1306
  %v1308 = vpop.f32.mrb[0].mxu0
  %1309 = vmatprep.mubr.bf16.mxu0 0
  %1310 = vmatmul.mubr.bf16.gmra.mrb[0].mxu0 %v730
  %v1311 = vpop.f32.mrb[0].mxu0
  %v1312 = vadd.f32 %v166, %v1311
  %v1313 = vpop.f32.mrb[0].mxu0
  %v1314 = vpop.f32.mrb[0].mxu0
  %v1315 = vadd.f32 %v166, %v1314
  %v1316 = vpop.f32.mrb[0].mxu0
  %1317 = vmatprep.mubr.bf16.mxu0 0
  %1318 = vmatmul.mubr.bf16.gmra.mrb[0].mxu0 %v733
  %v1319 = vpop.f32.mrb[0].mxu0
  %v1320 = vadd.f32 %v166, %v1319
  %v1321 = vpop.f32.mrb[0].mxu0
  %v1322 = vpop.f32.mrb[0].mxu0
  %v1323 = vadd.f32 %v166, %v1322
  %v1324 = vpop.f32.mrb[0].mxu0
  %1325 = vmatprep.mubr.bf16.mxu0 0
  %1326 = vmatmul.mubr.bf16.gmra.mrb[0].mxu0 %v736
  %v1327 = vpop.f32.mrb[0].mxu0
  %v1328 = vadd.f32 %v166, %v1327
  %v1329 = vpop.f32.mrb[0].mxu0
  %v1330 = vpop.f32.mrb[0].mxu0
  %v1331 = vadd.f32 %v166, %v1330
  %v1332 = vpop.f32.mrb[0].mxu0
  %1333 = vmatprep.mubr.bf16.mxu0 0
  %1334 = vmatmul.mubr.bf16.gmra.mrb[0].mxu0 %v739
  %v1335 = vpop.f32.mrb[0].mxu0
  %v1336 = vadd.f32 %v166, %v1335
  %v1337 = vpop.f32.mrb[0].mxu0
  %v1338 = vpop.f32.mrb[0].mxu0
  %v1339 = vadd.f32 %v166, %v1338
  %v1340 = vpop.f32.mrb[0].mxu0
  %1341 = vmatprep.mubr.bf16.mxu0 0
  %1342 = vmatmul.mubr.bf16.gmra.mrb[0].mxu0 %v742
  %v1343 = vpop.f32.mrb[0].mxu0
  %v1344 = vadd.f32 %v166, %v1343
  %v1345 = vpop.f32.mrb[0].mxu0
  %v1346 = vpop.f32.mrb[0].mxu0
  %v1347 = vadd.f32 %v166, %v1346
  %v1348 = vpop.f32.mrb[0].mxu0
  %1349 = vmatprep.mubr.bf16.mxu0 0
  %1350 = vmatmul.mubr.bf16.gmra.mrb[0].mxu0 %v745
  %v1351 = vpop.f32.mrb[0].mxu0
  %v1352 = vadd.f32 %v166, %v1351
  %v1353 = vpop.f32.mrb[0].mxu0
  %v1354 = vpop.f32.mrb[0].mxu0
  %v1355 = vadd.f32 %v166, %v1354
  %v1356 = vpop.f32.mrb[0].mxu0
  %1357 = vmatprep.mubr.bf16.mxu0 0
  %1358 = vmatmul.mubr.bf16.gmra.mrb[0].mxu0 %v748
  %v1359 = vpop.f32.mrb[0].mxu0
  %v1360 = vadd.f32 %v166, %v1359
  %v1361 = vpop.f32.mrb[0].mxu0
  %v1362 = vpop.f32.mrb[0].mxu0
  %v1363 = vadd.f32 %v166, %v1362
  %v1364 = vpop.f32.mrb[0].mxu0
  %1365 = vdwg.mxu0
  %v1366 = vmax.f32 %v792, 0.0
  %v1367 = vmax.f32 %v795, 0.0
  %v1368 = vmax.f32 %v800, 0.0
  %v1369 = vmax.f32 %v803, 0.0
  %v1370 = vmax.f32 %v808, 0.0
  %v1371 = vmax.f32 %v811, 0.0
  %v1372 = vmax.f32 %v816, 0.0
  %v1373 = vmax.f32 %v819, 0.0
  %v1374 = vmax.f32 %v824, 0.0
  %v1375 = vmax.f32 %v827, 0.0
  %v1376 = vmax.f32 %v832, 0.0
  %v1377 = vmax.f32 %v835, 0.0
  %v1378 = vmax.f32 %v840, 0.0
  %v1379 = vmax.f32 %v843, 0.0
  %v1380 = vmax.f32 %v848, 0.0
  %v1381 = vmax.f32 %v851, 0.0
  %v1382 = vmax.f32 %v856, 0.0
  %v1383 = vmax.f32 %v859, 0.0
  %v1384 = vmax.f32 %v864, 0.0
  %v1385 = vmax.f32 %v867, 0.0
  %v1386 = vmax.f32 %v872, 0.0
  %v1387 = vmax.f32 %v875, 0.0
  %v1388 = vmax.f32 %v880, 0.0
  %v1389 = vmax.f32 %v883, 0.0
  %v1390 = vmax.f32 %v888, 0.0
  %v1391 = vmax.f32 %v891, 0.0
  %v1392 = vmax.f32 %v896, 0.0
  %v1393 = vmax.f32 %v899, 0.0
  %v1394 = vmax.f32 %v904, 0.0
  %v1395 = vmax.f32 %v907, 0.0
  %v1396 = vmax.f32 %v912, 0.0
  %v1397 = vmax.f32 %v915, 0.0
  %v1398 = vmax.f32 %v920, 0.0
  %v1399 = vmax.f32 %v923, 0.0
  %v1400 = vmax.f32 %v928, 0.0
  %v1401 = vmax.f32 %v931, 0.0
  %v1402 = vmax.f32 %v936, 0.0
  %v1403 = vmax.f32 %v939, 0.0
  %v1404 = vmax.f32 %v944, 0.0
  %v1405 = vmax.f32 %v947, 0.0
  %v1406 = vmax.f32 %v952, 0.0
  %v1407 = vmax.f32 %v955, 0.0
  %v1408 = vmax.f32 %v960, 0.0
  %v1409 = vmax.f32 %v963, 0.0
  %v1410 = vmax.f32 %v968, 0.0
  %v1411 = vmax.f32 %v971, 0.0
  %v1412 = vmax.f32 %v976, 0.0
  %v1413 = vmax.f32 %v979, 0.0
  %v1414 = vmax.f32 %v984, 0.0
  %v1415 = vmax.f32 %v987, 0.0
  %v1416 = vmax.f32 %v992, 0.0
  %v1417 = vmax.f32 %v995, 0.0
  %v1418 = vmax.f32 %v1000, 0.0
  %v1419 = vmax.f32 %v1003, 0.0
  %v1420 = vmax.f32 %v1008, 0.0
  %v1421 = vmax.f32 %v1011, 0.0
  %v1422 = vmax.f32 %v1016, 0.0
  %v1423 = vmax.f32 %v1019, 0.0
  %v1424 = vmax.f32 %v1024, 0.0
  %v1425 = vmax.f32 %v1027, 0.0
  %v1426 = vmax.f32 %v1032, 0.0
  %v1427 = vmax.f32 %v1035, 0.0
  %v1428 = vmax.f32 %v1040, 0.0
  %v1429 = vmax.f32 %v1043, 0.0
  %v1430 = vmax.f32 %v1048, 0.0
  %v1431 = vmax.f32 %v1051, 0.0
  %v1432 = vmax.f32 %v1056, 0.0
  %v1433 = vmax.f32 %v1059, 0.0
  %v1434 = vmax.f32 %v1064, 0.0
  %v1435 = vmax.f32 %v1067, 0.0
  %v1436 = vmax.f32 %v1072, 0.0
  %v1437 = vmax.f32 %v1075, 0.0
  %v1438 = vmax.f32 %v1080, 0.0
  %v1439 = vmax.f32 %v1083, 0.0
  %v1440 = vmax.f32 %v1088, 0.0
  %v1441 = vmax.f32 %v1091, 0.0
  %v1442 = vmax.f32 %v1096, 0.0
  %v1443 = vmax.f32 %v1099, 0.0
  %v1444 = vmax.f32 %v1104, 0.0
  %v1445 = vmax.f32 %v1107, 0.0
  %v1446 = vmax.f32 %v1112, 0.0
  %v1447 = vmax.f32 %v1115, 0.0
  %v1448 = vmax.f32 %v1120, 0.0
  %v1449 = vmax.f32 %v1123, 0.0
  %v1450 = vmax.f32 %v1128, 0.0
  %v1451 = vmax.f32 %v1131, 0.0
  %v1452 = vmax.f32 %v1136, 0.0
  %v1453 = vmax.f32 %v1139, 0.0
  %v1454 = vmax.f32 %v1144, 0.0
  %v1455 = vmax.f32 %v1147, 0.0
  %v1456 = vmax.f32 %v1152, 0.0
  %v1457 = vmax.f32 %v1155, 0.0
  %v1458 = vmax.f32 %v1160, 0.0
  %v1459 = vmax.f32 %v1163, 0.0
  %v1460 = vmax.f32 %v1168, 0.0
  %v1461 = vmax.f32 %v1171, 0.0
  %v1462 = vmax.f32 %v1176, 0.0
  %v1463 = vmax.f32 %v1179, 0.0
  %v1464 = vmax.f32 %v1184, 0.0
  %v1465 = vmax.f32 %v1187, 0.0
  %v1466 = vmax.f32 %v1192, 0.0
  %v1467 = vmax.f32 %v1195, 0.0
  %v1468 = vmax.f32 %v1200, 0.0
  %v1469 = vmax.f32 %v1203, 0.0
  %v1470 = vmax.f32 %v1208, 0.0
  %v1471 = vmax.f32 %v1211, 0.0
  %v1472 = vmax.f32 %v1216, 0.0
  %v1473 = vmax.f32 %v1219, 0.0
  %v1474 = vmax.f32 %v1224, 0.0
  %v1475 = vmax.f32 %v1227, 0.0
  %v1476 = vmax.f32 %v1232, 0.0
  %v1477 = vmax.f32 %v1235, 0.0
  %v1478 = vmax.f32 %v1240, 0.0
  %v1479 = vmax.f32 %v1243, 0.0
  %v1480 = vmax.f32 %v1248, 0.0
  %v1481 = vmax.f32 %v1251, 0.0
  %v1482 = vmax.f32 %v1256, 0.0
  %v1483 = vmax.f32 %v1259, 0.0
  %v1484 = vmax.f32 %v1264, 0.0
  %v1485 = vmax.f32 %v1267, 0.0
  %v1486 = vmax.f32 %v1272, 0.0
  %v1487 = vmax.f32 %v1275, 0.0
  %v1488 = vmax.f32 %v1280, 0.0
  %v1489 = vmax.f32 %v1283, 0.0
  %v1490 = vmax.f32 %v1288, 0.0
  %v1491 = vmax.f32 %v1291, 0.0
  %v1492 = vmax.f32 %v1296, 0.0
  %v1493 = vmax.f32 %v1299, 0.0
  %v1494 = vmax.f32 %v1304, 0.0
  %v1495 = vmax.f32 %v1307, 0.0
  %v1496 = vmax.f32 %v1312, 0.0
  %v1497 = vmax.f32 %v1315, 0.0
  %v1498 = vmax.f32 %v1320, 0.0
  %v1499 = vmax.f32 %v1323, 0.0
  %v1500 = vmax.f32 %v1328, 0.0
  %v1501 = vmax.f32 %v1331, 0.0
  %v1502 = vmax.f32 %v1336, 0.0
  %v1503 = vmax.f32 %v1339, 0.0
  %v1504 = vmax.f32 %v1344, 0.0
  %v1505 = vmax.f32 %v1347, 0.0
  %v1506 = vmax.f32 %v1352, 0.0
  %v1507 = vmax.f32 %v1355, 0.0
  %v1508 = vmax.f32 %v1360, 0.0
  %v1509 = vmax.f32 %v1363, 0.0
  %v1510 = vpack.c.bf16 %v1367, %v1366
  %v1511 = vpack.c.bf16 %v1369, %v1368
  %v1512 = vpack.c.bf16 %v1371, %v1370
  %v1513 = vpack.c.bf16 %v1373, %v1372
  %v1514 = vpack.c.bf16 %v1375, %v1374
  %v1515 = vpack.c.bf16 %v1377, %v1376
  %v1516 = vpack.c.bf16 %v1379, %v1378
  %v1517 = vpack.c.bf16 %v1381, %v1380
  %v1518 = vpack.c.bf16 %v1383, %v1382
  %v1519 = vpack.c.bf16 %v1385, %v1384
  %v1520 = vpack.c.bf16 %v1387, %v1386
  %v1521 = vpack.c.bf16 %v1389, %v1388
  %v1522 = vpack.c.bf16 %v1391, %v1390
  %v1523 = vpack.c.bf16 %v1393, %v1392
  %v1524 = vpack.c.bf16 %v1395, %v1394
  %v1525 = vpack.c.bf16 %v1397, %v1396
  %v1526 = vpack.c.bf16 %v1399, %v1398
  %v1527 = vpack.c.bf16 %v1401, %v1400
  %v1528 = vpack.c.bf16 %v1403, %v1402
  %v1529 = vpack.c.bf16 %v1405, %v1404
  %v1530 = vpack.c.bf16 %v1407, %v1406
  %v1531 = vpack.c.bf16 %v1409, %v1408
  %v1532 = vpack.c.bf16 %v1411, %v1410
  %v1533 = vpack.c.bf16 %v1413, %v1412
  %v1534 = vpack.c.bf16 %v1415, %v1414
  %v1535 = vpack.c.bf16 %v1417, %v1416
  %v1536 = vpack.c.bf16 %v1419, %v1418
  %v1537 = vpack.c.bf16 %v1421, %v1420
  %v1538 = vpack.c.bf16 %v1423, %v1422
  %v1539 = vpack.c.bf16 %v1425, %v1424
  %v1540 = vpack.c.bf16 %v1427, %v1426
  %v1541 = vpack.c.bf16 %v1429, %v1428
  %v1542 = vpack.c.bf16 %v1431, %v1430
  %v1543 = vpack.c.bf16 %v1433, %v1432
  %v1544 = vpack.c.bf16 %v1435, %v1434
  %v1545 = vpack.c.bf16 %v1437, %v1436
  %v1546 = vpack.c.bf16 %v1439, %v1438
  %v1547 = vpack.c.bf16 %v1441, %v1440
  %v1548 = vpack.c.bf16 %v1443, %v1442
  %v1549 = vpack.c.bf16 %v1445, %v1444
  %v1550 = vpack.c.bf16 %v1447, %v1446
  %v1551 = vpack.c.bf16 %v1449, %v1448
  %v1552 = vpack.c.bf16 %v1451, %v1450
  %v1553 = vpack.c.bf16 %v1453, %v1452
  %v1554 = vpack.c.bf16 %v1455, %v1454
  %v1555 = vpack.c.bf16 %v1457, %v1456
  %v1556 = vpack.c.bf16 %v1459, %v1458
  %v1557 = vpack.c.bf16 %v1461, %v1460
  %v1558 = vpack.c.bf16 %v1463, %v1462
  %v1559 = vpack.c.bf16 %v1465, %v1464
  %v1560 = vpack.c.bf16 %v1467, %v1466
  %v1561 = vpack.c.bf16 %v1469, %v1468
  %v1562 = vpack.c.bf16 %v1471, %v1470
  %v1563 = vpack.c.bf16 %v1473, %v1472
  %v1564 = vpack.c.bf16 %v1475, %v1474
  %v1565 = vpack.c.bf16 %v1477, %v1476
  %v1566 = vpack.c.bf16 %v1479, %v1478
  %v1567 = vpack.c.bf16 %v1481, %v1480
  %v1568 = vpack.c.bf16 %v1483, %v1482
  %v1569 = vpack.c.bf16 %v1485, %v1484
  %v1570 = vpack.c.bf16 %v1487, %v1486
  %v1571 = vpack.c.bf16 %v1489, %v1488
  %v1572 = vpack.c.bf16 %v1491, %v1490
  %v1573 = vpack.c.bf16 %v1493, %v1492
  %v1574 = vpack.c.bf16 %v1495, %v1494
  %v1575 = vpack.c.bf16 %v1497, %v1496
  %v1576 = vpack.c.bf16 %v1499, %v1498
  %v1577 = vpack.c.bf16 %v1501, %v1500
  %v1578 = vpack.c.bf16 %v1503, %v1502
  %v1579 = vpack.c.bf16 %v1505, %v1504
  %v1580 = vpack.c.bf16 %v1507, %v1506
  %v1581 = vpack.c.bf16 %v1509, %v1508
  %v1654 = vunpack.c.l.b16 %v1510
  %v1655 = vunpack.c.h.b16 %v1510
  %v1656 = vunpack.c.l.b16 %v1511
  %v1657 = vunpack.c.h.b16 %v1511
  %v1658 = vunpack.c.l.b16 %v1512
  %v1659 = vunpack.c.h.b16 %v1512
  %v1660 = vunpack.c.l.b16 %v1513
  %v1661 = vunpack.c.h.b16 %v1513
  %v1662 = vunpack.c.l.b16 %v1514
  %v1663 = vunpack.c.h.b16 %v1514
  %v1664 = vunpack.c.l.b16 %v1515
  %v1665 = vunpack.c.h.b16 %v1515
  %v1666 = vunpack.c.l.b16 %v1516
  %v1667 = vunpack.c.h.b16 %v1516
  %v1668 = vunpack.c.l.b16 %v1517
  %v1669 = vunpack.c.h.b16 %v1517
  %v1670 = vunpack.c.l.b16 %v1518
  %v1671 = vunpack.c.h.b16 %v1518
  %v1672 = vunpack.c.l.b16 %v1519
  %v1673 = vunpack.c.h.b16 %v1519
  %v1674 = vunpack.c.l.b16 %v1520
  %v1675 = vunpack.c.h.b16 %v1520
  %v1676 = vunpack.c.l.b16 %v1521
  %v1677 = vunpack.c.h.b16 %v1521
  %v1678 = vunpack.c.l.b16 %v1522
  %v1679 = vunpack.c.h.b16 %v1522
  %v1680 = vunpack.c.l.b16 %v1523
  %v1681 = vunpack.c.h.b16 %v1523
  %v1682 = vunpack.c.l.b16 %v1524
  %v1683 = vunpack.c.h.b16 %v1524
  %v1684 = vunpack.c.l.b16 %v1525
  %v1685 = vunpack.c.h.b16 %v1525
  %v1686 = vunpack.c.l.b16 %v1526
  %v1687 = vunpack.c.h.b16 %v1526
  %v1688 = vunpack.c.l.b16 %v1527
  %v1689 = vunpack.c.h.b16 %v1527
  %v1690 = vunpack.c.l.b16 %v1528
  %v1691 = vunpack.c.h.b16 %v1528
  %v1692 = vunpack.c.l.b16 %v1529
  %v1693 = vunpack.c.h.b16 %v1529
  %v1694 = vunpack.c.l.b16 %v1530
  %v1695 = vunpack.c.h.b16 %v1530
  %v1696 = vunpack.c.l.b16 %v1531
  %v1697 = vunpack.c.h.b16 %v1531
  %v1698 = vunpack.c.l.b16 %v1532
  %v1699 = vunpack.c.h.b16 %v1532
  %v1700 = vunpack.c.l.b16 %v1533
  %v1701 = vunpack.c.h.b16 %v1533
  %v1702 = vunpack.c.l.b16 %v1534
  %v1703 = vunpack.c.h.b16 %v1534
  %v1704 = vunpack.c.l.b16 %v1535
  %v1705 = vunpack.c.h.b16 %v1535
  %v1706 = vunpack.c.l.b16 %v1536
  %v1707 = vunpack.c.h.b16 %v1536
  %v1708 = vunpack.c.l.b16 %v1537
  %v1709 = vunpack.c.h.b16 %v1537
  %v1710 = vunpack.c.l.b16 %v1538
  %v1711 = vunpack.c.h.b16 %v1538
  %v1712 = vunpack.c.l.b16 %v1539
  %v1713 = vunpack.c.h.b16 %v1539
  %v1714 = vunpack.c.l.b16 %v1540
  %v1715 = vunpack.c.h.b16 %v1540
  %v1716 = vunpack.c.l.b16 %v1541
  %v1717 = vunpack.c.h.b16 %v1541
  %v1718 = vunpack.c.l.b16 %v1542
  %v1719 = vunpack.c.h.b16 %v1542
  %v1720 = vunpack.c.l.b16 %v1543
  %v1721 = vunpack.c.h.b16 %v1543
  %v1722 = vunpack.c.l.b16 %v1544
  %v1723 = vunpack.c.h.b16 %v1544
  %v1724 = vunpack.c.l.b16 %v1545
  %v1725 = vunpack.c.h.b16 %v1545
  %v1726 = vunpack.c.l.b16 %v1546
  %v1727 = vunpack.c.h.b16 %v1546
  %v1728 = vunpack.c.l.b16 %v1547
  %v1729 = vunpack.c.h.b16 %v1547
  %v1730 = vunpack.c.l.b16 %v1548
  %v1731 = vunpack.c.h.b16 %v1548
  %v1732 = vunpack.c.l.b16 %v1549
  %v1733 = vunpack.c.h.b16 %v1549
  %v1734 = vunpack.c.l.b16 %v1550
  %v1735 = vunpack.c.h.b16 %v1550
  %v1736 = vunpack.c.l.b16 %v1551
  %v1737 = vunpack.c.h.b16 %v1551
  %v1738 = vunpack.c.l.b16 %v1552
  %v1739 = vunpack.c.h.b16 %v1552
  %v1740 = vunpack.c.l.b16 %v1553
  %v1741 = vunpack.c.h.b16 %v1553
  %v1742 = vunpack.c.l.b16 %v1554
  %v1743 = vunpack.c.h.b16 %v1554
  %v1744 = vunpack.c.l.b16 %v1555
  %v1745 = vunpack.c.h.b16 %v1555
  %v1746 = vunpack.c.l.b16 %v1556
  %v1747 = vunpack.c.h.b16 %v1556
  %v1748 = vunpack.c.l.b16 %v1557
  %v1749 = vunpack.c.h.b16 %v1557
  %v1750 = vunpack.c.l.b16 %v1558
  %v1751 = vunpack.c.h.b16 %v1558
  %v1752 = vunpack.c.l.b16 %v1559
  %v1753 = vunpack.c.h.b16 %v1559
  %v1754 = vunpack.c.l.b16 %v1560
  %v1755 = vunpack.c.h.b16 %v1560
  %v1756 = vunpack.c.l.b16 %v1561
  %v1757 = vunpack.c.h.b16 %v1561
  %v1758 = vunpack.c.l.b16 %v1562
  %v1759 = vunpack.c.h.b16 %v1562
  %v1760 = vunpack.c.l.b16 %v1563
  %v1761 = vunpack.c.h.b16 %v1563
  %v1762 = vunpack.c.l.b16 %v1564
  %v1763 = vunpack.c.h.b16 %v1564
  %v1764 = vunpack.c.l.b16 %v1565
  %v1765 = vunpack.c.h.b16 %v1565
  %v1766 = vunpack.c.l.b16 %v1566
  %v1767 = vunpack.c.h.b16 %v1566
  %v1768 = vunpack.c.l.b16 %v1567
  %v1769 = vunpack.c.h.b16 %v1567
  %v1770 = vunpack.c.l.b16 %v1568
  %v1771 = vunpack.c.h.b16 %v1568
  %v1772 = vunpack.c.l.b16 %v1569
  %v1773 = vunpack.c.h.b16 %v1569
  %v1774 = vunpack.c.l.b16 %v1570
  %v1775 = vunpack.c.h.b16 %v1570
  %v1776 = vunpack.c.l.b16 %v1571
  %v1777 = vunpack.c.h.b16 %v1571
  %v1778 = vunpack.c.l.b16 %v1572
  %v1779 = vunpack.c.h.b16 %v1572
  %v1780 = vunpack.c.l.b16 %v1573
  %v1781 = vunpack.c.h.b16 %v1573
  %v1782 = vunpack.c.l.b16 %v1574
  %v1783 = vunpack.c.h.b16 %v1574
  %v1784 = vunpack.c.l.b16 %v1575
  %v1785 = vunpack.c.h.b16 %v1575
  %v1786 = vunpack.c.l.b16 %v1576
  %v1787 = vunpack.c.h.b16 %v1576
  %v1788 = vunpack.c.l.b16 %v1577
  %v1789 = vunpack.c.h.b16 %v1577
  %v1790 = vunpack.c.l.b16 %v1578
  %v1791 = vunpack.c.h.b16 %v1578
  %v1792 = vunpack.c.l.b16 %v1579
  %v1793 = vunpack.c.h.b16 %v1579
  %v1794 = vunpack.c.l.b16 %v1580
  %v1795 = vunpack.c.h.b16 %v1580
  %v1796 = vunpack.c.l.b16 %v1581
  %v1797 = vunpack.c.h.b16 %v1581
  %v1798 = vpack.c.b16 %v1654, %v1654
  %v1799 = vpack.c.b16 %v1655, %v1655
  %v1800 = vpack.c.b16 %v1656, %v1656
  %v1801 = vpack.c.b16 %v1657, %v1657
  %v1802 = vpack.c.b16 %v1658, %v1658
  %v1803 = vpack.c.b16 %v1659, %v1659
  %v1804 = vpack.c.b16 %v1660, %v1660
  %v1805 = vpack.c.b16 %v1661, %v1661
  %v1806 = vpack.c.b16 %v1662, %v1662
  %v1807 = vpack.c.b16 %v1663, %v1663
  %v1808 = vpack.c.b16 %v1664, %v1664
  %v1809 = vpack.c.b16 %v1665, %v1665
  %v1810 = vpack.c.b16 %v1666, %v1666
  %v1811 = vpack.c.b16 %v1667, %v1667
  %v1812 = vpack.c.b16 %v1668, %v1668
  %v1813 = vpack.c.b16 %v1669, %v1669
  %v1814 = vpack.c.b16 %v1670, %v1670
  %v1815 = vpack.c.b16 %v1671, %v1671
  %v1816 = vpack.c.b16 %v1672, %v1672
  %v1817 = vpack.c.b16 %v1673, %v1673
  %v1818 = vpack.c.b16 %v1674, %v1674
  %v1819 = vpack.c.b16 %v1675, %v1675
  %v1820 = vpack.c.b16 %v1676, %v1676
  %v1821 = vpack.c.b16 %v1677, %v1677
  %v1822 = vpack.c.b16 %v1678, %v1678
  %v1823 = vpack.c.b16 %v1679, %v1679
  %v1824 = vpack.c.b16 %v1680, %v1680
  %v1825 = vpack.c.b16 %v1681, %v1681
  %v1826 = vpack.c.b16 %v1682, %v1682
  %v1827 = vpack.c.b16 %v1683, %v1683
  %v1828 = vpack.c.b16 %v1684, %v1684
  %v1829 = vpack.c.b16 %v1685, %v1685
  %v1830 = vpack.c.b16 %v1686, %v1686
  %v1831 = vpack.c.b16 %v1687, %v1687
  %v1832 = vpack.c.b16 %v1688, %v1688
  %v1833 = vpack.c.b16 %v1689, %v1689
  %v1834 = vpack.c.b16 %v1690, %v1690
  %v1835 = vpack.c.b16 %v1691, %v1691
  %v1836 = vpack.c.b16 %v1692, %v1692
  %v1837 = vpack.c.b16 %v1693, %v1693
  %v1838 = vpack.c.b16 %v1694, %v1694
  %v1839 = vpack.c.b16 %v1695, %v1695
  %v1840 = vpack.c.b16 %v1696, %v1696
  %v1841 = vpack.c.b16 %v1697, %v1697
  %v1842 = vpack.c.b16 %v1698, %v1698
  %v1843 = vpack.c.b16 %v1699, %v1699
  %v1844 = vpack.c.b16 %v1700, %v1700
  %v1845 = vpack.c.b16 %v1701, %v1701
  %v1846 = vpack.c.b16 %v1702, %v1702
  %v1847 = vpack.c.b16 %v1703, %v1703
  %v1848 = vpack.c.b16 %v1704, %v1704
  %v1849 = vpack.c.b16 %v1705, %v1705
  %v1850 = vpack.c.b16 %v1706, %v1706
  %v1851 = vpack.c.b16 %v1707, %v1707
  %v1852 = vpack.c.b16 %v1708, %v1708
  %v1853 = vpack.c.b16 %v1709, %v1709
  %v1854 = vpack.c.b16 %v1710, %v1710
  %v1855 = vpack.c.b16 %v1711, %v1711
  %v1856 = vpack.c.b16 %v1712, %v1712
  %v1857 = vpack.c.b16 %v1713, %v1713
  %v1858 = vpack.c.b16 %v1714, %v1714
  %v1859 = vpack.c.b16 %v1715, %v1715
  %v1860 = vpack.c.b16 %v1716, %v1716
  %v1861 = vpack.c.b16 %v1717, %v1717
  %v1862 = vpack.c.b16 %v1718, %v1718
  %v1863 = vpack.c.b16 %v1719, %v1719
  %v1864 = vpack.c.b16 %v1720, %v1720
  %v1865 = vpack.c.b16 %v1721, %v1721
  %v1866 = vpack.c.b16 %v1722, %v1722
  %v1867 = vpack.c.b16 %v1723, %v1723
  %v1868 = vpack.c.b16 %v1724, %v1724
  %v1869 = vpack.c.b16 %v1725, %v1725
  %v1870 = vpack.c.b16 %v1726, %v1726
  %v1871 = vpack.c.b16 %v1727, %v1727
  %v1872 = vpack.c.b16 %v1728, %v1728
  %v1873 = vpack.c.b16 %v1729, %v1729
  %v1874 = vpack.c.b16 %v1730, %v1730
  %v1875 = vpack.c.b16 %v1731, %v1731
  %v1876 = vpack.c.b16 %v1732, %v1732
  %v1877 = vpack.c.b16 %v1733, %v1733
  %v1878 = vpack.c.b16 %v1734, %v1734
  %v1879 = vpack.c.b16 %v1735, %v1735
  %v1880 = vpack.c.b16 %v1736, %v1736
  %v1881 = vpack.c.b16 %v1737, %v1737
  %v1882 = vpack.c.b16 %v1738, %v1738
  %v1883 = vpack.c.b16 %v1739, %v1739
  %v1884 = vpack.c.b16 %v1740, %v1740
  %v1885 = vpack.c.b16 %v1741, %v1741
  %v1886 = vpack.c.b16 %v1742, %v1742
  %v1887 = vpack.c.b16 %v1743, %v1743
  %v1888 = vpack.c.b16 %v1744, %v1744
  %v1889 = vpack.c.b16 %v1745, %v1745
  %v1890 = vpack.c.b16 %v1746, %v1746
  %v1891 = vpack.c.b16 %v1747, %v1747
  %v1892 = vpack.c.b16 %v1748, %v1748
  %v1893 = vpack.c.b16 %v1749, %v1749
  %v1894 = vpack.c.b16 %v1750, %v1750
  %v1895 = vpack.c.b16 %v1751, %v1751
  %v1896 = vpack.c.b16 %v1752, %v1752
  %v1897 = vpack.c.b16 %v1753, %v1753
  %v1898 = vpack.c.b16 %v1754, %v1754
  %v1899 = vpack.c.b16 %v1755, %v1755
  %v1900 = vpack.c.b16 %v1756, %v1756
  %v1901 = vpack.c.b16 %v1757, %v1757
  %v1902 = vpack.c.b16 %v1758, %v1758
  %v1903 = vpack.c.b16 %v1759, %v1759
  %v1904 = vpack.c.b16 %v1760, %v1760
  %v1905 = vpack.c.b16 %v1761, %v1761
  %v1906 = vpack.c.b16 %v1762, %v1762
  %v1907 = vpack.c.b16 %v1763, %v1763
  %v1908 = vpack.c.b16 %v1764, %v1764
  %v1909 = vpack.c.b16 %v1765, %v1765
  %v1910 = vpack.c.b16 %v1766, %v1766
  %v1911 = vpack.c.b16 %v1767, %v1767
  %v1912 = vpack.c.b16 %v1768, %v1768
  %v1913 = vpack.c.b16 %v1769, %v1769
  %v1914 = vpack.c.b16 %v1770, %v1770
  %v1915 = vpack.c.b16 %v1771, %v1771
  %v1916 = vpack.c.b16 %v1772, %v1772
  %v1917 = vpack.c.b16 %v1773, %v1773
  %v1918 = vpack.c.b16 %v1774, %v1774
  %v1919 = vpack.c.b16 %v1775, %v1775
  %v1920 = vpack.c.b16 %v1776, %v1776
  %v1921 = vpack.c.b16 %v1777, %v1777
  %v1922 = vpack.c.b16 %v1778, %v1778
  %v1923 = vpack.c.b16 %v1779, %v1779
  %v1924 = vpack.c.b16 %v1780, %v1780
  %v1925 = vpack.c.b16 %v1781, %v1781
  %v1926 = vpack.c.b16 %v1782, %v1782
  %v1927 = vpack.c.b16 %v1783, %v1783
  %v1928 = vpack.c.b16 %v1784, %v1784
  %v1929 = vpack.c.b16 %v1785, %v1785
  %v1930 = vpack.c.b16 %v1786, %v1786
  %v1931 = vpack.c.b16 %v1787, %v1787
  %v1932 = vpack.c.b16 %v1788, %v1788
  %v1933 = vpack.c.b16 %v1789, %v1789
  %v1934 = vpack.c.b16 %v1790, %v1790
  %v1935 = vpack.c.b16 %v1791, %v1791
  %v1936 = vpack.c.b16 %v1792, %v1792
  %v1937 = vpack.c.b16 %v1793, %v1793
  %v1938 = vpack.c.b16 %v1794, %v1794
  %v1939 = vpack.c.b16 %v1795, %v1795
  %v1940 = vpack.c.b16 %v1796, %v1796
  %v1941 = vpack.c.b16 %v1797, %v1797
  %vm2086 = vcmask 257024
  %2087 = vst.msk [vmem:[%s3] sm:$0xf] %vm2086, %v1798
  %2088 = vst.msk [vmem:[%s3 + $0x4] sm:$0xf] %vm2086, %v1799
  %2089 = vst.msk [vmem:[%s3 + $0x8] sm:$0xf] %vm2086, %v1800
  %2090 = vst.msk [vmem:[%s3 + $0xc] sm:$0xf] %vm2086, %v1801
  %2091 = vst.msk [vmem:[%s3 + $0x10] sm:$0xf] %vm2086, %v1802
  %2092 = vst.msk [vmem:[%s3 + $0x14] sm:$0xf] %vm2086, %v1803
  %2093 = vst.msk [vmem:[%s3 + $0x18] sm:$0xf] %vm2086, %v1804
  %2094 = vst.msk [vmem:[%s3 + $0x1c] sm:$0xf] %vm2086, %v1805
  %2095 = vst.msk [vmem:[%s3 + $0x20] sm:$0xf] %vm2086, %v1806
  %2096 = vst.msk [vmem:[%s3 + $0x24] sm:$0xf] %vm2086, %v1807
  %2097 = vst.msk [vmem:[%s3 + $0x28] sm:$0xf] %vm2086, %v1808
  %2098 = vst.msk [vmem:[%s3 + $0x2c] sm:$0xf] %vm2086, %v1809
  %2099 = vst.msk [vmem:[%s3 + $0x30] sm:$0xf] %vm2086, %v1810
  %2100 = vst.msk [vmem:[%s3 + $0x34] sm:$0xf] %vm2086, %v1811
  %2101 = vst.msk [vmem:[%s3 + $0x38] sm:$0xf] %vm2086, %v1812
  %2102 = vst.msk [vmem:[%s3 + $0x3c] sm:$0xf] %vm2086, %v1813
  %2103 = vst.msk [vmem:[%s3 + $0x40] sm:$0xf] %vm2086, %v1814
  %2104 = vst.msk [vmem:[%s3 + $0x44] sm:$0xf] %vm2086, %v1815
  %2105 = vst.msk [vmem:[%s3 + $0x48] sm:$0xf] %vm2086, %v1816
  %2106 = vst.msk [vmem:[%s3 + $0x4c] sm:$0xf] %vm2086, %v1817
  %2107 = vst.msk [vmem:[%s3 + $0x50] sm:$0xf] %vm2086, %v1818
  %2108 = vst.msk [vmem:[%s3 + $0x54] sm:$0xf] %vm2086, %v1819
  %2109 = vst.msk [vmem:[%s3 + $0x58] sm:$0xf] %vm2086, %v1820
  %2110 = vst.msk [vmem:[%s3 + $0x5c] sm:$0xf] %vm2086, %v1821
  %2111 = vst.msk [vmem:[%s3 + $0x60] sm:$0xf] %vm2086, %v1822
  %2112 = vst.msk [vmem:[%s3 + $0x64] sm:$0xf] %vm2086, %v1823
  %2113 = vst.msk [vmem:[%s3 + $0x68] sm:$0xf] %vm2086, %v1824
  %2114 = vst.msk [vmem:[%s3 + $0x6c] sm:$0xf] %vm2086, %v1825
  %2115 = vst.msk [vmem:[%s3 + $0x70] sm:$0xf] %vm2086, %v1826
  %2116 = vst.msk [vmem:[%s3 + $0x74] sm:$0xf] %vm2086, %v1827
  %2117 = vst.msk [vmem:[%s3 + $0x78] sm:$0xf] %vm2086, %v1828
  %2118 = vst.msk [vmem:[%s3 + $0x7c] sm:$0xf] %vm2086, %v1829
  %2119 = vst.msk [vmem:[%s3 + $0x80] sm:$0xf] %vm2086, %v1830
  %2120 = vst.msk [vmem:[%s3 + $0x84] sm:$0xf] %vm2086, %v1831
  %2121 = vst.msk [vmem:[%s3 + $0x88] sm:$0xf] %vm2086, %v1832
  %2122 = vst.msk [vmem:[%s3 + $0x8c] sm:$0xf] %vm2086, %v1833
  %2123 = vst.msk [vmem:[%s3 + $0x90] sm:$0xf] %vm2086, %v1834
  %2124 = vst.msk [vmem:[%s3 + $0x94] sm:$0xf] %vm2086, %v1835
  %2125 = vst.msk [vmem:[%s3 + $0x98] sm:$0xf] %vm2086, %v1836
  %2126 = vst.msk [vmem:[%s3 + $0x9c] sm:$0xf] %vm2086, %v1837
  %2127 = vst.msk [vmem:[%s3 + $0xa0] sm:$0xf] %vm2086, %v1838
  %2128 = vst.msk [vmem:[%s3 + $0xa4] sm:$0xf] %vm2086, %v1839
  %2129 = vst.msk [vmem:[%s3 + $0xa8] sm:$0xf] %vm2086, %v1840
  %2130 = vst.msk [vmem:[%s3 + $0xac] sm:$0xf] %vm2086, %v1841
  %2131 = vst.msk [vmem:[%s3 + $0xb0] sm:$0xf] %vm2086, %v1842
  %2132 = vst.msk [vmem:[%s3 + $0xb4] sm:$0xf] %vm2086, %v1843
  %2133 = vst.msk [vmem:[%s3 + $0xb8] sm:$0xf] %vm2086, %v1844
  %2134 = vst.msk [vmem:[%s3 + $0xbc] sm:$0xf] %vm2086, %v1845
  %2135 = vst.msk [vmem:[%s3 + $0xc0] sm:$0xf] %vm2086, %v1846
  %2136 = vst.msk [vmem:[%s3 + $0xc4] sm:$0xf] %vm2086, %v1847
  %2137 = vst.msk [vmem:[%s3 + $0xc8] sm:$0xf] %vm2086, %v1848
  %2138 = vst.msk [vmem:[%s3 + $0xcc] sm:$0xf] %vm2086, %v1849
  %2139 = vst.msk [vmem:[%s3 + $0xd0] sm:$0xf] %vm2086, %v1850
  %2140 = vst.msk [vmem:[%s3 + $0xd4] sm:$0xf] %vm2086, %v1851
  %2141 = vst.msk [vmem:[%s3 + $0xd8] sm:$0xf] %vm2086, %v1852
  %2142 = vst.msk [vmem:[%s3 + $0xdc] sm:$0xf] %vm2086, %v1853
  %2143 = vst.msk [vmem:[%s3 + $0xe0] sm:$0xf] %vm2086, %v1854
  %2144 = vst.msk [vmem:[%s3 + $0xe4] sm:$0xf] %vm2086, %v1855
  %2145 = vst.msk [vmem:[%s3 + $0xe8] sm:$0xf] %vm2086, %v1856
  %2146 = vst.msk [vmem:[%s3 + $0xec] sm:$0xf] %vm2086, %v1857
  %2147 = vst.msk [vmem:[%s3 + $0xf0] sm:$0xf] %vm2086, %v1858
  %2148 = vst.msk [vmem:[%s3 + $0xf4] sm:$0xf] %vm2086, %v1859
  %2149 = vst.msk [vmem:[%s3 + $0xf8] sm:$0xf] %vm2086, %v1860
  %2150 = vst.msk [vmem:[%s3 + $0xfc] sm:$0xf] %vm2086, %v1861
  %2151 = vst.msk [vmem:[%s3 + $0x100] sm:$0xf] %vm2086, %v1862
  %2152 = vst.msk [vmem:[%s3 + $0x104] sm:$0xf] %vm2086, %v1863
  %2153 = vst.msk [vmem:[%s3 + $0x108] sm:$0xf] %vm2086, %v1864
  %2154 = vst.msk [vmem:[%s3 + $0x10c] sm:$0xf] %vm2086, %v1865
  %2155 = vst.msk [vmem:[%s3 + $0x110] sm:$0xf] %vm2086, %v1866
  %2156 = vst.msk [vmem:[%s3 + $0x114] sm:$0xf] %vm2086, %v1867
  %2157 = vst.msk [vmem:[%s3 + $0x118] sm:$0xf] %vm2086, %v1868
  %2158 = vst.msk [vmem:[%s3 + $0x11c] sm:$0xf] %vm2086, %v1869
  %2159 = vst.msk [vmem:[%s3 + $0x120] sm:$0xf] %vm2086, %v1870
  %2160 = vst.msk [vmem:[%s3 + $0x124] sm:$0xf] %vm2086, %v1871
  %2161 = vst.msk [vmem:[%s3 + $0x128] sm:$0xf] %vm2086, %v1872
  %2162 = vst.msk [vmem:[%s3 + $0x12c] sm:$0xf] %vm2086, %v1873
  %2163 = vst.msk [vmem:[%s3 + $0x130] sm:$0xf] %vm2086, %v1874
  %2164 = vst.msk [vmem:[%s3 + $0x134] sm:$0xf] %vm2086, %v1875
  %2165 = vst.msk [vmem:[%s3 + $0x138] sm:$0xf] %vm2086, %v1876
  %2166 = vst.msk [vmem:[%s3 + $0x13c] sm:$0xf] %vm2086, %v1877
  %2167 = vst.msk [vmem:[%s3 + $0x140] sm:$0xf] %vm2086, %v1878
  %2168 = vst.msk [vmem:[%s3 + $0x144] sm:$0xf] %vm2086, %v1879
  %2169 = vst.msk [vmem:[%s3 + $0x148] sm:$0xf] %vm2086, %v1880
  %2170 = vst.msk [vmem:[%s3 + $0x14c] sm:$0xf] %vm2086, %v1881
  %2171 = vst.msk [vmem:[%s3 + $0x150] sm:$0xf] %vm2086, %v1882
  %2172 = vst.msk [vmem:[%s3 + $0x154] sm:$0xf] %vm2086, %v1883
  %2173 = vst.msk [vmem:[%s3 + $0x158] sm:$0xf] %vm2086, %v1884
  %2174 = vst.msk [vmem:[%s3 + $0x15c] sm:$0xf] %vm2086, %v1885
  %2175 = vst.msk [vmem:[%s3 + $0x160] sm:$0xf] %vm2086, %v1886
  %2176 = vst.msk [vmem:[%s3 + $0x164] sm:$0xf] %vm2086, %v1887
  %2177 = vst.msk [vmem:[%s3 + $0x168] sm:$0xf] %vm2086, %v1888
  %2178 = vst.msk [vmem:[%s3 + $0x16c] sm:$0xf] %vm2086, %v1889
  %2179 = vst.msk [vmem:[%s3 + $0x170] sm:$0xf] %vm2086, %v1890
  %2180 = vst.msk [vmem:[%s3 + $0x174] sm:$0xf] %vm2086, %v1891
  %2181 = vst.msk [vmem:[%s3 + $0x178] sm:$0xf] %vm2086, %v1892
  %2182 = vst.msk [vmem:[%s3 + $0x17c] sm:$0xf] %vm2086, %v1893
  %2183 = vst.msk [vmem:[%s3 + $0x180] sm:$0xf] %vm2086, %v1894
  %2184 = vst.msk [vmem:[%s3 + $0x184] sm:$0xf] %vm2086, %v1895
  %2185 = vst.msk [vmem:[%s3 + $0x188] sm:$0xf] %vm2086, %v1896
  %2186 = vst.msk [vmem:[%s3 + $0x18c] sm:$0xf] %vm2086, %v1897
  %2187 = vst.msk [vmem:[%s3 + $0x190] sm:$0xf] %vm2086, %v1898
  %2188 = vst.msk [vmem:[%s3 + $0x194] sm:$0xf] %vm2086, %v1899
  %2189 = vst.msk [vmem:[%s3 + $0x198] sm:$0xf] %vm2086, %v1900
  %2190 = vst.msk [vmem:[%s3 + $0x19c] sm:$0xf] %vm2086, %v1901
  %2191 = vst.msk [vmem:[%s3 + $0x1a0] sm:$0xf] %vm2086, %v1902
  %2192 = vst.msk [vmem:[%s3 + $0x1a4] sm:$0xf] %vm2086, %v1903
  %2193 = vst.msk [vmem:[%s3 + $0x1a8] sm:$0xf] %vm2086, %v1904
  %2194 = vst.msk [vmem:[%s3 + $0x1ac] sm:$0xf] %vm2086, %v1905
  %2195 = vst.msk [vmem:[%s3 + $0x1b0] sm:$0xf] %vm2086, %v1906
  %2196 = vst.msk [vmem:[%s3 + $0x1b4] sm:$0xf] %vm2086, %v1907
  %2197 = vst.msk [vmem:[%s3 + $0x1b8] sm:$0xf] %vm2086, %v1908
  %2198 = vst.msk [vmem:[%s3 + $0x1bc] sm:$0xf] %vm2086, %v1909
  %2199 = vst.msk [vmem:[%s3 + $0x1c0] sm:$0xf] %vm2086, %v1910
  %2200 = vst.msk [vmem:[%s3 + $0x1c4] sm:$0xf] %vm2086, %v1911
  %2201 = vst.msk [vmem:[%s3 + $0x1c8] sm:$0xf] %vm2086, %v1912
  %2202 = vst.msk [vmem:[%s3 + $0x1cc] sm:$0xf] %vm2086, %v1913
  %2203 = vst.msk [vmem:[%s3 + $0x1d0] sm:$0xf] %vm2086, %v1914
  %2204 = vst.msk [vmem:[%s3 + $0x1d4] sm:$0xf] %vm2086, %v1915
  %2205 = vst.msk [vmem:[%s3 + $0x1d8] sm:$0xf] %vm2086, %v1916
  %2206 = vst.msk [vmem:[%s3 + $0x1dc] sm:$0xf] %vm2086, %v1917
  %2207 = vst.msk [vmem:[%s3 + $0x1e0] sm:$0xf] %vm2086, %v1918
  %2208 = vst.msk [vmem:[%s3 + $0x1e4] sm:$0xf] %vm2086, %v1919
  %2209 = vst.msk [vmem:[%s3 + $0x1e8] sm:$0xf] %vm2086, %v1920
  %2210 = vst.msk [vmem:[%s3 + $0x1ec] sm:$0xf] %vm2086, %v1921
  %2211 = vst.msk [vmem:[%s3 + $0x1f0] sm:$0xf] %vm2086, %v1922
  %2212 = vst.msk [vmem:[%s3 + $0x1f4] sm:$0xf] %vm2086, %v1923
  %2213 = vst.msk [vmem:[%s3 + $0x1f8] sm:$0xf] %vm2086, %v1924
  %2214 = vst.msk [vmem:[%s3 + $0x1fc] sm:$0xf] %vm2086, %v1925
  %2215 = vst.msk [vmem:[%s3 + $0x200] sm:$0xf] %vm2086, %v1926
  %2216 = vst.msk [vmem:[%s3 + $0x204] sm:$0xf] %vm2086, %v1927
  %2217 = vst.msk [vmem:[%s3 + $0x208] sm:$0xf] %vm2086, %v1928
  %2218 = vst.msk [vmem:[%s3 + $0x20c] sm:$0xf] %vm2086, %v1929
  %2219 = vst.msk [vmem:[%s3 + $0x210] sm:$0xf] %vm2086, %v1930
  %2220 = vst.msk [vmem:[%s3 + $0x214] sm:$0xf] %vm2086, %v1931
  %2221 = vst.msk [vmem:[%s3 + $0x218] sm:$0xf] %vm2086, %v1932
  %2222 = vst.msk [vmem:[%s3 + $0x21c] sm:$0xf] %vm2086, %v1933
  %2223 = vst.msk [vmem:[%s3 + $0x220] sm:$0xf] %vm2086, %v1934
  %2224 = vst.msk [vmem:[%s3 + $0x224] sm:$0xf] %vm2086, %v1935
  %2225 = vst.msk [vmem:[%s3 + $0x228] sm:$0xf] %vm2086, %v1936
  %2226 = vst.msk [vmem:[%s3 + $0x22c] sm:$0xf] %vm2086, %v1937
  %2227 = vst.msk [vmem:[%s3 + $0x230] sm:$0xf] %vm2086, %v1938
  %2228 = vst.msk [vmem:[%s3 + $0x234] sm:$0xf] %vm2086, %v1939
  %2229 = vst.msk [vmem:[%s3 + $0x238] sm:$0xf] %vm2086, %v1940
  %2230 = vst.msk [vmem:[%s3 + $0x23c] sm:$0xf] %vm2086, %v1941
  // Predicated region
  $region14: #{state_tracker_forward.4} parent=0 // pred_check
    _
  $region15: #{state_tracker_forward.4} parent=0 // pred_check_branch
    %2232 = sbr.rel (0) target = $region17
  $region16: #{state_tracker_forward.4} parent=0 // pred_region
    _
  $region17: #{state_tracker_forward.4} parent=0 // pred_fallthru
    _
  // Predicated region
  $region18: #{state_tracker_forward.4} parent=0 // pred_check
    _
  $region19: #{state_tracker_forward.4} parent=0 // pred_check_branch
    %2234 = sbr.rel (0) target = $region21
  $region20: #{state_tracker_forward.4} parent=0 // pred_region
    _
  $region21: #{state_tracker_forward.4} parent=0 // pred_fallthru
    _

// kernel: state_tracker_forward.5
$region0: #{state_tracker_forward.5}
  #allocation0 [shape = 'u32[]', space=smem, size = 0x4, offset = 0x4, fixed_abs, tag = 'smem constant byte address 0x4 - core index']
  #allocation1 [shape = 'u32[144,128]{1,0:T(1,128)}', space=vmem, size = 0x12000, scoped, tag = 'internal scratch']
  %s0 = inlined_call_operand.vmem [shape: bf16[288,288], index: 0, kind: input, shape index: {}]
  %s1 = inlined_call_operand.vmem [shape: bf16[288,64], index: 1, kind: input, shape index: {}]
  %s2 = inlined_call_operand.vmem [shape: f32[1,64], index: 2, kind: input, shape index: {}]
  %s3 = inlined_call_operand.vmem [shape: bf16[64,32], index: 3, kind: input, shape index: {}]
  %s4 = inlined_call_operand.vmem [shape: f32[1,32], index: 4, kind: input, shape index: {}]
  %s5 = inlined_call_operand.vmem [shape: bf16[288,32], index: 5, kind: output, shape index: {}]
  %s6 = sld [smem:[#allocation0]]
  $region30: #{state_tracker_forward.5} parent=0
    _
  %s8 = ssub.s32 1, %s6
  %s9 = scalar_select 0, %s8, %s6
  // Predicated region
  $region2: #{state_tracker_forward.5} parent=0 // pred_check
    _
  $region3: #{state_tracker_forward.5} parent=0 // pred_check_branch
    %11 = sbr.rel (0) target = $region5
  $region4: #{state_tracker_forward.5} parent=0 // pred_region
    _
  $region5: #{state_tracker_forward.5} parent=0 // pred_fallthru
    _
  // Predicated region
  $region6: #{state_tracker_forward.5} parent=0 // pred_check
    _
  $region7: #{state_tracker_forward.5} parent=0 // pred_check_branch
    %13 = sbr.rel (0) target = $region9
  $region8: #{state_tracker_forward.5} parent=0 // pred_region
    _
  $region9: #{state_tracker_forward.5} parent=0 // pred_fallthru
    _
  // Predicated region
  $region10: #{state_tracker_forward.5} parent=0 // pred_check
    _
  $region11: #{state_tracker_forward.5} parent=0 // pred_check_branch
    %15 = sbr.rel (0) target = $region13
  $region12: #{state_tracker_forward.5} parent=0 // pred_region
    _
  $region13: #{state_tracker_forward.5} parent=0 // pred_fallthru
    _
  // Predicated region
  $region14: #{state_tracker_forward.5} parent=0 // pred_check
    _
  $region15: #{state_tracker_forward.5} parent=0 // pred_check_branch
    %17 = sbr.rel (0) target = $region17
  $region16: #{state_tracker_forward.5} parent=0 // pred_region
    _
  $region17: #{state_tracker_forward.5} parent=0 // pred_fallthru
    _
  // Predicated region
  $region18: #{state_tracker_forward.5} parent=0 // pred_check
    _
  $region19: #{state_tracker_forward.5} parent=0 // pred_check_branch
    %19 = sbr.rel (0) target = $region21
  $region20: #{state_tracker_forward.5} parent=0 // pred_region
    _
  $region21: #{state_tracker_forward.5} parent=0 // pred_fallthru
    _
  %v21 = vld [vmem:[%s0] sm:$0xff]
  %v22 = vld [vmem:[%s0 + $0x8] sm:$0xf]
  %v23 = vld [vmem:[%s0 + $0xc] sm:$0xff]
  %v24 = vld [vmem:[%s0 + $0x14] sm:$0xf]
  %v25 = vld [vmem:[%s0 + $0x18] sm:$0xff]
  %v26 = vld [vmem:[%s0 + $0x20] sm:$0xf]
  %v27 = vld [vmem:[%s0 + $0x24] sm:$0xff]
  %v28 = vld [vmem:[%s0 + $0x2c] sm:$0xf]
  %v29 = vld [vmem:[%s0 + $0x30] sm:$0xff]
  %v30 = vld [vmem:[%s0 + $0x38] sm:$0xf]
  %v31 = vld [vmem:[%s0 + $0x3c] sm:$0xff]
  %v32 = vld [vmem:[%s0 + $0x44] sm:$0xf]
  %v33 = vld [vmem:[%s0 + $0x48] sm:$0xff]
  %v34 = vld [vmem:[%s0 + $0x50] sm:$0xf]
  %v35 = vld [vmem:[%s0 + $0x54] sm:$0xff]
  %v36 = vld [vmem:[%s0 + $0x5c] sm:$0xf]
  %v37 = vld [vmem:[%s0 + $0x60] sm:$0xff]
  %v38 = vld [vmem:[%s0 + $0x68] sm:$0xf]
  %v39 = vld [vmem:[%s0 + $0x6c] sm:$0xff]
  %v40 = vld [vmem:[%s0 + $0x74] sm:$0xf]
  %v41 = vld [vmem:[%s0 + $0x78] sm:$0xff]
  %v42 = vld [vmem:[%s0 + $0x80] sm:$0xf]
  %v43 = vld [vmem:[%s0 + $0x84] sm:$0xff]
  %v44 = vld [vmem:[%s0 + $0x8c] sm:$0xf]
  %v45 = vld [vmem:[%s0 + $0x90] sm:$0xff]
  %v46 = vld [vmem:[%s0 + $0x98] sm:$0xf]
  %v47 = vld [vmem:[%s0 + $0x9c] sm:$0xff]
  %v48 = vld [vmem:[%s0 + $0xa4] sm:$0xf]
  %v49 = vld [vmem:[%s0 + $0xa8] sm:$0xff]
  %v50 = vld [vmem:[%s0 + $0xb0] sm:$0xf]
  %v51 = vld [vmem:[%s0 + $0xb4] sm:$0xff]
  %v52 = vld [vmem:[%s0 + $0xbc] sm:$0xf]
  %v53 = vld [vmem:[%s0 + $0xc0] sm:$0xff]
  %v54 = vld [vmem:[%s0 + $0xc8] sm:$0xf]
  %v55 = vld [vmem:[%s0 + $0xcc] sm:$0xff]
  %v56 = vld [vmem:[%s0 + $0xd4] sm:$0xf]
  %v57 = vld [vmem:[%s0 + $0xd8] sm:$0xff]
  %v58 = vld [vmem:[%s0 + $0xe0] sm:$0xf]
  %v59 = vld [vmem:[%s0 + $0xe4] sm:$0xff]
  %v60 = vld [vmem:[%s0 + $0xec] sm:$0xf]
  %v61 = vld [vmem:[%s0 + $0xf0] sm:$0xff]
  %v62 = vld [vmem:[%s0 + $0xf8] sm:$0xf]
  %v63 = vld [vmem:[%s0 + $0xfc] sm:$0xff]
  %v64 = vld [vmem:[%s0 + $0x104] sm:$0xf]
  %v65 = vld [vmem:[%s0 + $0x108] sm:$0xff]
  %v66 = vld [vmem:[%s0 + $0x110] sm:$0xf]
  %v67 = vld [vmem:[%s0 + $0x114] sm:$0xff]
  %v68 = vld [vmem:[%s0 + $0x11c] sm:$0xf]
  %v69 = vld [vmem:[%s0 + $0x120] sm:$0xff]
  %v70 = vld [vmem:[%s0 + $0x128] sm:$0xf]
  %v71 = vld [vmem:[%s0 + $0x12c] sm:$0xff]
  %v72 = vld [vmem:[%s0 + $0x134] sm:$0xf]
  %v73 = vld [vmem:[%s0 + $0x138] sm:$0xff]
  %v74 = vld [vmem:[%s0 + $0x140] sm:$0xf]
  %v75 = vld [vmem:[%s0 + $0x144] sm:$0xff]
  %v76 = vld [vmem:[%s0 + $0x14c] sm:$0xf]
  %v77 = vld [vmem:[%s0 + $0x150] sm:$0xff]
  %v78 = vld [vmem:[%s0 + $0x158] sm:$0xf]
  %v79 = vld [vmem:[%s0 + $0x15c] sm:$0xff]
  %v80 = vld [vmem:[%s0 + $0x164] sm:$0xf]
  %v81 = vld [vmem:[%s0 + $0x168] sm:$0xff]
  %v82 = vld [vmem:[%s0 + $0x170] sm:$0xf]
  %v83 = vld [vmem:[%s0 + $0x174] sm:$0xff]
  %v84 = vld [vmem:[%s0 + $0x17c] sm:$0xf]
  %v85 = vld [vmem:[%s0 + $0x180] sm:$0xff]
  %v86 = vld [vmem:[%s0 + $0x188] sm:$0xf]
  %v87 = vld [vmem:[%s0 + $0x18c] sm:$0xff]
  %v88 = vld [vmem:[%s0 + $0x194] sm:$0xf]
  %v89 = vld [vmem:[%s0 + $0x198] sm:$0xff]
  %v90 = vld [vmem:[%s0 + $0x1a0] sm:$0xf]
  %v91 = vld [vmem:[%s0 + $0x1a4] sm:$0xff]
  %v92 = vld [vmem:[%s0 + $0x1ac] sm:$0xf]
  %v93 = vld [vmem:[%s1] sm:$0xf]
  %v94 = vld [vmem:[%s1 + $0x4] sm:$0xf]
  %v95 = vld [vmem:[%s1 + $0x8] sm:$0xf]
  %v96 = vld [vmem:[%s1 + $0xc] sm:$0xf]
  %v97 = vld [vmem:[%s1 + $0x10] sm:$0xf]
  %v98 = vld [vmem:[%s1 + $0x14] sm:$0xf]
  %v99 = vld [vmem:[%s1 + $0x18] sm:$0xf]
  %v100 = vld [vmem:[%s1 + $0x1c] sm:$0xf]
  %v101 = vld [vmem:[%s1 + $0x20] sm:$0xf]
  %v102 = vld [vmem:[%s1 + $0x24] sm:$0xf]
  %v103 = vld [vmem:[%s1 + $0x28] sm:$0xf]
  %v104 = vld [vmem:[%s1 + $0x2c] sm:$0xf]
  %v105 = vld [vmem:[%s1 + $0x30] sm:$0xf]
  %v106 = vld [vmem:[%s1 + $0x34] sm:$0xf]
  %v107 = vld [vmem:[%s1 + $0x38] sm:$0xf]
  %v108 = vld [vmem:[%s1 + $0x3c] sm:$0xf]
  %v109 = vld [vmem:[%s1 + $0x40] sm:$0xf]
  %v110 = vld [vmem:[%s1 + $0x44] sm:$0xf]
  %v111 = vld [vmem:[%s1 + $0x48] sm:$0xf]
  %v112 = vld [vmem:[%s1 + $0x4c] sm:$0xf]
  %v113 = vld [vmem:[%s1 + $0x50] sm:$0xf]
  %v114 = vld [vmem:[%s1 + $0x54] sm:$0xf]
  %v115 = vld [vmem:[%s1 + $0x58] sm:$0xf]
  %v116 = vld [vmem:[%s1 + $0x5c] sm:$0xf]
  %v117 = vld [vmem:[%s1 + $0x60] sm:$0xf]
  %v118 = vld [vmem:[%s1 + $0x64] sm:$0xf]
  %v119 = vld [vmem:[%s1 + $0x68] sm:$0xf]
  %v120 = vld [vmem:[%s1 + $0x6c] sm:$0xf]
  %v121 = vld [vmem:[%s1 + $0x70] sm:$0xf]
  %v122 = vld [vmem:[%s1 + $0x74] sm:$0xf]
  %v123 = vld [vmem:[%s1 + $0x78] sm:$0xf]
  %v124 = vld [vmem:[%s1 + $0x7c] sm:$0xf]
  %v125 = vld [vmem:[%s1 + $0x80] sm:$0xf]
  %v126 = vld [vmem:[%s1 + $0x84] sm:$0xf]
  %v127 = vld [vmem:[%s1 + $0x88] sm:$0xf]
  %v128 = vld [vmem:[%s1 + $0x8c] sm:$0xf]
  %v129 = vld [vmem:[%s2] sm:$0x1]
  %v131 = vlaneseq
  %v132 = vshrl.u32 %v131, 7
  %v133 = vsub.s32 0, %v132
  %v134 = vrot.slane %v129, %v133
  %v208 = vunpack.c.l.b16 %v21
  %v209 = vunpack.c.h.b16 %v21
  %v210 = vunpack.c.l.b16 %v22
  %v211 = vunpack.c.l.b16 %v23
  %v212 = vunpack.c.h.b16 %v23
  %v213 = vunpack.c.l.b16 %v24
  %v214 = vunpack.c.l.b16 %v25
  %v215 = vunpack.c.h.b16 %v25
  %v216 = vunpack.c.l.b16 %v26
  %v217 = vunpack.c.l.b16 %v27
  %v218 = vunpack.c.h.b16 %v27
  %v219 = vunpack.c.l.b16 %v28
  %v220 = vunpack.c.l.b16 %v29
  %v221 = vunpack.c.h.b16 %v29
  %v222 = vunpack.c.l.b16 %v30
  %v223 = vunpack.c.l.b16 %v31
  %v224 = vunpack.c.h.b16 %v31
  %v225 = vunpack.c.l.b16 %v32
  %v226 = vunpack.c.l.b16 %v33
  %v227 = vunpack.c.h.b16 %v33
  %v228 = vunpack.c.l.b16 %v34
  %v229 = vunpack.c.l.b16 %v35
  %v230 = vunpack.c.h.b16 %v35
  %v231 = vunpack.c.l.b16 %v36
  %v232 = vunpack.c.l.b16 %v37
  %v233 = vunpack.c.h.b16 %v37
  %v234 = vunpack.c.l.b16 %v38
  %v235 = vunpack.c.l.b16 %v39
  %v236 = vunpack.c.h.b16 %v39
  %v237 = vunpack.c.l.b16 %v40
  %v238 = vunpack.c.l.b16 %v41
  %v239 = vunpack.c.h.b16 %v41
  %v240 = vunpack.c.l.b16 %v42
  %v241 = vunpack.c.l.b16 %v43
  %v242 = vunpack.c.h.b16 %v43
  %v243 = vunpack.c.l.b16 %v44
  %v244 = vunpack.c.l.b16 %v45
  %v245 = vunpack.c.h.b16 %v45
  %v246 = vunpack.c.l.b16 %v46
  %v247 = vunpack.c.l.b16 %v47
  %v248 = vunpack.c.h.b16 %v47
  %v249 = vunpack.c.l.b16 %v48
  %v250 = vunpack.c.l.b16 %v49
  %v251 = vunpack.c.h.b16 %v49
  %v252 = vunpack.c.l.b16 %v50
  %v253 = vunpack.c.l.b16 %v51
  %v254 = vunpack.c.h.b16 %v51
  %v255 = vunpack.c.l.b16 %v52
  %v256 = vunpack.c.l.b16 %v53
  %v257 = vunpack.c.h.b16 %v53
  %v258 = vunpack.c.l.b16 %v54
  %v259 = vunpack.c.l.b16 %v55
  %v260 = vunpack.c.h.b16 %v55
  %v261 = vunpack.c.l.b16 %v56
  %v262 = vunpack.c.l.b16 %v57
  %v263 = vunpack.c.h.b16 %v57
  %v264 = vunpack.c.l.b16 %v58
  %v265 = vunpack.c.l.b16 %v59
  %v266 = vunpack.c.h.b16 %v59
  %v267 = vunpack.c.l.b16 %v60
  %v268 = vunpack.c.l.b16 %v61
  %v269 = vunpack.c.h.b16 %v61
  %v270 = vunpack.c.l.b16 %v62
  %v271 = vunpack.c.l.b16 %v63
  %v272 = vunpack.c.h.b16 %v63
  %v273 = vunpack.c.l.b16 %v64
  %v274 = vunpack.c.l.b16 %v65
  %v275 = vunpack.c.h.b16 %v65
  %v276 = vunpack.c.l.b16 %v66
  %v277 = vunpack.c.l.b16 %v67
  %v278 = vunpack.c.h.b16 %v67
  %v279 = vunpack.c.l.b16 %v68
  %v280 = vunpack.c.l.b16 %v69
  %v281 = vunpack.c.h.b16 %v69
  %v282 = vunpack.c.l.b16 %v70
  %v283 = vunpack.c.l.b16 %v71
  %v284 = vunpack.c.h.b16 %v71
  %v285 = vunpack.c.l.b16 %v72
  %v286 = vunpack.c.l.b16 %v73
  %v287 = vunpack.c.h.b16 %v73
  %v288 = vunpack.c.l.b16 %v74
  %v289 = vunpack.c.l.b16 %v75
  %v290 = vunpack.c.h.b16 %v75
  %v291 = vunpack.c.l.b16 %v76
  %v292 = vunpack.c.l.b16 %v77
  %v293 = vunpack.c.h.b16 %v77
  %v294 = vunpack.c.l.b16 %v78
  %v295 = vunpack.c.l.b16 %v79
  %v296 = vunpack.c.h.b16 %v79
  %v297 = vunpack.c.l.b16 %v80
  %v298 = vunpack.c.l.b16 %v81
  %v299 = vunpack.c.h.b16 %v81
  %v300 = vunpack.c.l.b16 %v82
  %v301 = vunpack.c.l.b16 %v83
  %v302 = vunpack.c.h.b16 %v83
  %v303 = vunpack.c.l.b16 %v84
  %v304 = vunpack.c.l.b16 %v85
  %v305 = vunpack.c.h.b16 %v85
  %v306 = vunpack.c.l.b16 %v86
  %v307 = vunpack.c.l.b16 %v87
  %v308 = vunpack.c.h.b16 %v87
  %v309 = vunpack.c.l.b16 %v88
  %v310 = vunpack.c.l.b16 %v89
  %v311 = vunpack.c.h.b16 %v89
  %v312 = vunpack.c.l.b16 %v90
  %v313 = vunpack.c.l.b16 %v91
  %v314 = vunpack.c.h.b16 %v91
  %v315 = vunpack.c.l.b16 %v92
  %v316 = vpack.c.b16 %v211, %v208
  %v317 = vpack.c.b16 %v212, %v209
  %v318 = vpack.c.b16 %v213, %v210
  %v319 = vpack.c.b16 %v217, %v214
  %v320 = vpack.c.b16 %v218, %v215
  %v321 = vpack.c.b16 %v219, %v216
  %v322 = vpack.c.b16 %v223, %v220
  %v323 = vpack.c.b16 %v224, %v221
  %v324 = vpack.c.b16 %v225, %v222
  %v325 = vpack.c.b16 %v229, %v226
  %v326 = vpack.c.b16 %v230, %v227
  %v327 = vpack.c.b16 %v231, %v228
  %v328 = vpack.c.b16 %v235, %v232
  %v329 = vpack.c.b16 %v236, %v233
  %v330 = vpack.c.b16 %v237, %v234
  %v331 = vpack.c.b16 %v241, %v238
  %v332 = vpack.c.b16 %v242, %v239
  %v333 = vpack.c.b16 %v243, %v240
  %v334 = vpack.c.b16 %v247, %v244
  %v335 = vpack.c.b16 %v248, %v245
  %v336 = vpack.c.b16 %v249, %v246
  %v337 = vpack.c.b16 %v253, %v250
  %v338 = vpack.c.b16 %v254, %v251
  %v339 = vpack.c.b16 %v255, %v252
  %v340 = vpack.c.b16 %v259, %v256
  %v341 = vpack.c.b16 %v260, %v257
  %v342 = vpack.c.b16 %v261, %v258
  %v343 = vpack.c.b16 %v265, %v262
  %v344 = vpack.c.b16 %v266, %v263
  %v345 = vpack.c.b16 %v267, %v264
  %v346 = vpack.c.b16 %v271, %v268
  %v347 = vpack.c.b16 %v272, %v269
  %v348 = vpack.c.b16 %v273, %v270
  %v349 = vpack.c.b16 %v277, %v274
  %v350 = vpack.c.b16 %v278, %v275
  %v351 = vpack.c.b16 %v279, %v276
  %v352 = vpack.c.b16 %v283, %v280
  %v353 = vpack.c.b16 %v284, %v281
  %v354 = vpack.c.b16 %v285, %v282
  %v355 = vpack.c.b16 %v289, %v286
  %v356 = vpack.c.b16 %v290, %v287
  %v357 = vpack.c.b16 %v291, %v288
  %v358 = vpack.c.b16 %v295, %v292
  %v359 = vpack.c.b16 %v296, %v293
  %v360 = vpack.c.b16 %v297, %v294
  %v361 = vpack.c.b16 %v301, %v298
  %v362 = vpack.c.b16 %v302, %v299
  %v363 = vpack.c.b16 %v303, %v300
  %v364 = vpack.c.b16 %v307, %v304
  %v365 = vpack.c.b16 %v308, %v305
  %v366 = vpack.c.b16 %v309, %v306
  %v367 = vpack.c.b16 %v313, %v310
  %v368 = vpack.c.b16 %v314, %v311
  %v369 = vpack.c.b16 %v315, %v312
  %v442 = vunpack.c.l.b16 %v93
  %v443 = vunpack.c.l.b16 %v94
  %v444 = vunpack.c.l.b16 %v95
  %v445 = vunpack.c.l.b16 %v96
  %v446 = vunpack.c.l.b16 %v97
  %v447 = vunpack.c.l.b16 %v98
  %v448 = vunpack.c.l.b16 %v99
  %v449 = vunpack.c.l.b16 %v100
  %v450 = vunpack.c.l.b16 %v101
  %v451 = vunpack.c.l.b16 %v102
  %v452 = vunpack.c.l.b16 %v103
  %v453 = vunpack.c.l.b16 %v104
  %v454 = vunpack.c.l.b16 %v105
  %v455 = vunpack.c.l.b16 %v106
  %v456 = vunpack.c.l.b16 %v107
  %v457 = vunpack.c.l.b16 %v108
  %v458 = vunpack.c.l.b16 %v109
  %v459 = vunpack.c.l.b16 %v110
  %v460 = vunpack.c.l.b16 %v111
  %v461 = vunpack.c.l.b16 %v112
  %v462 = vunpack.c.l.b16 %v113
  %v463 = vunpack.c.l.b16 %v114
  %v464 = vunpack.c.l.b16 %v115
  %v465 = vunpack.c.l.b16 %v116
  %v466 = vunpack.c.l.b16 %v117
  %v467 = vunpack.c.l.b16 %v118
  %v468 = vunpack.c.l.b16 %v119
  %v469 = vunpack.c.l.b16 %v120
  %v470 = vunpack.c.l.b16 %v121
  %v471 = vunpack.c.l.b16 %v122
  %v472 = vunpack.c.l.b16 %v123
  %v473 = vunpack.c.l.b16 %v124
  %v474 = vunpack.c.l.b16 %v125
  %v475 = vunpack.c.l.b16 %v126
  %v476 = vunpack.c.l.b16 %v127
  %v477 = vunpack.c.l.b16 %v128
  %v478 = vpack.c.b16 %v443, %v442
  %v479 = vpack.c.b16 %v445, %v444
  %v480 = vpack.c.b16 %v447, %v446
  %v481 = vpack.c.b16 %v449, %v448
  %v482 = vpack.c.b16 %v451, %v450
  %v483 = vpack.c.b16 %v453, %v452
  %v484 = vpack.c.b16 %v455, %v454
  %v485 = vpack.c.b16 %v457, %v456
  %v486 = vpack.c.b16 %v459, %v458
  %v487 = vpack.c.b16 %v461, %v460
  %v488 = vpack.c.b16 %v463, %v462
  %v489 = vpack.c.b16 %v465, %v464
  %v490 = vpack.c.b16 %v467, %v466
  %v491 = vpack.c.b16 %v469, %v468
  %v492 = vpack.c.b16 %v471, %v470
  %v493 = vpack.c.b16 %v473, %v472
  %v494 = vpack.c.b16 %v475, %v474
  %v495 = vpack.c.b16 %v477, %v476
  %vm514 = vcmask 261120
  %v516 = vsel %vm514, %v318, 0
  %v519 = vsel %vm514, %v321, 0
  %v522 = vsel %vm514, %v324, 0
  %v525 = vsel %vm514, %v327, 0
  %v528 = vsel %vm514, %v330, 0
  %v531 = vsel %vm514, %v333, 0
  %v534 = vsel %vm514, %v336, 0
  %v537 = vsel %vm514, %v339, 0
  %v540 = vsel %vm514, %v342, 0
  %v543 = vsel %vm514, %v345, 0
  %v546 = vsel %vm514, %v348, 0
  %v549 = vsel %vm514, %v351, 0
  %v552 = vsel %vm514, %v354, 0
  %v555 = vsel %vm514, %v357, 0
  %v558 = vsel %vm514, %v360, 0
  %v561 = vsel %vm514, %v363, 0
  %v564 = vsel %vm514, %v366, 0
  %v567 = vsel %vm514, %v369, 0
  %569 = vmatprep.subr.bf16.mxu0 0
  %570 = vmatpush1.bf16.msra.mxu0 %v478
  %571 = vmatprep.subr.bf16.mxu0 0
  %572 = vmatpush1.bf16.msra.mxu0 %v479
  %573 = vmatprep.subr.bf16.mxu0 0
  %574 = vmatpush1.bf16.msra.mxu0 %v480
  %575 = vmatprep.subr.bf16.mxu0 0
  %576 = vmatpush1.bf16.msra.mxu0 %v481
  %577 = vmatprep.subr.bf16.mxu0 0
  %578 = vmatpush1.bf16.msra.mxu0 %v482
  %579 = vmatprep.subr.bf16.mxu0 0
  %580 = vmatpush1.bf16.msra.mxu0 %v483
  %581 = vmatprep.subr.bf16.mxu0 0
  %582 = vmatpush1.bf16.msra.mxu0 %v484
  %583 = vmatprep.subr.bf16.mxu0 0
  %584 = vmatpush1.bf16.msra.mxu0 %v485
  %585 = vmatprep.subr.bf16.mxu0 0
  %586 = vmatpush1.bf16.msra.mxu0 %v486
  %587 = vmatprep.subr.bf16.mxu0 0
  %588 = vmatpush1.bf16.msra.mxu0 %v487
  %589 = vmatprep.subr.bf16.mxu0 0
  %590 = vmatpush1.bf16.msra.mxu0 %v488
  %591 = vmatprep.subr.bf16.mxu0 0
  %592 = vmatpush1.bf16.msra.mxu0 %v489
  %593 = vmatprep.subr.bf16.mxu0 0
  %594 = vmatpush1.bf16.msra.mxu0 %v490
  %595 = vmatprep.subr.bf16.mxu0 0
  %596 = vmatpush1.bf16.msra.mxu0 %v491
  %597 = vmatprep.subr.bf16.mxu0 0
  %598 = vmatpush1.bf16.msra.mxu0 %v492
  %599 = vmatprep.subr.bf16.mxu0 0
  %600 = vmatpush1.bf16.msra.mxu0 %v493
  %601 = vmatprep.mubr.bf16.mxu0 %v317
  %602 = vmatmul.mubr.bf16.gmra.mrb[0].mxu0 %v316
  %v603 = vpop.f32.mrb[0].mxu0
  %v604 = vadd.f32 %v134, %v603
  %v605 = vpop.f32.mrb[0].mxu0
  %v606 = vpop.f32.mrb[0].mxu0
  %v607 = vadd.f32 %v134, %v606
  %v608 = vpop.f32.mrb[0].mxu0
  %609 = vmatprep.mubr.bf16.mxu0 %v320
  %610 = vmatmul.mubr.bf16.gmra.mrb[0].mxu0 %v319
  %v611 = vpop.f32.mrb[0].mxu0
  %v612 = vadd.f32 %v134, %v611
  %v613 = vpop.f32.mrb[0].mxu0
  %v614 = vpop.f32.mrb[0].mxu0
  %v615 = vadd.f32 %v134, %v614
  %v616 = vpop.f32.mrb[0].mxu0
  %617 = vmatprep.mubr.bf16.mxu0 %v323
  %618 = vmatmul.mubr.bf16.gmra.mrb[0].mxu0 %v322
  %v619 = vpop.f32.mrb[0].mxu0
  %v620 = vadd.f32 %v134, %v619
  %v621 = vpop.f32.mrb[0].mxu0
  %v622 = vpop.f32.mrb[0].mxu0
  %v623 = vadd.f32 %v134, %v622
  %v624 = vpop.f32.mrb[0].mxu0
  %625 = vmatprep.mubr.bf16.mxu0 %v326
  %626 = vmatmul.mubr.bf16.gmra.mrb[0].mxu0 %v325
  %v627 = vpop.f32.mrb[0].mxu0
  %v628 = vadd.f32 %v134, %v627
  %v629 = vpop.f32.mrb[0].mxu0
  %v630 = vpop.f32.mrb[0].mxu0
  %v631 = vadd.f32 %v134, %v630
  %v632 = vpop.f32.mrb[0].mxu0
  %633 = vmatprep.mubr.bf16.mxu0 %v329
  %634 = vmatmul.mubr.bf16.gmra.mrb[0].mxu0 %v328
  %v635 = vpop.f32.mrb[0].mxu0
  %v636 = vadd.f32 %v134, %v635
  %v637 = vpop.f32.mrb[0].mxu0
  %v638 = vpop.f32.mrb[0].mxu0
  %v639 = vadd.f32 %v134, %v638
  %v640 = vpop.f32.mrb[0].mxu0
  %641 = vmatprep.mubr.bf16.mxu0 %v332
  %642 = vmatmul.mubr.bf16.gmra.mrb[0].mxu0 %v331
  %v643 = vpop.f32.mrb[0].mxu0
  %v644 = vadd.f32 %v134, %v643
  %v645 = vpop.f32.mrb[0].mxu0
  %v646 = vpop.f32.mrb[0].mxu0
  %v647 = vadd.f32 %v134, %v646
  %v648 = vpop.f32.mrb[0].mxu0
  %649 = vmatprep.mubr.bf16.mxu0 %v335
  %650 = vmatmul.mubr.bf16.gmra.mrb[0].mxu0 %v334
  %v651 = vpop.f32.mrb[0].mxu0
  %v652 = vadd.f32 %v134, %v651
  %v653 = vpop.f32.mrb[0].mxu0
  %v654 = vpop.f32.mrb[0].mxu0
  %v655 = vadd.f32 %v134, %v654
  %v656 = vpop.f32.mrb[0].mxu0
  %657 = vmatprep.mubr.bf16.mxu0 %v338
  %658 = vmatmul.mubr.bf16.gmra.mrb[0].mxu0 %v337
  %v659 = vpop.f32.mrb[0].mxu0
  %v660 = vadd.f32 %v134, %v659
  %v661 = vpop.f32.mrb[0].mxu0
  %v662 = vpop.f32.mrb[0].mxu0
  %v663 = vadd.f32 %v134, %v662
  %v664 = vpop.f32.mrb[0].mxu0
  %665 = vmatprep.mubr.bf16.mxu0 %v341
  %666 = vmatmul.mubr.bf16.gmra.mrb[0].mxu0 %v340
  %v667 = vpop.f32.mrb[0].mxu0
  %v668 = vadd.f32 %v134, %v667
  %v669 = vpop.f32.mrb[0].mxu0
  %v670 = vpop.f32.mrb[0].mxu0
  %v671 = vadd.f32 %v134, %v670
  %v672 = vpop.f32.mrb[0].mxu0
  %673 = vmatprep.mubr.bf16.mxu0 %v344
  %674 = vmatmul.mubr.bf16.gmra.mrb[0].mxu0 %v343
  %v675 = vpop.f32.mrb[0].mxu0
  %v676 = vadd.f32 %v134, %v675
  %v677 = vpop.f32.mrb[0].mxu0
  %v678 = vpop.f32.mrb[0].mxu0
  %v679 = vadd.f32 %v134, %v678
  %v680 = vpop.f32.mrb[0].mxu0
  %681 = vmatprep.mubr.bf16.mxu0 %v347
  %682 = vmatmul.mubr.bf16.gmra.mrb[0].mxu0 %v346
  %v683 = vpop.f32.mrb[0].mxu0
  %v684 = vadd.f32 %v134, %v683
  %v685 = vpop.f32.mrb[0].mxu0
  %v686 = vpop.f32.mrb[0].mxu0
  %v687 = vadd.f32 %v134, %v686
  %v688 = vpop.f32.mrb[0].mxu0
  %689 = vmatprep.mubr.bf16.mxu0 %v350
  %690 = vmatmul.mubr.bf16.gmra.mrb[0].mxu0 %v349
  %v691 = vpop.f32.mrb[0].mxu0
  %v692 = vadd.f32 %v134, %v691
  %v693 = vpop.f32.mrb[0].mxu0
  %v694 = vpop.f32.mrb[0].mxu0
  %v695 = vadd.f32 %v134, %v694
  %v696 = vpop.f32.mrb[0].mxu0
  %697 = vmatprep.mubr.bf16.mxu0 %v353
  %698 = vmatmul.mubr.bf16.gmra.mrb[0].mxu0 %v352
  %v699 = vpop.f32.mrb[0].mxu0
  %v700 = vadd.f32 %v134, %v699
  %v701 = vpop.f32.mrb[0].mxu0
  %v702 = vpop.f32.mrb[0].mxu0
  %v703 = vadd.f32 %v134, %v702
  %v704 = vpop.f32.mrb[0].mxu0
  %705 = vmatprep.mubr.bf16.mxu0 %v356
  %706 = vmatmul.mubr.bf16.gmra.mrb[0].mxu0 %v355
  %v707 = vpop.f32.mrb[0].mxu0
  %v708 = vadd.f32 %v134, %v707
  %v709 = vpop.f32.mrb[0].mxu0
  %v710 = vpop.f32.mrb[0].mxu0
  %v711 = vadd.f32 %v134, %v710
  %v712 = vpop.f32.mrb[0].mxu0
  %713 = vmatprep.mubr.bf16.mxu0 %v359
  %714 = vmatmul.mubr.bf16.gmra.mrb[0].mxu0 %v358
  %v715 = vpop.f32.mrb[0].mxu0
  %v716 = vadd.f32 %v134, %v715
  %v717 = vpop.f32.mrb[0].mxu0
  %v718 = vpop.f32.mrb[0].mxu0
  %v719 = vadd.f32 %v134, %v718
  %v720 = vpop.f32.mrb[0].mxu0
  %721 = vmatprep.mubr.bf16.mxu0 %v362
  %722 = vmatmul.mubr.bf16.gmra.mrb[0].mxu0 %v361
  %v723 = vpop.f32.mrb[0].mxu0
  %v724 = vadd.f32 %v134, %v723
  %v725 = vpop.f32.mrb[0].mxu0
  %v726 = vpop.f32.mrb[0].mxu0
  %v727 = vadd.f32 %v134, %v726
  %v728 = vpop.f32.mrb[0].mxu0
  %729 = vmatprep.mubr.bf16.mxu0 %v365
  %730 = vmatmul.mubr.bf16.gmra.mrb[0].mxu0 %v364
  %v731 = vpop.f32.mrb[0].mxu0
  %v732 = vadd.f32 %v134, %v731
  %v733 = vpop.f32.mrb[0].mxu0
  %v734 = vpop.f32.mrb[0].mxu0
  %v735 = vadd.f32 %v134, %v734
  %v736 = vpop.f32.mrb[0].mxu0
  %737 = vmatprep.mubr.bf16.mxu0 %v368
  %738 = vmatmul.mubr.bf16.gmra.mrb[0].mxu0 %v367
  %v739 = vpop.f32.mrb[0].mxu0
  %v740 = vadd.f32 %v134, %v739
  %v741 = vpop.f32.mrb[0].mxu0
  %v742 = vpop.f32.mrb[0].mxu0
  %v743 = vadd.f32 %v134, %v742
  %v744 = vpop.f32.mrb[0].mxu0
  %745 = vdwg.mxu0
  %746 = vmatprep.subr.bf16.mxu0 0
  %747 = vmatpush1.bf16.msra.mxu0 %v494
  %748 = vmatprep.subr.bf16.mxu0 0
  %749 = vmatpush1.bf16.msra.mxu0 %v495
  %750 = vmatprep.subr.bf16.mxu0 0
  %751 = vmatpush1.bf16.msra.mxu0 0
  %752 = vmatprep.subr.bf16.mxu0 0
  %753 = vmatpush1.bf16.msra.mxu0 0
  %754 = vmatprep.subr.bf16.mxu0 0
  %755 = vmatpush1.bf16.msra.mxu0 0
  %756 = vmatprep.subr.bf16.mxu0 0
  %757 = vmatpush1.bf16.msra.mxu0 0
  %758 = vmatprep.subr.bf16.mxu0 0
  %759 = vmatpush1.bf16.msra.mxu0 0
  %760 = vmatprep.subr.bf16.mxu0 0
  %761 = vmatpush1.bf16.msra.mxu0 0
  %762 = vmatprep.subr.bf16.mxu0 0
  %763 = vmatpush1.bf16.msra.mxu0 0
  %764 = vmatprep.subr.bf16.mxu0 0
  %765 = vmatpush1.bf16.msra.mxu0 0
  %766 = vmatprep.subr.bf16.mxu0 0
  %767 = vmatpush1.bf16.msra.mxu0 0
  %768 = vmatprep.subr.bf16.mxu0 0
  %769 = vmatpush1.bf16.msra.mxu0 0
  %770 = vmatprep.subr.bf16.mxu0 0
  %771 = vmatpush1.bf16.msra.mxu0 0
  %772 = vmatprep.subr.bf16.mxu0 0
  %773 = vmatpush1.bf16.msra.mxu0 0
  %774 = vmatprep.subr.bf16.mxu0 0
  %775 = vmatpush1.bf16.msra.mxu0 0
  %776 = vmatprep.subr.bf16.mxu0 0
  %777 = vmatpush1.bf16.msra.mxu0 0
  %778 = vmatprep.mubr.bf16.mxu0 0
  %779 = vmatmul.mubr.bf16.gmra.mrb[0].mxu0 %v516
  %v780 = vpop.f32.mrb[0].mxu0
  %v781 = vadd.f32 %v604, %v780
  %v782 = vpop.f32.mrb[0].mxu0
  %v783 = vpop.f32.mrb[0].mxu0
  %v784 = vadd.f32 %v607, %v783
  %v785 = vpop.f32.mrb[0].mxu0
  %786 = vmatprep.mubr.bf16.mxu0 0
  %787 = vmatmul.mubr.bf16.gmra.mrb[0].mxu0 %v519
  %v788 = vpop.f32.mrb[0].mxu0
  %v789 = vadd.f32 %v612, %v788
  %v790 = vpop.f32.mrb[0].mxu0
  %v791 = vpop.f32.mrb[0].mxu0
  %v792 = vadd.f32 %v615, %v791
  %v793 = vpop.f32.mrb[0].mxu0
  %794 = vmatprep.mubr.bf16.mxu0 0
  %795 = vmatmul.mubr.bf16.gmra.mrb[0].mxu0 %v522
  %v796 = vpop.f32.mrb[0].mxu0
  %v797 = vadd.f32 %v620, %v796
  %v798 = vpop.f32.mrb[0].mxu0
  %v799 = vpop.f32.mrb[0].mxu0
  %v800 = vadd.f32 %v623, %v799
  %v801 = vpop.f32.mrb[0].mxu0
  %802 = vmatprep.mubr.bf16.mxu0 0
  %803 = vmatmul.mubr.bf16.gmra.mrb[0].mxu0 %v525
  %v804 = vpop.f32.mrb[0].mxu0
  %v805 = vadd.f32 %v628, %v804
  %v806 = vpop.f32.mrb[0].mxu0
  %v807 = vpop.f32.mrb[0].mxu0
  %v808 = vadd.f32 %v631, %v807
  %v809 = vpop.f32.mrb[0].mxu0
  %810 = vmatprep.mubr.bf16.mxu0 0
  %811 = vmatmul.mubr.bf16.gmra.mrb[0].mxu0 %v528
  %v812 = vpop.f32.mrb[0].mxu0
  %v813 = vadd.f32 %v636, %v812
  %v814 = vpop.f32.mrb[0].mxu0
  %v815 = vpop.f32.mrb[0].mxu0
  %v816 = vadd.f32 %v639, %v815
  %v817 = vpop.f32.mrb[0].mxu0
  %818 = vmatprep.mubr.bf16.mxu0 0
  %819 = vmatmul.mubr.bf16.gmra.mrb[0].mxu0 %v531
  %v820 = vpop.f32.mrb[0].mxu0
  %v821 = vadd.f32 %v644, %v820
  %v822 = vpop.f32.mrb[0].mxu0
  %v823 = vpop.f32.mrb[0].mxu0
  %v824 = vadd.f32 %v647, %v823
  %v825 = vpop.f32.mrb[0].mxu0
  %826 = vmatprep.mubr.bf16.mxu0 0
  %827 = vmatmul.mubr.bf16.gmra.mrb[0].mxu0 %v534
  %v828 = vpop.f32.mrb[0].mxu0
  %v829 = vadd.f32 %v652, %v828
  %v830 = vpop.f32.mrb[0].mxu0
  %v831 = vpop.f32.mrb[0].mxu0
  %v832 = vadd.f32 %v655, %v831
  %v833 = vpop.f32.mrb[0].mxu0
  %834 = vmatprep.mubr.bf16.mxu0 0
  %835 = vmatmul.mubr.bf16.gmra.mrb[0].mxu0 %v537
  %v836 = vpop.f32.mrb[0].mxu0
  %v837 = vadd.f32 %v660, %v836
  %v838 = vpop.f32.mrb[0].mxu0
  %v839 = vpop.f32.mrb[0].mxu0
  %v840 = vadd.f32 %v663, %v839
  %v841 = vpop.f32.mrb[0].mxu0
  %842 = vmatprep.mubr.bf16.mxu0 0
  %843 = vmatmul.mubr.bf16.gmra.mrb[0].mxu0 %v540
  %v844 = vpop.f32.mrb[0].mxu0
  %v845 = vadd.f32 %v668, %v844
  %v846 = vpop.f32.mrb[0].mxu0
  %v847 = vpop.f32.mrb[0].mxu0
  %v848 = vadd.f32 %v671, %v847
  %v849 = vpop.f32.mrb[0].mxu0
  %850 = vmatprep.mubr.bf16.mxu0 0
  %851 = vmatmul.mubr.bf16.gmra.mrb[0].mxu0 %v543
  %v852 = vpop.f32.mrb[0].mxu0
  %v853 = vadd.f32 %v676, %v852
  %v854 = vpop.f32.mrb[0].mxu0
  %v855 = vpop.f32.mrb[0].mxu0
  %v856 = vadd.f32 %v679, %v855
  %v857 = vpop.f32.mrb[0].mxu0
  %858 = vmatprep.mubr.bf16.mxu0 0
  %859 = vmatmul.mubr.bf16.gmra.mrb[0].mxu0 %v546
  %v860 = vpop.f32.mrb[0].mxu0
  %v861 = vadd.f32 %v684, %v860
  %v862 = vpop.f32.mrb[0].mxu0
  %v863 = vpop.f32.mrb[0].mxu0
  %v864 = vadd.f32 %v687, %v863
  %v865 = vpop.f32.mrb[0].mxu0
  %866 = vmatprep.mubr.bf16.mxu0 0
  %867 = vmatmul.mubr.bf16.gmra.mrb[0].mxu0 %v549
  %v868 = vpop.f32.mrb[0].mxu0
  %v869 = vadd.f32 %v692, %v868
  %v870 = vpop.f32.mrb[0].mxu0
  %v871 = vpop.f32.mrb[0].mxu0
  %v872 = vadd.f32 %v695, %v871
  %v873 = vpop.f32.mrb[0].mxu0
  %874 = vmatprep.mubr.bf16.mxu0 0
  %875 = vmatmul.mubr.bf16.gmra.mrb[0].mxu0 %v552
  %v876 = vpop.f32.mrb[0].mxu0
  %v877 = vadd.f32 %v700, %v876
  %v878 = vpop.f32.mrb[0].mxu0
  %v879 = vpop.f32.mrb[0].mxu0
  %v880 = vadd.f32 %v703, %v879
  %v881 = vpop.f32.mrb[0].mxu0
  %882 = vmatprep.mubr.bf16.mxu0 0
  %883 = vmatmul.mubr.bf16.gmra.mrb[0].mxu0 %v555
  %v884 = vpop.f32.mrb[0].mxu0
  %v885 = vadd.f32 %v708, %v884
  %v886 = vpop.f32.mrb[0].mxu0
  %v887 = vpop.f32.mrb[0].mxu0
  %v888 = vadd.f32 %v711, %v887
  %v889 = vpop.f32.mrb[0].mxu0
  %890 = vmatprep.mubr.bf16.mxu0 0
  %891 = vmatmul.mubr.bf16.gmra.mrb[0].mxu0 %v558
  %v892 = vpop.f32.mrb[0].mxu0
  %v893 = vadd.f32 %v716, %v892
  %v894 = vpop.f32.mrb[0].mxu0
  %v895 = vpop.f32.mrb[0].mxu0
  %v896 = vadd.f32 %v719, %v895
  %v897 = vpop.f32.mrb[0].mxu0
  %898 = vmatprep.mubr.bf16.mxu0 0
  %899 = vmatmul.mubr.bf16.gmra.mrb[0].mxu0 %v561
  %v900 = vpop.f32.mrb[0].mxu0
  %v901 = vadd.f32 %v724, %v900
  %v902 = vpop.f32.mrb[0].mxu0
  %v903 = vpop.f32.mrb[0].mxu0
  %v904 = vadd.f32 %v727, %v903
  %v905 = vpop.f32.mrb[0].mxu0
  %906 = vmatprep.mubr.bf16.mxu0 0
  %907 = vmatmul.mubr.bf16.gmra.mrb[0].mxu0 %v564
  %v908 = vpop.f32.mrb[0].mxu0
  %v909 = vadd.f32 %v732, %v908
  %v910 = vpop.f32.mrb[0].mxu0
  %v911 = vpop.f32.mrb[0].mxu0
  %v912 = vadd.f32 %v735, %v911
  %v913 = vpop.f32.mrb[0].mxu0
  %914 = vmatprep.mubr.bf16.mxu0 0
  %915 = vmatmul.mubr.bf16.gmra.mrb[0].mxu0 %v567
  %v916 = vpop.f32.mrb[0].mxu0
  %v917 = vadd.f32 %v740, %v916
  %v918 = vpop.f32.mrb[0].mxu0
  %v919 = vpop.f32.mrb[0].mxu0
  %v920 = vadd.f32 %v743, %v919
  %v921 = vpop.f32.mrb[0].mxu0
  %922 = vdwg.mxu0
  %v923 = vmax.f32 %v781, 0.0
  %v924 = vmax.f32 %v784, 0.0
  %v925 = vmax.f32 %v789, 0.0
  %v926 = vmax.f32 %v792, 0.0
  %v927 = vmax.f32 %v797, 0.0
  %v928 = vmax.f32 %v800, 0.0
  %v929 = vmax.f32 %v805, 0.0
  %v930 = vmax.f32 %v808, 0.0
  %v931 = vmax.f32 %v813, 0.0
  %v932 = vmax.f32 %v816, 0.0
  %v933 = vmax.f32 %v821, 0.0
  %v934 = vmax.f32 %v824, 0.0
  %v935 = vmax.f32 %v829, 0.0
  %v936 = vmax.f32 %v832, 0.0
  %v937 = vmax.f32 %v837, 0.0
  %v938 = vmax.f32 %v840, 0.0
  %v939 = vmax.f32 %v845, 0.0
  %v940 = vmax.f32 %v848, 0.0
  %v941 = vmax.f32 %v853, 0.0
  %v942 = vmax.f32 %v856, 0.0
  %v943 = vmax.f32 %v861, 0.0
  %v944 = vmax.f32 %v864, 0.0
  %v945 = vmax.f32 %v869, 0.0
  %v946 = vmax.f32 %v872, 0.0
  %v947 = vmax.f32 %v877, 0.0
  %v948 = vmax.f32 %v880, 0.0
  %v949 = vmax.f32 %v885, 0.0
  %v950 = vmax.f32 %v888, 0.0
  %v951 = vmax.f32 %v893, 0.0
  %v952 = vmax.f32 %v896, 0.0
  %v953 = vmax.f32 %v901, 0.0
  %v954 = vmax.f32 %v904, 0.0
  %v955 = vmax.f32 %v909, 0.0
  %v956 = vmax.f32 %v912, 0.0
  %v957 = vmax.f32 %v917, 0.0
  %v958 = vmax.f32 %v920, 0.0
  %v959 = vld [vmem:[%s3] sm:$0xf]
  %v960 = vld [vmem:[%s3 + $0x4] sm:$0xf]
  %v961 = vld [vmem:[%s3 + $0x8] sm:$0xf]
  %v962 = vld [vmem:[%s3 + $0xc] sm:$0xf]
  %v963 = vld [vmem:[%s3 + $0x10] sm:$0xf]
  %v964 = vld [vmem:[%s3 + $0x14] sm:$0xf]
  %v965 = vld [vmem:[%s3 + $0x18] sm:$0xf]
  %v966 = vld [vmem:[%s3 + $0x1c] sm:$0xf]
  %v967 = vld [vmem:[%s4] sm:$0x1]
  %v968 = vpack.c.bf16 %v924, %v923
  %v969 = vpack.c.bf16 %v926, %v925
  %v970 = vpack.c.bf16 %v928, %v927
  %v971 = vpack.c.bf16 %v930, %v929
  %v972 = vpack.c.bf16 %v932, %v931
  %v973 = vpack.c.bf16 %v934, %v933
  %v974 = vpack.c.bf16 %v936, %v935
  %v975 = vpack.c.bf16 %v938, %v937
  %v976 = vpack.c.bf16 %v940, %v939
  %v977 = vpack.c.bf16 %v942, %v941
  %v978 = vpack.c.bf16 %v944, %v943
  %v979 = vpack.c.bf16 %v946, %v945
  %v980 = vpack.c.bf16 %v948, %v947
  %v981 = vpack.c.bf16 %v950, %v949
  %v982 = vpack.c.bf16 %v952, %v951
  %v983 = vpack.c.bf16 %v954, %v953
  %v984 = vpack.c.bf16 %v956, %v955
  %v985 = vpack.c.bf16 %v958, %v957
  %v987 = vlaneseq
  %v988 = vshrl.u32 %v987, 7
  %v989 = vsub.s32 0, %v988
  %v990 = vrot.slane %v967, %v989
  %v1000 = vunpack.c.l.b16 %v959
  %v1001 = vunpack.c.l.b16 %v960
  %v1002 = vunpack.c.l.b16 %v961
  %v1003 = vunpack.c.l.b16 %v962
  %v1004 = vunpack.c.l.b16 %v963
  %v1005 = vunpack.c.l.b16 %v964
  %v1006 = vunpack.c.l.b16 %v965
  %v1007 = vunpack.c.l.b16 %v966
  %v1008 = vpack.c.b16 %v1001, %v1000
  %v1009 = vpack.c.b16 %v1003, %v1002
  %v1010 = vpack.c.b16 %v1005, %v1004
  %v1011 = vpack.c.b16 %v1007, %v1006
  %vm1016 = vcmask 523264
  %v1018 = vsel %vm1016, %v968, 0
  %v1021 = vsel %vm1016, %v969, 0
  %v1024 = vsel %vm1016, %v970, 0
  %v1027 = vsel %vm1016, %v971, 0
  %v1030 = vsel %vm1016, %v972, 0
  %v1033 = vsel %vm1016, %v973, 0
  %v1036 = vsel %vm1016, %v974, 0
  %v1039 = vsel %vm1016, %v975, 0
  %v1042 = vsel %vm1016, %v976, 0
  %v1045 = vsel %vm1016, %v977, 0
  %v1048 = vsel %vm1016, %v978, 0
  %v1051 = vsel %vm1016, %v979, 0
  %v1054 = vsel %vm1016, %v980, 0
  %v1057 = vsel %vm1016, %v981, 0
  %v1060 = vsel %vm1016, %v982, 0
  %v1063 = vsel %vm1016, %v983, 0
  %v1066 = vsel %vm1016, %v984, 0
  %v1069 = vsel %vm1016, %v985, 0
  %1071 = vmatprep.subr.bf16.mxu0 0
  %1072 = vmatpush1.bf16.msra.mxu0 %v1008
  %1073 = vmatprep.subr.bf16.mxu0 0
  %1074 = vmatpush1.bf16.msra.mxu0 %v1009
  %1075 = vmatprep.subr.bf16.mxu0 0
  %1076 = vmatpush1.bf16.msra.mxu0 %v1010
  %1077 = vmatprep.subr.bf16.mxu0 0
  %1078 = vmatpush1.bf16.msra.mxu0 %v1011
  %1079 = vmatprep.subr.bf16.mxu0 0
  %1080 = vmatpush1.bf16.msra.mxu0 0
  %1081 = vmatprep.subr.bf16.mxu0 0
  %1082 = vmatpush1.bf16.msra.mxu0 0
  %1083 = vmatprep.subr.bf16.mxu0 0
  %1084 = vmatpush1.bf16.msra.mxu0 0
  %1085 = vmatprep.subr.bf16.mxu0 0
  %1086 = vmatpush1.bf16.msra.mxu0 0
  %1087 = vmatprep.subr.bf16.mxu0 0
  %1088 = vmatpush1.bf16.msra.mxu0 0
  %1089 = vmatprep.subr.bf16.mxu0 0
  %1090 = vmatpush1.bf16.msra.mxu0 0
  %1091 = vmatprep.subr.bf16.mxu0 0
  %1092 = vmatpush1.bf16.msra.mxu0 0
  %1093 = vmatprep.subr.bf16.mxu0 0
  %1094 = vmatpush1.bf16.msra.mxu0 0
  %1095 = vmatprep.subr.bf16.mxu0 0
  %1096 = vmatpush1.bf16.msra.mxu0 0
  %1097 = vmatprep.subr.bf16.mxu0 0
  %1098 = vmatpush1.bf16.msra.mxu0 0
  %1099 = vmatprep.subr.bf16.mxu0 0
  %1100 = vmatpush1.bf16.msra.mxu0 0
  %1101 = vmatprep.subr.bf16.mxu0 0
  %1102 = vmatpush1.bf16.msra.mxu0 0
  %1103 = vmatprep.mubr.bf16.mxu0 0
  %1104 = vmatmul.mubr.bf16.gmra.mrb[0].mxu0 %v1018
  %v1105 = vpop.f32.mrb[0].mxu0
  %v1106 = vadd.f32 %v990, %v1105
  %v1107 = vpop.f32.mrb[0].mxu0
  %v1108 = vpop.f32.mrb[0].mxu0
  %v1109 = vadd.f32 %v990, %v1108
  %v1110 = vpop.f32.mrb[0].mxu0
  %1111 = vmatprep.mubr.bf16.mxu0 0
  %1112 = vmatmul.mubr.bf16.gmra.mrb[0].mxu0 %v1021
  %v1113 = vpop.f32.mrb[0].mxu0
  %v1114 = vadd.f32 %v990, %v1113
  %v1115 = vpop.f32.mrb[0].mxu0
  %v1116 = vpop.f32.mrb[0].mxu0
  %v1117 = vadd.f32 %v990, %v1116
  %v1118 = vpop.f32.mrb[0].mxu0
  %1119 = vmatprep.mubr.bf16.mxu0 0
  %1120 = vmatmul.mubr.bf16.gmra.mrb[0].mxu0 %v1024
  %v1121 = vpop.f32.mrb[0].mxu0
  %v1122 = vadd.f32 %v990, %v1121
  %v1123 = vpop.f32.mrb[0].mxu0
  %v1124 = vpop.f32.mrb[0].mxu0
  %v1125 = vadd.f32 %v990, %v1124
  %v1126 = vpop.f32.mrb[0].mxu0
  %1127 = vmatprep.mubr.bf16.mxu0 0
  %1128 = vmatmul.mubr.bf16.gmra.mrb[0].mxu0 %v1027
  %v1129 = vpop.f32.mrb[0].mxu0
  %v1130 = vadd.f32 %v990, %v1129
  %v1131 = vpop.f32.mrb[0].mxu0
  %v1132 = vpop.f32.mrb[0].mxu0
  %v1133 = vadd.f32 %v990, %v1132
  %v1134 = vpop.f32.mrb[0].mxu0
  %1135 = vmatprep.mubr.bf16.mxu0 0
  %1136 = vmatmul.mubr.bf16.gmra.mrb[0].mxu0 %v1030
  %v1137 = vpop.f32.mrb[0].mxu0
  %v1138 = vadd.f32 %v990, %v1137
  %v1139 = vpop.f32.mrb[0].mxu0
  %v1140 = vpop.f32.mrb[0].mxu0
  %v1141 = vadd.f32 %v990, %v1140
  %v1142 = vpop.f32.mrb[0].mxu0
  %1143 = vmatprep.mubr.bf16.mxu0 0
  %1144 = vmatmul.mubr.bf16.gmra.mrb[0].mxu0 %v1033
  %v1145 = vpop.f32.mrb[0].mxu0
  %v1146 = vadd.f32 %v990, %v1145
  %v1147 = vpop.f32.mrb[0].mxu0
  %v1148 = vpop.f32.mrb[0].mxu0
  %v1149 = vadd.f32 %v990, %v1148
  %v1150 = vpop.f32.mrb[0].mxu0
  %1151 = vmatprep.mubr.bf16.mxu0 0
  %1152 = vmatmul.mubr.bf16.gmra.mrb[0].mxu0 %v1036
  %v1153 = vpop.f32.mrb[0].mxu0
  %v1154 = vadd.f32 %v990, %v1153
  %v1155 = vpop.f32.mrb[0].mxu0
  %v1156 = vpop.f32.mrb[0].mxu0
  %v1157 = vadd.f32 %v990, %v1156
  %v1158 = vpop.f32.mrb[0].mxu0
  %1159 = vmatprep.mubr.bf16.mxu0 0
  %1160 = vmatmul.mubr.bf16.gmra.mrb[0].mxu0 %v1039
  %v1161 = vpop.f32.mrb[0].mxu0
  %v1162 = vadd.f32 %v990, %v1161
  %v1163 = vpop.f32.mrb[0].mxu0
  %v1164 = vpop.f32.mrb[0].mxu0
  %v1165 = vadd.f32 %v990, %v1164
  %v1166 = vpop.f32.mrb[0].mxu0
  %1167 = vmatprep.mubr.bf16.mxu0 0
  %1168 = vmatmul.mubr.bf16.gmra.mrb[0].mxu0 %v1042
  %v1169 = vpop.f32.mrb[0].mxu0
  %v1170 = vadd.f32 %v990, %v1169
  %v1171 = vpop.f32.mrb[0].mxu0
  %v1172 = vpop.f32.mrb[0].mxu0
  %v1173 = vadd.f32 %v990, %v1172
  %v1174 = vpop.f32.mrb[0].mxu0
  %1175 = vmatprep.mubr.bf16.mxu0 0
  %1176 = vmatmul.mubr.bf16.gmra.mrb[0].mxu0 %v1045
  %v1177 = vpop.f32.mrb[0].mxu0
  %v1178 = vadd.f32 %v990, %v1177
  %v1179 = vpop.f32.mrb[0].mxu0
  %v1180 = vpop.f32.mrb[0].mxu0
  %v1181 = vadd.f32 %v990, %v1180
  %v1182 = vpop.f32.mrb[0].mxu0
  %1183 = vmatprep.mubr.bf16.mxu0 0
  %1184 = vmatmul.mubr.bf16.gmra.mrb[0].mxu0 %v1048
  %v1185 = vpop.f32.mrb[0].mxu0
  %v1186 = vadd.f32 %v990, %v1185
  %v1187 = vpop.f32.mrb[0].mxu0
  %v1188 = vpop.f32.mrb[0].mxu0
  %v1189 = vadd.f32 %v990, %v1188
  %v1190 = vpop.f32.mrb[0].mxu0
  %1191 = vmatprep.mubr.bf16.mxu0 0
  %1192 = vmatmul.mubr.bf16.gmra.mrb[0].mxu0 %v1051
  %v1193 = vpop.f32.mrb[0].mxu0
  %v1194 = vadd.f32 %v990, %v1193
  %v1195 = vpop.f32.mrb[0].mxu0
  %v1196 = vpop.f32.mrb[0].mxu0
  %v1197 = vadd.f32 %v990, %v1196
  %v1198 = vpop.f32.mrb[0].mxu0
  %1199 = vmatprep.mubr.bf16.mxu0 0
  %1200 = vmatmul.mubr.bf16.gmra.mrb[0].mxu0 %v1054
  %v1201 = vpop.f32.mrb[0].mxu0
  %v1202 = vadd.f32 %v990, %v1201
  %v1203 = vpop.f32.mrb[0].mxu0
  %v1204 = vpop.f32.mrb[0].mxu0
  %v1205 = vadd.f32 %v990, %v1204
  %v1206 = vpop.f32.mrb[0].mxu0
  %1207 = vmatprep.mubr.bf16.mxu0 0
  %1208 = vmatmul.mubr.bf16.gmra.mrb[0].mxu0 %v1057
  %v1209 = vpop.f32.mrb[0].mxu0
  %v1210 = vadd.f32 %v990, %v1209
  %v1211 = vpop.f32.mrb[0].mxu0
  %v1212 = vpop.f32.mrb[0].mxu0
  %v1213 = vadd.f32 %v990, %v1212
  %v1214 = vpop.f32.mrb[0].mxu0
  %1215 = vmatprep.mubr.bf16.mxu0 0
  %1216 = vmatmul.mubr.bf16.gmra.mrb[0].mxu0 %v1060
  %v1217 = vpop.f32.mrb[0].mxu0
  %v1218 = vadd.f32 %v990, %v1217
  %v1219 = vpop.f32.mrb[0].mxu0
  %v1220 = vpop.f32.mrb[0].mxu0
  %v1221 = vadd.f32 %v990, %v1220
  %v1222 = vpop.f32.mrb[0].mxu0
  %1223 = vmatprep.mubr.bf16.mxu0 0
  %1224 = vmatmul.mubr.bf16.gmra.mrb[0].mxu0 %v1063
  %v1225 = vpop.f32.mrb[0].mxu0
  %v1226 = vadd.f32 %v990, %v1225
  %v1227 = vpop.f32.mrb[0].mxu0
  %v1228 = vpop.f32.mrb[0].mxu0
  %v1229 = vadd.f32 %v990, %v1228
  %v1230 = vpop.f32.mrb[0].mxu0
  %1231 = vmatprep.mubr.bf16.mxu0 0
  %1232 = vmatmul.mubr.bf16.gmra.mrb[0].mxu0 %v1066
  %v1233 = vpop.f32.mrb[0].mxu0
  %v1234 = vadd.f32 %v990, %v1233
  %v1235 = vpop.f32.mrb[0].mxu0
  %v1236 = vpop.f32.mrb[0].mxu0
  %v1237 = vadd.f32 %v990, %v1236
  %v1238 = vpop.f32.mrb[0].mxu0
  %1239 = vmatprep.mubr.bf16.mxu0 0
  %1240 = vmatmul.mubr.bf16.gmra.mrb[0].mxu0 %v1069
  %v1241 = vpop.f32.mrb[0].mxu0
  %v1242 = vadd.f32 %v990, %v1241
  %v1243 = vpop.f32.mrb[0].mxu0
  %v1244 = vpop.f32.mrb[0].mxu0
  %v1245 = vadd.f32 %v990, %v1244
  %v1246 = vpop.f32.mrb[0].mxu0
  %1247 = vdwg.mxu0
  %v1248 = vmax.f32 %v1106, 0.0
  %v1249 = vmax.f32 %v1109, 0.0
  %v1250 = vmax.f32 %v1114, 0.0
  %v1251 = vmax.f32 %v1117, 0.0
  %v1252 = vmax.f32 %v1122, 0.0
  %v1253 = vmax.f32 %v1125, 0.0
  %v1254 = vmax.f32 %v1130, 0.0
  %v1255 = vmax.f32 %v1133, 0.0
  %v1256 = vmax.f32 %v1138, 0.0
  %v1257 = vmax.f32 %v1141, 0.0
  %v1258 = vmax.f32 %v1146, 0.0
  %v1259 = vmax.f32 %v1149, 0.0
  %v1260 = vmax.f32 %v1154, 0.0
  %v1261 = vmax.f32 %v1157, 0.0
  %v1262 = vmax.f32 %v1162, 0.0
  %v1263 = vmax.f32 %v1165, 0.0
  %v1264 = vmax.f32 %v1170, 0.0
  %v1265 = vmax.f32 %v1173, 0.0
  %v1266 = vmax.f32 %v1178, 0.0
  %v1267 = vmax.f32 %v1181, 0.0
  %v1268 = vmax.f32 %v1186, 0.0
  %v1269 = vmax.f32 %v1189, 0.0
  %v1270 = vmax.f32 %v1194, 0.0
  %v1271 = vmax.f32 %v1197, 0.0
  %v1272 = vmax.f32 %v1202, 0.0
  %v1273 = vmax.f32 %v1205, 0.0
  %v1274 = vmax.f32 %v1210, 0.0
  %v1275 = vmax.f32 %v1213, 0.0
  %v1276 = vmax.f32 %v1218, 0.0
  %v1277 = vmax.f32 %v1221, 0.0
  %v1278 = vmax.f32 %v1226, 0.0
  %v1279 = vmax.f32 %v1229, 0.0
  %v1280 = vmax.f32 %v1234, 0.0
  %v1281 = vmax.f32 %v1237, 0.0
  %v1282 = vmax.f32 %v1242, 0.0
  %v1283 = vmax.f32 %v1245, 0.0
  %v1284 = vpack.c.bf16 %v1249, %v1248
  %v1285 = vpack.c.bf16 %v1251, %v1250
  %v1286 = vpack.c.bf16 %v1253, %v1252
  %v1287 = vpack.c.bf16 %v1255, %v1254
  %v1288 = vpack.c.bf16 %v1257, %v1256
  %v1289 = vpack.c.bf16 %v1259, %v1258
  %v1290 = vpack.c.bf16 %v1261, %v1260
  %v1291 = vpack.c.bf16 %v1263, %v1262
  %v1292 = vpack.c.bf16 %v1265, %v1264
  %v1293 = vpack.c.bf16 %v1267, %v1266
  %v1294 = vpack.c.bf16 %v1269, %v1268
  %v1295 = vpack.c.bf16 %v1271, %v1270
  %v1296 = vpack.c.bf16 %v1273, %v1272
  %v1297 = vpack.c.bf16 %v1275, %v1274
  %v1298 = vpack.c.bf16 %v1277, %v1276
  %v1299 = vpack.c.bf16 %v1279, %v1278
  %v1300 = vpack.c.bf16 %v1281, %v1280
  %v1301 = vpack.c.bf16 %v1283, %v1282
  %v1320 = vunpack.c.l.b16 %v1284
  %v1321 = vunpack.c.h.b16 %v1284
  %v1322 = vunpack.c.l.b16 %v1285
  %v1323 = vunpack.c.h.b16 %v1285
  %v1324 = vunpack.c.l.b16 %v1286
  %v1325 = vunpack.c.h.b16 %v1286
  %v1326 = vunpack.c.l.b16 %v1287
  %v1327 = vunpack.c.h.b16 %v1287
  %v1328 = vunpack.c.l.b16 %v1288
  %v1329 = vunpack.c.h.b16 %v1288
  %v1330 = vunpack.c.l.b16 %v1289
  %v1331 = vunpack.c.h.b16 %v1289
  %v1332 = vunpack.c.l.b16 %v1290
  %v1333 = vunpack.c.h.b16 %v1290
  %v1334 = vunpack.c.l.b16 %v1291
  %v1335 = vunpack.c.h.b16 %v1291
  %v1336 = vunpack.c.l.b16 %v1292
  %v1337 = vunpack.c.h.b16 %v1292
  %v1338 = vunpack.c.l.b16 %v1293
  %v1339 = vunpack.c.h.b16 %v1293
  %v1340 = vunpack.c.l.b16 %v1294
  %v1341 = vunpack.c.h.b16 %v1294
  %v1342 = vunpack.c.l.b16 %v1295
  %v1343 = vunpack.c.h.b16 %v1295
  %v1344 = vunpack.c.l.b16 %v1296
  %v1345 = vunpack.c.h.b16 %v1296
  %v1346 = vunpack.c.l.b16 %v1297
  %v1347 = vunpack.c.h.b16 %v1297
  %v1348 = vunpack.c.l.b16 %v1298
  %v1349 = vunpack.c.h.b16 %v1298
  %v1350 = vunpack.c.l.b16 %v1299
  %v1351 = vunpack.c.h.b16 %v1299
  %v1352 = vunpack.c.l.b16 %v1300
  %v1353 = vunpack.c.h.b16 %v1300
  %v1354 = vunpack.c.l.b16 %v1301
  %v1355 = vunpack.c.h.b16 %v1301
  %v1356 = vpack.c.b16 %v1320, %v1320
  %v1357 = vpack.c.b16 %v1321, %v1321
  %v1358 = vpack.c.b16 %v1322, %v1322
  %v1359 = vpack.c.b16 %v1323, %v1323
  %v1360 = vpack.c.b16 %v1324, %v1324
  %v1361 = vpack.c.b16 %v1325, %v1325
  %v1362 = vpack.c.b16 %v1326, %v1326
  %v1363 = vpack.c.b16 %v1327, %v1327
  %v1364 = vpack.c.b16 %v1328, %v1328
  %v1365 = vpack.c.b16 %v1329, %v1329
  %v1366 = vpack.c.b16 %v1330, %v1330
  %v1367 = vpack.c.b16 %v1331, %v1331
  %v1368 = vpack.c.b16 %v1332, %v1332
  %v1369 = vpack.c.b16 %v1333, %v1333
  %v1370 = vpack.c.b16 %v1334, %v1334
  %v1371 = vpack.c.b16 %v1335, %v1335
  %v1372 = vpack.c.b16 %v1336, %v1336
  %v1373 = vpack.c.b16 %v1337, %v1337
  %v1374 = vpack.c.b16 %v1338, %v1338
  %v1375 = vpack.c.b16 %v1339, %v1339
  %v1376 = vpack.c.b16 %v1340, %v1340
  %v1377 = vpack.c.b16 %v1341, %v1341
  %v1378 = vpack.c.b16 %v1342, %v1342
  %v1379 = vpack.c.b16 %v1343, %v1343
  %v1380 = vpack.c.b16 %v1344, %v1344
  %v1381 = vpack.c.b16 %v1345, %v1345
  %v1382 = vpack.c.b16 %v1346, %v1346
  %v1383 = vpack.c.b16 %v1347, %v1347
  %v1384 = vpack.c.b16 %v1348, %v1348
  %v1385 = vpack.c.b16 %v1349, %v1349
  %v1386 = vpack.c.b16 %v1350, %v1350
  %v1387 = vpack.c.b16 %v1351, %v1351
  %v1388 = vpack.c.b16 %v1352, %v1352
  %v1389 = vpack.c.b16 %v1353, %v1353
  %v1390 = vpack.c.b16 %v1354, %v1354
  %v1391 = vpack.c.b16 %v1355, %v1355
  %vm1428 = vcmask 257024
  %1429 = vst.msk [vmem:[%s5] sm:$0xf] %vm1428, %v1356
  %1430 = vst.msk [vmem:[%s5 + $0x4] sm:$0xf] %vm1428, %v1357
  %1431 = vst.msk [vmem:[%s5 + $0x8] sm:$0xf] %vm1428, %v1358
  %1432 = vst.msk [vmem:[%s5 + $0xc] sm:$0xf] %vm1428, %v1359
  %1433 = vst.msk [vmem:[%s5 + $0x10] sm:$0xf] %vm1428, %v1360
  %1434 = vst.msk [vmem:[%s5 + $0x14] sm:$0xf] %vm1428, %v1361
  %1435 = vst.msk [vmem:[%s5 + $0x18] sm:$0xf] %vm1428, %v1362
  %1436 = vst.msk [vmem:[%s5 + $0x1c] sm:$0xf] %vm1428, %v1363
  %1437 = vst.msk [vmem:[%s5 + $0x20] sm:$0xf] %vm1428, %v1364
  %1438 = vst.msk [vmem:[%s5 + $0x24] sm:$0xf] %vm1428, %v1365
  %1439 = vst.msk [vmem:[%s5 + $0x28] sm:$0xf] %vm1428, %v1366
  %1440 = vst.msk [vmem:[%s5 + $0x2c] sm:$0xf] %vm1428, %v1367
  %1441 = vst.msk [vmem:[%s5 + $0x30] sm:$0xf] %vm1428, %v1368
  %1442 = vst.msk [vmem:[%s5 + $0x34] sm:$0xf] %vm1428, %v1369
  %1443 = vst.msk [vmem:[%s5 + $0x38] sm:$0xf] %vm1428, %v1370
  %1444 = vst.msk [vmem:[%s5 + $0x3c] sm:$0xf] %vm1428, %v1371
  %1445 = vst.msk [vmem:[%s5 + $0x40] sm:$0xf] %vm1428, %v1372
  %1446 = vst.msk [vmem:[%s5 + $0x44] sm:$0xf] %vm1428, %v1373
  %1447 = vst.msk [vmem:[%s5 + $0x48] sm:$0xf] %vm1428, %v1374
  %1448 = vst.msk [vmem:[%s5 + $0x4c] sm:$0xf] %vm1428, %v1375
  %1449 = vst.msk [vmem:[%s5 + $0x50] sm:$0xf] %vm1428, %v1376
  %1450 = vst.msk [vmem:[%s5 + $0x54] sm:$0xf] %vm1428, %v1377
  %1451 = vst.msk [vmem:[%s5 + $0x58] sm:$0xf] %vm1428, %v1378
  %1452 = vst.msk [vmem:[%s5 + $0x5c] sm:$0xf] %vm1428, %v1379
  %1453 = vst.msk [vmem:[%s5 + $0x60] sm:$0xf] %vm1428, %v1380
  %1454 = vst.msk [vmem:[%s5 + $0x64] sm:$0xf] %vm1428, %v1381
  %1455 = vst.msk [vmem:[%s5 + $0x68] sm:$0xf] %vm1428, %v1382
  %1456 = vst.msk [vmem:[%s5 + $0x6c] sm:$0xf] %vm1428, %v1383
  %1457 = vst.msk [vmem:[%s5 + $0x70] sm:$0xf] %vm1428, %v1384
  %1458 = vst.msk [vmem:[%s5 + $0x74] sm:$0xf] %vm1428, %v1385
  %1459 = vst.msk [vmem:[%s5 + $0x78] sm:$0xf] %vm1428, %v1386
  %1460 = vst.msk [vmem:[%s5 + $0x7c] sm:$0xf] %vm1428, %v1387
  %1461 = vst.msk [vmem:[%s5 + $0x80] sm:$0xf] %vm1428, %v1388
  %1462 = vst.msk [vmem:[%s5 + $0x84] sm:$0xf] %vm1428, %v1389
  %1463 = vst.msk [vmem:[%s5 + $0x88] sm:$0xf] %vm1428, %v1390
  %1464 = vst.msk [vmem:[%s5 + $0x8c] sm:$0xf] %vm1428, %v1391
  // Predicated region
  $region22: #{state_tracker_forward.5} parent=0 // pred_check
    _
  $region23: #{state_tracker_forward.5} parent=0 // pred_check_branch
    %1466 = sbr.rel (0) target = $region25
  $region24: #{state_tracker_forward.5} parent=0 // pred_region
    _
  $region25: #{state_tracker_forward.5} parent=0 // pred_fallthru
    _
  // Predicated region
  $region26: #{state_tracker_forward.5} parent=0 // pred_check
    _
  $region27: #{state_tracker_forward.5} parent=0 // pred_check_branch
    %1468 = sbr.rel (0) target = $region29
  $region28: #{state_tracker_forward.5} parent=0 // pred_region
    _
  $region29: #{state_tracker_forward.5} parent=0 // pred_fallthru
    _

// kernel: state_tracker_forward.7
$region0: #{state_tracker_forward.7}
  #allocation0 [shape = 'u32[]', space=smem, size = 0x4, offset = 0x4, fixed_abs, tag = 'smem constant byte address 0x4 - core index']
  #allocation1 [shape = 'u32[144,128]{1,0:T(1,128)}', space=vmem, size = 0x12000, scoped, tag = 'internal scratch']
  %s0 = inlined_call_operand.vmem [shape: bf16[8,128], index: 0, kind: input, shape index: {}]
  %s1 = inlined_call_operand.vmem [shape: bf16[128,1024], index: 1, kind: input, shape index: {}]
  %s2 = inlined_call_operand.vmem [shape: f32[1,1024], index: 2, kind: input, shape index: {}]
  %s3 = inlined_call_operand.vmem [shape: f32[8,1024], index: 3, kind: output, shape index: {}]
  %s4 = sld [smem:[#allocation0]]
  $region22: #{state_tracker_forward.7} parent=0
    _
  %s6 = ssub.s32 1, %s4
  %s7 = scalar_select 0, %s6, %s4
  // Predicated region
  $region2: #{state_tracker_forward.7} parent=0 // pred_check
    _
  $region3: #{state_tracker_forward.7} parent=0 // pred_check_branch
    %9 = sbr.rel (0) target = $region5
  $region4: #{state_tracker_forward.7} parent=0 // pred_region
    _
  $region5: #{state_tracker_forward.7} parent=0 // pred_fallthru
    _
  // Predicated region
  $region6: #{state_tracker_forward.7} parent=0 // pred_check
    _
  $region7: #{state_tracker_forward.7} parent=0 // pred_check_branch
    %11 = sbr.rel (0) target = $region9
  $region8: #{state_tracker_forward.7} parent=0 // pred_region
    _
  $region9: #{state_tracker_forward.7} parent=0 // pred_fallthru
    _
  // Predicated region
  $region10: #{state_tracker_forward.7} parent=0 // pred_check
    _
  $region11: #{state_tracker_forward.7} parent=0 // pred_check_branch
    %13 = sbr.rel (0) target = $region13
  $region12: #{state_tracker_forward.7} parent=0 // pred_region
    _
  $region13: #{state_tracker_forward.7} parent=0 // pred_fallthru
    _
  %v15 = vld [vmem:[%s0] sm:$0xf]
  %v16 = vld [vmem:[%s1] sm:$0xff]
  %v17 = vld [vmem:[%s1 + $0x8] sm:$0xff]
  %v18 = vld [vmem:[%s1 + $0x10] sm:$0xff]
  %v19 = vld [vmem:[%s1 + $0x18] sm:$0xff]
  %v20 = vld [vmem:[%s1 + $0x20] sm:$0xff]
  %v21 = vld [vmem:[%s1 + $0x28] sm:$0xff]
  %v22 = vld [vmem:[%s1 + $0x30] sm:$0xff]
  %v23 = vld [vmem:[%s1 + $0x38] sm:$0xff]
  %v24 = vld [vmem:[%s1 + $0x40] sm:$0xff]
  %v25 = vld [vmem:[%s1 + $0x48] sm:$0xff]
  %v26 = vld [vmem:[%s1 + $0x50] sm:$0xff]
  %v27 = vld [vmem:[%s1 + $0x58] sm:$0xff]
  %v28 = vld [vmem:[%s1 + $0x60] sm:$0xff]
  %v29 = vld [vmem:[%s1 + $0x68] sm:$0xff]
  %v30 = vld [vmem:[%s1 + $0x70] sm:$0xff]
  %v31 = vld [vmem:[%s1 + $0x78] sm:$0xff]
  %v32 = vld [vmem:[%s1 + $0x80] sm:$0xff]
  %v33 = vld [vmem:[%s1 + $0x88] sm:$0xff]
  %v34 = vld [vmem:[%s1 + $0x90] sm:$0xff]
  %v35 = vld [vmem:[%s1 + $0x98] sm:$0xff]
  %v36 = vld [vmem:[%s1 + $0xa0] sm:$0xff]
  %v37 = vld [vmem:[%s1 + $0xa8] sm:$0xff]
  %v38 = vld [vmem:[%s1 + $0xb0] sm:$0xff]
  %v39 = vld [vmem:[%s1 + $0xb8] sm:$0xff]
  %v40 = vld [vmem:[%s1 + $0xc0] sm:$0xff]
  %v41 = vld [vmem:[%s1 + $0xc8] sm:$0xff]
  %v42 = vld [vmem:[%s1 + $0xd0] sm:$0xff]
  %v43 = vld [vmem:[%s1 + $0xd8] sm:$0xff]
  %v44 = vld [vmem:[%s1 + $0xe0] sm:$0xff]
  %v45 = vld [vmem:[%s1 + $0xe8] sm:$0xff]
  %v46 = vld [vmem:[%s1 + $0xf0] sm:$0xff]
  %v47 = vld [vmem:[%s1 + $0xf8] sm:$0xff]
  %v48 = vld [vmem:[%s1 + $0x100] sm:$0xff]
  %v49 = vld [vmem:[%s1 + $0x108] sm:$0xff]
  %v50 = vld [vmem:[%s1 + $0x110] sm:$0xff]
  %v51 = vld [vmem:[%s1 + $0x118] sm:$0xff]
  %v52 = vld [vmem:[%s1 + $0x120] sm:$0xff]
  %v53 = vld [vmem:[%s1 + $0x128] sm:$0xff]
  %v54 = vld [vmem:[%s1 + $0x130] sm:$0xff]
  %v55 = vld [vmem:[%s1 + $0x138] sm:$0xff]
  %v56 = vld [vmem:[%s1 + $0x140] sm:$0xff]
  %v57 = vld [vmem:[%s1 + $0x148] sm:$0xff]
  %v58 = vld [vmem:[%s1 + $0x150] sm:$0xff]
  %v59 = vld [vmem:[%s1 + $0x158] sm:$0xff]
  %v60 = vld [vmem:[%s1 + $0x160] sm:$0xff]
  %v61 = vld [vmem:[%s1 + $0x168] sm:$0xff]
  %v62 = vld [vmem:[%s1 + $0x170] sm:$0xff]
  %v63 = vld [vmem:[%s1 + $0x178] sm:$0xff]
  %v64 = vld [vmem:[%s1 + $0x180] sm:$0xff]
  %v65 = vld [vmem:[%s1 + $0x188] sm:$0xff]
  %v66 = vld [vmem:[%s1 + $0x190] sm:$0xff]
  %v67 = vld [vmem:[%s1 + $0x198] sm:$0xff]
  %v68 = vld [vmem:[%s1 + $0x1a0] sm:$0xff]
  %v69 = vld [vmem:[%s1 + $0x1a8] sm:$0xff]
  %v70 = vld [vmem:[%s1 + $0x1b0] sm:$0xff]
  %v71 = vld [vmem:[%s1 + $0x1b8] sm:$0xff]
  %v72 = vld [vmem:[%s1 + $0x1c0] sm:$0xff]
  %v73 = vld [vmem:[%s1 + $0x1c8] sm:$0xff]
  %v74 = vld [vmem:[%s1 + $0x1d0] sm:$0xff]
  %v75 = vld [vmem:[%s1 + $0x1d8] sm:$0xff]
  %v76 = vld [vmem:[%s1 + $0x1e0] sm:$0xff]
  %v77 = vld [vmem:[%s1 + $0x1e8] sm:$0xff]
  %v78 = vld [vmem:[%s1 + $0x1f0] sm:$0xff]
  %v79 = vld [vmem:[%s1 + $0x1f8] sm:$0xff]
  %v80 = vld [vmem:[%s2] sm:$0xff]
  %v82 = vlaneseq
  %v83 = vshrl.u32 %v82, 7
  %v84 = vsub.s32 0, %v83
  %v85 = vrot.slane %v80, %v84
  %v86 = vlaneseq
  %v87 = vshrl.u32 %v86, 7
  %v88 = vsub.s32 1, %v87
  %v89 = vrot.slane %v80, %v88
  %v90 = vlaneseq
  %v91 = vshrl.u32 %v90, 7
  %v92 = vsub.s32 2, %v91
  %v93 = vrot.slane %v80, %v92
  %v94 = vlaneseq
  %v95 = vshrl.u32 %v94, 7
  %v96 = vsub.s32 3, %v95
  %v97 = vrot.slane %v80, %v96
  %v98 = vlaneseq
  %v99 = vshrl.u32 %v98, 7
  %v100 = vsub.s32 4, %v99
  %v101 = vrot.slane %v80, %v100
  %v102 = vlaneseq
  %v103 = vshrl.u32 %v102, 7
  %v104 = vsub.s32 5, %v103
  %v105 = vrot.slane %v80, %v104
  %v106 = vlaneseq
  %v107 = vshrl.u32 %v106, 7
  %v108 = vsub.s32 6, %v107
  %v109 = vrot.slane %v80, %v108
  %v110 = vlaneseq
  %v111 = vshrl.u32 %v110, 7
  %v112 = vsub.s32 7, %v111
  %v113 = vrot.slane %v80, %v112
  %v186 = vunpack.c.l.b16 %v16
  %v187 = vunpack.c.h.b16 %v16
  %v188 = vunpack.c.l.b16 %v17
  %v189 = vunpack.c.h.b16 %v17
  %v190 = vunpack.c.l.b16 %v18
  %v191 = vunpack.c.h.b16 %v18
  %v192 = vunpack.c.l.b16 %v19
  %v193 = vunpack.c.h.b16 %v19
  %v194 = vunpack.c.l.b16 %v20
  %v195 = vunpack.c.h.b16 %v20
  %v196 = vunpack.c.l.b16 %v21
  %v197 = vunpack.c.h.b16 %v21
  %v198 = vunpack.c.l.b16 %v22
  %v199 = vunpack.c.h.b16 %v22
  %v200 = vunpack.c.l.b16 %v23
  %v201 = vunpack.c.h.b16 %v23
  %v202 = vunpack.c.l.b16 %v24
  %v203 = vunpack.c.h.b16 %v24
  %v204 = vunpack.c.l.b16 %v25
  %v205 = vunpack.c.h.b16 %v25
  %v206 = vunpack.c.l.b16 %v26
  %v207 = vunpack.c.h.b16 %v26
  %v208 = vunpack.c.l.b16 %v27
  %v209 = vunpack.c.h.b16 %v27
  %v210 = vunpack.c.l.b16 %v28
  %v211 = vunpack.c.h.b16 %v28
  %v212 = vunpack.c.l.b16 %v29
  %v213 = vunpack.c.h.b16 %v29
  %v214 = vunpack.c.l.b16 %v30
  %v215 = vunpack.c.h.b16 %v30
  %v216 = vunpack.c.l.b16 %v31
  %v217 = vunpack.c.h.b16 %v31
  %v218 = vunpack.c.l.b16 %v32
  %v219 = vunpack.c.h.b16 %v32
  %v220 = vunpack.c.l.b16 %v33
  %v221 = vunpack.c.h.b16 %v33
  %v222 = vunpack.c.l.b16 %v34
  %v223 = vunpack.c.h.b16 %v34
  %v224 = vunpack.c.l.b16 %v35
  %v225 = vunpack.c.h.b16 %v35
  %v226 = vunpack.c.l.b16 %v36
  %v227 = vunpack.c.h.b16 %v36
  %v228 = vunpack.c.l.b16 %v37
  %v229 = vunpack.c.h.b16 %v37
  %v230 = vunpack.c.l.b16 %v38
  %v231 = vunpack.c.h.b16 %v38
  %v232 = vunpack.c.l.b16 %v39
  %v233 = vunpack.c.h.b16 %v39
  %v234 = vunpack.c.l.b16 %v40
  %v235 = vunpack.c.h.b16 %v40
  %v236 = vunpack.c.l.b16 %v41
  %v237 = vunpack.c.h.b16 %v41
  %v238 = vunpack.c.l.b16 %v42
  %v239 = vunpack.c.h.b16 %v42
  %v240 = vunpack.c.l.b16 %v43
  %v241 = vunpack.c.h.b16 %v43
  %v242 = vunpack.c.l.b16 %v44
  %v243 = vunpack.c.h.b16 %v44
  %v244 = vunpack.c.l.b16 %v45
  %v245 = vunpack.c.h.b16 %v45
  %v246 = vunpack.c.l.b16 %v46
  %v247 = vunpack.c.h.b16 %v46
  %v248 = vunpack.c.l.b16 %v47
  %v249 = vunpack.c.h.b16 %v47
  %v250 = vunpack.c.l.b16 %v48
  %v251 = vunpack.c.h.b16 %v48
  %v252 = vunpack.c.l.b16 %v49
  %v253 = vunpack.c.h.b16 %v49
  %v254 = vunpack.c.l.b16 %v50
  %v255 = vunpack.c.h.b16 %v50
  %v256 = vunpack.c.l.b16 %v51
  %v257 = vunpack.c.h.b16 %v51
  %v258 = vunpack.c.l.b16 %v52
  %v259 = vunpack.c.h.b16 %v52
  %v260 = vunpack.c.l.b16 %v53
  %v261 = vunpack.c.h.b16 %v53
  %v262 = vunpack.c.l.b16 %v54
  %v263 = vunpack.c.h.b16 %v54
  %v264 = vunpack.c.l.b16 %v55
  %v265 = vunpack.c.h.b16 %v55
  %v266 = vunpack.c.l.b16 %v56
  %v267 = vunpack.c.h.b16 %v56
  %v268 = vunpack.c.l.b16 %v57
  %v269 = vunpack.c.h.b16 %v57
  %v270 = vunpack.c.l.b16 %v58
  %v271 = vunpack.c.h.b16 %v58
  %v272 = vunpack.c.l.b16 %v59
  %v273 = vunpack.c.h.b16 %v59
  %v274 = vunpack.c.l.b16 %v60
  %v275 = vunpack.c.h.b16 %v60
  %v276 = vunpack.c.l.b16 %v61
  %v277 = vunpack.c.h.b16 %v61
  %v278 = vunpack.c.l.b16 %v62
  %v279 = vunpack.c.h.b16 %v62
  %v280 = vunpack.c.l.b16 %v63
  %v281 = vunpack.c.h.b16 %v63
  %v282 = vunpack.c.l.b16 %v64
  %v283 = vunpack.c.h.b16 %v64
  %v284 = vunpack.c.l.b16 %v65
  %v285 = vunpack.c.h.b16 %v65
  %v286 = vunpack.c.l.b16 %v66
  %v287 = vunpack.c.h.b16 %v66
  %v288 = vunpack.c.l.b16 %v67
  %v289 = vunpack.c.h.b16 %v67
  %v290 = vunpack.c.l.b16 %v68
  %v291 = vunpack.c.h.b16 %v68
  %v292 = vunpack.c.l.b16 %v69
  %v293 = vunpack.c.h.b16 %v69
  %v294 = vunpack.c.l.b16 %v70
  %v295 = vunpack.c.h.b16 %v70
  %v296 = vunpack.c.l.b16 %v71
  %v297 = vunpack.c.h.b16 %v71
  %v298 = vunpack.c.l.b16 %v72
  %v299 = vunpack.c.h.b16 %v72
  %v300 = vunpack.c.l.b16 %v73
  %v301 = vunpack.c.h.b16 %v73
  %v302 = vunpack.c.l.b16 %v74
  %v303 = vunpack.c.h.b16 %v74
  %v304 = vunpack.c.l.b16 %v75
  %v305 = vunpack.c.h.b16 %v75
  %v306 = vunpack.c.l.b16 %v76
  %v307 = vunpack.c.h.b16 %v76
  %v308 = vunpack.c.l.b16 %v77
  %v309 = vunpack.c.h.b16 %v77
  %v310 = vunpack.c.l.b16 %v78
  %v311 = vunpack.c.h.b16 %v78
  %v312 = vunpack.c.l.b16 %v79
  %v313 = vunpack.c.h.b16 %v79
  %v314 = vpack.c.b16 %v194, %v186
  %v315 = vpack.c.b16 %v195, %v187
  %v316 = vpack.c.b16 %v196, %v188
  %v317 = vpack.c.b16 %v197, %v189
  %v318 = vpack.c.b16 %v198, %v190
  %v319 = vpack.c.b16 %v199, %v191
  %v320 = vpack.c.b16 %v200, %v192
  %v321 = vpack.c.b16 %v201, %v193
  %v322 = vpack.c.b16 %v210, %v202
  %v323 = vpack.c.b16 %v211, %v203
  %v324 = vpack.c.b16 %v212, %v204
  %v325 = vpack.c.b16 %v213, %v205
  %v326 = vpack.c.b16 %v214, %v206
  %v327 = vpack.c.b16 %v215, %v207
  %v328 = vpack.c.b16 %v216, %v208
  %v329 = vpack.c.b16 %v217, %v209
  %v330 = vpack.c.b16 %v226, %v218
  %v331 = vpack.c.b16 %v227, %v219
  %v332 = vpack.c.b16 %v228, %v220
  %v333 = vpack.c.b16 %v229, %v221
  %v334 = vpack.c.b16 %v230, %v222
  %v335 = vpack.c.b16 %v231, %v223
  %v336 = vpack.c.b16 %v232, %v224
  %v337 = vpack.c.b16 %v233, %v225
  %v338 = vpack.c.b16 %v242, %v234
  %v339 = vpack.c.b16 %v243, %v235
  %v340 = vpack.c.b16 %v244, %v236
  %v341 = vpack.c.b16 %v245, %v237
  %v342 = vpack.c.b16 %v246, %v238
  %v343 = vpack.c.b16 %v247, %v239
  %v344 = vpack.c.b16 %v248, %v240
  %v345 = vpack.c.b16 %v249, %v241
  %v346 = vpack.c.b16 %v258, %v250
  %v347 = vpack.c.b16 %v259, %v251
  %v348 = vpack.c.b16 %v260, %v252
  %v349 = vpack.c.b16 %v261, %v253
  %v350 = vpack.c.b16 %v262, %v254
  %v351 = vpack.c.b16 %v263, %v255
  %v352 = vpack.c.b16 %v264, %v256
  %v353 = vpack.c.b16 %v265, %v257
  %v354 = vpack.c.b16 %v274, %v266
  %v355 = vpack.c.b16 %v275, %v267
  %v356 = vpack.c.b16 %v276, %v268
  %v357 = vpack.c.b16 %v277, %v269
  %v358 = vpack.c.b16 %v278, %v270
  %v359 = vpack.c.b16 %v279, %v271
  %v360 = vpack.c.b16 %v280, %v272
  %v361 = vpack.c.b16 %v281, %v273
  %v362 = vpack.c.b16 %v290, %v282
  %v363 = vpack.c.b16 %v291, %v283
  %v364 = vpack.c.b16 %v292, %v284
  %v365 = vpack.c.b16 %v293, %v285
  %v366 = vpack.c.b16 %v294, %v286
  %v367 = vpack.c.b16 %v295, %v287
  %v368 = vpack.c.b16 %v296, %v288
  %v369 = vpack.c.b16 %v297, %v289
  %v370 = vpack.c.b16 %v306, %v298
  %v371 = vpack.c.b16 %v307, %v299
  %v372 = vpack.c.b16 %v308, %v300
  %v373 = vpack.c.b16 %v309, %v301
  %v374 = vpack.c.b16 %v310, %v302
  %v375 = vpack.c.b16 %v311, %v303
  %v376 = vpack.c.b16 %v312, %v304
  %v377 = vpack.c.b16 %v313, %v305
  %442 = vmatprep.subr.bf16.mxu0 %v315
  %443 = vmatpush1.bf16.msra.mxu0 %v314
  %444 = vmatprep.subr.bf16.mxu0 %v323
  %445 = vmatpush1.bf16.msra.mxu0 %v322
  %446 = vmatprep.subr.bf16.mxu0 %v331
  %447 = vmatpush1.bf16.msra.mxu0 %v330
  %448 = vmatprep.subr.bf16.mxu0 %v339
  %449 = vmatpush1.bf16.msra.mxu0 %v338
  %450 = vmatprep.subr.bf16.mxu0 %v347
  %451 = vmatpush1.bf16.msra.mxu0 %v346
  %452 = vmatprep.subr.bf16.mxu0 %v355
  %453 = vmatpush1.bf16.msra.mxu0 %v354
  %454 = vmatprep.subr.bf16.mxu0 %v363
  %455 = vmatpush1.bf16.msra.mxu0 %v362
  %456 = vmatprep.subr.bf16.mxu0 %v371
  %457 = vmatpush1.bf16.msra.mxu0 %v370
  %458 = vmatprep.subr.bf16.mxu0 0
  %459 = vmatpush1.bf16.msra.mxu0 0
  %460 = vmatprep.subr.bf16.mxu0 0
  %461 = vmatpush1.bf16.msra.mxu0 0
  %462 = vmatprep.subr.bf16.mxu0 0
  %463 = vmatpush1.bf16.msra.mxu0 0
  %464 = vmatprep.subr.bf16.mxu0 0
  %465 = vmatpush1.bf16.msra.mxu0 0
  %466 = vmatprep.subr.bf16.mxu0 0
  %467 = vmatpush1.bf16.msra.mxu0 0
  %468 = vmatprep.subr.bf16.mxu0 0
  %469 = vmatpush1.bf16.msra.mxu0 0
  %470 = vmatprep.subr.bf16.mxu0 0
  %471 = vmatpush1.bf16.msra.mxu0 0
  %472 = vmatprep.subr.bf16.mxu0 0
  %473 = vmatpush1.bf16.msra.mxu0 0
  %474 = vmatprep.mubr.bf16.mxu0 0
  %475 = vmatmul.mubr.bf16.gmra.mrb[0].mxu0 %v15
  %v476 = vpop.f32.mrb[0].mxu0
  %v477 = vadd.f32 %v85, %v476
  %v478 = vpop.f32.mrb[0].mxu0
  %v479 = vadd.f32 %v89, %v478
  %v480 = vpop.f32.mrb[0].mxu0
  %v481 = vpop.f32.mrb[0].mxu0
  %482 = vdwg.mxu0
  %483 = vmatprep.subr.bf16.mxu0 %v317
  %484 = vmatpush1.bf16.msra.mxu0 %v316
  %485 = vmatprep.subr.bf16.mxu0 %v325
  %486 = vmatpush1.bf16.msra.mxu0 %v324
  %487 = vmatprep.subr.bf16.mxu0 %v333
  %488 = vmatpush1.bf16.msra.mxu0 %v332
  %489 = vmatprep.subr.bf16.mxu0 %v341
  %490 = vmatpush1.bf16.msra.mxu0 %v340
  %491 = vmatprep.subr.bf16.mxu0 %v349
  %492 = vmatpush1.bf16.msra.mxu0 %v348
  %493 = vmatprep.subr.bf16.mxu0 %v357
  %494 = vmatpush1.bf16.msra.mxu0 %v356
  %495 = vmatprep.subr.bf16.mxu0 %v365
  %496 = vmatpush1.bf16.msra.mxu0 %v364
  %497 = vmatprep.subr.bf16.mxu0 %v373
  %498 = vmatpush1.bf16.msra.mxu0 %v372
  %499 = vmatprep.subr.bf16.mxu0 0
  %500 = vmatpush1.bf16.msra.mxu0 0
  %501 = vmatprep.subr.bf16.mxu0 0
  %502 = vmatpush1.bf16.msra.mxu0 0
  %503 = vmatprep.subr.bf16.mxu0 0
  %504 = vmatpush1.bf16.msra.mxu0 0
  %505 = vmatprep.subr.bf16.mxu0 0
  %506 = vmatpush1.bf16.msra.mxu0 0
  %507 = vmatprep.subr.bf16.mxu0 0
  %508 = vmatpush1.bf16.msra.mxu0 0
  %509 = vmatprep.subr.bf16.mxu0 0
  %510 = vmatpush1.bf16.msra.mxu0 0
  %511 = vmatprep.subr.bf16.mxu0 0
  %512 = vmatpush1.bf16.msra.mxu0 0
  %513 = vmatprep.subr.bf16.mxu0 0
  %514 = vmatpush1.bf16.msra.mxu0 0
  %515 = vmatprep.mubr.bf16.mxu0 0
  %516 = vmatmul.mubr.bf16.gmra.mrb[0].mxu0 %v15
  %v517 = vpop.f32.mrb[0].mxu0
  %v518 = vadd.f32 %v93, %v517
  %v519 = vpop.f32.mrb[0].mxu0
  %v520 = vadd.f32 %v97, %v519
  %v521 = vpop.f32.mrb[0].mxu0
  %v522 = vpop.f32.mrb[0].mxu0
  %523 = vdwg.mxu0
  %524 = vmatprep.subr.bf16.mxu0 %v319
  %525 = vmatpush1.bf16.msra.mxu0 %v318
  %526 = vmatprep.subr.bf16.mxu0 %v327
  %527 = vmatpush1.bf16.msra.mxu0 %v326
  %528 = vmatprep.subr.bf16.mxu0 %v335
  %529 = vmatpush1.bf16.msra.mxu0 %v334
  %530 = vmatprep.subr.bf16.mxu0 %v343
  %531 = vmatpush1.bf16.msra.mxu0 %v342
  %532 = vmatprep.subr.bf16.mxu0 %v351
  %533 = vmatpush1.bf16.msra.mxu0 %v350
  %534 = vmatprep.subr.bf16.mxu0 %v359
  %535 = vmatpush1.bf16.msra.mxu0 %v358
  %536 = vmatprep.subr.bf16.mxu0 %v367
  %537 = vmatpush1.bf16.msra.mxu0 %v366
  %538 = vmatprep.subr.bf16.mxu0 %v375
  %539 = vmatpush1.bf16.msra.mxu0 %v374
  %540 = vmatprep.subr.bf16.mxu0 0
  %541 = vmatpush1.bf16.msra.mxu0 0
  %542 = vmatprep.subr.bf16.mxu0 0
  %543 = vmatpush1.bf16.msra.mxu0 0
  %544 = vmatprep.subr.bf16.mxu0 0
  %545 = vmatpush1.bf16.msra.mxu0 0
  %546 = vmatprep.subr.bf16.mxu0 0
  %547 = vmatpush1.bf16.msra.mxu0 0
  %548 = vmatprep.subr.bf16.mxu0 0
  %549 = vmatpush1.bf16.msra.mxu0 0
  %550 = vmatprep.subr.bf16.mxu0 0
  %551 = vmatpush1.bf16.msra.mxu0 0
  %552 = vmatprep.subr.bf16.mxu0 0
  %553 = vmatpush1.bf16.msra.mxu0 0
  %554 = vmatprep.subr.bf16.mxu0 0
  %555 = vmatpush1.bf16.msra.mxu0 0
  %556 = vmatprep.mubr.bf16.mxu0 0
  %557 = vmatmul.mubr.bf16.gmra.mrb[0].mxu0 %v15
  %v558 = vpop.f32.mrb[0].mxu0
  %v559 = vadd.f32 %v101, %v558
  %v560 = vpop.f32.mrb[0].mxu0
  %v561 = vadd.f32 %v105, %v560
  %v562 = vpop.f32.mrb[0].mxu0
  %v563 = vpop.f32.mrb[0].mxu0
  %564 = vdwg.mxu0
  %565 = vmatprep.subr.bf16.mxu0 %v321
  %566 = vmatpush1.bf16.msra.mxu0 %v320
  %567 = vmatprep.subr.bf16.mxu0 %v329
  %568 = vmatpush1.bf16.msra.mxu0 %v328
  %569 = vmatprep.subr.bf16.mxu0 %v337
  %570 = vmatpush1.bf16.msra.mxu0 %v336
  %571 = vmatprep.subr.bf16.mxu0 %v345
  %572 = vmatpush1.bf16.msra.mxu0 %v344
  %573 = vmatprep.subr.bf16.mxu0 %v353
  %574 = vmatpush1.bf16.msra.mxu0 %v352
  %575 = vmatprep.subr.bf16.mxu0 %v361
  %576 = vmatpush1.bf16.msra.mxu0 %v360
  %577 = vmatprep.subr.bf16.mxu0 %v369
  %578 = vmatpush1.bf16.msra.mxu0 %v368
  %579 = vmatprep.subr.bf16.mxu0 %v377
  %580 = vmatpush1.bf16.msra.mxu0 %v376
  %581 = vmatprep.subr.bf16.mxu0 0
  %582 = vmatpush1.bf16.msra.mxu0 0
  %583 = vmatprep.subr.bf16.mxu0 0
  %584 = vmatpush1.bf16.msra.mxu0 0
  %585 = vmatprep.subr.bf16.mxu0 0
  %586 = vmatpush1.bf16.msra.mxu0 0
  %587 = vmatprep.subr.bf16.mxu0 0
  %588 = vmatpush1.bf16.msra.mxu0 0
  %589 = vmatprep.subr.bf16.mxu0 0
  %590 = vmatpush1.bf16.msra.mxu0 0
  %591 = vmatprep.subr.bf16.mxu0 0
  %592 = vmatpush1.bf16.msra.mxu0 0
  %593 = vmatprep.subr.bf16.mxu0 0
  %594 = vmatpush1.bf16.msra.mxu0 0
  %595 = vmatprep.subr.bf16.mxu0 0
  %596 = vmatpush1.bf16.msra.mxu0 0
  %597 = vmatprep.mubr.bf16.mxu0 0
  %598 = vmatmul.mubr.bf16.gmra.mrb[0].mxu0 %v15
  %v599 = vpop.f32.mrb[0].mxu0
  %v600 = vadd.f32 %v109, %v599
  %v601 = vpop.f32.mrb[0].mxu0
  %v602 = vadd.f32 %v113, %v601
  %v603 = vpop.f32.mrb[0].mxu0
  %v604 = vpop.f32.mrb[0].mxu0
  %605 = vdwg.mxu0
  %606 = vst [vmem:[%s3] sm:$0xff] %v477
  %607 = vst [vmem:[%s3 + $0x8] sm:$0xff] %v479
  %608 = vst [vmem:[%s3 + $0x10] sm:$0xff] %v518
  %609 = vst [vmem:[%s3 + $0x18] sm:$0xff] %v520
  %610 = vst [vmem:[%s3 + $0x20] sm:$0xff] %v559
  %611 = vst [vmem:[%s3 + $0x28] sm:$0xff] %v561
  %612 = vst [vmem:[%s3 + $0x30] sm:$0xff] %v600
  %613 = vst [vmem:[%s3 + $0x38] sm:$0xff] %v602
  // Predicated region
  $region14: #{state_tracker_forward.7} parent=0 // pred_check
    _
  $region15: #{state_tracker_forward.7} parent=0 // pred_check_branch
    %615 = sbr.rel (0) target = $region17
  $region16: #{state_tracker_forward.7} parent=0 // pred_region
    _
  $region17: #{state_tracker_forward.7} parent=0 // pred_fallthru
    _
  // Predicated region
  $region18: #{state_tracker_forward.7} parent=0 // pred_check
    _
  $region19: #{state_tracker_forward.7} parent=0 // pred_check_branch
    %617 = sbr.rel (0) target = $region21
  $region20: #{state_tracker_forward.7} parent=0 // pred_region
    _
  $region21: #{state_tracker_forward.7} parent=0 // pred_fallthru
    _

// kernel: state_tracker_forward.6
$region0: #{state_tracker_forward.6}
  #allocation0 [shape = 'u32[]', space=smem, size = 0x4, offset = 0x4, fixed_abs, tag = 'smem constant byte address 0x4 - core index']
  #allocation1 [shape = 'u32[144,128]{1,0:T(1,128)}', space=vmem, size = 0x12000, scoped, tag = 'internal scratch']
  %s0 = inlined_call_operand.vmem [shape: bf16[50,32], index: 0, kind: input, shape index: {}]
  %s1 = inlined_call_operand.vmem [shape: bf16[50,32], index: 1, kind: input, shape index: {}]
  %s2 = inlined_call_operand.vmem [shape: bf16[50,32], index: 2, kind: input, shape index: {}]
  %s3 = inlined_call_operand.vmem [shape: bf16[50,32], index: 3, kind: input, shape index: {}]
  %s4 = inlined_call_operand.vmem [shape: bf16[50,32], index: 4, kind: input, shape index: {}]
  %s5 = inlined_call_operand.vmem [shape: bf16[50,32], index: 5, kind: input, shape index: {}]
  %s6 = inlined_call_operand.vmem [shape: bf16[50,32], index: 6, kind: input, shape index: {}]
  %s7 = inlined_call_operand.vmem [shape: bf16[50,32], index: 7, kind: input, shape index: {}]
  %s8 = inlined_call_operand.vmem [shape: bf16[50,32], index: 8, kind: input, shape index: {}]
  %s9 = inlined_call_operand.vmem [shape: bf16[50,32], index: 9, kind: input, shape index: {}]
  %s10 = inlined_call_operand.vmem [shape: bf16[50,32], index: 10, kind: input, shape index: {}]
  %s11 = inlined_call_operand.vmem [shape: bf16[50,32], index: 11, kind: input, shape index: {}]
  %s12 = inlined_call_operand.vmem [shape: bf16[50,32], index: 12, kind: input, shape index: {}]
  %s13 = inlined_call_operand.vmem [shape: bf16[50,32], index: 13, kind: input, shape index: {}]
  %s14 = inlined_call_operand.vmem [shape: bf16[50,32], index: 14, kind: input, shape index: {}]
  %s15 = inlined_call_operand.vmem [shape: bf16[50,32], index: 15, kind: input, shape index: {}]
  %s16 = inlined_call_operand.vmem [shape: bf16[128,16], index: 16, kind: input, shape index: {}]
  %s17 = inlined_call_operand.vmem [shape: f32[1,16], index: 17, kind: input, shape index: {}]
  %s18 = inlined_call_operand.vmem [shape: bf16[64,8], index: 18, kind: input, shape index: {}]
  %s19 = inlined_call_operand.vmem [shape: f32[1,8], index: 19, kind: input, shape index: {}]
  %s20 = inlined_call_operand.vmem [shape: bf16[8,8], index: 20, kind: input, shape index: {}]
  %s21 = inlined_call_operand.vmem [shape: f32[1,8], index: 21, kind: input, shape index: {}]
  %s22 = inlined_call_operand.vmem [shape: bf16[8,4], index: 22, kind: input, shape index: {}]
  %s23 = inlined_call_operand.vmem [shape: f32[1,4], index: 23, kind: input, shape index: {}]
  %s24 = inlined_call_operand.vmem [shape: bf16[50,4], index: 24, kind: output, shape index: {}]
  %s25 = sld [smem:[#allocation0]]
  $region106: #{state_tracker_forward.6} parent=0
    _
  %s27 = ssub.s32 1, %s25
  %s28 = scalar_select 0, %s27, %s25
  // Predicated region
  $region2: #{state_tracker_forward.6} parent=0 // pred_check
    _
  $region3: #{state_tracker_forward.6} parent=0 // pred_check_branch
    %30 = sbr.rel (0) target = $region5
  $region4: #{state_tracker_forward.6} parent=0 // pred_region
    _
  $region5: #{state_tracker_forward.6} parent=0 // pred_fallthru
    _
  // Predicated region
  $region6: #{state_tracker_forward.6} parent=0 // pred_check
    _
  $region7: #{state_tracker_forward.6} parent=0 // pred_check_branch
    %32 = sbr.rel (0) target = $region9
  $region8: #{state_tracker_forward.6} parent=0 // pred_region
    _
  $region9: #{state_tracker_forward.6} parent=0 // pred_fallthru
    _
  // Predicated region
  $region10: #{state_tracker_forward.6} parent=0 // pred_check
    _
  $region11: #{state_tracker_forward.6} parent=0 // pred_check_branch
    %34 = sbr.rel (0) target = $region13
  $region12: #{state_tracker_forward.6} parent=0 // pred_region
    _
  $region13: #{state_tracker_forward.6} parent=0 // pred_fallthru
    _
  // Predicated region
  $region14: #{state_tracker_forward.6} parent=0 // pred_check
    _
  $region15: #{state_tracker_forward.6} parent=0 // pred_check_branch
    %36 = sbr.rel (0) target = $region17
  $region16: #{state_tracker_forward.6} parent=0 // pred_region
    _
  $region17: #{state_tracker_forward.6} parent=0 // pred_fallthru
    _
  // Predicated region
  $region18: #{state_tracker_forward.6} parent=0 // pred_check
    _
  $region19: #{state_tracker_forward.6} parent=0 // pred_check_branch
    %38 = sbr.rel (0) target = $region21
  $region20: #{state_tracker_forward.6} parent=0 // pred_region
    _
  $region21: #{state_tracker_forward.6} parent=0 // pred_fallthru
    _
  // Predicated region
  $region22: #{state_tracker_forward.6} parent=0 // pred_check
    _
  $region23: #{state_tracker_forward.6} parent=0 // pred_check_branch
    %40 = sbr.rel (0) target = $region25
  $region24: #{state_tracker_forward.6} parent=0 // pred_region
    _
  $region25: #{state_tracker_forward.6} parent=0 // pred_fallthru
    _
  // Predicated region
  $region26: #{state_tracker_forward.6} parent=0 // pred_check
    _
  $region27: #{state_tracker_forward.6} parent=0 // pred_check_branch
    %42 = sbr.rel (0) target = $region29
  $region28: #{state_tracker_forward.6} parent=0 // pred_region
    _
  $region29: #{state_tracker_forward.6} parent=0 // pred_fallthru
    _
  // Predicated region
  $region30: #{state_tracker_forward.6} parent=0 // pred_check
    _
  $region31: #{state_tracker_forward.6} parent=0 // pred_check_branch
    %44 = sbr.rel (0) target = $region33
  $region32: #{state_tracker_forward.6} parent=0 // pred_region
    _
  $region33: #{state_tracker_forward.6} parent=0 // pred_fallthru
    _
  // Predicated region
  $region34: #{state_tracker_forward.6} parent=0 // pred_check
    _
  $region35: #{state_tracker_forward.6} parent=0 // pred_check_branch
    %46 = sbr.rel (0) target = $region37
  $region36: #{state_tracker_forward.6} parent=0 // pred_region
    _
  $region37: #{state_tracker_forward.6} parent=0 // pred_fallthru
    _
  // Predicated region
  $region38: #{state_tracker_forward.6} parent=0 // pred_check
    _
  $region39: #{state_tracker_forward.6} parent=0 // pred_check_branch
    %48 = sbr.rel (0) target = $region41
  $region40: #{state_tracker_forward.6} parent=0 // pred_region
    _
  $region41: #{state_tracker_forward.6} parent=0 // pred_fallthru
    _
  // Predicated region
  $region42: #{state_tracker_forward.6} parent=0 // pred_check
    _
  $region43: #{state_tracker_forward.6} parent=0 // pred_check_branch
    %50 = sbr.rel (0) target = $region45
  $region44: #{state_tracker_forward.6} parent=0 // pred_region
    _
  $region45: #{state_tracker_forward.6} parent=0 // pred_fallthru
    _
  // Predicated region
  $region46: #{state_tracker_forward.6} parent=0 // pred_check
    _
  $region47: #{state_tracker_forward.6} parent=0 // pred_check_branch
    %52 = sbr.rel (0) target = $region49
  $region48: #{state_tracker_forward.6} parent=0 // pred_region
    _
  $region49: #{state_tracker_forward.6} parent=0 // pred_fallthru
    _
  // Predicated region
  $region50: #{state_tracker_forward.6} parent=0 // pred_check
    _
  $region51: #{state_tracker_forward.6} parent=0 // pred_check_branch
    %54 = sbr.rel (0) target = $region53
  $region52: #{state_tracker_forward.6} parent=0 // pred_region
    _
  $region53: #{state_tracker_forward.6} parent=0 // pred_fallthru
    _
  // Predicated region
  $region54: #{state_tracker_forward.6} parent=0 // pred_check
    _
  $region55: #{state_tracker_forward.6} parent=0 // pred_check_branch
    %56 = sbr.rel (0) target = $region57
  $region56: #{state_tracker_forward.6} parent=0 // pred_region
    _
  $region57: #{state_tracker_forward.6} parent=0 // pred_fallthru
    _
  // Predicated region
  $region58: #{state_tracker_forward.6} parent=0 // pred_check
    _
  $region59: #{state_tracker_forward.6} parent=0 // pred_check_branch
    %58 = sbr.rel (0) target = $region61
  $region60: #{state_tracker_forward.6} parent=0 // pred_region
    _
  $region61: #{state_tracker_forward.6} parent=0 // pred_fallthru
    _
  // Predicated region
  $region62: #{state_tracker_forward.6} parent=0 // pred_check
    _
  $region63: #{state_tracker_forward.6} parent=0 // pred_check_branch
    %60 = sbr.rel (0) target = $region65
  $region64: #{state_tracker_forward.6} parent=0 // pred_region
    _
  $region65: #{state_tracker_forward.6} parent=0 // pred_fallthru
    _
  // Predicated region
  $region66: #{state_tracker_forward.6} parent=0 // pred_check
    _
  $region67: #{state_tracker_forward.6} parent=0 // pred_check_branch
    %62 = sbr.rel (0) target = $region69
  $region68: #{state_tracker_forward.6} parent=0 // pred_region
    _
  $region69: #{state_tracker_forward.6} parent=0 // pred_fallthru
    _
  // Predicated region
  $region70: #{state_tracker_forward.6} parent=0 // pred_check
    _
  $region71: #{state_tracker_forward.6} parent=0 // pred_check_branch
    %64 = sbr.rel (0) target = $region73
  $region72: #{state_tracker_forward.6} parent=0 // pred_region
    _
  $region73: #{state_tracker_forward.6} parent=0 // pred_fallthru
    _
  // Predicated region
  $region74: #{state_tracker_forward.6} parent=0 // pred_check
    _
  $region75: #{state_tracker_forward.6} parent=0 // pred_check_branch
    %66 = sbr.rel (0) target = $region77
  $region76: #{state_tracker_forward.6} parent=0 // pred_region
    _
  $region77: #{state_tracker_forward.6} parent=0 // pred_fallthru
    _
  // Predicated region
  $region78: #{state_tracker_forward.6} parent=0 // pred_check
    _
  $region79: #{state_tracker_forward.6} parent=0 // pred_check_branch
    %68 = sbr.rel (0) target = $region81
  $region80: #{state_tracker_forward.6} parent=0 // pred_region
    _
  $region81: #{state_tracker_forward.6} parent=0 // pred_fallthru
    _
  // Predicated region
  $region82: #{state_tracker_forward.6} parent=0 // pred_check
    _
  $region83: #{state_tracker_forward.6} parent=0 // pred_check_branch
    %70 = sbr.rel (0) target = $region85
  $region84: #{state_tracker_forward.6} parent=0 // pred_region
    _
  $region85: #{state_tracker_forward.6} parent=0 // pred_fallthru
    _
  // Predicated region
  $region86: #{state_tracker_forward.6} parent=0 // pred_check
    _
  $region87: #{state_tracker_forward.6} parent=0 // pred_check_branch
    %72 = sbr.rel (0) target = $region89
  $region88: #{state_tracker_forward.6} parent=0 // pred_region
    _
  $region89: #{state_tracker_forward.6} parent=0 // pred_fallthru
    _
  // Predicated region
  $region90: #{state_tracker_forward.6} parent=0 // pred_check
    _
  $region91: #{state_tracker_forward.6} parent=0 // pred_check_branch
    %74 = sbr.rel (0) target = $region93
  $region92: #{state_tracker_forward.6} parent=0 // pred_region
    _
  $region93: #{state_tracker_forward.6} parent=0 // pred_fallthru
    _
  // Predicated region
  $region94: #{state_tracker_forward.6} parent=0 // pred_check
    _
  $region95: #{state_tracker_forward.6} parent=0 // pred_check_branch
    %76 = sbr.rel (0) target = $region97
  $region96: #{state_tracker_forward.6} parent=0 // pred_region
    _
  $region97: #{state_tracker_forward.6} parent=0 // pred_fallthru
    _
  %v78 = vld [vmem:[%s17] sm:$0x1]
  %v79 = vld [vmem:[%s19] sm:$0x1]
  %v80 = vld [vmem:[%s21] sm:$0x1]
  %v81 = vld [vmem:[%s23] sm:$0x1]
  %v82 = vld [vmem:[%s0] sm:$0xf]
  %v83 = vld [vmem:[%s0 + $0x4] sm:$0xf]
  %v84 = vld [vmem:[%s0 + $0x8] sm:$0xf]
  %v85 = vld [vmem:[%s0 + $0xc] sm:$0xf]
  %v86 = vld [vmem:[%s0 + $0x10] sm:$0xf]
  %v87 = vld [vmem:[%s0 + $0x14] sm:$0xf]
  %v88 = vld [vmem:[%s0 + $0x18] sm:$0x1]
  %v89 = vld [vmem:[%s16] sm:$0xf]
  %v90 = vld [vmem:[%s16 + $0x4] sm:$0xf]
  %v91 = vld [vmem:[%s16 + $0x8] sm:$0xf]
  %v92 = vld [vmem:[%s16 + $0xc] sm:$0xf]
  %v100 = vunpack.c.l.b16 %v82
  %v101 = vunpack.c.l.b16 %v83
  %v102 = vunpack.c.l.b16 %v84
  %v103 = vunpack.c.l.b16 %v85
  %v104 = vunpack.c.l.b16 %v86
  %v105 = vunpack.c.l.b16 %v87
  %v106 = vunpack.c.l.b16 %v88
  %v107 = vpack.c.b16 %v101, %v100
  %v108 = vpack.c.b16 %v103, %v102
  %v109 = vpack.c.b16 %v105, %v104
  %v110 = vpack.c.b16 %v106, %v106
  %v115 = vunpack.c.l.b16 %v89
  %v116 = vunpack.c.l.b16 %v90
  %v117 = vunpack.c.l.b16 %v91
  %v118 = vunpack.c.l.b16 %v92
  %v119 = vpack.c.b16 %v116, %v115
  %v120 = vpack.c.b16 %v118, %v117
  %vm123 = vcmask 261120
  %v125 = vsel %vm123, %v107, 0
  %v128 = vsel %vm123, %v108, 0
  %v131 = vsel %vm123, %v109, 0
  %v134 = vsel %vm123, %v110, 0
  %136 = vmatprep.subr.bf16.mxu0 0
  %137 = vmatpush1.bf16.msra.mxu0 %v119
  %138 = vmatprep.subr.bf16.mxu0 0
  %139 = vmatpush1.bf16.msra.mxu0 %v120
  %140 = vmatprep.subr.bf16.mxu0 0
  %141 = vmatpush1.bf16.msra.mxu0 0
  %142 = vmatprep.subr.bf16.mxu0 0
  %143 = vmatpush1.bf16.msra.mxu0 0
  %144 = vmatprep.subr.bf16.mxu0 0
  %145 = vmatpush1.bf16.msra.mxu0 0
  %146 = vmatprep.subr.bf16.mxu0 0
  %147 = vmatpush1.bf16.msra.mxu0 0
  %148 = vmatprep.subr.bf16.mxu0 0
  %149 = vmatpush1.bf16.msra.mxu0 0
  %150 = vmatprep.subr.bf16.mxu0 0
  %151 = vmatpush1.bf16.msra.mxu0 0
  %152 = vmatprep.subr.bf16.mxu0 0
  %153 = vmatpush1.bf16.msra.mxu0 0
  %154 = vmatprep.subr.bf16.mxu0 0
  %155 = vmatpush1.bf16.msra.mxu0 0
  %156 = vmatprep.subr.bf16.mxu0 0
  %157 = vmatpush1.bf16.msra.mxu0 0
  %158 = vmatprep.subr.bf16.mxu0 0
  %159 = vmatpush1.bf16.msra.mxu0 0
  %160 = vmatprep.subr.bf16.mxu0 0
  %161 = vmatpush1.bf16.msra.mxu0 0
  %162 = vmatprep.subr.bf16.mxu0 0
  %163 = vmatpush1.bf16.msra.mxu0 0
  %164 = vmatprep.subr.bf16.mxu0 0
  %165 = vmatpush1.bf16.msra.mxu0 0
  %166 = vmatprep.subr.bf16.mxu0 0
  %167 = vmatpush1.bf16.msra.mxu0 0
  %168 = vmatprep.mubr.bf16.mxu0 0
  %169 = vmatmul.mubr.bf16.gmra.mrb[0].mxu0 %v125
  %v170 = vpop.f32.mrb[0].mxu0
  %v171 = vadd.f32 0.0, %v170
  %v172 = vpop.f32.mrb[0].mxu0
  %v173 = vpop.f32.mrb[0].mxu0
  %v174 = vadd.f32 0.0, %v173
  %v175 = vpop.f32.mrb[0].mxu0
  %176 = vmatprep.mubr.bf16.mxu0 0
  %177 = vmatmul.mubr.bf16.gmra.mrb[0].mxu0 %v128
  %v178 = vpop.f32.mrb[0].mxu0
  %v179 = vadd.f32 0.0, %v178
  %v180 = vpop.f32.mrb[0].mxu0
  %v181 = vpop.f32.mrb[0].mxu0
  %v182 = vadd.f32 0.0, %v181
  %v183 = vpop.f32.mrb[0].mxu0
  %184 = vmatprep.mubr.bf16.mxu0 0
  %185 = vmatmul.mubr.bf16.gmra.mrb[0].mxu0 %v131
  %v186 = vpop.f32.mrb[0].mxu0
  %v187 = vadd.f32 0.0, %v186
  %v188 = vpop.f32.mrb[0].mxu0
  %v189 = vpop.f32.mrb[0].mxu0
  %v190 = vadd.f32 0.0, %v189
  %v191 = vpop.f32.mrb[0].mxu0
  %192 = vmatprep.mubr.bf16.mxu0 0
  %193 = vmatmul.mubr.bf16.gmra.mrb[0].mxu0 %v134
  %v194 = vpop.f32.mrb[0].mxu0
  %v195 = vadd.f32 0.0, %v194
  %v196 = vpop.f32.mrb[0].mxu0
  %v197 = vpop.f32.mrb[0].mxu0
  %v198 = vpop.f32.mrb[0].mxu0
  %199 = vdwg.mxu0
  %v201 = vlaneseq
  %v202 = vshrl.u32 %v201, 7
  %v203 = vsub.s32 0, %v202
  %v204 = vrot.slane %v78, %v203
  %v206 = vadd.f32 %v204, %v171
  %v207 = vadd.f32 %v204, %v174
  %v208 = vadd.f32 %v204, %v179
  %v209 = vadd.f32 %v204, %v182
  %v210 = vadd.f32 %v204, %v187
  %v211 = vadd.f32 %v204, %v190
  %v212 = vadd.f32 %v204, %v195
  %v213 = vld [vmem:[%s1] sm:$0xf]
  %v214 = vld [vmem:[%s1 + $0x4] sm:$0xf]
  %v215 = vld [vmem:[%s1 + $0x8] sm:$0xf]
  %v216 = vld [vmem:[%s1 + $0xc] sm:$0xf]
  %v217 = vld [vmem:[%s1 + $0x10] sm:$0xf]
  %v218 = vld [vmem:[%s1 + $0x14] sm:$0xf]
  %v219 = vld [vmem:[%s1 + $0x18] sm:$0x1]
  %v220 = vld [vmem:[%s16 + $0x10] sm:$0xf]
  %v221 = vld [vmem:[%s16 + $0x14] sm:$0xf]
  %v222 = vld [vmem:[%s16 + $0x18] sm:$0xf]
  %v223 = vld [vmem:[%s16 + $0x1c] sm:$0xf]
  %v231 = vunpack.c.l.b16 %v213
  %v232 = vunpack.c.l.b16 %v214
  %v233 = vunpack.c.l.b16 %v215
  %v234 = vunpack.c.l.b16 %v216
  %v235 = vunpack.c.l.b16 %v217
  %v236 = vunpack.c.l.b16 %v218
  %v237 = vunpack.c.l.b16 %v219
  %v238 = vpack.c.b16 %v232, %v231
  %v239 = vpack.c.b16 %v234, %v233
  %v240 = vpack.c.b16 %v236, %v235
  %v241 = vpack.c.b16 %v237, %v237
  %v246 = vunpack.c.l.b16 %v220
  %v247 = vunpack.c.l.b16 %v221
  %v248 = vunpack.c.l.b16 %v222
  %v249 = vunpack.c.l.b16 %v223
  %v250 = vpack.c.b16 %v247, %v246
  %v251 = vpack.c.b16 %v249, %v248
  %v255 = vsel %vm123, %v238, 0
  %v258 = vsel %vm123, %v239, 0
  %v261 = vsel %vm123, %v240, 0
  %v264 = vsel %vm123, %v241, 0
  %266 = vmatprep.subr.bf16.mxu0 0
  %267 = vmatpush1.bf16.msra.mxu0 %v250
  %268 = vmatprep.subr.bf16.mxu0 0
  %269 = vmatpush1.bf16.msra.mxu0 %v251
  %270 = vmatprep.subr.bf16.mxu0 0
  %271 = vmatpush1.bf16.msra.mxu0 0
  %272 = vmatprep.subr.bf16.mxu0 0
  %273 = vmatpush1.bf16.msra.mxu0 0
  %274 = vmatprep.subr.bf16.mxu0 0
  %275 = vmatpush1.bf16.msra.mxu0 0
  %276 = vmatprep.subr.bf16.mxu0 0
  %277 = vmatpush1.bf16.msra.mxu0 0
  %278 = vmatprep.subr.bf16.mxu0 0
  %279 = vmatpush1.bf16.msra.mxu0 0
  %280 = vmatprep.subr.bf16.mxu0 0
  %281 = vmatpush1.bf16.msra.mxu0 0
  %282 = vmatprep.subr.bf16.mxu0 0
  %283 = vmatpush1.bf16.msra.mxu0 0
  %284 = vmatprep.subr.bf16.mxu0 0
  %285 = vmatpush1.bf16.msra.mxu0 0
  %286 = vmatprep.subr.bf16.mxu0 0
  %287 = vmatpush1.bf16.msra.mxu0 0
  %288 = vmatprep.subr.bf16.mxu0 0
  %289 = vmatpush1.bf16.msra.mxu0 0
  %290 = vmatprep.subr.bf16.mxu0 0
  %291 = vmatpush1.bf16.msra.mxu0 0
  %292 = vmatprep.subr.bf16.mxu0 0
  %293 = vmatpush1.bf16.msra.mxu0 0
  %294 = vmatprep.subr.bf16.mxu0 0
  %295 = vmatpush1.bf16.msra.mxu0 0
  %296 = vmatprep.subr.bf16.mxu0 0
  %297 = vmatpush1.bf16.msra.mxu0 0
  %298 = vmatprep.mubr.bf16.mxu0 0
  %299 = vmatmul.mubr.bf16.gmra.mrb[0].mxu0 %v255
  %v300 = vpop.f32.mrb[0].mxu0
  %v301 = vadd.f32 0.0, %v300
  %v302 = vpop.f32.mrb[0].mxu0
  %v303 = vpop.f32.mrb[0].mxu0
  %v304 = vadd.f32 0.0, %v303
  %v305 = vpop.f32.mrb[0].mxu0
  %306 = vmatprep.mubr.bf16.mxu0 0
  %307 = vmatmul.mubr.bf16.gmra.mrb[0].mxu0 %v258
  %v308 = vpop.f32.mrb[0].mxu0
  %v309 = vadd.f32 0.0, %v308
  %v310 = vpop.f32.mrb[0].mxu0
  %v311 = vpop.f32.mrb[0].mxu0
  %v312 = vadd.f32 0.0, %v311
  %v313 = vpop.f32.mrb[0].mxu0
  %314 = vmatprep.mubr.bf16.mxu0 0
  %315 = vmatmul.mubr.bf16.gmra.mrb[0].mxu0 %v261
  %v316 = vpop.f32.mrb[0].mxu0
  %v317 = vadd.f32 0.0, %v316
  %v318 = vpop.f32.mrb[0].mxu0
  %v319 = vpop.f32.mrb[0].mxu0
  %v320 = vadd.f32 0.0, %v319
  %v321 = vpop.f32.mrb[0].mxu0
  %322 = vmatprep.mubr.bf16.mxu0 0
  %323 = vmatmul.mubr.bf16.gmra.mrb[0].mxu0 %v264
  %v324 = vpop.f32.mrb[0].mxu0
  %v325 = vadd.f32 0.0, %v324
  %v326 = vpop.f32.mrb[0].mxu0
  %v327 = vpop.f32.mrb[0].mxu0
  %v328 = vpop.f32.mrb[0].mxu0
  %329 = vdwg.mxu0
  %v330 = vadd.f32 %v206, %v301
  %v331 = vadd.f32 %v207, %v304
  %v332 = vadd.f32 %v208, %v309
  %v333 = vadd.f32 %v209, %v312
  %v334 = vadd.f32 %v210, %v317
  %v335 = vadd.f32 %v211, %v320
  %v336 = vadd.f32 %v212, %v325
  %v337 = vld [vmem:[%s4] sm:$0xf]
  %v338 = vld [vmem:[%s4 + $0x4] sm:$0xf]
  %v339 = vld [vmem:[%s4 + $0x8] sm:$0xf]
  %v340 = vld [vmem:[%s4 + $0xc] sm:$0xf]
  %v341 = vld [vmem:[%s4 + $0x10] sm:$0xf]
  %v342 = vld [vmem:[%s4 + $0x14] sm:$0xf]
  %v343 = vld [vmem:[%s4 + $0x18] sm:$0x1]
  %v344 = vld [vmem:[%s16 + $0x20] sm:$0xf]
  %v345 = vld [vmem:[%s16 + $0x24] sm:$0xf]
  %v346 = vld [vmem:[%s16 + $0x28] sm:$0xf]
  %v347 = vld [vmem:[%s16 + $0x2c] sm:$0xf]
  %v355 = vunpack.c.l.b16 %v337
  %v356 = vunpack.c.l.b16 %v338
  %v357 = vunpack.c.l.b16 %v339
  %v358 = vunpack.c.l.b16 %v340
  %v359 = vunpack.c.l.b16 %v341
  %v360 = vunpack.c.l.b16 %v342
  %v361 = vunpack.c.l.b16 %v343
  %v362 = vpack.c.b16 %v356, %v355
  %v363 = vpack.c.b16 %v358, %v357
  %v364 = vpack.c.b16 %v360, %v359
  %v365 = vpack.c.b16 %v361, %v361
  %v370 = vunpack.c.l.b16 %v344
  %v371 = vunpack.c.l.b16 %v345
  %v372 = vunpack.c.l.b16 %v346
  %v373 = vunpack.c.l.b16 %v347
  %v374 = vpack.c.b16 %v371, %v370
  %v375 = vpack.c.b16 %v373, %v372
  %v379 = vsel %vm123, %v362, 0
  %v382 = vsel %vm123, %v363, 0
  %v385 = vsel %vm123, %v364, 0
  %v388 = vsel %vm123, %v365, 0
  %390 = vmatprep.subr.bf16.mxu0 0
  %391 = vmatpush1.bf16.msra.mxu0 %v374
  %392 = vmatprep.subr.bf16.mxu0 0
  %393 = vmatpush1.bf16.msra.mxu0 %v375
  %394 = vmatprep.subr.bf16.mxu0 0
  %395 = vmatpush1.bf16.msra.mxu0 0
  %396 = vmatprep.subr.bf16.mxu0 0
  %397 = vmatpush1.bf16.msra.mxu0 0
  %398 = vmatprep.subr.bf16.mxu0 0
  %399 = vmatpush1.bf16.msra.mxu0 0
  %400 = vmatprep.subr.bf16.mxu0 0
  %401 = vmatpush1.bf16.msra.mxu0 0
  %402 = vmatprep.subr.bf16.mxu0 0
  %403 = vmatpush1.bf16.msra.mxu0 0
  %404 = vmatprep.subr.bf16.mxu0 0
  %405 = vmatpush1.bf16.msra.mxu0 0
  %406 = vmatprep.subr.bf16.mxu0 0
  %407 = vmatpush1.bf16.msra.mxu0 0
  %408 = vmatprep.subr.bf16.mxu0 0
  %409 = vmatpush1.bf16.msra.mxu0 0
  %410 = vmatprep.subr.bf16.mxu0 0
  %411 = vmatpush1.bf16.msra.mxu0 0
  %412 = vmatprep.subr.bf16.mxu0 0
  %413 = vmatpush1.bf16.msra.mxu0 0
  %414 = vmatprep.subr.bf16.mxu0 0
  %415 = vmatpush1.bf16.msra.mxu0 0
  %416 = vmatprep.subr.bf16.mxu0 0
  %417 = vmatpush1.bf16.msra.mxu0 0
  %418 = vmatprep.subr.bf16.mxu0 0
  %419 = vmatpush1.bf16.msra.mxu0 0
  %420 = vmatprep.subr.bf16.mxu0 0
  %421 = vmatpush1.bf16.msra.mxu0 0
  %422 = vmatprep.mubr.bf16.mxu0 0
  %423 = vmatmul.mubr.bf16.gmra.mrb[0].mxu0 %v379
  %v424 = vpop.f32.mrb[0].mxu0
  %v425 = vadd.f32 0.0, %v424
  %v426 = vpop.f32.mrb[0].mxu0
  %v427 = vpop.f32.mrb[0].mxu0
  %v428 = vadd.f32 0.0, %v427
  %v429 = vpop.f32.mrb[0].mxu0
  %430 = vmatprep.mubr.bf16.mxu0 0
  %431 = vmatmul.mubr.bf16.gmra.mrb[0].mxu0 %v382
  %v432 = vpop.f32.mrb[0].mxu0
  %v433 = vadd.f32 0.0, %v432
  %v434 = vpop.f32.mrb[0].mxu0
  %v435 = vpop.f32.mrb[0].mxu0
  %v436 = vadd.f32 0.0, %v435
  %v437 = vpop.f32.mrb[0].mxu0
  %438 = vmatprep.mubr.bf16.mxu0 0
  %439 = vmatmul.mubr.bf16.gmra.mrb[0].mxu0 %v385
  %v440 = vpop.f32.mrb[0].mxu0
  %v441 = vadd.f32 0.0, %v440
  %v442 = vpop.f32.mrb[0].mxu0
  %v443 = vpop.f32.mrb[0].mxu0
  %v444 = vadd.f32 0.0, %v443
  %v445 = vpop.f32.mrb[0].mxu0
  %446 = vmatprep.mubr.bf16.mxu0 0
  %447 = vmatmul.mubr.bf16.gmra.mrb[0].mxu0 %v388
  %v448 = vpop.f32.mrb[0].mxu0
  %v449 = vadd.f32 0.0, %v448
  %v450 = vpop.f32.mrb[0].mxu0
  %v451 = vpop.f32.mrb[0].mxu0
  %v452 = vpop.f32.mrb[0].mxu0
  %453 = vdwg.mxu0
  %v454 = vadd.f32 %v330, %v425
  %v455 = vadd.f32 %v331, %v428
  %v456 = vadd.f32 %v332, %v433
  %v457 = vadd.f32 %v333, %v436
  %v458 = vadd.f32 %v334, %v441
  %v459 = vadd.f32 %v335, %v444
  %v460 = vadd.f32 %v336, %v449
  %v461 = vld [vmem:[%s5] sm:$0xf]
  %v462 = vld [vmem:[%s5 + $0x4] sm:$0xf]
  %v463 = vld [vmem:[%s5 + $0x8] sm:$0xf]
  %v464 = vld [vmem:[%s5 + $0xc] sm:$0xf]
  %v465 = vld [vmem:[%s5 + $0x10] sm:$0xf]
  %v466 = vld [vmem:[%s5 + $0x14] sm:$0xf]
  %v467 = vld [vmem:[%s5 + $0x18] sm:$0x1]
  %v468 = vld [vmem:[%s16 + $0x30] sm:$0xf]
  %v469 = vld [vmem:[%s16 + $0x34] sm:$0xf]
  %v470 = vld [vmem:[%s16 + $0x38] sm:$0xf]
  %v471 = vld [vmem:[%s16 + $0x3c] sm:$0xf]
  %v479 = vunpack.c.l.b16 %v461
  %v480 = vunpack.c.l.b16 %v462
  %v481 = vunpack.c.l.b16 %v463
  %v482 = vunpack.c.l.b16 %v464
  %v483 = vunpack.c.l.b16 %v465
  %v484 = vunpack.c.l.b16 %v466
  %v485 = vunpack.c.l.b16 %v467
  %v486 = vpack.c.b16 %v480, %v479
  %v487 = vpack.c.b16 %v482, %v481
  %v488 = vpack.c.b16 %v484, %v483
  %v489 = vpack.c.b16 %v485, %v485
  %v494 = vunpack.c.l.b16 %v468
  %v495 = vunpack.c.l.b16 %v469
  %v496 = vunpack.c.l.b16 %v470
  %v497 = vunpack.c.l.b16 %v471
  %v498 = vpack.c.b16 %v495, %v494
  %v499 = vpack.c.b16 %v497, %v496
  %v503 = vsel %vm123, %v486, 0
  %v506 = vsel %vm123, %v487, 0
  %v509 = vsel %vm123, %v488, 0
  %v512 = vsel %vm123, %v489, 0
  %514 = vmatprep.subr.bf16.mxu0 0
  %515 = vmatpush1.bf16.msra.mxu0 %v498
  %516 = vmatprep.subr.bf16.mxu0 0
  %517 = vmatpush1.bf16.msra.mxu0 %v499
  %518 = vmatprep.subr.bf16.mxu0 0
  %519 = vmatpush1.bf16.msra.mxu0 0
  %520 = vmatprep.subr.bf16.mxu0 0
  %521 = vmatpush1.bf16.msra.mxu0 0
  %522 = vmatprep.subr.bf16.mxu0 0
  %523 = vmatpush1.bf16.msra.mxu0 0
  %524 = vmatprep.subr.bf16.mxu0 0
  %525 = vmatpush1.bf16.msra.mxu0 0
  %526 = vmatprep.subr.bf16.mxu0 0
  %527 = vmatpush1.bf16.msra.mxu0 0
  %528 = vmatprep.subr.bf16.mxu0 0
  %529 = vmatpush1.bf16.msra.mxu0 0
  %530 = vmatprep.subr.bf16.mxu0 0
  %531 = vmatpush1.bf16.msra.mxu0 0
  %532 = vmatprep.subr.bf16.mxu0 0
  %533 = vmatpush1.bf16.msra.mxu0 0
  %534 = vmatprep.subr.bf16.mxu0 0
  %535 = vmatpush1.bf16.msra.mxu0 0
  %536 = vmatprep.subr.bf16.mxu0 0
  %537 = vmatpush1.bf16.msra.mxu0 0
  %538 = vmatprep.subr.bf16.mxu0 0
  %539 = vmatpush1.bf16.msra.mxu0 0
  %540 = vmatprep.subr.bf16.mxu0 0
  %541 = vmatpush1.bf16.msra.mxu0 0
  %542 = vmatprep.subr.bf16.mxu0 0
  %543 = vmatpush1.bf16.msra.mxu0 0
  %544 = vmatprep.subr.bf16.mxu0 0
  %545 = vmatpush1.bf16.msra.mxu0 0
  %546 = vmatprep.mubr.bf16.mxu0 0
  %547 = vmatmul.mubr.bf16.gmra.mrb[0].mxu0 %v503
  %v548 = vpop.f32.mrb[0].mxu0
  %v549 = vadd.f32 0.0, %v548
  %v550 = vpop.f32.mrb[0].mxu0
  %v551 = vpop.f32.mrb[0].mxu0
  %v552 = vadd.f32 0.0, %v551
  %v553 = vpop.f32.mrb[0].mxu0
  %554 = vmatprep.mubr.bf16.mxu0 0
  %555 = vmatmul.mubr.bf16.gmra.mrb[0].mxu0 %v506
  %v556 = vpop.f32.mrb[0].mxu0
  %v557 = vadd.f32 0.0, %v556
  %v558 = vpop.f32.mrb[0].mxu0
  %v559 = vpop.f32.mrb[0].mxu0
  %v560 = vadd.f32 0.0, %v559
  %v561 = vpop.f32.mrb[0].mxu0
  %562 = vmatprep.mubr.bf16.mxu0 0
  %563 = vmatmul.mubr.bf16.gmra.mrb[0].mxu0 %v509
  %v564 = vpop.f32.mrb[0].mxu0
  %v565 = vadd.f32 0.0, %v564
  %v566 = vpop.f32.mrb[0].mxu0
  %v567 = vpop.f32.mrb[0].mxu0
  %v568 = vadd.f32 0.0, %v567
  %v569 = vpop.f32.mrb[0].mxu0
  %570 = vmatprep.mubr.bf16.mxu0 0
  %571 = vmatmul.mubr.bf16.gmra.mrb[0].mxu0 %v512
  %v572 = vpop.f32.mrb[0].mxu0
  %v573 = vadd.f32 0.0, %v572
  %v574 = vpop.f32.mrb[0].mxu0
  %v575 = vpop.f32.mrb[0].mxu0
  %v576 = vpop.f32.mrb[0].mxu0
  %577 = vdwg.mxu0
  %v578 = vadd.f32 %v454, %v549
  %v579 = vadd.f32 %v455, %v552
  %v580 = vadd.f32 %v456, %v557
  %v581 = vadd.f32 %v457, %v560
  %v582 = vadd.f32 %v458, %v565
  %v583 = vadd.f32 %v459, %v568
  %v584 = vadd.f32 %v460, %v573
  %v585 = vmax.f32 %v578, 0.0
  %v586 = vmax.f32 %v579, 0.0
  %v587 = vmax.f32 %v580, 0.0
  %v588 = vmax.f32 %v581, 0.0
  %v589 = vmax.f32 %v582, 0.0
  %v590 = vmax.f32 %v583, 0.0
  %v591 = vmax.f32 %v584, 0.0
  %v592 = vpack.c.bf16 %v586, %v585
  %v593 = vpack.c.bf16 %v588, %v587
  %v594 = vpack.c.bf16 %v590, %v589
  %v595 = vpack.c.bf16 %v591, %v591
  %596 = vmatprep.subr.bf16.mxu0 0
  %597 = vmatpush1.bf16.msra.mxu0 %v119
  %598 = vmatprep.subr.bf16.mxu0 0
  %599 = vmatpush1.bf16.msra.mxu0 %v120
  %600 = vmatprep.subr.bf16.mxu0 0
  %601 = vmatpush1.bf16.msra.mxu0 0
  %602 = vmatprep.subr.bf16.mxu0 0
  %603 = vmatpush1.bf16.msra.mxu0 0
  %604 = vmatprep.subr.bf16.mxu0 0
  %605 = vmatpush1.bf16.msra.mxu0 0
  %606 = vmatprep.subr.bf16.mxu0 0
  %607 = vmatpush1.bf16.msra.mxu0 0
  %608 = vmatprep.subr.bf16.mxu0 0
  %609 = vmatpush1.bf16.msra.mxu0 0
  %610 = vmatprep.subr.bf16.mxu0 0
  %611 = vmatpush1.bf16.msra.mxu0 0
  %612 = vmatprep.subr.bf16.mxu0 0
  %613 = vmatpush1.bf16.msra.mxu0 0
  %614 = vmatprep.subr.bf16.mxu0 0
  %615 = vmatpush1.bf16.msra.mxu0 0
  %616 = vmatprep.subr.bf16.mxu0 0
  %617 = vmatpush1.bf16.msra.mxu0 0
  %618 = vmatprep.subr.bf16.mxu0 0
  %619 = vmatpush1.bf16.msra.mxu0 0
  %620 = vmatprep.subr.bf16.mxu0 0
  %621 = vmatpush1.bf16.msra.mxu0 0
  %622 = vmatprep.subr.bf16.mxu0 0
  %623 = vmatpush1.bf16.msra.mxu0 0
  %624 = vmatprep.subr.bf16.mxu0 0
  %625 = vmatpush1.bf16.msra.mxu0 0
  %626 = vmatprep.subr.bf16.mxu0 0
  %627 = vmatpush1.bf16.msra.mxu0 0
  %628 = vmatprep.mubr.bf16.mxu0 0
  %629 = vmatmul.mubr.bf16.gmra.mrb[0].mxu0 %v255
  %v630 = vpop.f32.mrb[0].mxu0
  %v631 = vadd.f32 0.0, %v630
  %v632 = vpop.f32.mrb[0].mxu0
  %v633 = vpop.f32.mrb[0].mxu0
  %v634 = vadd.f32 0.0, %v633
  %v635 = vpop.f32.mrb[0].mxu0
  %636 = vmatprep.mubr.bf16.mxu0 0
  %637 = vmatmul.mubr.bf16.gmra.mrb[0].mxu0 %v258
  %v638 = vpop.f32.mrb[0].mxu0
  %v639 = vadd.f32 0.0, %v638
  %v640 = vpop.f32.mrb[0].mxu0
  %v641 = vpop.f32.mrb[0].mxu0
  %v642 = vadd.f32 0.0, %v641
  %v643 = vpop.f32.mrb[0].mxu0
  %644 = vmatprep.mubr.bf16.mxu0 0
  %645 = vmatmul.mubr.bf16.gmra.mrb[0].mxu0 %v261
  %v646 = vpop.f32.mrb[0].mxu0
  %v647 = vadd.f32 0.0, %v646
  %v648 = vpop.f32.mrb[0].mxu0
  %v649 = vpop.f32.mrb[0].mxu0
  %v650 = vadd.f32 0.0, %v649
  %v651 = vpop.f32.mrb[0].mxu0
  %652 = vmatprep.mubr.bf16.mxu0 0
  %653 = vmatmul.mubr.bf16.gmra.mrb[0].mxu0 %v264
  %v654 = vpop.f32.mrb[0].mxu0
  %v655 = vadd.f32 0.0, %v654
  %v656 = vpop.f32.mrb[0].mxu0
  %v657 = vpop.f32.mrb[0].mxu0
  %v658 = vpop.f32.mrb[0].mxu0
  %659 = vdwg.mxu0
  %v660 = vadd.f32 %v204, %v631
  %v661 = vadd.f32 %v204, %v634
  %v662 = vadd.f32 %v204, %v639
  %v663 = vadd.f32 %v204, %v642
  %v664 = vadd.f32 %v204, %v647
  %v665 = vadd.f32 %v204, %v650
  %v666 = vadd.f32 %v204, %v655
  %v667 = vld [vmem:[%s2] sm:$0xf]
  %v668 = vld [vmem:[%s2 + $0x4] sm:$0xf]
  %v669 = vld [vmem:[%s2 + $0x8] sm:$0xf]
  %v670 = vld [vmem:[%s2 + $0xc] sm:$0xf]
  %v671 = vld [vmem:[%s2 + $0x10] sm:$0xf]
  %v672 = vld [vmem:[%s2 + $0x14] sm:$0xf]
  %v673 = vld [vmem:[%s2 + $0x18] sm:$0x1]
  %v681 = vunpack.c.l.b16 %v667
  %v682 = vunpack.c.l.b16 %v668
  %v683 = vunpack.c.l.b16 %v669
  %v684 = vunpack.c.l.b16 %v670
  %v685 = vunpack.c.l.b16 %v671
  %v686 = vunpack.c.l.b16 %v672
  %v687 = vunpack.c.l.b16 %v673
  %v688 = vpack.c.b16 %v682, %v681
  %v689 = vpack.c.b16 %v684, %v683
  %v690 = vpack.c.b16 %v686, %v685
  %v691 = vpack.c.b16 %v687, %v687
  %v693 = vsel %vm123, %v688, 0
  %v696 = vsel %vm123, %v689, 0
  %v699 = vsel %vm123, %v690, 0
  %v702 = vsel %vm123, %v691, 0
  %704 = vmatprep.subr.bf16.mxu0 0
  %705 = vmatpush1.bf16.msra.mxu0 %v250
  %706 = vmatprep.subr.bf16.mxu0 0
  %707 = vmatpush1.bf16.msra.mxu0 %v251
  %708 = vmatprep.subr.bf16.mxu0 0
  %709 = vmatpush1.bf16.msra.mxu0 0
  %710 = vmatprep.subr.bf16.mxu0 0
  %711 = vmatpush1.bf16.msra.mxu0 0
  %712 = vmatprep.subr.bf16.mxu0 0
  %713 = vmatpush1.bf16.msra.mxu0 0
  %714 = vmatprep.subr.bf16.mxu0 0
  %715 = vmatpush1.bf16.msra.mxu0 0
  %716 = vmatprep.subr.bf16.mxu0 0
  %717 = vmatpush1.bf16.msra.mxu0 0
  %718 = vmatprep.subr.bf16.mxu0 0
  %719 = vmatpush1.bf16.msra.mxu0 0
  %720 = vmatprep.subr.bf16.mxu0 0
  %721 = vmatpush1.bf16.msra.mxu0 0
  %722 = vmatprep.subr.bf16.mxu0 0
  %723 = vmatpush1.bf16.msra.mxu0 0
  %724 = vmatprep.subr.bf16.mxu0 0
  %725 = vmatpush1.bf16.msra.mxu0 0
  %726 = vmatprep.subr.bf16.mxu0 0
  %727 = vmatpush1.bf16.msra.mxu0 0
  %728 = vmatprep.subr.bf16.mxu0 0
  %729 = vmatpush1.bf16.msra.mxu0 0
  %730 = vmatprep.subr.bf16.mxu0 0
  %731 = vmatpush1.bf16.msra.mxu0 0
  %732 = vmatprep.subr.bf16.mxu0 0
  %733 = vmatpush1.bf16.msra.mxu0 0
  %734 = vmatprep.subr.bf16.mxu0 0
  %735 = vmatpush1.bf16.msra.mxu0 0
  %736 = vmatprep.mubr.bf16.mxu0 0
  %737 = vmatmul.mubr.bf16.gmra.mrb[0].mxu0 %v693
  %v738 = vpop.f32.mrb[0].mxu0
  %v739 = vadd.f32 0.0, %v738
  %v740 = vpop.f32.mrb[0].mxu0
  %v741 = vpop.f32.mrb[0].mxu0
  %v742 = vadd.f32 0.0, %v741
  %v743 = vpop.f32.mrb[0].mxu0
  %744 = vmatprep.mubr.bf16.mxu0 0
  %745 = vmatmul.mubr.bf16.gmra.mrb[0].mxu0 %v696
  %v746 = vpop.f32.mrb[0].mxu0
  %v747 = vadd.f32 0.0, %v746
  %v748 = vpop.f32.mrb[0].mxu0
  %v749 = vpop.f32.mrb[0].mxu0
  %v750 = vadd.f32 0.0, %v749
  %v751 = vpop.f32.mrb[0].mxu0
  %752 = vmatprep.mubr.bf16.mxu0 0
  %753 = vmatmul.mubr.bf16.gmra.mrb[0].mxu0 %v699
  %v754 = vpop.f32.mrb[0].mxu0
  %v755 = vadd.f32 0.0, %v754
  %v756 = vpop.f32.mrb[0].mxu0
  %v757 = vpop.f32.mrb[0].mxu0
  %v758 = vadd.f32 0.0, %v757
  %v759 = vpop.f32.mrb[0].mxu0
  %760 = vmatprep.mubr.bf16.mxu0 0
  %761 = vmatmul.mubr.bf16.gmra.mrb[0].mxu0 %v702
  %v762 = vpop.f32.mrb[0].mxu0
  %v763 = vadd.f32 0.0, %v762
  %v764 = vpop.f32.mrb[0].mxu0
  %v765 = vpop.f32.mrb[0].mxu0
  %v766 = vpop.f32.mrb[0].mxu0
  %767 = vdwg.mxu0
  %v768 = vadd.f32 %v660, %v739
  %v769 = vadd.f32 %v661, %v742
  %v770 = vadd.f32 %v662, %v747
  %v771 = vadd.f32 %v663, %v750
  %v772 = vadd.f32 %v664, %v755
  %v773 = vadd.f32 %v665, %v758
  %v774 = vadd.f32 %v666, %v763
  %775 = vmatprep.subr.bf16.mxu0 0
  %776 = vmatpush1.bf16.msra.mxu0 %v374
  %777 = vmatprep.subr.bf16.mxu0 0
  %778 = vmatpush1.bf16.msra.mxu0 %v375
  %779 = vmatprep.subr.bf16.mxu0 0
  %780 = vmatpush1.bf16.msra.mxu0 0
  %781 = vmatprep.subr.bf16.mxu0 0
  %782 = vmatpush1.bf16.msra.mxu0 0
  %783 = vmatprep.subr.bf16.mxu0 0
  %784 = vmatpush1.bf16.msra.mxu0 0
  %785 = vmatprep.subr.bf16.mxu0 0
  %786 = vmatpush1.bf16.msra.mxu0 0
  %787 = vmatprep.subr.bf16.mxu0 0
  %788 = vmatpush1.bf16.msra.mxu0 0
  %789 = vmatprep.subr.bf16.mxu0 0
  %790 = vmatpush1.bf16.msra.mxu0 0
  %791 = vmatprep.subr.bf16.mxu0 0
  %792 = vmatpush1.bf16.msra.mxu0 0
  %793 = vmatprep.subr.bf16.mxu0 0
  %794 = vmatpush1.bf16.msra.mxu0 0
  %795 = vmatprep.subr.bf16.mxu0 0
  %796 = vmatpush1.bf16.msra.mxu0 0
  %797 = vmatprep.subr.bf16.mxu0 0
  %798 = vmatpush1.bf16.msra.mxu0 0
  %799 = vmatprep.subr.bf16.mxu0 0
  %800 = vmatpush1.bf16.msra.mxu0 0
  %801 = vmatprep.subr.bf16.mxu0 0
  %802 = vmatpush1.bf16.msra.mxu0 0
  %803 = vmatprep.subr.bf16.mxu0 0
  %804 = vmatpush1.bf16.msra.mxu0 0
  %805 = vmatprep.subr.bf16.mxu0 0
  %806 = vmatpush1.bf16.msra.mxu0 0
  %807 = vmatprep.mubr.bf16.mxu0 0
  %808 = vmatmul.mubr.bf16.gmra.mrb[0].mxu0 %v503
  %v809 = vpop.f32.mrb[0].mxu0
  %v810 = vadd.f32 0.0, %v809
  %v811 = vpop.f32.mrb[0].mxu0
  %v812 = vpop.f32.mrb[0].mxu0
  %v813 = vadd.f32 0.0, %v812
  %v814 = vpop.f32.mrb[0].mxu0
  %815 = vmatprep.mubr.bf16.mxu0 0
  %816 = vmatmul.mubr.bf16.gmra.mrb[0].mxu0 %v506
  %v817 = vpop.f32.mrb[0].mxu0
  %v818 = vadd.f32 0.0, %v817
  %v819 = vpop.f32.mrb[0].mxu0
  %v820 = vpop.f32.mrb[0].mxu0
  %v821 = vadd.f32 0.0, %v820
  %v822 = vpop.f32.mrb[0].mxu0
  %823 = vmatprep.mubr.bf16.mxu0 0
  %824 = vmatmul.mubr.bf16.gmra.mrb[0].mxu0 %v509
  %v825 = vpop.f32.mrb[0].mxu0
  %v826 = vadd.f32 0.0, %v825
  %v827 = vpop.f32.mrb[0].mxu0
  %v828 = vpop.f32.mrb[0].mxu0
  %v829 = vadd.f32 0.0, %v828
  %v830 = vpop.f32.mrb[0].mxu0
  %831 = vmatprep.mubr.bf16.mxu0 0
  %832 = vmatmul.mubr.bf16.gmra.mrb[0].mxu0 %v512
  %v833 = vpop.f32.mrb[0].mxu0
  %v834 = vadd.f32 0.0, %v833
  %v835 = vpop.f32.mrb[0].mxu0
  %v836 = vpop.f32.mrb[0].mxu0
  %v837 = vpop.f32.mrb[0].mxu0
  %838 = vdwg.mxu0
  %v839 = vadd.f32 %v768, %v810
  %v840 = vadd.f32 %v769, %v813
  %v841 = vadd.f32 %v770, %v818
  %v842 = vadd.f32 %v771, %v821
  %v843 = vadd.f32 %v772, %v826
  %v844 = vadd.f32 %v773, %v829
  %v845 = vadd.f32 %v774, %v834
  %v846 = vld [vmem:[%s6] sm:$0xf]
  %v847 = vld [vmem:[%s6 + $0x4] sm:$0xf]
  %v848 = vld [vmem:[%s6 + $0x8] sm:$0xf]
  %v849 = vld [vmem:[%s6 + $0xc] sm:$0xf]
  %v850 = vld [vmem:[%s6 + $0x10] sm:$0xf]
  %v851 = vld [vmem:[%s6 + $0x14] sm:$0xf]
  %v852 = vld [vmem:[%s6 + $0x18] sm:$0x1]
  %v860 = vunpack.c.l.b16 %v846
  %v861 = vunpack.c.l.b16 %v847
  %v862 = vunpack.c.l.b16 %v848
  %v863 = vunpack.c.l.b16 %v849
  %v864 = vunpack.c.l.b16 %v850
  %v865 = vunpack.c.l.b16 %v851
  %v866 = vunpack.c.l.b16 %v852
  %v867 = vpack.c.b16 %v861, %v860
  %v868 = vpack.c.b16 %v863, %v862
  %v869 = vpack.c.b16 %v865, %v864
  %v870 = vpack.c.b16 %v866, %v866
  %v872 = vsel %vm123, %v867, 0
  %v875 = vsel %vm123, %v868, 0
  %v878 = vsel %vm123, %v869, 0
  %v881 = vsel %vm123, %v870, 0
  %883 = vmatprep.subr.bf16.mxu0 0
  %884 = vmatpush1.bf16.msra.mxu0 %v498
  %885 = vmatprep.subr.bf16.mxu0 0
  %886 = vmatpush1.bf16.msra.mxu0 %v499
  %887 = vmatprep.subr.bf16.mxu0 0
  %888 = vmatpush1.bf16.msra.mxu0 0
  %889 = vmatprep.subr.bf16.mxu0 0
  %890 = vmatpush1.bf16.msra.mxu0 0
  %891 = vmatprep.subr.bf16.mxu0 0
  %892 = vmatpush1.bf16.msra.mxu0 0
  %893 = vmatprep.subr.bf16.mxu0 0
  %894 = vmatpush1.bf16.msra.mxu0 0
  %895 = vmatprep.subr.bf16.mxu0 0
  %896 = vmatpush1.bf16.msra.mxu0 0
  %897 = vmatprep.subr.bf16.mxu0 0
  %898 = vmatpush1.bf16.msra.mxu0 0
  %899 = vmatprep.subr.bf16.mxu0 0
  %900 = vmatpush1.bf16.msra.mxu0 0
  %901 = vmatprep.subr.bf16.mxu0 0
  %902 = vmatpush1.bf16.msra.mxu0 0
  %903 = vmatprep.subr.bf16.mxu0 0
  %904 = vmatpush1.bf16.msra.mxu0 0
  %905 = vmatprep.subr.bf16.mxu0 0
  %906 = vmatpush1.bf16.msra.mxu0 0
  %907 = vmatprep.subr.bf16.mxu0 0
  %908 = vmatpush1.bf16.msra.mxu0 0
  %909 = vmatprep.subr.bf16.mxu0 0
  %910 = vmatpush1.bf16.msra.mxu0 0
  %911 = vmatprep.subr.bf16.mxu0 0
  %912 = vmatpush1.bf16.msra.mxu0 0
  %913 = vmatprep.subr.bf16.mxu0 0
  %914 = vmatpush1.bf16.msra.mxu0 0
  %915 = vmatprep.mubr.bf16.mxu0 0
  %916 = vmatmul.mubr.bf16.gmra.mrb[0].mxu0 %v872
  %v917 = vpop.f32.mrb[0].mxu0
  %v918 = vadd.f32 0.0, %v917
  %v919 = vpop.f32.mrb[0].mxu0
  %v920 = vpop.f32.mrb[0].mxu0
  %v921 = vadd.f32 0.0, %v920
  %v922 = vpop.f32.mrb[0].mxu0
  %923 = vmatprep.mubr.bf16.mxu0 0
  %924 = vmatmul.mubr.bf16.gmra.mrb[0].mxu0 %v875
  %v925 = vpop.f32.mrb[0].mxu0
  %v926 = vadd.f32 0.0, %v925
  %v927 = vpop.f32.mrb[0].mxu0
  %v928 = vpop.f32.mrb[0].mxu0
  %v929 = vadd.f32 0.0, %v928
  %v930 = vpop.f32.mrb[0].mxu0
  %931 = vmatprep.mubr.bf16.mxu0 0
  %932 = vmatmul.mubr.bf16.gmra.mrb[0].mxu0 %v878
  %v933 = vpop.f32.mrb[0].mxu0
  %v934 = vadd.f32 0.0, %v933
  %v935 = vpop.f32.mrb[0].mxu0
  %v936 = vpop.f32.mrb[0].mxu0
  %v937 = vadd.f32 0.0, %v936
  %v938 = vpop.f32.mrb[0].mxu0
  %939 = vmatprep.mubr.bf16.mxu0 0
  %940 = vmatmul.mubr.bf16.gmra.mrb[0].mxu0 %v881
  %v941 = vpop.f32.mrb[0].mxu0
  %v942 = vadd.f32 0.0, %v941
  %v943 = vpop.f32.mrb[0].mxu0
  %v944 = vpop.f32.mrb[0].mxu0
  %v945 = vpop.f32.mrb[0].mxu0
  %946 = vdwg.mxu0
  %v947 = vadd.f32 %v839, %v918
  %v948 = vadd.f32 %v840, %v921
  %v949 = vadd.f32 %v841, %v926
  %v950 = vadd.f32 %v842, %v929
  %v951 = vadd.f32 %v843, %v934
  %v952 = vadd.f32 %v844, %v937
  %v953 = vadd.f32 %v845, %v942
  %v954 = vmax.f32 %v947, 0.0
  %v955 = vmax.f32 %v948, 0.0
  %v956 = vmax.f32 %v949, 0.0
  %v957 = vmax.f32 %v950, 0.0
  %v958 = vmax.f32 %v951, 0.0
  %v959 = vmax.f32 %v952, 0.0
  %v960 = vmax.f32 %v953, 0.0
  %v961 = vpack.c.bf16 %v955, %v954
  %v962 = vpack.c.bf16 %v957, %v956
  %v963 = vpack.c.bf16 %v959, %v958
  %v964 = vpack.c.bf16 %v960, %v960
  %965 = vmatprep.subr.bf16.mxu0 0
  %966 = vmatpush1.bf16.msra.mxu0 %v119
  %967 = vmatprep.subr.bf16.mxu0 0
  %968 = vmatpush1.bf16.msra.mxu0 %v120
  %969 = vmatprep.subr.bf16.mxu0 0
  %970 = vmatpush1.bf16.msra.mxu0 0
  %971 = vmatprep.subr.bf16.mxu0 0
  %972 = vmatpush1.bf16.msra.mxu0 0
  %973 = vmatprep.subr.bf16.mxu0 0
  %974 = vmatpush1.bf16.msra.mxu0 0
  %975 = vmatprep.subr.bf16.mxu0 0
  %976 = vmatpush1.bf16.msra.mxu0 0
  %977 = vmatprep.subr.bf16.mxu0 0
  %978 = vmatpush1.bf16.msra.mxu0 0
  %979 = vmatprep.subr.bf16.mxu0 0
  %980 = vmatpush1.bf16.msra.mxu0 0
  %981 = vmatprep.subr.bf16.mxu0 0
  %982 = vmatpush1.bf16.msra.mxu0 0
  %983 = vmatprep.subr.bf16.mxu0 0
  %984 = vmatpush1.bf16.msra.mxu0 0
  %985 = vmatprep.subr.bf16.mxu0 0
  %986 = vmatpush1.bf16.msra.mxu0 0
  %987 = vmatprep.subr.bf16.mxu0 0
  %988 = vmatpush1.bf16.msra.mxu0 0
  %989 = vmatprep.subr.bf16.mxu0 0
  %990 = vmatpush1.bf16.msra.mxu0 0
  %991 = vmatprep.subr.bf16.mxu0 0
  %992 = vmatpush1.bf16.msra.mxu0 0
  %993 = vmatprep.subr.bf16.mxu0 0
  %994 = vmatpush1.bf16.msra.mxu0 0
  %995 = vmatprep.subr.bf16.mxu0 0
  %996 = vmatpush1.bf16.msra.mxu0 0
  %997 = vmatprep.mubr.bf16.mxu0 0
  %998 = vmatmul.mubr.bf16.gmra.mrb[0].mxu0 %v693
  %v999 = vpop.f32.mrb[0].mxu0
  %v1000 = vadd.f32 0.0, %v999
  %v1001 = vpop.f32.mrb[0].mxu0
  %v1002 = vpop.f32.mrb[0].mxu0
  %v1003 = vadd.f32 0.0, %v1002
  %v1004 = vpop.f32.mrb[0].mxu0
  %1005 = vmatprep.mubr.bf16.mxu0 0
  %1006 = vmatmul.mubr.bf16.gmra.mrb[0].mxu0 %v696
  %v1007 = vpop.f32.mrb[0].mxu0
  %v1008 = vadd.f32 0.0, %v1007
  %v1009 = vpop.f32.mrb[0].mxu0
  %v1010 = vpop.f32.mrb[0].mxu0
  %v1011 = vadd.f32 0.0, %v1010
  %v1012 = vpop.f32.mrb[0].mxu0
  %1013 = vmatprep.mubr.bf16.mxu0 0
  %1014 = vmatmul.mubr.bf16.gmra.mrb[0].mxu0 %v699
  %v1015 = vpop.f32.mrb[0].mxu0
  %v1016 = vadd.f32 0.0, %v1015
  %v1017 = vpop.f32.mrb[0].mxu0
  %v1018 = vpop.f32.mrb[0].mxu0
  %v1019 = vadd.f32 0.0, %v1018
  %v1020 = vpop.f32.mrb[0].mxu0
  %1021 = vmatprep.mubr.bf16.mxu0 0
  %1022 = vmatmul.mubr.bf16.gmra.mrb[0].mxu0 %v702
  %v1023 = vpop.f32.mrb[0].mxu0
  %v1024 = vadd.f32 0.0, %v1023
  %v1025 = vpop.f32.mrb[0].mxu0
  %v1026 = vpop.f32.mrb[0].mxu0
  %v1027 = vpop.f32.mrb[0].mxu0
  %1028 = vdwg.mxu0
  %v1029 = vadd.f32 %v204, %v1000
  %v1030 = vadd.f32 %v204, %v1003
  %v1031 = vadd.f32 %v204, %v1008
  %v1032 = vadd.f32 %v204, %v1011
  %v1033 = vadd.f32 %v204, %v1016
  %v1034 = vadd.f32 %v204, %v1019
  %v1035 = vadd.f32 %v204, %v1024
  %v1036 = vld [vmem:[%s3] sm:$0xf]
  %v1037 = vld [vmem:[%s3 + $0x4] sm:$0xf]
  %v1038 = vld [vmem:[%s3 + $0x8] sm:$0xf]
  %v1039 = vld [vmem:[%s3 + $0xc] sm:$0xf]
  %v1040 = vld [vmem:[%s3 + $0x10] sm:$0xf]
  %v1041 = vld [vmem:[%s3 + $0x14] sm:$0xf]
  %v1042 = vld [vmem:[%s3 + $0x18] sm:$0x1]
  %v1050 = vunpack.c.l.b16 %v1036
  %v1051 = vunpack.c.l.b16 %v1037
  %v1052 = vunpack.c.l.b16 %v1038
  %v1053 = vunpack.c.l.b16 %v1039
  %v1054 = vunpack.c.l.b16 %v1040
  %v1055 = vunpack.c.l.b16 %v1041
  %v1056 = vunpack.c.l.b16 %v1042
  %v1057 = vpack.c.b16 %v1051, %v1050
  %v1058 = vpack.c.b16 %v1053, %v1052
  %v1059 = vpack.c.b16 %v1055, %v1054
  %v1060 = vpack.c.b16 %v1056, %v1056
  %v1062 = vsel %vm123, %v1057, 0
  %v1065 = vsel %vm123, %v1058, 0
  %v1068 = vsel %vm123, %v1059, 0
  %v1071 = vsel %vm123, %v1060, 0
  %1073 = vmatprep.subr.bf16.mxu0 0
  %1074 = vmatpush1.bf16.msra.mxu0 %v250
  %1075 = vmatprep.subr.bf16.mxu0 0
  %1076 = vmatpush1.bf16.msra.mxu0 %v251
  %1077 = vmatprep.subr.bf16.mxu0 0
  %1078 = vmatpush1.bf16.msra.mxu0 0
  %1079 = vmatprep.subr.bf16.mxu0 0
  %1080 = vmatpush1.bf16.msra.mxu0 0
  %1081 = vmatprep.subr.bf16.mxu0 0
  %1082 = vmatpush1.bf16.msra.mxu0 0
  %1083 = vmatprep.subr.bf16.mxu0 0
  %1084 = vmatpush1.bf16.msra.mxu0 0
  %1085 = vmatprep.subr.bf16.mxu0 0
  %1086 = vmatpush1.bf16.msra.mxu0 0
  %1087 = vmatprep.subr.bf16.mxu0 0
  %1088 = vmatpush1.bf16.msra.mxu0 0
  %1089 = vmatprep.subr.bf16.mxu0 0
  %1090 = vmatpush1.bf16.msra.mxu0 0
  %1091 = vmatprep.subr.bf16.mxu0 0
  %1092 = vmatpush1.bf16.msra.mxu0 0
  %1093 = vmatprep.subr.bf16.mxu0 0
  %1094 = vmatpush1.bf16.msra.mxu0 0
  %1095 = vmatprep.subr.bf16.mxu0 0
  %1096 = vmatpush1.bf16.msra.mxu0 0
  %1097 = vmatprep.subr.bf16.mxu0 0
  %1098 = vmatpush1.bf16.msra.mxu0 0
  %1099 = vmatprep.subr.bf16.mxu0 0
  %1100 = vmatpush1.bf16.msra.mxu0 0
  %1101 = vmatprep.subr.bf16.mxu0 0
  %1102 = vmatpush1.bf16.msra.mxu0 0
  %1103 = vmatprep.subr.bf16.mxu0 0
  %1104 = vmatpush1.bf16.msra.mxu0 0
  %1105 = vmatprep.mubr.bf16.mxu0 0
  %1106 = vmatmul.mubr.bf16.gmra.mrb[0].mxu0 %v1062
  %v1107 = vpop.f32.mrb[0].mxu0
  %v1108 = vadd.f32 0.0, %v1107
  %v1109 = vpop.f32.mrb[0].mxu0
  %v1110 = vpop.f32.mrb[0].mxu0
  %v1111 = vadd.f32 0.0, %v1110
  %v1112 = vpop.f32.mrb[0].mxu0
  %1113 = vmatprep.mubr.bf16.mxu0 0
  %1114 = vmatmul.mubr.bf16.gmra.mrb[0].mxu0 %v1065
  %v1115 = vpop.f32.mrb[0].mxu0
  %v1116 = vadd.f32 0.0, %v1115
  %v1117 = vpop.f32.mrb[0].mxu0
  %v1118 = vpop.f32.mrb[0].mxu0
  %v1119 = vadd.f32 0.0, %v1118
  %v1120 = vpop.f32.mrb[0].mxu0
  %1121 = vmatprep.mubr.bf16.mxu0 0
  %1122 = vmatmul.mubr.bf16.gmra.mrb[0].mxu0 %v1068
  %v1123 = vpop.f32.mrb[0].mxu0
  %v1124 = vadd.f32 0.0, %v1123
  %v1125 = vpop.f32.mrb[0].mxu0
  %v1126 = vpop.f32.mrb[0].mxu0
  %v1127 = vadd.f32 0.0, %v1126
  %v1128 = vpop.f32.mrb[0].mxu0
  %1129 = vmatprep.mubr.bf16.mxu0 0
  %1130 = vmatmul.mubr.bf16.gmra.mrb[0].mxu0 %v1071
  %v1131 = vpop.f32.mrb[0].mxu0
  %v1132 = vadd.f32 0.0, %v1131
  %v1133 = vpop.f32.mrb[0].mxu0
  %v1134 = vpop.f32.mrb[0].mxu0
  %v1135 = vpop.f32.mrb[0].mxu0
  %1136 = vdwg.mxu0
  %v1137 = vadd.f32 %v1029, %v1108
  %v1138 = vadd.f32 %v1030, %v1111
  %v1139 = vadd.f32 %v1031, %v1116
  %v1140 = vadd.f32 %v1032, %v1119
  %v1141 = vadd.f32 %v1033, %v1124
  %v1142 = vadd.f32 %v1034, %v1127
  %v1143 = vadd.f32 %v1035, %v1132
  %1144 = vmatprep.subr.bf16.mxu0 0
  %1145 = vmatpush1.bf16.msra.mxu0 %v374
  %1146 = vmatprep.subr.bf16.mxu0 0
  %1147 = vmatpush1.bf16.msra.mxu0 %v375
  %1148 = vmatprep.subr.bf16.mxu0 0
  %1149 = vmatpush1.bf16.msra.mxu0 0
  %1150 = vmatprep.subr.bf16.mxu0 0
  %1151 = vmatpush1.bf16.msra.mxu0 0
  %1152 = vmatprep.subr.bf16.mxu0 0
  %1153 = vmatpush1.bf16.msra.mxu0 0
  %1154 = vmatprep.subr.bf16.mxu0 0
  %1155 = vmatpush1.bf16.msra.mxu0 0
  %1156 = vmatprep.subr.bf16.mxu0 0
  %1157 = vmatpush1.bf16.msra.mxu0 0
  %1158 = vmatprep.subr.bf16.mxu0 0
  %1159 = vmatpush1.bf16.msra.mxu0 0
  %1160 = vmatprep.subr.bf16.mxu0 0
  %1161 = vmatpush1.bf16.msra.mxu0 0
  %1162 = vmatprep.subr.bf16.mxu0 0
  %1163 = vmatpush1.bf16.msra.mxu0 0
  %1164 = vmatprep.subr.bf16.mxu0 0
  %1165 = vmatpush1.bf16.msra.mxu0 0
  %1166 = vmatprep.subr.bf16.mxu0 0
  %1167 = vmatpush1.bf16.msra.mxu0 0
  %1168 = vmatprep.subr.bf16.mxu0 0
  %1169 = vmatpush1.bf16.msra.mxu0 0
  %1170 = vmatprep.subr.bf16.mxu0 0
  %1171 = vmatpush1.bf16.msra.mxu0 0
  %1172 = vmatprep.subr.bf16.mxu0 0
  %1173 = vmatpush1.bf16.msra.mxu0 0
  %1174 = vmatprep.subr.bf16.mxu0 0
  %1175 = vmatpush1.bf16.msra.mxu0 0
  %1176 = vmatprep.mubr.bf16.mxu0 0
  %1177 = vmatmul.mubr.bf16.gmra.mrb[0].mxu0 %v872
  %v1178 = vpop.f32.mrb[0].mxu0
  %v1179 = vadd.f32 0.0, %v1178
  %v1180 = vpop.f32.mrb[0].mxu0
  %v1181 = vpop.f32.mrb[0].mxu0
  %v1182 = vadd.f32 0.0, %v1181
  %v1183 = vpop.f32.mrb[0].mxu0
  %1184 = vmatprep.mubr.bf16.mxu0 0
  %1185 = vmatmul.mubr.bf16.gmra.mrb[0].mxu0 %v875
  %v1186 = vpop.f32.mrb[0].mxu0
  %v1187 = vadd.f32 0.0, %v1186
  %v1188 = vpop.f32.mrb[0].mxu0
  %v1189 = vpop.f32.mrb[0].mxu0
  %v1190 = vadd.f32 0.0, %v1189
  %v1191 = vpop.f32.mrb[0].mxu0
  %1192 = vmatprep.mubr.bf16.mxu0 0
  %1193 = vmatmul.mubr.bf16.gmra.mrb[0].mxu0 %v878
  %v1194 = vpop.f32.mrb[0].mxu0
  %v1195 = vadd.f32 0.0, %v1194
  %v1196 = vpop.f32.mrb[0].mxu0
  %v1197 = vpop.f32.mrb[0].mxu0
  %v1198 = vadd.f32 0.0, %v1197
  %v1199 = vpop.f32.mrb[0].mxu0
  %1200 = vmatprep.mubr.bf16.mxu0 0
  %1201 = vmatmul.mubr.bf16.gmra.mrb[0].mxu0 %v881
  %v1202 = vpop.f32.mrb[0].mxu0
  %v1203 = vadd.f32 0.0, %v1202
  %v1204 = vpop.f32.mrb[0].mxu0
  %v1205 = vpop.f32.mrb[0].mxu0
  %v1206 = vpop.f32.mrb[0].mxu0
  %1207 = vdwg.mxu0
  %v1208 = vadd.f32 %v1137, %v1179
  %v1209 = vadd.f32 %v1138, %v1182
  %v1210 = vadd.f32 %v1139, %v1187
  %v1211 = vadd.f32 %v1140, %v1190
  %v1212 = vadd.f32 %v1141, %v1195
  %v1213 = vadd.f32 %v1142, %v1198
  %v1214 = vadd.f32 %v1143, %v1203
  %v1215 = vld [vmem:[%s7] sm:$0xf]
  %v1216 = vld [vmem:[%s7 + $0x4] sm:$0xf]
  %v1217 = vld [vmem:[%s7 + $0x8] sm:$0xf]
  %v1218 = vld [vmem:[%s7 + $0xc] sm:$0xf]
  %v1219 = vld [vmem:[%s7 + $0x10] sm:$0xf]
  %v1220 = vld [vmem:[%s7 + $0x14] sm:$0xf]
  %v1221 = vld [vmem:[%s7 + $0x18] sm:$0x1]
  %v1229 = vunpack.c.l.b16 %v1215
  %v1230 = vunpack.c.l.b16 %v1216
  %v1231 = vunpack.c.l.b16 %v1217
  %v1232 = vunpack.c.l.b16 %v1218
  %v1233 = vunpack.c.l.b16 %v1219
  %v1234 = vunpack.c.l.b16 %v1220
  %v1235 = vunpack.c.l.b16 %v1221
  %v1236 = vpack.c.b16 %v1230, %v1229
  %v1237 = vpack.c.b16 %v1232, %v1231
  %v1238 = vpack.c.b16 %v1234, %v1233
  %v1239 = vpack.c.b16 %v1235, %v1235
  %v1241 = vsel %vm123, %v1236, 0
  %v1244 = vsel %vm123, %v1237, 0
  %v1247 = vsel %vm123, %v1238, 0
  %v1250 = vsel %vm123, %v1239, 0
  %1252 = vmatprep.subr.bf16.mxu0 0
  %1253 = vmatpush1.bf16.msra.mxu0 %v498
  %1254 = vmatprep.subr.bf16.mxu0 0
  %1255 = vmatpush1.bf16.msra.mxu0 %v499
  %1256 = vmatprep.subr.bf16.mxu0 0
  %1257 = vmatpush1.bf16.msra.mxu0 0
  %1258 = vmatprep.subr.bf16.mxu0 0
  %1259 = vmatpush1.bf16.msra.mxu0 0
  %1260 = vmatprep.subr.bf16.mxu0 0
  %1261 = vmatpush1.bf16.msra.mxu0 0
  %1262 = vmatprep.subr.bf16.mxu0 0
  %1263 = vmatpush1.bf16.msra.mxu0 0
  %1264 = vmatprep.subr.bf16.mxu0 0
  %1265 = vmatpush1.bf16.msra.mxu0 0
  %1266 = vmatprep.subr.bf16.mxu0 0
  %1267 = vmatpush1.bf16.msra.mxu0 0
  %1268 = vmatprep.subr.bf16.mxu0 0
  %1269 = vmatpush1.bf16.msra.mxu0 0
  %1270 = vmatprep.subr.bf16.mxu0 0
  %1271 = vmatpush1.bf16.msra.mxu0 0
  %1272 = vmatprep.subr.bf16.mxu0 0
  %1273 = vmatpush1.bf16.msra.mxu0 0
  %1274 = vmatprep.subr.bf16.mxu0 0
  %1275 = vmatpush1.bf16.msra.mxu0 0
  %1276 = vmatprep.subr.bf16.mxu0 0
  %1277 = vmatpush1.bf16.msra.mxu0 0
  %1278 = vmatprep.subr.bf16.mxu0 0
  %1279 = vmatpush1.bf16.msra.mxu0 0
  %1280 = vmatprep.subr.bf16.mxu0 0
  %1281 = vmatpush1.bf16.msra.mxu0 0
  %1282 = vmatprep.subr.bf16.mxu0 0
  %1283 = vmatpush1.bf16.msra.mxu0 0
  %1284 = vmatprep.mubr.bf16.mxu0 0
  %1285 = vmatmul.mubr.bf16.gmra.mrb[0].mxu0 %v1241
  %v1286 = vpop.f32.mrb[0].mxu0
  %v1287 = vadd.f32 0.0, %v1286
  %v1288 = vpop.f32.mrb[0].mxu0
  %v1289 = vpop.f32.mrb[0].mxu0
  %v1290 = vadd.f32 0.0, %v1289
  %v1291 = vpop.f32.mrb[0].mxu0
  %1292 = vmatprep.mubr.bf16.mxu0 0
  %1293 = vmatmul.mubr.bf16.gmra.mrb[0].mxu0 %v1244
  %v1294 = vpop.f32.mrb[0].mxu0
  %v1295 = vadd.f32 0.0, %v1294
  %v1296 = vpop.f32.mrb[0].mxu0
  %v1297 = vpop.f32.mrb[0].mxu0
  %v1298 = vadd.f32 0.0, %v1297
  %v1299 = vpop.f32.mrb[0].mxu0
  %1300 = vmatprep.mubr.bf16.mxu0 0
  %1301 = vmatmul.mubr.bf16.gmra.mrb[0].mxu0 %v1247
  %v1302 = vpop.f32.mrb[0].mxu0
  %v1303 = vadd.f32 0.0, %v1302
  %v1304 = vpop.f32.mrb[0].mxu0
  %v1305 = vpop.f32.mrb[0].mxu0
  %v1306 = vadd.f32 0.0, %v1305
  %v1307 = vpop.f32.mrb[0].mxu0
  %1308 = vmatprep.mubr.bf16.mxu0 0
  %1309 = vmatmul.mubr.bf16.gmra.mrb[0].mxu0 %v1250
  %v1310 = vpop.f32.mrb[0].mxu0
  %v1311 = vadd.f32 0.0, %v1310
  %v1312 = vpop.f32.mrb[0].mxu0
  %v1313 = vpop.f32.mrb[0].mxu0
  %v1314 = vpop.f32.mrb[0].mxu0
  %1315 = vdwg.mxu0
  %v1316 = vadd.f32 %v1208, %v1287
  %v1317 = vadd.f32 %v1209, %v1290
  %v1318 = vadd.f32 %v1210, %v1295
  %v1319 = vadd.f32 %v1211, %v1298
  %v1320 = vadd.f32 %v1212, %v1303
  %v1321 = vadd.f32 %v1213, %v1306
  %v1322 = vadd.f32 %v1214, %v1311
  %v1323 = vmax.f32 %v1316, 0.0
  %v1324 = vmax.f32 %v1317, 0.0
  %v1325 = vmax.f32 %v1318, 0.0
  %v1326 = vmax.f32 %v1319, 0.0
  %v1327 = vmax.f32 %v1320, 0.0
  %v1328 = vmax.f32 %v1321, 0.0
  %v1329 = vmax.f32 %v1322, 0.0
  %v1330 = vpack.c.bf16 %v1324, %v1323
  %v1331 = vpack.c.bf16 %v1326, %v1325
  %v1332 = vpack.c.bf16 %v1328, %v1327
  %v1333 = vpack.c.bf16 %v1329, %v1329
  %1334 = vmatprep.subr.bf16.mxu0 0
  %1335 = vmatpush1.bf16.msra.mxu0 %v119
  %1336 = vmatprep.subr.bf16.mxu0 0
  %1337 = vmatpush1.bf16.msra.mxu0 %v120
  %1338 = vmatprep.subr.bf16.mxu0 0
  %1339 = vmatpush1.bf16.msra.mxu0 0
  %1340 = vmatprep.subr.bf16.mxu0 0
  %1341 = vmatpush1.bf16.msra.mxu0 0
  %1342 = vmatprep.subr.bf16.mxu0 0
  %1343 = vmatpush1.bf16.msra.mxu0 0
  %1344 = vmatprep.subr.bf16.mxu0 0
  %1345 = vmatpush1.bf16.msra.mxu0 0
  %1346 = vmatprep.subr.bf16.mxu0 0
  %1347 = vmatpush1.bf16.msra.mxu0 0
  %1348 = vmatprep.subr.bf16.mxu0 0
  %1349 = vmatpush1.bf16.msra.mxu0 0
  %1350 = vmatprep.subr.bf16.mxu0 0
  %1351 = vmatpush1.bf16.msra.mxu0 0
  %1352 = vmatprep.subr.bf16.mxu0 0
  %1353 = vmatpush1.bf16.msra.mxu0 0
  %1354 = vmatprep.subr.bf16.mxu0 0
  %1355 = vmatpush1.bf16.msra.mxu0 0
  %1356 = vmatprep.subr.bf16.mxu0 0
  %1357 = vmatpush1.bf16.msra.mxu0 0
  %1358 = vmatprep.subr.bf16.mxu0 0
  %1359 = vmatpush1.bf16.msra.mxu0 0
  %1360 = vmatprep.subr.bf16.mxu0 0
  %1361 = vmatpush1.bf16.msra.mxu0 0
  %1362 = vmatprep.subr.bf16.mxu0 0
  %1363 = vmatpush1.bf16.msra.mxu0 0
  %1364 = vmatprep.subr.bf16.mxu0 0
  %1365 = vmatpush1.bf16.msra.mxu0 0
  %1366 = vmatprep.mubr.bf16.mxu0 0
  %1367 = vmatmul.mubr.bf16.gmra.mrb[0].mxu0 %v379
  %v1368 = vpop.f32.mrb[0].mxu0
  %v1369 = vadd.f32 0.0, %v1368
  %v1370 = vpop.f32.mrb[0].mxu0
  %v1371 = vpop.f32.mrb[0].mxu0
  %v1372 = vadd.f32 0.0, %v1371
  %v1373 = vpop.f32.mrb[0].mxu0
  %1374 = vmatprep.mubr.bf16.mxu0 0
  %1375 = vmatmul.mubr.bf16.gmra.mrb[0].mxu0 %v382
  %v1376 = vpop.f32.mrb[0].mxu0
  %v1377 = vadd.f32 0.0, %v1376
  %v1378 = vpop.f32.mrb[0].mxu0
  %v1379 = vpop.f32.mrb[0].mxu0
  %v1380 = vadd.f32 0.0, %v1379
  %v1381 = vpop.f32.mrb[0].mxu0
  %1382 = vmatprep.mubr.bf16.mxu0 0
  %1383 = vmatmul.mubr.bf16.gmra.mrb[0].mxu0 %v385
  %v1384 = vpop.f32.mrb[0].mxu0
  %v1385 = vadd.f32 0.0, %v1384
  %v1386 = vpop.f32.mrb[0].mxu0
  %v1387 = vpop.f32.mrb[0].mxu0
  %v1388 = vadd.f32 0.0, %v1387
  %v1389 = vpop.f32.mrb[0].mxu0
  %1390 = vmatprep.mubr.bf16.mxu0 0
  %1391 = vmatmul.mubr.bf16.gmra.mrb[0].mxu0 %v388
  %v1392 = vpop.f32.mrb[0].mxu0
  %v1393 = vadd.f32 0.0, %v1392
  %v1394 = vpop.f32.mrb[0].mxu0
  %v1395 = vpop.f32.mrb[0].mxu0
  %v1396 = vpop.f32.mrb[0].mxu0
  %1397 = vdwg.mxu0
  %v1398 = vadd.f32 %v204, %v1369
  %v1399 = vadd.f32 %v204, %v1372
  %v1400 = vadd.f32 %v204, %v1377
  %v1401 = vadd.f32 %v204, %v1380
  %v1402 = vadd.f32 %v204, %v1385
  %v1403 = vadd.f32 %v204, %v1388
  %v1404 = vadd.f32 %v204, %v1393
  %1405 = vmatprep.subr.bf16.mxu0 0
  %1406 = vmatpush1.bf16.msra.mxu0 %v250
  %1407 = vmatprep.subr.bf16.mxu0 0
  %1408 = vmatpush1.bf16.msra.mxu0 %v251
  %1409 = vmatprep.subr.bf16.mxu0 0
  %1410 = vmatpush1.bf16.msra.mxu0 0
  %1411 = vmatprep.subr.bf16.mxu0 0
  %1412 = vmatpush1.bf16.msra.mxu0 0
  %1413 = vmatprep.subr.bf16.mxu0 0
  %1414 = vmatpush1.bf16.msra.mxu0 0
  %1415 = vmatprep.subr.bf16.mxu0 0
  %1416 = vmatpush1.bf16.msra.mxu0 0
  %1417 = vmatprep.subr.bf16.mxu0 0
  %1418 = vmatpush1.bf16.msra.mxu0 0
  %1419 = vmatprep.subr.bf16.mxu0 0
  %1420 = vmatpush1.bf16.msra.mxu0 0
  %1421 = vmatprep.subr.bf16.mxu0 0
  %1422 = vmatpush1.bf16.msra.mxu0 0
  %1423 = vmatprep.subr.bf16.mxu0 0
  %1424 = vmatpush1.bf16.msra.mxu0 0
  %1425 = vmatprep.subr.bf16.mxu0 0
  %1426 = vmatpush1.bf16.msra.mxu0 0
  %1427 = vmatprep.subr.bf16.mxu0 0
  %1428 = vmatpush1.bf16.msra.mxu0 0
  %1429 = vmatprep.subr.bf16.mxu0 0
  %1430 = vmatpush1.bf16.msra.mxu0 0
  %1431 = vmatprep.subr.bf16.mxu0 0
  %1432 = vmatpush1.bf16.msra.mxu0 0
  %1433 = vmatprep.subr.bf16.mxu0 0
  %1434 = vmatpush1.bf16.msra.mxu0 0
  %1435 = vmatprep.subr.bf16.mxu0 0
  %1436 = vmatpush1.bf16.msra.mxu0 0
  %1437 = vmatprep.mubr.bf16.mxu0 0
  %1438 = vmatmul.mubr.bf16.gmra.mrb[0].mxu0 %v503
  %v1439 = vpop.f32.mrb[0].mxu0
  %v1440 = vadd.f32 0.0, %v1439
  %v1441 = vpop.f32.mrb[0].mxu0
  %v1442 = vpop.f32.mrb[0].mxu0
  %v1443 = vadd.f32 0.0, %v1442
  %v1444 = vpop.f32.mrb[0].mxu0
  %1445 = vmatprep.mubr.bf16.mxu0 0
  %1446 = vmatmul.mubr.bf16.gmra.mrb[0].mxu0 %v506
  %v1447 = vpop.f32.mrb[0].mxu0
  %v1448 = vadd.f32 0.0, %v1447
  %v1449 = vpop.f32.mrb[0].mxu0
  %v1450 = vpop.f32.mrb[0].mxu0
  %v1451 = vadd.f32 0.0, %v1450
  %v1452 = vpop.f32.mrb[0].mxu0
  %1453 = vmatprep.mubr.bf16.mxu0 0
  %1454 = vmatmul.mubr.bf16.gmra.mrb[0].mxu0 %v509
  %v1455 = vpop.f32.mrb[0].mxu0
  %v1456 = vadd.f32 0.0, %v1455
  %v1457 = vpop.f32.mrb[0].mxu0
  %v1458 = vpop.f32.mrb[0].mxu0
  %v1459 = vadd.f32 0.0, %v1458
  %v1460 = vpop.f32.mrb[0].mxu0
  %1461 = vmatprep.mubr.bf16.mxu0 0
  %1462 = vmatmul.mubr.bf16.gmra.mrb[0].mxu0 %v512
  %v1463 = vpop.f32.mrb[0].mxu0
  %v1464 = vadd.f32 0.0, %v1463
  %v1465 = vpop.f32.mrb[0].mxu0
  %v1466 = vpop.f32.mrb[0].mxu0
  %v1467 = vpop.f32.mrb[0].mxu0
  %1468 = vdwg.mxu0
  %v1469 = vadd.f32 %v1398, %v1440
  %v1470 = vadd.f32 %v1399, %v1443
  %v1471 = vadd.f32 %v1400, %v1448
  %v1472 = vadd.f32 %v1401, %v1451
  %v1473 = vadd.f32 %v1402, %v1456
  %v1474 = vadd.f32 %v1403, %v1459
  %v1475 = vadd.f32 %v1404, %v1464
  %v1476 = vld [vmem:[%s8] sm:$0xf]
  %v1477 = vld [vmem:[%s8 + $0x4] sm:$0xf]
  %v1478 = vld [vmem:[%s8 + $0x8] sm:$0xf]
  %v1479 = vld [vmem:[%s8 + $0xc] sm:$0xf]
  %v1480 = vld [vmem:[%s8 + $0x10] sm:$0xf]
  %v1481 = vld [vmem:[%s8 + $0x14] sm:$0xf]
  %v1482 = vld [vmem:[%s8 + $0x18] sm:$0x1]
  %v1490 = vunpack.c.l.b16 %v1476
  %v1491 = vunpack.c.l.b16 %v1477
  %v1492 = vunpack.c.l.b16 %v1478
  %v1493 = vunpack.c.l.b16 %v1479
  %v1494 = vunpack.c.l.b16 %v1480
  %v1495 = vunpack.c.l.b16 %v1481
  %v1496 = vunpack.c.l.b16 %v1482
  %v1497 = vpack.c.b16 %v1491, %v1490
  %v1498 = vpack.c.b16 %v1493, %v1492
  %v1499 = vpack.c.b16 %v1495, %v1494
  %v1500 = vpack.c.b16 %v1496, %v1496
  %v1502 = vsel %vm123, %v1497, 0
  %v1505 = vsel %vm123, %v1498, 0
  %v1508 = vsel %vm123, %v1499, 0
  %v1511 = vsel %vm123, %v1500, 0
  %1513 = vmatprep.subr.bf16.mxu0 0
  %1514 = vmatpush1.bf16.msra.mxu0 %v374
  %1515 = vmatprep.subr.bf16.mxu0 0
  %1516 = vmatpush1.bf16.msra.mxu0 %v375
  %1517 = vmatprep.subr.bf16.mxu0 0
  %1518 = vmatpush1.bf16.msra.mxu0 0
  %1519 = vmatprep.subr.bf16.mxu0 0
  %1520 = vmatpush1.bf16.msra.mxu0 0
  %1521 = vmatprep.subr.bf16.mxu0 0
  %1522 = vmatpush1.bf16.msra.mxu0 0
  %1523 = vmatprep.subr.bf16.mxu0 0
  %1524 = vmatpush1.bf16.msra.mxu0 0
  %1525 = vmatprep.subr.bf16.mxu0 0
  %1526 = vmatpush1.bf16.msra.mxu0 0
  %1527 = vmatprep.subr.bf16.mxu0 0
  %1528 = vmatpush1.bf16.msra.mxu0 0
  %1529 = vmatprep.subr.bf16.mxu0 0
  %1530 = vmatpush1.bf16.msra.mxu0 0
  %1531 = vmatprep.subr.bf16.mxu0 0
  %1532 = vmatpush1.bf16.msra.mxu0 0
  %1533 = vmatprep.subr.bf16.mxu0 0
  %1534 = vmatpush1.bf16.msra.mxu0 0
  %1535 = vmatprep.subr.bf16.mxu0 0
  %1536 = vmatpush1.bf16.msra.mxu0 0
  %1537 = vmatprep.subr.bf16.mxu0 0
  %1538 = vmatpush1.bf16.msra.mxu0 0
  %1539 = vmatprep.subr.bf16.mxu0 0
  %1540 = vmatpush1.bf16.msra.mxu0 0
  %1541 = vmatprep.subr.bf16.mxu0 0
  %1542 = vmatpush1.bf16.msra.mxu0 0
  %1543 = vmatprep.subr.bf16.mxu0 0
  %1544 = vmatpush1.bf16.msra.mxu0 0
  %1545 = vmatprep.mubr.bf16.mxu0 0
  %1546 = vmatmul.mubr.bf16.gmra.mrb[0].mxu0 %v1502
  %v1547 = vpop.f32.mrb[0].mxu0
  %v1548 = vadd.f32 0.0, %v1547
  %v1549 = vpop.f32.mrb[0].mxu0
  %v1550 = vpop.f32.mrb[0].mxu0
  %v1551 = vadd.f32 0.0, %v1550
  %v1552 = vpop.f32.mrb[0].mxu0
  %1553 = vmatprep.mubr.bf16.mxu0 0
  %1554 = vmatmul.mubr.bf16.gmra.mrb[0].mxu0 %v1505
  %v1555 = vpop.f32.mrb[0].mxu0
  %v1556 = vadd.f32 0.0, %v1555
  %v1557 = vpop.f32.mrb[0].mxu0
  %v1558 = vpop.f32.mrb[0].mxu0
  %v1559 = vadd.f32 0.0, %v1558
  %v1560 = vpop.f32.mrb[0].mxu0
  %1561 = vmatprep.mubr.bf16.mxu0 0
  %1562 = vmatmul.mubr.bf16.gmra.mrb[0].mxu0 %v1508
  %v1563 = vpop.f32.mrb[0].mxu0
  %v1564 = vadd.f32 0.0, %v1563
  %v1565 = vpop.f32.mrb[0].mxu0
  %v1566 = vpop.f32.mrb[0].mxu0
  %v1567 = vadd.f32 0.0, %v1566
  %v1568 = vpop.f32.mrb[0].mxu0
  %1569 = vmatprep.mubr.bf16.mxu0 0
  %1570 = vmatmul.mubr.bf16.gmra.mrb[0].mxu0 %v1511
  %v1571 = vpop.f32.mrb[0].mxu0
  %v1572 = vadd.f32 0.0, %v1571
  %v1573 = vpop.f32.mrb[0].mxu0
  %v1574 = vpop.f32.mrb[0].mxu0
  %v1575 = vpop.f32.mrb[0].mxu0
  %1576 = vdwg.mxu0
  %v1577 = vadd.f32 %v1469, %v1548
  %v1578 = vadd.f32 %v1470, %v1551
  %v1579 = vadd.f32 %v1471, %v1556
  %v1580 = vadd.f32 %v1472, %v1559
  %v1581 = vadd.f32 %v1473, %v1564
  %v1582 = vadd.f32 %v1474, %v1567
  %v1583 = vadd.f32 %v1475, %v1572
  %v1584 = vld [vmem:[%s9] sm:$0xf]
  %v1585 = vld [vmem:[%s9 + $0x4] sm:$0xf]
  %v1586 = vld [vmem:[%s9 + $0x8] sm:$0xf]
  %v1587 = vld [vmem:[%s9 + $0xc] sm:$0xf]
  %v1588 = vld [vmem:[%s9 + $0x10] sm:$0xf]
  %v1589 = vld [vmem:[%s9 + $0x14] sm:$0xf]
  %v1590 = vld [vmem:[%s9 + $0x18] sm:$0x1]
  %v1598 = vunpack.c.l.b16 %v1584
  %v1599 = vunpack.c.l.b16 %v1585
  %v1600 = vunpack.c.l.b16 %v1586
  %v1601 = vunpack.c.l.b16 %v1587
  %v1602 = vunpack.c.l.b16 %v1588
  %v1603 = vunpack.c.l.b16 %v1589
  %v1604 = vunpack.c.l.b16 %v1590
  %v1605 = vpack.c.b16 %v1599, %v1598
  %v1606 = vpack.c.b16 %v1601, %v1600
  %v1607 = vpack.c.b16 %v1603, %v1602
  %v1608 = vpack.c.b16 %v1604, %v1604
  %v1610 = vsel %vm123, %v1605, 0
  %v1613 = vsel %vm123, %v1606, 0
  %v1616 = vsel %vm123, %v1607, 0
  %v1619 = vsel %vm123, %v1608, 0
  %1621 = vmatprep.subr.bf16.mxu0 0
  %1622 = vmatpush1.bf16.msra.mxu0 %v498
  %1623 = vmatprep.subr.bf16.mxu0 0
  %1624 = vmatpush1.bf16.msra.mxu0 %v499
  %1625 = vmatprep.subr.bf16.mxu0 0
  %1626 = vmatpush1.bf16.msra.mxu0 0
  %1627 = vmatprep.subr.bf16.mxu0 0
  %1628 = vmatpush1.bf16.msra.mxu0 0
  %1629 = vmatprep.subr.bf16.mxu0 0
  %1630 = vmatpush1.bf16.msra.mxu0 0
  %1631 = vmatprep.subr.bf16.mxu0 0
  %1632 = vmatpush1.bf16.msra.mxu0 0
  %1633 = vmatprep.subr.bf16.mxu0 0
  %1634 = vmatpush1.bf16.msra.mxu0 0
  %1635 = vmatprep.subr.bf16.mxu0 0
  %1636 = vmatpush1.bf16.msra.mxu0 0
  %1637 = vmatprep.subr.bf16.mxu0 0
  %1638 = vmatpush1.bf16.msra.mxu0 0
  %1639 = vmatprep.subr.bf16.mxu0 0
  %1640 = vmatpush1.bf16.msra.mxu0 0
  %1641 = vmatprep.subr.bf16.mxu0 0
  %1642 = vmatpush1.bf16.msra.mxu0 0
  %1643 = vmatprep.subr.bf16.mxu0 0
  %1644 = vmatpush1.bf16.msra.mxu0 0
  %1645 = vmatprep.subr.bf16.mxu0 0
  %1646 = vmatpush1.bf16.msra.mxu0 0
  %1647 = vmatprep.subr.bf16.mxu0 0
  %1648 = vmatpush1.bf16.msra.mxu0 0
  %1649 = vmatprep.subr.bf16.mxu0 0
  %1650 = vmatpush1.bf16.msra.mxu0 0
  %1651 = vmatprep.subr.bf16.mxu0 0
  %1652 = vmatpush1.bf16.msra.mxu0 0
  %1653 = vmatprep.mubr.bf16.mxu0 0
  %1654 = vmatmul.mubr.bf16.gmra.mrb[0].mxu0 %v1610
  %v1655 = vpop.f32.mrb[0].mxu0
  %v1656 = vadd.f32 0.0, %v1655
  %v1657 = vpop.f32.mrb[0].mxu0
  %v1658 = vpop.f32.mrb[0].mxu0
  %v1659 = vadd.f32 0.0, %v1658
  %v1660 = vpop.f32.mrb[0].mxu0
  %1661 = vmatprep.mubr.bf16.mxu0 0
  %1662 = vmatmul.mubr.bf16.gmra.mrb[0].mxu0 %v1613
  %v1663 = vpop.f32.mrb[0].mxu0
  %v1664 = vadd.f32 0.0, %v1663
  %v1665 = vpop.f32.mrb[0].mxu0
  %v1666 = vpop.f32.mrb[0].mxu0
  %v1667 = vadd.f32 0.0, %v1666
  %v1668 = vpop.f32.mrb[0].mxu0
  %1669 = vmatprep.mubr.bf16.mxu0 0
  %1670 = vmatmul.mubr.bf16.gmra.mrb[0].mxu0 %v1616
  %v1671 = vpop.f32.mrb[0].mxu0
  %v1672 = vadd.f32 0.0, %v1671
  %v1673 = vpop.f32.mrb[0].mxu0
  %v1674 = vpop.f32.mrb[0].mxu0
  %v1675 = vadd.f32 0.0, %v1674
  %v1676 = vpop.f32.mrb[0].mxu0
  %1677 = vmatprep.mubr.bf16.mxu0 0
  %1678 = vmatmul.mubr.bf16.gmra.mrb[0].mxu0 %v1619
  %v1679 = vpop.f32.mrb[0].mxu0
  %v1680 = vadd.f32 0.0, %v1679
  %v1681 = vpop.f32.mrb[0].mxu0
  %v1682 = vpop.f32.mrb[0].mxu0
  %v1683 = vpop.f32.mrb[0].mxu0
  %1684 = vdwg.mxu0
  %v1685 = vadd.f32 %v1577, %v1656
  %v1686 = vadd.f32 %v1578, %v1659
  %v1687 = vadd.f32 %v1579, %v1664
  %v1688 = vadd.f32 %v1580, %v1667
  %v1689 = vadd.f32 %v1581, %v1672
  %v1690 = vadd.f32 %v1582, %v1675
  %v1691 = vadd.f32 %v1583, %v1680
  %v1692 = vmax.f32 %v1685, 0.0
  %v1693 = vmax.f32 %v1686, 0.0
  %v1694 = vmax.f32 %v1687, 0.0
  %v1695 = vmax.f32 %v1688, 0.0
  %v1696 = vmax.f32 %v1689, 0.0
  %v1697 = vmax.f32 %v1690, 0.0
  %v1698 = vmax.f32 %v1691, 0.0
  %v1699 = vpack.c.bf16 %v1693, %v1692
  %v1700 = vpack.c.bf16 %v1695, %v1694
  %v1701 = vpack.c.bf16 %v1697, %v1696
  %v1702 = vpack.c.bf16 %v1698, %v1698
  %1703 = vmatprep.subr.bf16.mxu0 0
  %1704 = vmatpush1.bf16.msra.mxu0 %v119
  %1705 = vmatprep.subr.bf16.mxu0 0
  %1706 = vmatpush1.bf16.msra.mxu0 %v120
  %1707 = vmatprep.subr.bf16.mxu0 0
  %1708 = vmatpush1.bf16.msra.mxu0 0
  %1709 = vmatprep.subr.bf16.mxu0 0
  %1710 = vmatpush1.bf16.msra.mxu0 0
  %1711 = vmatprep.subr.bf16.mxu0 0
  %1712 = vmatpush1.bf16.msra.mxu0 0
  %1713 = vmatprep.subr.bf16.mxu0 0
  %1714 = vmatpush1.bf16.msra.mxu0 0
  %1715 = vmatprep.subr.bf16.mxu0 0
  %1716 = vmatpush1.bf16.msra.mxu0 0
  %1717 = vmatprep.subr.bf16.mxu0 0
  %1718 = vmatpush1.bf16.msra.mxu0 0
  %1719 = vmatprep.subr.bf16.mxu0 0
  %1720 = vmatpush1.bf16.msra.mxu0 0
  %1721 = vmatprep.subr.bf16.mxu0 0
  %1722 = vmatpush1.bf16.msra.mxu0 0
  %1723 = vmatprep.subr.bf16.mxu0 0
  %1724 = vmatpush1.bf16.msra.mxu0 0
  %1725 = vmatprep.subr.bf16.mxu0 0
  %1726 = vmatpush1.bf16.msra.mxu0 0
  %1727 = vmatprep.subr.bf16.mxu0 0
  %1728 = vmatpush1.bf16.msra.mxu0 0
  %1729 = vmatprep.subr.bf16.mxu0 0
  %1730 = vmatpush1.bf16.msra.mxu0 0
  %1731 = vmatprep.subr.bf16.mxu0 0
  %1732 = vmatpush1.bf16.msra.mxu0 0
  %1733 = vmatprep.subr.bf16.mxu0 0
  %1734 = vmatpush1.bf16.msra.mxu0 0
  %1735 = vmatprep.mubr.bf16.mxu0 0
  %1736 = vmatmul.mubr.bf16.gmra.mrb[0].mxu0 %v503
  %v1737 = vpop.f32.mrb[0].mxu0
  %v1738 = vadd.f32 0.0, %v1737
  %v1739 = vpop.f32.mrb[0].mxu0
  %v1740 = vpop.f32.mrb[0].mxu0
  %v1741 = vadd.f32 0.0, %v1740
  %v1742 = vpop.f32.mrb[0].mxu0
  %1743 = vmatprep.mubr.bf16.mxu0 0
  %1744 = vmatmul.mubr.bf16.gmra.mrb[0].mxu0 %v506
  %v1745 = vpop.f32.mrb[0].mxu0
  %v1746 = vadd.f32 0.0, %v1745
  %v1747 = vpop.f32.mrb[0].mxu0
  %v1748 = vpop.f32.mrb[0].mxu0
  %v1749 = vadd.f32 0.0, %v1748
  %v1750 = vpop.f32.mrb[0].mxu0
  %1751 = vmatprep.mubr.bf16.mxu0 0
  %1752 = vmatmul.mubr.bf16.gmra.mrb[0].mxu0 %v509
  %v1753 = vpop.f32.mrb[0].mxu0
  %v1754 = vadd.f32 0.0, %v1753
  %v1755 = vpop.f32.mrb[0].mxu0
  %v1756 = vpop.f32.mrb[0].mxu0
  %v1757 = vadd.f32 0.0, %v1756
  %v1758 = vpop.f32.mrb[0].mxu0
  %1759 = vmatprep.mubr.bf16.mxu0 0
  %1760 = vmatmul.mubr.bf16.gmra.mrb[0].mxu0 %v512
  %v1761 = vpop.f32.mrb[0].mxu0
  %v1762 = vadd.f32 0.0, %v1761
  %v1763 = vpop.f32.mrb[0].mxu0
  %v1764 = vpop.f32.mrb[0].mxu0
  %v1765 = vpop.f32.mrb[0].mxu0
  %1766 = vdwg.mxu0
  %v1767 = vadd.f32 %v204, %v1738
  %v1768 = vadd.f32 %v204, %v1741
  %v1769 = vadd.f32 %v204, %v1746
  %v1770 = vadd.f32 %v204, %v1749
  %v1771 = vadd.f32 %v204, %v1754
  %v1772 = vadd.f32 %v204, %v1757
  %v1773 = vadd.f32 %v204, %v1762
  %1774 = vmatprep.subr.bf16.mxu0 0
  %1775 = vmatpush1.bf16.msra.mxu0 %v250
  %1776 = vmatprep.subr.bf16.mxu0 0
  %1777 = vmatpush1.bf16.msra.mxu0 %v251
  %1778 = vmatprep.subr.bf16.mxu0 0
  %1779 = vmatpush1.bf16.msra.mxu0 0
  %1780 = vmatprep.subr.bf16.mxu0 0
  %1781 = vmatpush1.bf16.msra.mxu0 0
  %1782 = vmatprep.subr.bf16.mxu0 0
  %1783 = vmatpush1.bf16.msra.mxu0 0
  %1784 = vmatprep.subr.bf16.mxu0 0
  %1785 = vmatpush1.bf16.msra.mxu0 0
  %1786 = vmatprep.subr.bf16.mxu0 0
  %1787 = vmatpush1.bf16.msra.mxu0 0
  %1788 = vmatprep.subr.bf16.mxu0 0
  %1789 = vmatpush1.bf16.msra.mxu0 0
  %1790 = vmatprep.subr.bf16.mxu0 0
  %1791 = vmatpush1.bf16.msra.mxu0 0
  %1792 = vmatprep.subr.bf16.mxu0 0
  %1793 = vmatpush1.bf16.msra.mxu0 0
  %1794 = vmatprep.subr.bf16.mxu0 0
  %1795 = vmatpush1.bf16.msra.mxu0 0
  %1796 = vmatprep.subr.bf16.mxu0 0
  %1797 = vmatpush1.bf16.msra.mxu0 0
  %1798 = vmatprep.subr.bf16.mxu0 0
  %1799 = vmatpush1.bf16.msra.mxu0 0
  %1800 = vmatprep.subr.bf16.mxu0 0
  %1801 = vmatpush1.bf16.msra.mxu0 0
  %1802 = vmatprep.subr.bf16.mxu0 0
  %1803 = vmatpush1.bf16.msra.mxu0 0
  %1804 = vmatprep.subr.bf16.mxu0 0
  %1805 = vmatpush1.bf16.msra.mxu0 0
  %1806 = vmatprep.mubr.bf16.mxu0 0
  %1807 = vmatmul.mubr.bf16.gmra.mrb[0].mxu0 %v872
  %v1808 = vpop.f32.mrb[0].mxu0
  %v1809 = vadd.f32 0.0, %v1808
  %v1810 = vpop.f32.mrb[0].mxu0
  %v1811 = vpop.f32.mrb[0].mxu0
  %v1812 = vadd.f32 0.0, %v1811
  %v1813 = vpop.f32.mrb[0].mxu0
  %1814 = vmatprep.mubr.bf16.mxu0 0
  %1815 = vmatmul.mubr.bf16.gmra.mrb[0].mxu0 %v875
  %v1816 = vpop.f32.mrb[0].mxu0
  %v1817 = vadd.f32 0.0, %v1816
  %v1818 = vpop.f32.mrb[0].mxu0
  %v1819 = vpop.f32.mrb[0].mxu0
  %v1820 = vadd.f32 0.0, %v1819
  %v1821 = vpop.f32.mrb[0].mxu0
  %1822 = vmatprep.mubr.bf16.mxu0 0
  %1823 = vmatmul.mubr.bf16.gmra.mrb[0].mxu0 %v878
  %v1824 = vpop.f32.mrb[0].mxu0
  %v1825 = vadd.f32 0.0, %v1824
  %v1826 = vpop.f32.mrb[0].mxu0
  %v1827 = vpop.f32.mrb[0].mxu0
  %v1828 = vadd.f32 0.0, %v1827
  %v1829 = vpop.f32.mrb[0].mxu0
  %1830 = vmatprep.mubr.bf16.mxu0 0
  %1831 = vmatmul.mubr.bf16.gmra.mrb[0].mxu0 %v881
  %v1832 = vpop.f32.mrb[0].mxu0
  %v1833 = vadd.f32 0.0, %v1832
  %v1834 = vpop.f32.mrb[0].mxu0
  %v1835 = vpop.f32.mrb[0].mxu0
  %v1836 = vpop.f32.mrb[0].mxu0
  %1837 = vdwg.mxu0
  %v1838 = vadd.f32 %v1767, %v1809
  %v1839 = vadd.f32 %v1768, %v1812
  %v1840 = vadd.f32 %v1769, %v1817
  %v1841 = vadd.f32 %v1770, %v1820
  %v1842 = vadd.f32 %v1771, %v1825
  %v1843 = vadd.f32 %v1772, %v1828
  %v1844 = vadd.f32 %v1773, %v1833
  %1845 = vmatprep.subr.bf16.mxu0 0
  %1846 = vmatpush1.bf16.msra.mxu0 %v374
  %1847 = vmatprep.subr.bf16.mxu0 0
  %1848 = vmatpush1.bf16.msra.mxu0 %v375
  %1849 = vmatprep.subr.bf16.mxu0 0
  %1850 = vmatpush1.bf16.msra.mxu0 0
  %1851 = vmatprep.subr.bf16.mxu0 0
  %1852 = vmatpush1.bf16.msra.mxu0 0
  %1853 = vmatprep.subr.bf16.mxu0 0
  %1854 = vmatpush1.bf16.msra.mxu0 0
  %1855 = vmatprep.subr.bf16.mxu0 0
  %1856 = vmatpush1.bf16.msra.mxu0 0
  %1857 = vmatprep.subr.bf16.mxu0 0
  %1858 = vmatpush1.bf16.msra.mxu0 0
  %1859 = vmatprep.subr.bf16.mxu0 0
  %1860 = vmatpush1.bf16.msra.mxu0 0
  %1861 = vmatprep.subr.bf16.mxu0 0
  %1862 = vmatpush1.bf16.msra.mxu0 0
  %1863 = vmatprep.subr.bf16.mxu0 0
  %1864 = vmatpush1.bf16.msra.mxu0 0
  %1865 = vmatprep.subr.bf16.mxu0 0
  %1866 = vmatpush1.bf16.msra.mxu0 0
  %1867 = vmatprep.subr.bf16.mxu0 0
  %1868 = vmatpush1.bf16.msra.mxu0 0
  %1869 = vmatprep.subr.bf16.mxu0 0
  %1870 = vmatpush1.bf16.msra.mxu0 0
  %1871 = vmatprep.subr.bf16.mxu0 0
  %1872 = vmatpush1.bf16.msra.mxu0 0
  %1873 = vmatprep.subr.bf16.mxu0 0
  %1874 = vmatpush1.bf16.msra.mxu0 0
  %1875 = vmatprep.subr.bf16.mxu0 0
  %1876 = vmatpush1.bf16.msra.mxu0 0
  %1877 = vmatprep.mubr.bf16.mxu0 0
  %1878 = vmatmul.mubr.bf16.gmra.mrb[0].mxu0 %v1610
  %v1879 = vpop.f32.mrb[0].mxu0
  %v1880 = vadd.f32 0.0, %v1879
  %v1881 = vpop.f32.mrb[0].mxu0
  %v1882 = vpop.f32.mrb[0].mxu0
  %v1883 = vadd.f32 0.0, %v1882
  %v1884 = vpop.f32.mrb[0].mxu0
  %1885 = vmatprep.mubr.bf16.mxu0 0
  %1886 = vmatmul.mubr.bf16.gmra.mrb[0].mxu0 %v1613
  %v1887 = vpop.f32.mrb[0].mxu0
  %v1888 = vadd.f32 0.0, %v1887
  %v1889 = vpop.f32.mrb[0].mxu0
  %v1890 = vpop.f32.mrb[0].mxu0
  %v1891 = vadd.f32 0.0, %v1890
  %v1892 = vpop.f32.mrb[0].mxu0
  %1893 = vmatprep.mubr.bf16.mxu0 0
  %1894 = vmatmul.mubr.bf16.gmra.mrb[0].mxu0 %v1616
  %v1895 = vpop.f32.mrb[0].mxu0
  %v1896 = vadd.f32 0.0, %v1895
  %v1897 = vpop.f32.mrb[0].mxu0
  %v1898 = vpop.f32.mrb[0].mxu0
  %v1899 = vadd.f32 0.0, %v1898
  %v1900 = vpop.f32.mrb[0].mxu0
  %1901 = vmatprep.mubr.bf16.mxu0 0
  %1902 = vmatmul.mubr.bf16.gmra.mrb[0].mxu0 %v1619
  %v1903 = vpop.f32.mrb[0].mxu0
  %v1904 = vadd.f32 0.0, %v1903
  %v1905 = vpop.f32.mrb[0].mxu0
  %v1906 = vpop.f32.mrb[0].mxu0
  %v1907 = vpop.f32.mrb[0].mxu0
  %1908 = vdwg.mxu0
  %v1909 = vadd.f32 %v1838, %v1880
  %v1910 = vadd.f32 %v1839, %v1883
  %v1911 = vadd.f32 %v1840, %v1888
  %v1912 = vadd.f32 %v1841, %v1891
  %v1913 = vadd.f32 %v1842, %v1896
  %v1914 = vadd.f32 %v1843, %v1899
  %v1915 = vadd.f32 %v1844, %v1904
  %v1916 = vld [vmem:[%s10] sm:$0xf]
  %v1917 = vld [vmem:[%s10 + $0x4] sm:$0xf]
  %v1918 = vld [vmem:[%s10 + $0x8] sm:$0xf]
  %v1919 = vld [vmem:[%s10 + $0xc] sm:$0xf]
  %v1920 = vld [vmem:[%s10 + $0x10] sm:$0xf]
  %v1921 = vld [vmem:[%s10 + $0x14] sm:$0xf]
  %v1922 = vld [vmem:[%s10 + $0x18] sm:$0x1]
  %v1930 = vunpack.c.l.b16 %v1916
  %v1931 = vunpack.c.l.b16 %v1917
  %v1932 = vunpack.c.l.b16 %v1918
  %v1933 = vunpack.c.l.b16 %v1919
  %v1934 = vunpack.c.l.b16 %v1920
  %v1935 = vunpack.c.l.b16 %v1921
  %v1936 = vunpack.c.l.b16 %v1922
  %v1937 = vpack.c.b16 %v1931, %v1930
  %v1938 = vpack.c.b16 %v1933, %v1932
  %v1939 = vpack.c.b16 %v1935, %v1934
  %v1940 = vpack.c.b16 %v1936, %v1936
  %v1942 = vsel %vm123, %v1937, 0
  %v1945 = vsel %vm123, %v1938, 0
  %v1948 = vsel %vm123, %v1939, 0
  %v1951 = vsel %vm123, %v1940, 0
  %1953 = vmatprep.subr.bf16.mxu0 0
  %1954 = vmatpush1.bf16.msra.mxu0 %v498
  %1955 = vmatprep.subr.bf16.mxu0 0
  %1956 = vmatpush1.bf16.msra.mxu0 %v499
  %1957 = vmatprep.subr.bf16.mxu0 0
  %1958 = vmatpush1.bf16.msra.mxu0 0
  %1959 = vmatprep.subr.bf16.mxu0 0
  %1960 = vmatpush1.bf16.msra.mxu0 0
  %1961 = vmatprep.subr.bf16.mxu0 0
  %1962 = vmatpush1.bf16.msra.mxu0 0
  %1963 = vmatprep.subr.bf16.mxu0 0
  %1964 = vmatpush1.bf16.msra.mxu0 0
  %1965 = vmatprep.subr.bf16.mxu0 0
  %1966 = vmatpush1.bf16.msra.mxu0 0
  %1967 = vmatprep.subr.bf16.mxu0 0
  %1968 = vmatpush1.bf16.msra.mxu0 0
  %1969 = vmatprep.subr.bf16.mxu0 0
  %1970 = vmatpush1.bf16.msra.mxu0 0
  %1971 = vmatprep.subr.bf16.mxu0 0
  %1972 = vmatpush1.bf16.msra.mxu0 0
  %1973 = vmatprep.subr.bf16.mxu0 0
  %1974 = vmatpush1.bf16.msra.mxu0 0
  %1975 = vmatprep.subr.bf16.mxu0 0
  %1976 = vmatpush1.bf16.msra.mxu0 0
  %1977 = vmatprep.subr.bf16.mxu0 0
  %1978 = vmatpush1.bf16.msra.mxu0 0
  %1979 = vmatprep.subr.bf16.mxu0 0
  %1980 = vmatpush1.bf16.msra.mxu0 0
  %1981 = vmatprep.subr.bf16.mxu0 0
  %1982 = vmatpush1.bf16.msra.mxu0 0
  %1983 = vmatprep.subr.bf16.mxu0 0
  %1984 = vmatpush1.bf16.msra.mxu0 0
  %1985 = vmatprep.mubr.bf16.mxu0 0
  %1986 = vmatmul.mubr.bf16.gmra.mrb[0].mxu0 %v1942
  %v1987 = vpop.f32.mrb[0].mxu0
  %v1988 = vadd.f32 0.0, %v1987
  %v1989 = vpop.f32.mrb[0].mxu0
  %v1990 = vpop.f32.mrb[0].mxu0
  %v1991 = vadd.f32 0.0, %v1990
  %v1992 = vpop.f32.mrb[0].mxu0
  %1993 = vmatprep.mubr.bf16.mxu0 0
  %1994 = vmatmul.mubr.bf16.gmra.mrb[0].mxu0 %v1945
  %v1995 = vpop.f32.mrb[0].mxu0
  %v1996 = vadd.f32 0.0, %v1995
  %v1997 = vpop.f32.mrb[0].mxu0
  %v1998 = vpop.f32.mrb[0].mxu0
  %v1999 = vadd.f32 0.0, %v1998
  %v2000 = vpop.f32.mrb[0].mxu0
  %2001 = vmatprep.mubr.bf16.mxu0 0
  %2002 = vmatmul.mubr.bf16.gmra.mrb[0].mxu0 %v1948
  %v2003 = vpop.f32.mrb[0].mxu0
  %v2004 = vadd.f32 0.0, %v2003
  %v2005 = vpop.f32.mrb[0].mxu0
  %v2006 = vpop.f32.mrb[0].mxu0
  %v2007 = vadd.f32 0.0, %v2006
  %v2008 = vpop.f32.mrb[0].mxu0
  %2009 = vmatprep.mubr.bf16.mxu0 0
  %2010 = vmatmul.mubr.bf16.gmra.mrb[0].mxu0 %v1951
  %v2011 = vpop.f32.mrb[0].mxu0
  %v2012 = vadd.f32 0.0, %v2011
  %v2013 = vpop.f32.mrb[0].mxu0
  %v2014 = vpop.f32.mrb[0].mxu0
  %v2015 = vpop.f32.mrb[0].mxu0
  %2016 = vdwg.mxu0
  %v2017 = vadd.f32 %v1909, %v1988
  %v2018 = vadd.f32 %v1910, %v1991
  %v2019 = vadd.f32 %v1911, %v1996
  %v2020 = vadd.f32 %v1912, %v1999
  %v2021 = vadd.f32 %v1913, %v2004
  %v2022 = vadd.f32 %v1914, %v2007
  %v2023 = vadd.f32 %v1915, %v2012
  %v2024 = vmax.f32 %v2017, 0.0
  %v2025 = vmax.f32 %v2018, 0.0
  %v2026 = vmax.f32 %v2019, 0.0
  %v2027 = vmax.f32 %v2020, 0.0
  %v2028 = vmax.f32 %v2021, 0.0
  %v2029 = vmax.f32 %v2022, 0.0
  %v2030 = vmax.f32 %v2023, 0.0
  %v2031 = vpack.c.bf16 %v2025, %v2024
  %v2032 = vpack.c.bf16 %v2027, %v2026
  %v2033 = vpack.c.bf16 %v2029, %v2028
  %v2034 = vpack.c.bf16 %v2030, %v2030
  %2035 = vmatprep.subr.bf16.mxu0 0
  %2036 = vmatpush1.bf16.msra.mxu0 %v119
  %2037 = vmatprep.subr.bf16.mxu0 0
  %2038 = vmatpush1.bf16.msra.mxu0 %v120
  %2039 = vmatprep.subr.bf16.mxu0 0
  %2040 = vmatpush1.bf16.msra.mxu0 0
  %2041 = vmatprep.subr.bf16.mxu0 0
  %2042 = vmatpush1.bf16.msra.mxu0 0
  %2043 = vmatprep.subr.bf16.mxu0 0
  %2044 = vmatpush1.bf16.msra.mxu0 0
  %2045 = vmatprep.subr.bf16.mxu0 0
  %2046 = vmatpush1.bf16.msra.mxu0 0
  %2047 = vmatprep.subr.bf16.mxu0 0
  %2048 = vmatpush1.bf16.msra.mxu0 0
  %2049 = vmatprep.subr.bf16.mxu0 0
  %2050 = vmatpush1.bf16.msra.mxu0 0
  %2051 = vmatprep.subr.bf16.mxu0 0
  %2052 = vmatpush1.bf16.msra.mxu0 0
  %2053 = vmatprep.subr.bf16.mxu0 0
  %2054 = vmatpush1.bf16.msra.mxu0 0
  %2055 = vmatprep.subr.bf16.mxu0 0
  %2056 = vmatpush1.bf16.msra.mxu0 0
  %2057 = vmatprep.subr.bf16.mxu0 0
  %2058 = vmatpush1.bf16.msra.mxu0 0
  %2059 = vmatprep.subr.bf16.mxu0 0
  %2060 = vmatpush1.bf16.msra.mxu0 0
  %2061 = vmatprep.subr.bf16.mxu0 0
  %2062 = vmatpush1.bf16.msra.mxu0 0
  %2063 = vmatprep.subr.bf16.mxu0 0
  %2064 = vmatpush1.bf16.msra.mxu0 0
  %2065 = vmatprep.subr.bf16.mxu0 0
  %2066 = vmatpush1.bf16.msra.mxu0 0
  %2067 = vmatprep.mubr.bf16.mxu0 0
  %2068 = vmatmul.mubr.bf16.gmra.mrb[0].mxu0 %v872
  %v2069 = vpop.f32.mrb[0].mxu0
  %v2070 = vadd.f32 0.0, %v2069
  %v2071 = vpop.f32.mrb[0].mxu0
  %v2072 = vpop.f32.mrb[0].mxu0
  %v2073 = vadd.f32 0.0, %v2072
  %v2074 = vpop.f32.mrb[0].mxu0
  %2075 = vmatprep.mubr.bf16.mxu0 0
  %2076 = vmatmul.mubr.bf16.gmra.mrb[0].mxu0 %v875
  %v2077 = vpop.f32.mrb[0].mxu0
  %v2078 = vadd.f32 0.0, %v2077
  %v2079 = vpop.f32.mrb[0].mxu0
  %v2080 = vpop.f32.mrb[0].mxu0
  %v2081 = vadd.f32 0.0, %v2080
  %v2082 = vpop.f32.mrb[0].mxu0
  %2083 = vmatprep.mubr.bf16.mxu0 0
  %2084 = vmatmul.mubr.bf16.gmra.mrb[0].mxu0 %v878
  %v2085 = vpop.f32.mrb[0].mxu0
  %v2086 = vadd.f32 0.0, %v2085
  %v2087 = vpop.f32.mrb[0].mxu0
  %v2088 = vpop.f32.mrb[0].mxu0
  %v2089 = vadd.f32 0.0, %v2088
  %v2090 = vpop.f32.mrb[0].mxu0
  %2091 = vmatprep.mubr.bf16.mxu0 0
  %2092 = vmatmul.mubr.bf16.gmra.mrb[0].mxu0 %v881
  %v2093 = vpop.f32.mrb[0].mxu0
  %v2094 = vadd.f32 0.0, %v2093
  %v2095 = vpop.f32.mrb[0].mxu0
  %v2096 = vpop.f32.mrb[0].mxu0
  %v2097 = vpop.f32.mrb[0].mxu0
  %2098 = vdwg.mxu0
  %v2099 = vadd.f32 %v204, %v2070
  %v2100 = vadd.f32 %v204, %v2073
  %v2101 = vadd.f32 %v204, %v2078
  %v2102 = vadd.f32 %v204, %v2081
  %v2103 = vadd.f32 %v204, %v2086
  %v2104 = vadd.f32 %v204, %v2089
  %v2105 = vadd.f32 %v204, %v2094
  %2106 = vmatprep.subr.bf16.mxu0 0
  %2107 = vmatpush1.bf16.msra.mxu0 %v250
  %2108 = vmatprep.subr.bf16.mxu0 0
  %2109 = vmatpush1.bf16.msra.mxu0 %v251
  %2110 = vmatprep.subr.bf16.mxu0 0
  %2111 = vmatpush1.bf16.msra.mxu0 0
  %2112 = vmatprep.subr.bf16.mxu0 0
  %2113 = vmatpush1.bf16.msra.mxu0 0
  %2114 = vmatprep.subr.bf16.mxu0 0
  %2115 = vmatpush1.bf16.msra.mxu0 0
  %2116 = vmatprep.subr.bf16.mxu0 0
  %2117 = vmatpush1.bf16.msra.mxu0 0
  %2118 = vmatprep.subr.bf16.mxu0 0
  %2119 = vmatpush1.bf16.msra.mxu0 0
  %2120 = vmatprep.subr.bf16.mxu0 0
  %2121 = vmatpush1.bf16.msra.mxu0 0
  %2122 = vmatprep.subr.bf16.mxu0 0
  %2123 = vmatpush1.bf16.msra.mxu0 0
  %2124 = vmatprep.subr.bf16.mxu0 0
  %2125 = vmatpush1.bf16.msra.mxu0 0
  %2126 = vmatprep.subr.bf16.mxu0 0
  %2127 = vmatpush1.bf16.msra.mxu0 0
  %2128 = vmatprep.subr.bf16.mxu0 0
  %2129 = vmatpush1.bf16.msra.mxu0 0
  %2130 = vmatprep.subr.bf16.mxu0 0
  %2131 = vmatpush1.bf16.msra.mxu0 0
  %2132 = vmatprep.subr.bf16.mxu0 0
  %2133 = vmatpush1.bf16.msra.mxu0 0
  %2134 = vmatprep.subr.bf16.mxu0 0
  %2135 = vmatpush1.bf16.msra.mxu0 0
  %2136 = vmatprep.subr.bf16.mxu0 0
  %2137 = vmatpush1.bf16.msra.mxu0 0
  %2138 = vmatprep.mubr.bf16.mxu0 0
  %2139 = vmatmul.mubr.bf16.gmra.mrb[0].mxu0 %v1241
  %v2140 = vpop.f32.mrb[0].mxu0
  %v2141 = vadd.f32 0.0, %v2140
  %v2142 = vpop.f32.mrb[0].mxu0
  %v2143 = vpop.f32.mrb[0].mxu0
  %v2144 = vadd.f32 0.0, %v2143
  %v2145 = vpop.f32.mrb[0].mxu0
  %2146 = vmatprep.mubr.bf16.mxu0 0
  %2147 = vmatmul.mubr.bf16.gmra.mrb[0].mxu0 %v1244
  %v2148 = vpop.f32.mrb[0].mxu0
  %v2149 = vadd.f32 0.0, %v2148
  %v2150 = vpop.f32.mrb[0].mxu0
  %v2151 = vpop.f32.mrb[0].mxu0
  %v2152 = vadd.f32 0.0, %v2151
  %v2153 = vpop.f32.mrb[0].mxu0
  %2154 = vmatprep.mubr.bf16.mxu0 0
  %2155 = vmatmul.mubr.bf16.gmra.mrb[0].mxu0 %v1247
  %v2156 = vpop.f32.mrb[0].mxu0
  %v2157 = vadd.f32 0.0, %v2156
  %v2158 = vpop.f32.mrb[0].mxu0
  %v2159 = vpop.f32.mrb[0].mxu0
  %v2160 = vadd.f32 0.0, %v2159
  %v2161 = vpop.f32.mrb[0].mxu0
  %2162 = vmatprep.mubr.bf16.mxu0 0
  %2163 = vmatmul.mubr.bf16.gmra.mrb[0].mxu0 %v1250
  %v2164 = vpop.f32.mrb[0].mxu0
  %v2165 = vadd.f32 0.0, %v2164
  %v2166 = vpop.f32.mrb[0].mxu0
  %v2167 = vpop.f32.mrb[0].mxu0
  %v2168 = vpop.f32.mrb[0].mxu0
  %2169 = vdwg.mxu0
  %v2170 = vadd.f32 %v2099, %v2141
  %v2171 = vadd.f32 %v2100, %v2144
  %v2172 = vadd.f32 %v2101, %v2149
  %v2173 = vadd.f32 %v2102, %v2152
  %v2174 = vadd.f32 %v2103, %v2157
  %v2175 = vadd.f32 %v2104, %v2160
  %v2176 = vadd.f32 %v2105, %v2165
  %2177 = vmatprep.subr.bf16.mxu0 0
  %2178 = vmatpush1.bf16.msra.mxu0 %v374
  %2179 = vmatprep.subr.bf16.mxu0 0
  %2180 = vmatpush1.bf16.msra.mxu0 %v375
  %2181 = vmatprep.subr.bf16.mxu0 0
  %2182 = vmatpush1.bf16.msra.mxu0 0
  %2183 = vmatprep.subr.bf16.mxu0 0
  %2184 = vmatpush1.bf16.msra.mxu0 0
  %2185 = vmatprep.subr.bf16.mxu0 0
  %2186 = vmatpush1.bf16.msra.mxu0 0
  %2187 = vmatprep.subr.bf16.mxu0 0
  %2188 = vmatpush1.bf16.msra.mxu0 0
  %2189 = vmatprep.subr.bf16.mxu0 0
  %2190 = vmatpush1.bf16.msra.mxu0 0
  %2191 = vmatprep.subr.bf16.mxu0 0
  %2192 = vmatpush1.bf16.msra.mxu0 0
  %2193 = vmatprep.subr.bf16.mxu0 0
  %2194 = vmatpush1.bf16.msra.mxu0 0
  %2195 = vmatprep.subr.bf16.mxu0 0
  %2196 = vmatpush1.bf16.msra.mxu0 0
  %2197 = vmatprep.subr.bf16.mxu0 0
  %2198 = vmatpush1.bf16.msra.mxu0 0
  %2199 = vmatprep.subr.bf16.mxu0 0
  %2200 = vmatpush1.bf16.msra.mxu0 0
  %2201 = vmatprep.subr.bf16.mxu0 0
  %2202 = vmatpush1.bf16.msra.mxu0 0
  %2203 = vmatprep.subr.bf16.mxu0 0
  %2204 = vmatpush1.bf16.msra.mxu0 0
  %2205 = vmatprep.subr.bf16.mxu0 0
  %2206 = vmatpush1.bf16.msra.mxu0 0
  %2207 = vmatprep.subr.bf16.mxu0 0
  %2208 = vmatpush1.bf16.msra.mxu0 0
  %2209 = vmatprep.mubr.bf16.mxu0 0
  %2210 = vmatmul.mubr.bf16.gmra.mrb[0].mxu0 %v1942
  %v2211 = vpop.f32.mrb[0].mxu0
  %v2212 = vadd.f32 0.0, %v2211
  %v2213 = vpop.f32.mrb[0].mxu0
  %v2214 = vpop.f32.mrb[0].mxu0
  %v2215 = vadd.f32 0.0, %v2214
  %v2216 = vpop.f32.mrb[0].mxu0
  %2217 = vmatprep.mubr.bf16.mxu0 0
  %2218 = vmatmul.mubr.bf16.gmra.mrb[0].mxu0 %v1945
  %v2219 = vpop.f32.mrb[0].mxu0
  %v2220 = vadd.f32 0.0, %v2219
  %v2221 = vpop.f32.mrb[0].mxu0
  %v2222 = vpop.f32.mrb[0].mxu0
  %v2223 = vadd.f32 0.0, %v2222
  %v2224 = vpop.f32.mrb[0].mxu0
  %2225 = vmatprep.mubr.bf16.mxu0 0
  %2226 = vmatmul.mubr.bf16.gmra.mrb[0].mxu0 %v1948
  %v2227 = vpop.f32.mrb[0].mxu0
  %v2228 = vadd.f32 0.0, %v2227
  %v2229 = vpop.f32.mrb[0].mxu0
  %v2230 = vpop.f32.mrb[0].mxu0
  %v2231 = vadd.f32 0.0, %v2230
  %v2232 = vpop.f32.mrb[0].mxu0
  %2233 = vmatprep.mubr.bf16.mxu0 0
  %2234 = vmatmul.mubr.bf16.gmra.mrb[0].mxu0 %v1951
  %v2235 = vpop.f32.mrb[0].mxu0
  %v2236 = vadd.f32 0.0, %v2235
  %v2237 = vpop.f32.mrb[0].mxu0
  %v2238 = vpop.f32.mrb[0].mxu0
  %v2239 = vpop.f32.mrb[0].mxu0
  %2240 = vdwg.mxu0
  %v2241 = vadd.f32 %v2170, %v2212
  %v2242 = vadd.f32 %v2171, %v2215
  %v2243 = vadd.f32 %v2172, %v2220
  %v2244 = vadd.f32 %v2173, %v2223
  %v2245 = vadd.f32 %v2174, %v2228
  %v2246 = vadd.f32 %v2175, %v2231
  %v2247 = vadd.f32 %v2176, %v2236
  %v2248 = vld [vmem:[%s11] sm:$0xf]
  %v2249 = vld [vmem:[%s11 + $0x4] sm:$0xf]
  %v2250 = vld [vmem:[%s11 + $0x8] sm:$0xf]
  %v2251 = vld [vmem:[%s11 + $0xc] sm:$0xf]
  %v2252 = vld [vmem:[%s11 + $0x10] sm:$0xf]
  %v2253 = vld [vmem:[%s11 + $0x14] sm:$0xf]
  %v2254 = vld [vmem:[%s11 + $0x18] sm:$0x1]
  %v2262 = vunpack.c.l.b16 %v2248
  %v2263 = vunpack.c.l.b16 %v2249
  %v2264 = vunpack.c.l.b16 %v2250
  %v2265 = vunpack.c.l.b16 %v2251
  %v2266 = vunpack.c.l.b16 %v2252
  %v2267 = vunpack.c.l.b16 %v2253
  %v2268 = vunpack.c.l.b16 %v2254
  %v2269 = vpack.c.b16 %v2263, %v2262
  %v2270 = vpack.c.b16 %v2265, %v2264
  %v2271 = vpack.c.b16 %v2267, %v2266
  %v2272 = vpack.c.b16 %v2268, %v2268
  %v2274 = vsel %vm123, %v2269, 0
  %v2277 = vsel %vm123, %v2270, 0
  %v2280 = vsel %vm123, %v2271, 0
  %v2283 = vsel %vm123, %v2272, 0
  %2285 = vmatprep.subr.bf16.mxu0 0
  %2286 = vmatpush1.bf16.msra.mxu0 %v498
  %2287 = vmatprep.subr.bf16.mxu0 0
  %2288 = vmatpush1.bf16.msra.mxu0 %v499
  %2289 = vmatprep.subr.bf16.mxu0 0
  %2290 = vmatpush1.bf16.msra.mxu0 0
  %2291 = vmatprep.subr.bf16.mxu0 0
  %2292 = vmatpush1.bf16.msra.mxu0 0
  %2293 = vmatprep.subr.bf16.mxu0 0
  %2294 = vmatpush1.bf16.msra.mxu0 0
  %2295 = vmatprep.subr.bf16.mxu0 0
  %2296 = vmatpush1.bf16.msra.mxu0 0
  %2297 = vmatprep.subr.bf16.mxu0 0
  %2298 = vmatpush1.bf16.msra.mxu0 0
  %2299 = vmatprep.subr.bf16.mxu0 0
  %2300 = vmatpush1.bf16.msra.mxu0 0
  %2301 = vmatprep.subr.bf16.mxu0 0
  %2302 = vmatpush1.bf16.msra.mxu0 0
  %2303 = vmatprep.subr.bf16.mxu0 0
  %2304 = vmatpush1.bf16.msra.mxu0 0
  %2305 = vmatprep.subr.bf16.mxu0 0
  %2306 = vmatpush1.bf16.msra.mxu0 0
  %2307 = vmatprep.subr.bf16.mxu0 0
  %2308 = vmatpush1.bf16.msra.mxu0 0
  %2309 = vmatprep.subr.bf16.mxu0 0
  %2310 = vmatpush1.bf16.msra.mxu0 0
  %2311 = vmatprep.subr.bf16.mxu0 0
  %2312 = vmatpush1.bf16.msra.mxu0 0
  %2313 = vmatprep.subr.bf16.mxu0 0
  %2314 = vmatpush1.bf16.msra.mxu0 0
  %2315 = vmatprep.subr.bf16.mxu0 0
  %2316 = vmatpush1.bf16.msra.mxu0 0
  %2317 = vmatprep.mubr.bf16.mxu0 0
  %2318 = vmatmul.mubr.bf16.gmra.mrb[0].mxu0 %v2274
  %v2319 = vpop.f32.mrb[0].mxu0
  %v2320 = vadd.f32 0.0, %v2319
  %v2321 = vpop.f32.mrb[0].mxu0
  %v2322 = vpop.f32.mrb[0].mxu0
  %v2323 = vadd.f32 0.0, %v2322
  %v2324 = vpop.f32.mrb[0].mxu0
  %2325 = vmatprep.mubr.bf16.mxu0 0
  %2326 = vmatmul.mubr.bf16.gmra.mrb[0].mxu0 %v2277
  %v2327 = vpop.f32.mrb[0].mxu0
  %v2328 = vadd.f32 0.0, %v2327
  %v2329 = vpop.f32.mrb[0].mxu0
  %v2330 = vpop.f32.mrb[0].mxu0
  %v2331 = vadd.f32 0.0, %v2330
  %v2332 = vpop.f32.mrb[0].mxu0
  %2333 = vmatprep.mubr.bf16.mxu0 0
  %2334 = vmatmul.mubr.bf16.gmra.mrb[0].mxu0 %v2280
  %v2335 = vpop.f32.mrb[0].mxu0
  %v2336 = vadd.f32 0.0, %v2335
  %v2337 = vpop.f32.mrb[0].mxu0
  %v2338 = vpop.f32.mrb[0].mxu0
  %v2339 = vadd.f32 0.0, %v2338
  %v2340 = vpop.f32.mrb[0].mxu0
  %2341 = vmatprep.mubr.bf16.mxu0 0
  %2342 = vmatmul.mubr.bf16.gmra.mrb[0].mxu0 %v2283
  %v2343 = vpop.f32.mrb[0].mxu0
  %v2344 = vadd.f32 0.0, %v2343
  %v2345 = vpop.f32.mrb[0].mxu0
  %v2346 = vpop.f32.mrb[0].mxu0
  %v2347 = vpop.f32.mrb[0].mxu0
  %2348 = vdwg.mxu0
  %v2349 = vadd.f32 %v2241, %v2320
  %v2350 = vadd.f32 %v2242, %v2323
  %v2351 = vadd.f32 %v2243, %v2328
  %v2352 = vadd.f32 %v2244, %v2331
  %v2353 = vadd.f32 %v2245, %v2336
  %v2354 = vadd.f32 %v2246, %v2339
  %v2355 = vadd.f32 %v2247, %v2344
  %v2356 = vmax.f32 %v2349, 0.0
  %v2357 = vmax.f32 %v2350, 0.0
  %v2358 = vmax.f32 %v2351, 0.0
  %v2359 = vmax.f32 %v2352, 0.0
  %v2360 = vmax.f32 %v2353, 0.0
  %v2361 = vmax.f32 %v2354, 0.0
  %v2362 = vmax.f32 %v2355, 0.0
  %v2363 = vpack.c.bf16 %v2357, %v2356
  %v2364 = vpack.c.bf16 %v2359, %v2358
  %v2365 = vpack.c.bf16 %v2361, %v2360
  %v2366 = vpack.c.bf16 %v2362, %v2362
  %2367 = vmatprep.subr.bf16.mxu0 0
  %2368 = vmatpush1.bf16.msra.mxu0 %v119
  %2369 = vmatprep.subr.bf16.mxu0 0
  %2370 = vmatpush1.bf16.msra.mxu0 %v120
  %2371 = vmatprep.subr.bf16.mxu0 0
  %2372 = vmatpush1.bf16.msra.mxu0 0
  %2373 = vmatprep.subr.bf16.mxu0 0
  %2374 = vmatpush1.bf16.msra.mxu0 0
  %2375 = vmatprep.subr.bf16.mxu0 0
  %2376 = vmatpush1.bf16.msra.mxu0 0
  %2377 = vmatprep.subr.bf16.mxu0 0
  %2378 = vmatpush1.bf16.msra.mxu0 0
  %2379 = vmatprep.subr.bf16.mxu0 0
  %2380 = vmatpush1.bf16.msra.mxu0 0
  %2381 = vmatprep.subr.bf16.mxu0 0
  %2382 = vmatpush1.bf16.msra.mxu0 0
  %2383 = vmatprep.subr.bf16.mxu0 0
  %2384 = vmatpush1.bf16.msra.mxu0 0
  %2385 = vmatprep.subr.bf16.mxu0 0
  %2386 = vmatpush1.bf16.msra.mxu0 0
  %2387 = vmatprep.subr.bf16.mxu0 0
  %2388 = vmatpush1.bf16.msra.mxu0 0
  %2389 = vmatprep.subr.bf16.mxu0 0
  %2390 = vmatpush1.bf16.msra.mxu0 0
  %2391 = vmatprep.subr.bf16.mxu0 0
  %2392 = vmatpush1.bf16.msra.mxu0 0
  %2393 = vmatprep.subr.bf16.mxu0 0
  %2394 = vmatpush1.bf16.msra.mxu0 0
  %2395 = vmatprep.subr.bf16.mxu0 0
  %2396 = vmatpush1.bf16.msra.mxu0 0
  %2397 = vmatprep.subr.bf16.mxu0 0
  %2398 = vmatpush1.bf16.msra.mxu0 0
  %2399 = vmatprep.mubr.bf16.mxu0 0
  %2400 = vmatmul.mubr.bf16.gmra.mrb[0].mxu0 %v1502
  %v2401 = vpop.f32.mrb[0].mxu0
  %v2402 = vadd.f32 0.0, %v2401
  %v2403 = vpop.f32.mrb[0].mxu0
  %v2404 = vpop.f32.mrb[0].mxu0
  %v2405 = vadd.f32 0.0, %v2404
  %v2406 = vpop.f32.mrb[0].mxu0
  %2407 = vmatprep.mubr.bf16.mxu0 0
  %2408 = vmatmul.mubr.bf16.gmra.mrb[0].mxu0 %v1505
  %v2409 = vpop.f32.mrb[0].mxu0
  %v2410 = vadd.f32 0.0, %v2409
  %v2411 = vpop.f32.mrb[0].mxu0
  %v2412 = vpop.f32.mrb[0].mxu0
  %v2413 = vadd.f32 0.0, %v2412
  %v2414 = vpop.f32.mrb[0].mxu0
  %2415 = vmatprep.mubr.bf16.mxu0 0
  %2416 = vmatmul.mubr.bf16.gmra.mrb[0].mxu0 %v1508
  %v2417 = vpop.f32.mrb[0].mxu0
  %v2418 = vadd.f32 0.0, %v2417
  %v2419 = vpop.f32.mrb[0].mxu0
  %v2420 = vpop.f32.mrb[0].mxu0
  %v2421 = vadd.f32 0.0, %v2420
  %v2422 = vpop.f32.mrb[0].mxu0
  %2423 = vmatprep.mubr.bf16.mxu0 0
  %2424 = vmatmul.mubr.bf16.gmra.mrb[0].mxu0 %v1511
  %v2425 = vpop.f32.mrb[0].mxu0
  %v2426 = vadd.f32 0.0, %v2425
  %v2427 = vpop.f32.mrb[0].mxu0
  %v2428 = vpop.f32.mrb[0].mxu0
  %v2429 = vpop.f32.mrb[0].mxu0
  %2430 = vdwg.mxu0
  %v2431 = vadd.f32 %v204, %v2402
  %v2432 = vadd.f32 %v204, %v2405
  %v2433 = vadd.f32 %v204, %v2410
  %v2434 = vadd.f32 %v204, %v2413
  %v2435 = vadd.f32 %v204, %v2418
  %v2436 = vadd.f32 %v204, %v2421
  %v2437 = vadd.f32 %v204, %v2426
  %2438 = vmatprep.subr.bf16.mxu0 0
  %2439 = vmatpush1.bf16.msra.mxu0 %v250
  %2440 = vmatprep.subr.bf16.mxu0 0
  %2441 = vmatpush1.bf16.msra.mxu0 %v251
  %2442 = vmatprep.subr.bf16.mxu0 0
  %2443 = vmatpush1.bf16.msra.mxu0 0
  %2444 = vmatprep.subr.bf16.mxu0 0
  %2445 = vmatpush1.bf16.msra.mxu0 0
  %2446 = vmatprep.subr.bf16.mxu0 0
  %2447 = vmatpush1.bf16.msra.mxu0 0
  %2448 = vmatprep.subr.bf16.mxu0 0
  %2449 = vmatpush1.bf16.msra.mxu0 0
  %2450 = vmatprep.subr.bf16.mxu0 0
  %2451 = vmatpush1.bf16.msra.mxu0 0
  %2452 = vmatprep.subr.bf16.mxu0 0
  %2453 = vmatpush1.bf16.msra.mxu0 0
  %2454 = vmatprep.subr.bf16.mxu0 0
  %2455 = vmatpush1.bf16.msra.mxu0 0
  %2456 = vmatprep.subr.bf16.mxu0 0
  %2457 = vmatpush1.bf16.msra.mxu0 0
  %2458 = vmatprep.subr.bf16.mxu0 0
  %2459 = vmatpush1.bf16.msra.mxu0 0
  %2460 = vmatprep.subr.bf16.mxu0 0
  %2461 = vmatpush1.bf16.msra.mxu0 0
  %2462 = vmatprep.subr.bf16.mxu0 0
  %2463 = vmatpush1.bf16.msra.mxu0 0
  %2464 = vmatprep.subr.bf16.mxu0 0
  %2465 = vmatpush1.bf16.msra.mxu0 0
  %2466 = vmatprep.subr.bf16.mxu0 0
  %2467 = vmatpush1.bf16.msra.mxu0 0
  %2468 = vmatprep.subr.bf16.mxu0 0
  %2469 = vmatpush1.bf16.msra.mxu0 0
  %2470 = vmatprep.mubr.bf16.mxu0 0
  %2471 = vmatmul.mubr.bf16.gmra.mrb[0].mxu0 %v1610
  %v2472 = vpop.f32.mrb[0].mxu0
  %v2473 = vadd.f32 0.0, %v2472
  %v2474 = vpop.f32.mrb[0].mxu0
  %v2475 = vpop.f32.mrb[0].mxu0
  %v2476 = vadd.f32 0.0, %v2475
  %v2477 = vpop.f32.mrb[0].mxu0
  %2478 = vmatprep.mubr.bf16.mxu0 0
  %2479 = vmatmul.mubr.bf16.gmra.mrb[0].mxu0 %v1613
  %v2480 = vpop.f32.mrb[0].mxu0
  %v2481 = vadd.f32 0.0, %v2480
  %v2482 = vpop.f32.mrb[0].mxu0
  %v2483 = vpop.f32.mrb[0].mxu0
  %v2484 = vadd.f32 0.0, %v2483
  %v2485 = vpop.f32.mrb[0].mxu0
  %2486 = vmatprep.mubr.bf16.mxu0 0
  %2487 = vmatmul.mubr.bf16.gmra.mrb[0].mxu0 %v1616
  %v2488 = vpop.f32.mrb[0].mxu0
  %v2489 = vadd.f32 0.0, %v2488
  %v2490 = vpop.f32.mrb[0].mxu0
  %v2491 = vpop.f32.mrb[0].mxu0
  %v2492 = vadd.f32 0.0, %v2491
  %v2493 = vpop.f32.mrb[0].mxu0
  %2494 = vmatprep.mubr.bf16.mxu0 0
  %2495 = vmatmul.mubr.bf16.gmra.mrb[0].mxu0 %v1619
  %v2496 = vpop.f32.mrb[0].mxu0
  %v2497 = vadd.f32 0.0, %v2496
  %v2498 = vpop.f32.mrb[0].mxu0
  %v2499 = vpop.f32.mrb[0].mxu0
  %v2500 = vpop.f32.mrb[0].mxu0
  %2501 = vdwg.mxu0
  %v2502 = vadd.f32 %v2431, %v2473
  %v2503 = vadd.f32 %v2432, %v2476
  %v2504 = vadd.f32 %v2433, %v2481
  %v2505 = vadd.f32 %v2434, %v2484
  %v2506 = vadd.f32 %v2435, %v2489
  %v2507 = vadd.f32 %v2436, %v2492
  %v2508 = vadd.f32 %v2437, %v2497
  %v2509 = vld [vmem:[%s12] sm:$0xf]
  %v2510 = vld [vmem:[%s12 + $0x4] sm:$0xf]
  %v2511 = vld [vmem:[%s12 + $0x8] sm:$0xf]
  %v2512 = vld [vmem:[%s12 + $0xc] sm:$0xf]
  %v2513 = vld [vmem:[%s12 + $0x10] sm:$0xf]
  %v2514 = vld [vmem:[%s12 + $0x14] sm:$0xf]
  %v2515 = vld [vmem:[%s12 + $0x18] sm:$0x1]
  %v2523 = vunpack.c.l.b16 %v2509
  %v2524 = vunpack.c.l.b16 %v2510
  %v2525 = vunpack.c.l.b16 %v2511
  %v2526 = vunpack.c.l.b16 %v2512
  %v2527 = vunpack.c.l.b16 %v2513
  %v2528 = vunpack.c.l.b16 %v2514
  %v2529 = vunpack.c.l.b16 %v2515
  %v2530 = vpack.c.b16 %v2524, %v2523
  %v2531 = vpack.c.b16 %v2526, %v2525
  %v2532 = vpack.c.b16 %v2528, %v2527
  %v2533 = vpack.c.b16 %v2529, %v2529
  %v2535 = vsel %vm123, %v2530, 0
  %v2538 = vsel %vm123, %v2531, 0
  %v2541 = vsel %vm123, %v2532, 0
  %v2544 = vsel %vm123, %v2533, 0
  %2546 = vmatprep.subr.bf16.mxu0 0
  %2547 = vmatpush1.bf16.msra.mxu0 %v374
  %2548 = vmatprep.subr.bf16.mxu0 0
  %2549 = vmatpush1.bf16.msra.mxu0 %v375
  %2550 = vmatprep.subr.bf16.mxu0 0
  %2551 = vmatpush1.bf16.msra.mxu0 0
  %2552 = vmatprep.subr.bf16.mxu0 0
  %2553 = vmatpush1.bf16.msra.mxu0 0
  %2554 = vmatprep.subr.bf16.mxu0 0
  %2555 = vmatpush1.bf16.msra.mxu0 0
  %2556 = vmatprep.subr.bf16.mxu0 0
  %2557 = vmatpush1.bf16.msra.mxu0 0
  %2558 = vmatprep.subr.bf16.mxu0 0
  %2559 = vmatpush1.bf16.msra.mxu0 0
  %2560 = vmatprep.subr.bf16.mxu0 0
  %2561 = vmatpush1.bf16.msra.mxu0 0
  %2562 = vmatprep.subr.bf16.mxu0 0
  %2563 = vmatpush1.bf16.msra.mxu0 0
  %2564 = vmatprep.subr.bf16.mxu0 0
  %2565 = vmatpush1.bf16.msra.mxu0 0
  %2566 = vmatprep.subr.bf16.mxu0 0
  %2567 = vmatpush1.bf16.msra.mxu0 0
  %2568 = vmatprep.subr.bf16.mxu0 0
  %2569 = vmatpush1.bf16.msra.mxu0 0
  %2570 = vmatprep.subr.bf16.mxu0 0
  %2571 = vmatpush1.bf16.msra.mxu0 0
  %2572 = vmatprep.subr.bf16.mxu0 0
  %2573 = vmatpush1.bf16.msra.mxu0 0
  %2574 = vmatprep.subr.bf16.mxu0 0
  %2575 = vmatpush1.bf16.msra.mxu0 0
  %2576 = vmatprep.subr.bf16.mxu0 0
  %2577 = vmatpush1.bf16.msra.mxu0 0
  %2578 = vmatprep.mubr.bf16.mxu0 0
  %2579 = vmatmul.mubr.bf16.gmra.mrb[0].mxu0 %v2535
  %v2580 = vpop.f32.mrb[0].mxu0
  %v2581 = vadd.f32 0.0, %v2580
  %v2582 = vpop.f32.mrb[0].mxu0
  %v2583 = vpop.f32.mrb[0].mxu0
  %v2584 = vadd.f32 0.0, %v2583
  %v2585 = vpop.f32.mrb[0].mxu0
  %2586 = vmatprep.mubr.bf16.mxu0 0
  %2587 = vmatmul.mubr.bf16.gmra.mrb[0].mxu0 %v2538
  %v2588 = vpop.f32.mrb[0].mxu0
  %v2589 = vadd.f32 0.0, %v2588
  %v2590 = vpop.f32.mrb[0].mxu0
  %v2591 = vpop.f32.mrb[0].mxu0
  %v2592 = vadd.f32 0.0, %v2591
  %v2593 = vpop.f32.mrb[0].mxu0
  %2594 = vmatprep.mubr.bf16.mxu0 0
  %2595 = vmatmul.mubr.bf16.gmra.mrb[0].mxu0 %v2541
  %v2596 = vpop.f32.mrb[0].mxu0
  %v2597 = vadd.f32 0.0, %v2596
  %v2598 = vpop.f32.mrb[0].mxu0
  %v2599 = vpop.f32.mrb[0].mxu0
  %v2600 = vadd.f32 0.0, %v2599
  %v2601 = vpop.f32.mrb[0].mxu0
  %2602 = vmatprep.mubr.bf16.mxu0 0
  %2603 = vmatmul.mubr.bf16.gmra.mrb[0].mxu0 %v2544
  %v2604 = vpop.f32.mrb[0].mxu0
  %v2605 = vadd.f32 0.0, %v2604
  %v2606 = vpop.f32.mrb[0].mxu0
  %v2607 = vpop.f32.mrb[0].mxu0
  %v2608 = vpop.f32.mrb[0].mxu0
  %2609 = vdwg.mxu0
  %v2610 = vadd.f32 %v2502, %v2581
  %v2611 = vadd.f32 %v2503, %v2584
  %v2612 = vadd.f32 %v2504, %v2589
  %v2613 = vadd.f32 %v2505, %v2592
  %v2614 = vadd.f32 %v2506, %v2597
  %v2615 = vadd.f32 %v2507, %v2600
  %v2616 = vadd.f32 %v2508, %v2605
  %v2617 = vld [vmem:[%s13] sm:$0xf]
  %v2618 = vld [vmem:[%s13 + $0x4] sm:$0xf]
  %v2619 = vld [vmem:[%s13 + $0x8] sm:$0xf]
  %v2620 = vld [vmem:[%s13 + $0xc] sm:$0xf]
  %v2621 = vld [vmem:[%s13 + $0x10] sm:$0xf]
  %v2622 = vld [vmem:[%s13 + $0x14] sm:$0xf]
  %v2623 = vld [vmem:[%s13 + $0x18] sm:$0x1]
  %v2631 = vunpack.c.l.b16 %v2617
  %v2632 = vunpack.c.l.b16 %v2618
  %v2633 = vunpack.c.l.b16 %v2619
  %v2634 = vunpack.c.l.b16 %v2620
  %v2635 = vunpack.c.l.b16 %v2621
  %v2636 = vunpack.c.l.b16 %v2622
  %v2637 = vunpack.c.l.b16 %v2623
  %v2638 = vpack.c.b16 %v2632, %v2631
  %v2639 = vpack.c.b16 %v2634, %v2633
  %v2640 = vpack.c.b16 %v2636, %v2635
  %v2641 = vpack.c.b16 %v2637, %v2637
  %v2643 = vsel %vm123, %v2638, 0
  %v2646 = vsel %vm123, %v2639, 0
  %v2649 = vsel %vm123, %v2640, 0
  %v2652 = vsel %vm123, %v2641, 0
  %2654 = vmatprep.subr.bf16.mxu0 0
  %2655 = vmatpush1.bf16.msra.mxu0 %v498
  %2656 = vmatprep.subr.bf16.mxu0 0
  %2657 = vmatpush1.bf16.msra.mxu0 %v499
  %2658 = vmatprep.subr.bf16.mxu0 0
  %2659 = vmatpush1.bf16.msra.mxu0 0
  %2660 = vmatprep.subr.bf16.mxu0 0
  %2661 = vmatpush1.bf16.msra.mxu0 0
  %2662 = vmatprep.subr.bf16.mxu0 0
  %2663 = vmatpush1.bf16.msra.mxu0 0
  %2664 = vmatprep.subr.bf16.mxu0 0
  %2665 = vmatpush1.bf16.msra.mxu0 0
  %2666 = vmatprep.subr.bf16.mxu0 0
  %2667 = vmatpush1.bf16.msra.mxu0 0
  %2668 = vmatprep.subr.bf16.mxu0 0
  %2669 = vmatpush1.bf16.msra.mxu0 0
  %2670 = vmatprep.subr.bf16.mxu0 0
  %2671 = vmatpush1.bf16.msra.mxu0 0
  %2672 = vmatprep.subr.bf16.mxu0 0
  %2673 = vmatpush1.bf16.msra.mxu0 0
  %2674 = vmatprep.subr.bf16.mxu0 0
  %2675 = vmatpush1.bf16.msra.mxu0 0
  %2676 = vmatprep.subr.bf16.mxu0 0
  %2677 = vmatpush1.bf16.msra.mxu0 0
  %2678 = vmatprep.subr.bf16.mxu0 0
  %2679 = vmatpush1.bf16.msra.mxu0 0
  %2680 = vmatprep.subr.bf16.mxu0 0
  %2681 = vmatpush1.bf16.msra.mxu0 0
  %2682 = vmatprep.subr.bf16.mxu0 0
  %2683 = vmatpush1.bf16.msra.mxu0 0
  %2684 = vmatprep.subr.bf16.mxu0 0
  %2685 = vmatpush1.bf16.msra.mxu0 0
  %2686 = vmatprep.mubr.bf16.mxu0 0
  %2687 = vmatmul.mubr.bf16.gmra.mrb[0].mxu0 %v2643
  %v2688 = vpop.f32.mrb[0].mxu0
  %v2689 = vadd.f32 0.0, %v2688
  %v2690 = vpop.f32.mrb[0].mxu0
  %v2691 = vpop.f32.mrb[0].mxu0
  %v2692 = vadd.f32 0.0, %v2691
  %v2693 = vpop.f32.mrb[0].mxu0
  %2694 = vmatprep.mubr.bf16.mxu0 0
  %2695 = vmatmul.mubr.bf16.gmra.mrb[0].mxu0 %v2646
  %v2696 = vpop.f32.mrb[0].mxu0
  %v2697 = vadd.f32 0.0, %v2696
  %v2698 = vpop.f32.mrb[0].mxu0
  %v2699 = vpop.f32.mrb[0].mxu0
  %v2700 = vadd.f32 0.0, %v2699
  %v2701 = vpop.f32.mrb[0].mxu0
  %2702 = vmatprep.mubr.bf16.mxu0 0
  %2703 = vmatmul.mubr.bf16.gmra.mrb[0].mxu0 %v2649
  %v2704 = vpop.f32.mrb[0].mxu0
  %v2705 = vadd.f32 0.0, %v2704
  %v2706 = vpop.f32.mrb[0].mxu0
  %v2707 = vpop.f32.mrb[0].mxu0
  %v2708 = vadd.f32 0.0, %v2707
  %v2709 = vpop.f32.mrb[0].mxu0
  %2710 = vmatprep.mubr.bf16.mxu0 0
  %2711 = vmatmul.mubr.bf16.gmra.mrb[0].mxu0 %v2652
  %v2712 = vpop.f32.mrb[0].mxu0
  %v2713 = vadd.f32 0.0, %v2712
  %v2714 = vpop.f32.mrb[0].mxu0
  %v2715 = vpop.f32.mrb[0].mxu0
  %v2716 = vpop.f32.mrb[0].mxu0
  %2717 = vdwg.mxu0
  %v2718 = vadd.f32 %v2610, %v2689
  %v2719 = vadd.f32 %v2611, %v2692
  %v2720 = vadd.f32 %v2612, %v2697
  %v2721 = vadd.f32 %v2613, %v2700
  %v2722 = vadd.f32 %v2614, %v2705
  %v2723 = vadd.f32 %v2615, %v2708
  %v2724 = vadd.f32 %v2616, %v2713
  %v2725 = vmax.f32 %v2718, 0.0
  %v2726 = vmax.f32 %v2719, 0.0
  %v2727 = vmax.f32 %v2720, 0.0
  %v2728 = vmax.f32 %v2721, 0.0
  %v2729 = vmax.f32 %v2722, 0.0
  %v2730 = vmax.f32 %v2723, 0.0
  %v2731 = vmax.f32 %v2724, 0.0
  %v2732 = vpack.c.bf16 %v2726, %v2725
  %v2733 = vpack.c.bf16 %v2728, %v2727
  %v2734 = vpack.c.bf16 %v2730, %v2729
  %v2735 = vpack.c.bf16 %v2731, %v2731
  %2736 = vmatprep.subr.bf16.mxu0 0
  %2737 = vmatpush1.bf16.msra.mxu0 %v119
  %2738 = vmatprep.subr.bf16.mxu0 0
  %2739 = vmatpush1.bf16.msra.mxu0 %v120
  %2740 = vmatprep.subr.bf16.mxu0 0
  %2741 = vmatpush1.bf16.msra.mxu0 0
  %2742 = vmatprep.subr.bf16.mxu0 0
  %2743 = vmatpush1.bf16.msra.mxu0 0
  %2744 = vmatprep.subr.bf16.mxu0 0
  %2745 = vmatpush1.bf16.msra.mxu0 0
  %2746 = vmatprep.subr.bf16.mxu0 0
  %2747 = vmatpush1.bf16.msra.mxu0 0
  %2748 = vmatprep.subr.bf16.mxu0 0
  %2749 = vmatpush1.bf16.msra.mxu0 0
  %2750 = vmatprep.subr.bf16.mxu0 0
  %2751 = vmatpush1.bf16.msra.mxu0 0
  %2752 = vmatprep.subr.bf16.mxu0 0
  %2753 = vmatpush1.bf16.msra.mxu0 0
  %2754 = vmatprep.subr.bf16.mxu0 0
  %2755 = vmatpush1.bf16.msra.mxu0 0
  %2756 = vmatprep.subr.bf16.mxu0 0
  %2757 = vmatpush1.bf16.msra.mxu0 0
  %2758 = vmatprep.subr.bf16.mxu0 0
  %2759 = vmatpush1.bf16.msra.mxu0 0
  %2760 = vmatprep.subr.bf16.mxu0 0
  %2761 = vmatpush1.bf16.msra.mxu0 0
  %2762 = vmatprep.subr.bf16.mxu0 0
  %2763 = vmatpush1.bf16.msra.mxu0 0
  %2764 = vmatprep.subr.bf16.mxu0 0
  %2765 = vmatpush1.bf16.msra.mxu0 0
  %2766 = vmatprep.subr.bf16.mxu0 0
  %2767 = vmatpush1.bf16.msra.mxu0 0
  %2768 = vmatprep.mubr.bf16.mxu0 0
  %2769 = vmatmul.mubr.bf16.gmra.mrb[0].mxu0 %v1610
  %v2770 = vpop.f32.mrb[0].mxu0
  %v2771 = vadd.f32 0.0, %v2770
  %v2772 = vpop.f32.mrb[0].mxu0
  %v2773 = vpop.f32.mrb[0].mxu0
  %v2774 = vadd.f32 0.0, %v2773
  %v2775 = vpop.f32.mrb[0].mxu0
  %2776 = vmatprep.mubr.bf16.mxu0 0
  %2777 = vmatmul.mubr.bf16.gmra.mrb[0].mxu0 %v1613
  %v2778 = vpop.f32.mrb[0].mxu0
  %v2779 = vadd.f32 0.0, %v2778
  %v2780 = vpop.f32.mrb[0].mxu0
  %v2781 = vpop.f32.mrb[0].mxu0
  %v2782 = vadd.f32 0.0, %v2781
  %v2783 = vpop.f32.mrb[0].mxu0
  %2784 = vmatprep.mubr.bf16.mxu0 0
  %2785 = vmatmul.mubr.bf16.gmra.mrb[0].mxu0 %v1616
  %v2786 = vpop.f32.mrb[0].mxu0
  %v2787 = vadd.f32 0.0, %v2786
  %v2788 = vpop.f32.mrb[0].mxu0
  %v2789 = vpop.f32.mrb[0].mxu0
  %v2790 = vadd.f32 0.0, %v2789
  %v2791 = vpop.f32.mrb[0].mxu0
  %2792 = vmatprep.mubr.bf16.mxu0 0
  %2793 = vmatmul.mubr.bf16.gmra.mrb[0].mxu0 %v1619
  %v2794 = vpop.f32.mrb[0].mxu0
  %v2795 = vadd.f32 0.0, %v2794
  %v2796 = vpop.f32.mrb[0].mxu0
  %v2797 = vpop.f32.mrb[0].mxu0
  %v2798 = vpop.f32.mrb[0].mxu0
  %2799 = vdwg.mxu0
  %v2800 = vadd.f32 %v204, %v2771
  %v2801 = vadd.f32 %v204, %v2774
  %v2802 = vadd.f32 %v204, %v2779
  %v2803 = vadd.f32 %v204, %v2782
  %v2804 = vadd.f32 %v204, %v2787
  %v2805 = vadd.f32 %v204, %v2790
  %v2806 = vadd.f32 %v204, %v2795
  %2807 = vmatprep.subr.bf16.mxu0 0
  %2808 = vmatpush1.bf16.msra.mxu0 %v250
  %2809 = vmatprep.subr.bf16.mxu0 0
  %2810 = vmatpush1.bf16.msra.mxu0 %v251
  %2811 = vmatprep.subr.bf16.mxu0 0
  %2812 = vmatpush1.bf16.msra.mxu0 0
  %2813 = vmatprep.subr.bf16.mxu0 0
  %2814 = vmatpush1.bf16.msra.mxu0 0
  %2815 = vmatprep.subr.bf16.mxu0 0
  %2816 = vmatpush1.bf16.msra.mxu0 0
  %2817 = vmatprep.subr.bf16.mxu0 0
  %2818 = vmatpush1.bf16.msra.mxu0 0
  %2819 = vmatprep.subr.bf16.mxu0 0
  %2820 = vmatpush1.bf16.msra.mxu0 0
  %2821 = vmatprep.subr.bf16.mxu0 0
  %2822 = vmatpush1.bf16.msra.mxu0 0
  %2823 = vmatprep.subr.bf16.mxu0 0
  %2824 = vmatpush1.bf16.msra.mxu0 0
  %2825 = vmatprep.subr.bf16.mxu0 0
  %2826 = vmatpush1.bf16.msra.mxu0 0
  %2827 = vmatprep.subr.bf16.mxu0 0
  %2828 = vmatpush1.bf16.msra.mxu0 0
  %2829 = vmatprep.subr.bf16.mxu0 0
  %2830 = vmatpush1.bf16.msra.mxu0 0
  %2831 = vmatprep.subr.bf16.mxu0 0
  %2832 = vmatpush1.bf16.msra.mxu0 0
  %2833 = vmatprep.subr.bf16.mxu0 0
  %2834 = vmatpush1.bf16.msra.mxu0 0
  %2835 = vmatprep.subr.bf16.mxu0 0
  %2836 = vmatpush1.bf16.msra.mxu0 0
  %2837 = vmatprep.subr.bf16.mxu0 0
  %2838 = vmatpush1.bf16.msra.mxu0 0
  %2839 = vmatprep.mubr.bf16.mxu0 0
  %2840 = vmatmul.mubr.bf16.gmra.mrb[0].mxu0 %v1942
  %v2841 = vpop.f32.mrb[0].mxu0
  %v2842 = vadd.f32 0.0, %v2841
  %v2843 = vpop.f32.mrb[0].mxu0
  %v2844 = vpop.f32.mrb[0].mxu0
  %v2845 = vadd.f32 0.0, %v2844
  %v2846 = vpop.f32.mrb[0].mxu0
  %2847 = vmatprep.mubr.bf16.mxu0 0
  %2848 = vmatmul.mubr.bf16.gmra.mrb[0].mxu0 %v1945
  %v2849 = vpop.f32.mrb[0].mxu0
  %v2850 = vadd.f32 0.0, %v2849
  %v2851 = vpop.f32.mrb[0].mxu0
  %v2852 = vpop.f32.mrb[0].mxu0
  %v2853 = vadd.f32 0.0, %v2852
  %v2854 = vpop.f32.mrb[0].mxu0
  %2855 = vmatprep.mubr.bf16.mxu0 0
  %2856 = vmatmul.mubr.bf16.gmra.mrb[0].mxu0 %v1948
  %v2857 = vpop.f32.mrb[0].mxu0
  %v2858 = vadd.f32 0.0, %v2857
  %v2859 = vpop.f32.mrb[0].mxu0
  %v2860 = vpop.f32.mrb[0].mxu0
  %v2861 = vadd.f32 0.0, %v2860
  %v2862 = vpop.f32.mrb[0].mxu0
  %2863 = vmatprep.mubr.bf16.mxu0 0
  %2864 = vmatmul.mubr.bf16.gmra.mrb[0].mxu0 %v1951
  %v2865 = vpop.f32.mrb[0].mxu0
  %v2866 = vadd.f32 0.0, %v2865
  %v2867 = vpop.f32.mrb[0].mxu0
  %v2868 = vpop.f32.mrb[0].mxu0
  %v2869 = vpop.f32.mrb[0].mxu0
  %2870 = vdwg.mxu0
  %v2871 = vadd.f32 %v2800, %v2842
  %v2872 = vadd.f32 %v2801, %v2845
  %v2873 = vadd.f32 %v2802, %v2850
  %v2874 = vadd.f32 %v2803, %v2853
  %v2875 = vadd.f32 %v2804, %v2858
  %v2876 = vadd.f32 %v2805, %v2861
  %v2877 = vadd.f32 %v2806, %v2866
  %2878 = vmatprep.subr.bf16.mxu0 0
  %2879 = vmatpush1.bf16.msra.mxu0 %v374
  %2880 = vmatprep.subr.bf16.mxu0 0
  %2881 = vmatpush1.bf16.msra.mxu0 %v375
  %2882 = vmatprep.subr.bf16.mxu0 0
  %2883 = vmatpush1.bf16.msra.mxu0 0
  %2884 = vmatprep.subr.bf16.mxu0 0
  %2885 = vmatpush1.bf16.msra.mxu0 0
  %2886 = vmatprep.subr.bf16.mxu0 0
  %2887 = vmatpush1.bf16.msra.mxu0 0
  %2888 = vmatprep.subr.bf16.mxu0 0
  %2889 = vmatpush1.bf16.msra.mxu0 0
  %2890 = vmatprep.subr.bf16.mxu0 0
  %2891 = vmatpush1.bf16.msra.mxu0 0
  %2892 = vmatprep.subr.bf16.mxu0 0
  %2893 = vmatpush1.bf16.msra.mxu0 0
  %2894 = vmatprep.subr.bf16.mxu0 0
  %2895 = vmatpush1.bf16.msra.mxu0 0
  %2896 = vmatprep.subr.bf16.mxu0 0
  %2897 = vmatpush1.bf16.msra.mxu0 0
  %2898 = vmatprep.subr.bf16.mxu0 0
  %2899 = vmatpush1.bf16.msra.mxu0 0
  %2900 = vmatprep.subr.bf16.mxu0 0
  %2901 = vmatpush1.bf16.msra.mxu0 0
  %2902 = vmatprep.subr.bf16.mxu0 0
  %2903 = vmatpush1.bf16.msra.mxu0 0
  %2904 = vmatprep.subr.bf16.mxu0 0
  %2905 = vmatpush1.bf16.msra.mxu0 0
  %2906 = vmatprep.subr.bf16.mxu0 0
  %2907 = vmatpush1.bf16.msra.mxu0 0
  %2908 = vmatprep.subr.bf16.mxu0 0
  %2909 = vmatpush1.bf16.msra.mxu0 0
  %2910 = vmatprep.mubr.bf16.mxu0 0
  %2911 = vmatmul.mubr.bf16.gmra.mrb[0].mxu0 %v2643
  %v2912 = vpop.f32.mrb[0].mxu0
  %v2913 = vadd.f32 0.0, %v2912
  %v2914 = vpop.f32.mrb[0].mxu0
  %v2915 = vpop.f32.mrb[0].mxu0
  %v2916 = vadd.f32 0.0, %v2915
  %v2917 = vpop.f32.mrb[0].mxu0
  %2918 = vmatprep.mubr.bf16.mxu0 0
  %2919 = vmatmul.mubr.bf16.gmra.mrb[0].mxu0 %v2646
  %v2920 = vpop.f32.mrb[0].mxu0
  %v2921 = vadd.f32 0.0, %v2920
  %v2922 = vpop.f32.mrb[0].mxu0
  %v2923 = vpop.f32.mrb[0].mxu0
  %v2924 = vadd.f32 0.0, %v2923
  %v2925 = vpop.f32.mrb[0].mxu0
  %2926 = vmatprep.mubr.bf16.mxu0 0
  %2927 = vmatmul.mubr.bf16.gmra.mrb[0].mxu0 %v2649
  %v2928 = vpop.f32.mrb[0].mxu0
  %v2929 = vadd.f32 0.0, %v2928
  %v2930 = vpop.f32.mrb[0].mxu0
  %v2931 = vpop.f32.mrb[0].mxu0
  %v2932 = vadd.f32 0.0, %v2931
  %v2933 = vpop.f32.mrb[0].mxu0
  %2934 = vmatprep.mubr.bf16.mxu0 0
  %2935 = vmatmul.mubr.bf16.gmra.mrb[0].mxu0 %v2652
  %v2936 = vpop.f32.mrb[0].mxu0
  %v2937 = vadd.f32 0.0, %v2936
  %v2938 = vpop.f32.mrb[0].mxu0
  %v2939 = vpop.f32.mrb[0].mxu0
  %v2940 = vpop.f32.mrb[0].mxu0
  %2941 = vdwg.mxu0
  %v2942 = vadd.f32 %v2871, %v2913
  %v2943 = vadd.f32 %v2872, %v2916
  %v2944 = vadd.f32 %v2873, %v2921
  %v2945 = vadd.f32 %v2874, %v2924
  %v2946 = vadd.f32 %v2875, %v2929
  %v2947 = vadd.f32 %v2876, %v2932
  %v2948 = vadd.f32 %v2877, %v2937
  %v2949 = vld [vmem:[%s14] sm:$0xf]
  %v2950 = vld [vmem:[%s14 + $0x4] sm:$0xf]
  %v2951 = vld [vmem:[%s14 + $0x8] sm:$0xf]
  %v2952 = vld [vmem:[%s14 + $0xc] sm:$0xf]
  %v2953 = vld [vmem:[%s14 + $0x10] sm:$0xf]
  %v2954 = vld [vmem:[%s14 + $0x14] sm:$0xf]
  %v2955 = vld [vmem:[%s14 + $0x18] sm:$0x1]
  %v2963 = vunpack.c.l.b16 %v2949
  %v2964 = vunpack.c.l.b16 %v2950
  %v2965 = vunpack.c.l.b16 %v2951
  %v2966 = vunpack.c.l.b16 %v2952
  %v2967 = vunpack.c.l.b16 %v2953
  %v2968 = vunpack.c.l.b16 %v2954
  %v2969 = vunpack.c.l.b16 %v2955
  %v2970 = vpack.c.b16 %v2964, %v2963
  %v2971 = vpack.c.b16 %v2966, %v2965
  %v2972 = vpack.c.b16 %v2968, %v2967
  %v2973 = vpack.c.b16 %v2969, %v2969
  %v2975 = vsel %vm123, %v2970, 0
  %v2978 = vsel %vm123, %v2971, 0
  %v2981 = vsel %vm123, %v2972, 0
  %v2984 = vsel %vm123, %v2973, 0
  %2986 = vmatprep.subr.bf16.mxu0 0
  %2987 = vmatpush1.bf16.msra.mxu0 %v498
  %2988 = vmatprep.subr.bf16.mxu0 0
  %2989 = vmatpush1.bf16.msra.mxu0 %v499
  %2990 = vmatprep.subr.bf16.mxu0 0
  %2991 = vmatpush1.bf16.msra.mxu0 0
  %2992 = vmatprep.subr.bf16.mxu0 0
  %2993 = vmatpush1.bf16.msra.mxu0 0
  %2994 = vmatprep.subr.bf16.mxu0 0
  %2995 = vmatpush1.bf16.msra.mxu0 0
  %2996 = vmatprep.subr.bf16.mxu0 0
  %2997 = vmatpush1.bf16.msra.mxu0 0
  %2998 = vmatprep.subr.bf16.mxu0 0
  %2999 = vmatpush1.bf16.msra.mxu0 0
  %3000 = vmatprep.subr.bf16.mxu0 0
  %3001 = vmatpush1.bf16.msra.mxu0 0
  %3002 = vmatprep.subr.bf16.mxu0 0
  %3003 = vmatpush1.bf16.msra.mxu0 0
  %3004 = vmatprep.subr.bf16.mxu0 0
  %3005 = vmatpush1.bf16.msra.mxu0 0
  %3006 = vmatprep.subr.bf16.mxu0 0
  %3007 = vmatpush1.bf16.msra.mxu0 0
  %3008 = vmatprep.subr.bf16.mxu0 0
  %3009 = vmatpush1.bf16.msra.mxu0 0
  %3010 = vmatprep.subr.bf16.mxu0 0
  %3011 = vmatpush1.bf16.msra.mxu0 0
  %3012 = vmatprep.subr.bf16.mxu0 0
  %3013 = vmatpush1.bf16.msra.mxu0 0
  %3014 = vmatprep.subr.bf16.mxu0 0
  %3015 = vmatpush1.bf16.msra.mxu0 0
  %3016 = vmatprep.subr.bf16.mxu0 0
  %3017 = vmatpush1.bf16.msra.mxu0 0
  %3018 = vmatprep.mubr.bf16.mxu0 0
  %3019 = vmatmul.mubr.bf16.gmra.mrb[0].mxu0 %v2975
  %v3020 = vpop.f32.mrb[0].mxu0
  %v3021 = vadd.f32 0.0, %v3020
  %v3022 = vpop.f32.mrb[0].mxu0
  %v3023 = vpop.f32.mrb[0].mxu0
  %v3024 = vadd.f32 0.0, %v3023
  %v3025 = vpop.f32.mrb[0].mxu0
  %3026 = vmatprep.mubr.bf16.mxu0 0
  %3027 = vmatmul.mubr.bf16.gmra.mrb[0].mxu0 %v2978
  %v3028 = vpop.f32.mrb[0].mxu0
  %v3029 = vadd.f32 0.0, %v3028
  %v3030 = vpop.f32.mrb[0].mxu0
  %v3031 = vpop.f32.mrb[0].mxu0
  %v3032 = vadd.f32 0.0, %v3031
  %v3033 = vpop.f32.mrb[0].mxu0
  %3034 = vmatprep.mubr.bf16.mxu0 0
  %3035 = vmatmul.mubr.bf16.gmra.mrb[0].mxu0 %v2981
  %v3036 = vpop.f32.mrb[0].mxu0
  %v3037 = vadd.f32 0.0, %v3036
  %v3038 = vpop.f32.mrb[0].mxu0
  %v3039 = vpop.f32.mrb[0].mxu0
  %v3040 = vadd.f32 0.0, %v3039
  %v3041 = vpop.f32.mrb[0].mxu0
  %3042 = vmatprep.mubr.bf16.mxu0 0
  %3043 = vmatmul.mubr.bf16.gmra.mrb[0].mxu0 %v2984
  %v3044 = vpop.f32.mrb[0].mxu0
  %v3045 = vadd.f32 0.0, %v3044
  %v3046 = vpop.f32.mrb[0].mxu0
  %v3047 = vpop.f32.mrb[0].mxu0
  %v3048 = vpop.f32.mrb[0].mxu0
  %3049 = vdwg.mxu0
  %v3050 = vadd.f32 %v2942, %v3021
  %v3051 = vadd.f32 %v2943, %v3024
  %v3052 = vadd.f32 %v2944, %v3029
  %v3053 = vadd.f32 %v2945, %v3032
  %v3054 = vadd.f32 %v2946, %v3037
  %v3055 = vadd.f32 %v2947, %v3040
  %v3056 = vadd.f32 %v2948, %v3045
  %v3057 = vmax.f32 %v3050, 0.0
  %v3058 = vmax.f32 %v3051, 0.0
  %v3059 = vmax.f32 %v3052, 0.0
  %v3060 = vmax.f32 %v3053, 0.0
  %v3061 = vmax.f32 %v3054, 0.0
  %v3062 = vmax.f32 %v3055, 0.0
  %v3063 = vmax.f32 %v3056, 0.0
  %v3064 = vpack.c.bf16 %v3058, %v3057
  %v3065 = vpack.c.bf16 %v3060, %v3059
  %v3066 = vpack.c.bf16 %v3062, %v3061
  %v3067 = vpack.c.bf16 %v3063, %v3063
  %3068 = vmatprep.subr.bf16.mxu0 0
  %3069 = vmatpush1.bf16.msra.mxu0 %v119
  %3070 = vmatprep.subr.bf16.mxu0 0
  %3071 = vmatpush1.bf16.msra.mxu0 %v120
  %3072 = vmatprep.subr.bf16.mxu0 0
  %3073 = vmatpush1.bf16.msra.mxu0 0
  %3074 = vmatprep.subr.bf16.mxu0 0
  %3075 = vmatpush1.bf16.msra.mxu0 0
  %3076 = vmatprep.subr.bf16.mxu0 0
  %3077 = vmatpush1.bf16.msra.mxu0 0
  %3078 = vmatprep.subr.bf16.mxu0 0
  %3079 = vmatpush1.bf16.msra.mxu0 0
  %3080 = vmatprep.subr.bf16.mxu0 0
  %3081 = vmatpush1.bf16.msra.mxu0 0
  %3082 = vmatprep.subr.bf16.mxu0 0
  %3083 = vmatpush1.bf16.msra.mxu0 0
  %3084 = vmatprep.subr.bf16.mxu0 0
  %3085 = vmatpush1.bf16.msra.mxu0 0
  %3086 = vmatprep.subr.bf16.mxu0 0
  %3087 = vmatpush1.bf16.msra.mxu0 0
  %3088 = vmatprep.subr.bf16.mxu0 0
  %3089 = vmatpush1.bf16.msra.mxu0 0
  %3090 = vmatprep.subr.bf16.mxu0 0
  %3091 = vmatpush1.bf16.msra.mxu0 0
  %3092 = vmatprep.subr.bf16.mxu0 0
  %3093 = vmatpush1.bf16.msra.mxu0 0
  %3094 = vmatprep.subr.bf16.mxu0 0
  %3095 = vmatpush1.bf16.msra.mxu0 0
  %3096 = vmatprep.subr.bf16.mxu0 0
  %3097 = vmatpush1.bf16.msra.mxu0 0
  %3098 = vmatprep.subr.bf16.mxu0 0
  %3099 = vmatpush1.bf16.msra.mxu0 0
  %3100 = vmatprep.mubr.bf16.mxu0 0
  %3101 = vmatmul.mubr.bf16.gmra.mrb[0].mxu0 %v1942
  %v3102 = vpop.f32.mrb[0].mxu0
  %v3103 = vadd.f32 0.0, %v3102
  %v3104 = vpop.f32.mrb[0].mxu0
  %v3105 = vpop.f32.mrb[0].mxu0
  %v3106 = vadd.f32 0.0, %v3105
  %v3107 = vpop.f32.mrb[0].mxu0
  %3108 = vmatprep.mubr.bf16.mxu0 0
  %3109 = vmatmul.mubr.bf16.gmra.mrb[0].mxu0 %v1945
  %v3110 = vpop.f32.mrb[0].mxu0
  %v3111 = vadd.f32 0.0, %v3110
  %v3112 = vpop.f32.mrb[0].mxu0
  %v3113 = vpop.f32.mrb[0].mxu0
  %v3114 = vadd.f32 0.0, %v3113
  %v3115 = vpop.f32.mrb[0].mxu0
  %3116 = vmatprep.mubr.bf16.mxu0 0
  %3117 = vmatmul.mubr.bf16.gmra.mrb[0].mxu0 %v1948
  %v3118 = vpop.f32.mrb[0].mxu0
  %v3119 = vadd.f32 0.0, %v3118
  %v3120 = vpop.f32.mrb[0].mxu0
  %v3121 = vpop.f32.mrb[0].mxu0
  %v3122 = vadd.f32 0.0, %v3121
  %v3123 = vpop.f32.mrb[0].mxu0
  %3124 = vmatprep.mubr.bf16.mxu0 0
  %3125 = vmatmul.mubr.bf16.gmra.mrb[0].mxu0 %v1951
  %v3126 = vpop.f32.mrb[0].mxu0
  %v3127 = vadd.f32 0.0, %v3126
  %v3128 = vpop.f32.mrb[0].mxu0
  %v3129 = vpop.f32.mrb[0].mxu0
  %v3130 = vpop.f32.mrb[0].mxu0
  %3131 = vdwg.mxu0
  %v3132 = vadd.f32 %v204, %v3103
  %v3133 = vadd.f32 %v204, %v3106
  %v3134 = vadd.f32 %v204, %v3111
  %v3135 = vadd.f32 %v204, %v3114
  %v3136 = vadd.f32 %v204, %v3119
  %v3137 = vadd.f32 %v204, %v3122
  %v3138 = vadd.f32 %v204, %v3127
  %3139 = vmatprep.subr.bf16.mxu0 0
  %3140 = vmatpush1.bf16.msra.mxu0 %v250
  %3141 = vmatprep.subr.bf16.mxu0 0
  %3142 = vmatpush1.bf16.msra.mxu0 %v251
  %3143 = vmatprep.subr.bf16.mxu0 0
  %3144 = vmatpush1.bf16.msra.mxu0 0
  %3145 = vmatprep.subr.bf16.mxu0 0
  %3146 = vmatpush1.bf16.msra.mxu0 0
  %3147 = vmatprep.subr.bf16.mxu0 0
  %3148 = vmatpush1.bf16.msra.mxu0 0
  %3149 = vmatprep.subr.bf16.mxu0 0
  %3150 = vmatpush1.bf16.msra.mxu0 0
  %3151 = vmatprep.subr.bf16.mxu0 0
  %3152 = vmatpush1.bf16.msra.mxu0 0
  %3153 = vmatprep.subr.bf16.mxu0 0
  %3154 = vmatpush1.bf16.msra.mxu0 0
  %3155 = vmatprep.subr.bf16.mxu0 0
  %3156 = vmatpush1.bf16.msra.mxu0 0
  %3157 = vmatprep.subr.bf16.mxu0 0
  %3158 = vmatpush1.bf16.msra.mxu0 0
  %3159 = vmatprep.subr.bf16.mxu0 0
  %3160 = vmatpush1.bf16.msra.mxu0 0
  %3161 = vmatprep.subr.bf16.mxu0 0
  %3162 = vmatpush1.bf16.msra.mxu0 0
  %3163 = vmatprep.subr.bf16.mxu0 0
  %3164 = vmatpush1.bf16.msra.mxu0 0
  %3165 = vmatprep.subr.bf16.mxu0 0
  %3166 = vmatpush1.bf16.msra.mxu0 0
  %3167 = vmatprep.subr.bf16.mxu0 0
  %3168 = vmatpush1.bf16.msra.mxu0 0
  %3169 = vmatprep.subr.bf16.mxu0 0
  %3170 = vmatpush1.bf16.msra.mxu0 0
  %3171 = vmatprep.mubr.bf16.mxu0 0
  %3172 = vmatmul.mubr.bf16.gmra.mrb[0].mxu0 %v2274
  %v3173 = vpop.f32.mrb[0].mxu0
  %v3174 = vadd.f32 0.0, %v3173
  %v3175 = vpop.f32.mrb[0].mxu0
  %v3176 = vpop.f32.mrb[0].mxu0
  %v3177 = vadd.f32 0.0, %v3176
  %v3178 = vpop.f32.mrb[0].mxu0
  %3179 = vmatprep.mubr.bf16.mxu0 0
  %3180 = vmatmul.mubr.bf16.gmra.mrb[0].mxu0 %v2277
  %v3181 = vpop.f32.mrb[0].mxu0
  %v3182 = vadd.f32 0.0, %v3181
  %v3183 = vpop.f32.mrb[0].mxu0
  %v3184 = vpop.f32.mrb[0].mxu0
  %v3185 = vadd.f32 0.0, %v3184
  %v3186 = vpop.f32.mrb[0].mxu0
  %3187 = vmatprep.mubr.bf16.mxu0 0
  %3188 = vmatmul.mubr.bf16.gmra.mrb[0].mxu0 %v2280
  %v3189 = vpop.f32.mrb[0].mxu0
  %v3190 = vadd.f32 0.0, %v3189
  %v3191 = vpop.f32.mrb[0].mxu0
  %v3192 = vpop.f32.mrb[0].mxu0
  %v3193 = vadd.f32 0.0, %v3192
  %v3194 = vpop.f32.mrb[0].mxu0
  %3195 = vmatprep.mubr.bf16.mxu0 0
  %3196 = vmatmul.mubr.bf16.gmra.mrb[0].mxu0 %v2283
  %v3197 = vpop.f32.mrb[0].mxu0
  %v3198 = vadd.f32 0.0, %v3197
  %v3199 = vpop.f32.mrb[0].mxu0
  %v3200 = vpop.f32.mrb[0].mxu0
  %v3201 = vpop.f32.mrb[0].mxu0
  %3202 = vdwg.mxu0
  %v3203 = vadd.f32 %v3132, %v3174
  %v3204 = vadd.f32 %v3133, %v3177
  %v3205 = vadd.f32 %v3134, %v3182
  %v3206 = vadd.f32 %v3135, %v3185
  %v3207 = vadd.f32 %v3136, %v3190
  %v3208 = vadd.f32 %v3137, %v3193
  %v3209 = vadd.f32 %v3138, %v3198
  %3210 = vmatprep.subr.bf16.mxu0 0
  %3211 = vmatpush1.bf16.msra.mxu0 %v374
  %3212 = vmatprep.subr.bf16.mxu0 0
  %3213 = vmatpush1.bf16.msra.mxu0 %v375
  %3214 = vmatprep.subr.bf16.mxu0 0
  %3215 = vmatpush1.bf16.msra.mxu0 0
  %3216 = vmatprep.subr.bf16.mxu0 0
  %3217 = vmatpush1.bf16.msra.mxu0 0
  %3218 = vmatprep.subr.bf16.mxu0 0
  %3219 = vmatpush1.bf16.msra.mxu0 0
  %3220 = vmatprep.subr.bf16.mxu0 0
  %3221 = vmatpush1.bf16.msra.mxu0 0
  %3222 = vmatprep.subr.bf16.mxu0 0
  %3223 = vmatpush1.bf16.msra.mxu0 0
  %3224 = vmatprep.subr.bf16.mxu0 0
  %3225 = vmatpush1.bf16.msra.mxu0 0
  %3226 = vmatprep.subr.bf16.mxu0 0
  %3227 = vmatpush1.bf16.msra.mxu0 0
  %3228 = vmatprep.subr.bf16.mxu0 0
  %3229 = vmatpush1.bf16.msra.mxu0 0
  %3230 = vmatprep.subr.bf16.mxu0 0
  %3231 = vmatpush1.bf16.msra.mxu0 0
  %3232 = vmatprep.subr.bf16.mxu0 0
  %3233 = vmatpush1.bf16.msra.mxu0 0
  %3234 = vmatprep.subr.bf16.mxu0 0
  %3235 = vmatpush1.bf16.msra.mxu0 0
  %3236 = vmatprep.subr.bf16.mxu0 0
  %3237 = vmatpush1.bf16.msra.mxu0 0
  %3238 = vmatprep.subr.bf16.mxu0 0
  %3239 = vmatpush1.bf16.msra.mxu0 0
  %3240 = vmatprep.subr.bf16.mxu0 0
  %3241 = vmatpush1.bf16.msra.mxu0 0
  %3242 = vmatprep.mubr.bf16.mxu0 0
  %3243 = vmatmul.mubr.bf16.gmra.mrb[0].mxu0 %v2975
  %v3244 = vpop.f32.mrb[0].mxu0
  %v3245 = vadd.f32 0.0, %v3244
  %v3246 = vpop.f32.mrb[0].mxu0
  %v3247 = vpop.f32.mrb[0].mxu0
  %v3248 = vadd.f32 0.0, %v3247
  %v3249 = vpop.f32.mrb[0].mxu0
  %3250 = vmatprep.mubr.bf16.mxu0 0
  %3251 = vmatmul.mubr.bf16.gmra.mrb[0].mxu0 %v2978
  %v3252 = vpop.f32.mrb[0].mxu0
  %v3253 = vadd.f32 0.0, %v3252
  %v3254 = vpop.f32.mrb[0].mxu0
  %v3255 = vpop.f32.mrb[0].mxu0
  %v3256 = vadd.f32 0.0, %v3255
  %v3257 = vpop.f32.mrb[0].mxu0
  %3258 = vmatprep.mubr.bf16.mxu0 0
  %3259 = vmatmul.mubr.bf16.gmra.mrb[0].mxu0 %v2981
  %v3260 = vpop.f32.mrb[0].mxu0
  %v3261 = vadd.f32 0.0, %v3260
  %v3262 = vpop.f32.mrb[0].mxu0
  %v3263 = vpop.f32.mrb[0].mxu0
  %v3264 = vadd.f32 0.0, %v3263
  %v3265 = vpop.f32.mrb[0].mxu0
  %3266 = vmatprep.mubr.bf16.mxu0 0
  %3267 = vmatmul.mubr.bf16.gmra.mrb[0].mxu0 %v2984
  %v3268 = vpop.f32.mrb[0].mxu0
  %v3269 = vadd.f32 0.0, %v3268
  %v3270 = vpop.f32.mrb[0].mxu0
  %v3271 = vpop.f32.mrb[0].mxu0
  %v3272 = vpop.f32.mrb[0].mxu0
  %3273 = vdwg.mxu0
  %v3274 = vadd.f32 %v3203, %v3245
  %v3275 = vadd.f32 %v3204, %v3248
  %v3276 = vadd.f32 %v3205, %v3253
  %v3277 = vadd.f32 %v3206, %v3256
  %v3278 = vadd.f32 %v3207, %v3261
  %v3279 = vadd.f32 %v3208, %v3264
  %v3280 = vadd.f32 %v3209, %v3269
  %v3281 = vld [vmem:[%s15] sm:$0xf]
  %v3282 = vld [vmem:[%s15 + $0x4] sm:$0xf]
  %v3283 = vld [vmem:[%s15 + $0x8] sm:$0xf]
  %v3284 = vld [vmem:[%s15 + $0xc] sm:$0xf]
  %v3285 = vld [vmem:[%s15 + $0x10] sm:$0xf]
  %v3286 = vld [vmem:[%s15 + $0x14] sm:$0xf]
  %v3287 = vld [vmem:[%s15 + $0x18] sm:$0x1]
  %v3295 = vunpack.c.l.b16 %v3281
  %v3296 = vunpack.c.l.b16 %v3282
  %v3297 = vunpack.c.l.b16 %v3283
  %v3298 = vunpack.c.l.b16 %v3284
  %v3299 = vunpack.c.l.b16 %v3285
  %v3300 = vunpack.c.l.b16 %v3286
  %v3301 = vunpack.c.l.b16 %v3287
  %v3302 = vpack.c.b16 %v3296, %v3295
  %v3303 = vpack.c.b16 %v3298, %v3297
  %v3304 = vpack.c.b16 %v3300, %v3299
  %v3305 = vpack.c.b16 %v3301, %v3301
  %v3307 = vsel %vm123, %v3302, 0
  %v3310 = vsel %vm123, %v3303, 0
  %v3313 = vsel %vm123, %v3304, 0
  %v3316 = vsel %vm123, %v3305, 0
  %3318 = vmatprep.subr.bf16.mxu0 0
  %3319 = vmatpush1.bf16.msra.mxu0 %v498
  %3320 = vmatprep.subr.bf16.mxu0 0
  %3321 = vmatpush1.bf16.msra.mxu0 %v499
  %3322 = vmatprep.subr.bf16.mxu0 0
  %3323 = vmatpush1.bf16.msra.mxu0 0
  %3324 = vmatprep.subr.bf16.mxu0 0
  %3325 = vmatpush1.bf16.msra.mxu0 0
  %3326 = vmatprep.subr.bf16.mxu0 0
  %3327 = vmatpush1.bf16.msra.mxu0 0
  %3328 = vmatprep.subr.bf16.mxu0 0
  %3329 = vmatpush1.bf16.msra.mxu0 0
  %3330 = vmatprep.subr.bf16.mxu0 0
  %3331 = vmatpush1.bf16.msra.mxu0 0
  %3332 = vmatprep.subr.bf16.mxu0 0
  %3333 = vmatpush1.bf16.msra.mxu0 0
  %3334 = vmatprep.subr.bf16.mxu0 0
  %3335 = vmatpush1.bf16.msra.mxu0 0
  %3336 = vmatprep.subr.bf16.mxu0 0
  %3337 = vmatpush1.bf16.msra.mxu0 0
  %3338 = vmatprep.subr.bf16.mxu0 0
  %3339 = vmatpush1.bf16.msra.mxu0 0
  %3340 = vmatprep.subr.bf16.mxu0 0
  %3341 = vmatpush1.bf16.msra.mxu0 0
  %3342 = vmatprep.subr.bf16.mxu0 0
  %3343 = vmatpush1.bf16.msra.mxu0 0
  %3344 = vmatprep.subr.bf16.mxu0 0
  %3345 = vmatpush1.bf16.msra.mxu0 0
  %3346 = vmatprep.subr.bf16.mxu0 0
  %3347 = vmatpush1.bf16.msra.mxu0 0
  %3348 = vmatprep.subr.bf16.mxu0 0
  %3349 = vmatpush1.bf16.msra.mxu0 0
  %3350 = vmatprep.mubr.bf16.mxu0 0
  %3351 = vmatmul.mubr.bf16.gmra.mrb[0].mxu0 %v3307
  %v3352 = vpop.f32.mrb[0].mxu0
  %v3353 = vadd.f32 0.0, %v3352
  %v3354 = vpop.f32.mrb[0].mxu0
  %v3355 = vpop.f32.mrb[0].mxu0
  %v3356 = vadd.f32 0.0, %v3355
  %v3357 = vpop.f32.mrb[0].mxu0
  %3358 = vmatprep.mubr.bf16.mxu0 0
  %3359 = vmatmul.mubr.bf16.gmra.mrb[0].mxu0 %v3310
  %v3360 = vpop.f32.mrb[0].mxu0
  %v3361 = vadd.f32 0.0, %v3360
  %v3362 = vpop.f32.mrb[0].mxu0
  %v3363 = vpop.f32.mrb[0].mxu0
  %v3364 = vadd.f32 0.0, %v3363
  %v3365 = vpop.f32.mrb[0].mxu0
  %3366 = vmatprep.mubr.bf16.mxu0 0
  %3367 = vmatmul.mubr.bf16.gmra.mrb[0].mxu0 %v3313
  %v3368 = vpop.f32.mrb[0].mxu0
  %v3369 = vadd.f32 0.0, %v3368
  %v3370 = vpop.f32.mrb[0].mxu0
  %v3371 = vpop.f32.mrb[0].mxu0
  %v3372 = vadd.f32 0.0, %v3371
  %v3373 = vpop.f32.mrb[0].mxu0
  %3374 = vmatprep.mubr.bf16.mxu0 0
  %3375 = vmatmul.mubr.bf16.gmra.mrb[0].mxu0 %v3316
  %v3376 = vpop.f32.mrb[0].mxu0
  %v3377 = vadd.f32 0.0, %v3376
  %v3378 = vpop.f32.mrb[0].mxu0
  %v3379 = vpop.f32.mrb[0].mxu0
  %v3380 = vpop.f32.mrb[0].mxu0
  %3381 = vdwg.mxu0
  %v3382 = vadd.f32 %v3274, %v3353
  %v3383 = vadd.f32 %v3275, %v3356
  %v3384 = vadd.f32 %v3276, %v3361
  %v3385 = vadd.f32 %v3277, %v3364
  %v3386 = vadd.f32 %v3278, %v3369
  %v3387 = vadd.f32 %v3279, %v3372
  %v3388 = vadd.f32 %v3280, %v3377
  %v3389 = vmax.f32 %v3382, 0.0
  %v3390 = vmax.f32 %v3383, 0.0
  %v3391 = vmax.f32 %v3384, 0.0
  %v3392 = vmax.f32 %v3385, 0.0
  %v3393 = vmax.f32 %v3386, 0.0
  %v3394 = vmax.f32 %v3387, 0.0
  %v3395 = vmax.f32 %v3388, 0.0
  %v3396 = vpack.c.bf16 %v3390, %v3389
  %v3397 = vpack.c.bf16 %v3392, %v3391
  %v3398 = vpack.c.bf16 %v3394, %v3393
  %v3399 = vpack.c.bf16 %v3395, %v3395
  %v3400 = vld [vmem:[%s18] sm:$0xf]
  %v3401 = vld [vmem:[%s18 + $0x4] sm:$0xf]
  %v3404 = vunpack.c.l.b16 %v3400
  %v3405 = vunpack.c.l.b16 %v3401
  %v3406 = vpack.c.b16 %v3405, %v3404
  %vm3408 = vcmask 130048
  %v3410 = vsel %vm3408, %v592, 0
  %v3413 = vsel %vm3408, %v593, 0
  %v3416 = vsel %vm3408, %v594, 0
  %v3419 = vsel %vm3408, %v595, 0
  %3421 = vmatprep.subr.bf16.mxu0 0
  %3422 = vmatpush1.bf16.msra.mxu0 %v3406
  %3423 = vmatprep.subr.bf16.mxu0 0
  %3424 = vmatpush1.bf16.msra.mxu0 0
  %3425 = vmatprep.subr.bf16.mxu0 0
  %3426 = vmatpush1.bf16.msra.mxu0 0
  %3427 = vmatprep.subr.bf16.mxu0 0
  %3428 = vmatpush1.bf16.msra.mxu0 0
  %3429 = vmatprep.subr.bf16.mxu0 0
  %3430 = vmatpush1.bf16.msra.mxu0 0
  %3431 = vmatprep.subr.bf16.mxu0 0
  %3432 = vmatpush1.bf16.msra.mxu0 0
  %3433 = vmatprep.subr.bf16.mxu0 0
  %3434 = vmatpush1.bf16.msra.mxu0 0
  %3435 = vmatprep.subr.bf16.mxu0 0
  %3436 = vmatpush1.bf16.msra.mxu0 0
  %3437 = vmatprep.subr.bf16.mxu0 0
  %3438 = vmatpush1.bf16.msra.mxu0 0
  %3439 = vmatprep.subr.bf16.mxu0 0
  %3440 = vmatpush1.bf16.msra.mxu0 0
  %3441 = vmatprep.subr.bf16.mxu0 0
  %3442 = vmatpush1.bf16.msra.mxu0 0
  %3443 = vmatprep.subr.bf16.mxu0 0
  %3444 = vmatpush1.bf16.msra.mxu0 0
  %3445 = vmatprep.subr.bf16.mxu0 0
  %3446 = vmatpush1.bf16.msra.mxu0 0
  %3447 = vmatprep.subr.bf16.mxu0 0
  %3448 = vmatpush1.bf16.msra.mxu0 0
  %3449 = vmatprep.subr.bf16.mxu0 0
  %3450 = vmatpush1.bf16.msra.mxu0 0
  %3451 = vmatprep.subr.bf16.mxu0 0
  %3452 = vmatpush1.bf16.msra.mxu0 0
  %3453 = vmatprep.mubr.bf16.mxu0 0
  %3454 = vmatmul.mubr.bf16.gmra.mrb[0].mxu0 %v3410
  %v3455 = vpop.f32.mrb[0].mxu0
  %v3456 = vadd.f32 0.0, %v3455
  %v3457 = vpop.f32.mrb[0].mxu0
  %v3458 = vpop.f32.mrb[0].mxu0
  %v3459 = vadd.f32 0.0, %v3458
  %v3460 = vpop.f32.mrb[0].mxu0
  %3461 = vmatprep.mubr.bf16.mxu0 0
  %3462 = vmatmul.mubr.bf16.gmra.mrb[0].mxu0 %v3413
  %v3463 = vpop.f32.mrb[0].mxu0
  %v3464 = vadd.f32 0.0, %v3463
  %v3465 = vpop.f32.mrb[0].mxu0
  %v3466 = vpop.f32.mrb[0].mxu0
  %v3467 = vadd.f32 0.0, %v3466
  %v3468 = vpop.f32.mrb[0].mxu0
  %3469 = vmatprep.mubr.bf16.mxu0 0
  %3470 = vmatmul.mubr.bf16.gmra.mrb[0].mxu0 %v3416
  %v3471 = vpop.f32.mrb[0].mxu0
  %v3472 = vadd.f32 0.0, %v3471
  %v3473 = vpop.f32.mrb[0].mxu0
  %v3474 = vpop.f32.mrb[0].mxu0
  %v3475 = vadd.f32 0.0, %v3474
  %v3476 = vpop.f32.mrb[0].mxu0
  %3477 = vmatprep.mubr.bf16.mxu0 0
  %3478 = vmatmul.mubr.bf16.gmra.mrb[0].mxu0 %v3419
  %v3479 = vpop.f32.mrb[0].mxu0
  %v3480 = vadd.f32 0.0, %v3479
  %v3481 = vpop.f32.mrb[0].mxu0
  %v3482 = vpop.f32.mrb[0].mxu0
  %v3483 = vpop.f32.mrb[0].mxu0
  %3484 = vdwg.mxu0
  %v3486 = vlaneseq
  %v3487 = vshrl.u32 %v3486, 7
  %v3488 = vsub.s32 0, %v3487
  %v3489 = vrot.slane %v79, %v3488
  %v3491 = vadd.f32 %v3489, %v3456
  %v3492 = vadd.f32 %v3489, %v3459
  %v3493 = vadd.f32 %v3489, %v3464
  %v3494 = vadd.f32 %v3489, %v3467
  %v3495 = vadd.f32 %v3489, %v3472
  %v3496 = vadd.f32 %v3489, %v3475
  %v3497 = vadd.f32 %v3489, %v3480
  %v3498 = vld [vmem:[%s18 + $0x8] sm:$0xf]
  %v3499 = vld [vmem:[%s18 + $0xc] sm:$0xf]
  %v3502 = vunpack.c.l.b16 %v3498
  %v3503 = vunpack.c.l.b16 %v3499
  %v3504 = vpack.c.b16 %v3503, %v3502
  %v3507 = vsel %vm3408, %v961, 0
  %v3510 = vsel %vm3408, %v962, 0
  %v3513 = vsel %vm3408, %v963, 0
  %v3516 = vsel %vm3408, %v964, 0
  %3518 = vmatprep.subr.bf16.mxu0 0
  %3519 = vmatpush1.bf16.msra.mxu0 %v3504
  %3520 = vmatprep.subr.bf16.mxu0 0
  %3521 = vmatpush1.bf16.msra.mxu0 0
  %3522 = vmatprep.subr.bf16.mxu0 0
  %3523 = vmatpush1.bf16.msra.mxu0 0
  %3524 = vmatprep.subr.bf16.mxu0 0
  %3525 = vmatpush1.bf16.msra.mxu0 0
  %3526 = vmatprep.subr.bf16.mxu0 0
  %3527 = vmatpush1.bf16.msra.mxu0 0
  %3528 = vmatprep.subr.bf16.mxu0 0
  %3529 = vmatpush1.bf16.msra.mxu0 0
  %3530 = vmatprep.subr.bf16.mxu0 0
  %3531 = vmatpush1.bf16.msra.mxu0 0
  %3532 = vmatprep.subr.bf16.mxu0 0
  %3533 = vmatpush1.bf16.msra.mxu0 0
  %3534 = vmatprep.subr.bf16.mxu0 0
  %3535 = vmatpush1.bf16.msra.mxu0 0
  %3536 = vmatprep.subr.bf16.mxu0 0
  %3537 = vmatpush1.bf16.msra.mxu0 0
  %3538 = vmatprep.subr.bf16.mxu0 0
  %3539 = vmatpush1.bf16.msra.mxu0 0
  %3540 = vmatprep.subr.bf16.mxu0 0
  %3541 = vmatpush1.bf16.msra.mxu0 0
  %3542 = vmatprep.subr.bf16.mxu0 0
  %3543 = vmatpush1.bf16.msra.mxu0 0
  %3544 = vmatprep.subr.bf16.mxu0 0
  %3545 = vmatpush1.bf16.msra.mxu0 0
  %3546 = vmatprep.subr.bf16.mxu0 0
  %3547 = vmatpush1.bf16.msra.mxu0 0
  %3548 = vmatprep.subr.bf16.mxu0 0
  %3549 = vmatpush1.bf16.msra.mxu0 0
  %3550 = vmatprep.mubr.bf16.mxu0 0
  %3551 = vmatmul.mubr.bf16.gmra.mrb[0].mxu0 %v3507
  %v3552 = vpop.f32.mrb[0].mxu0
  %v3553 = vadd.f32 0.0, %v3552
  %v3554 = vpop.f32.mrb[0].mxu0
  %v3555 = vpop.f32.mrb[0].mxu0
  %v3556 = vadd.f32 0.0, %v3555
  %v3557 = vpop.f32.mrb[0].mxu0
  %3558 = vmatprep.mubr.bf16.mxu0 0
  %3559 = vmatmul.mubr.bf16.gmra.mrb[0].mxu0 %v3510
  %v3560 = vpop.f32.mrb[0].mxu0
  %v3561 = vadd.f32 0.0, %v3560
  %v3562 = vpop.f32.mrb[0].mxu0
  %v3563 = vpop.f32.mrb[0].mxu0
  %v3564 = vadd.f32 0.0, %v3563
  %v3565 = vpop.f32.mrb[0].mxu0
  %3566 = vmatprep.mubr.bf16.mxu0 0
  %3567 = vmatmul.mubr.bf16.gmra.mrb[0].mxu0 %v3513
  %v3568 = vpop.f32.mrb[0].mxu0
  %v3569 = vadd.f32 0.0, %v3568
  %v3570 = vpop.f32.mrb[0].mxu0
  %v3571 = vpop.f32.mrb[0].mxu0
  %v3572 = vadd.f32 0.0, %v3571
  %v3573 = vpop.f32.mrb[0].mxu0
  %3574 = vmatprep.mubr.bf16.mxu0 0
  %3575 = vmatmul.mubr.bf16.gmra.mrb[0].mxu0 %v3516
  %v3576 = vpop.f32.mrb[0].mxu0
  %v3577 = vadd.f32 0.0, %v3576
  %v3578 = vpop.f32.mrb[0].mxu0
  %v3579 = vpop.f32.mrb[0].mxu0
  %v3580 = vpop.f32.mrb[0].mxu0
  %3581 = vdwg.mxu0
  %v3582 = vadd.f32 %v3491, %v3553
  %v3583 = vadd.f32 %v3492, %v3556
  %v3584 = vadd.f32 %v3493, %v3561
  %v3585 = vadd.f32 %v3494, %v3564
  %v3586 = vadd.f32 %v3495, %v3569
  %v3587 = vadd.f32 %v3496, %v3572
  %v3588 = vadd.f32 %v3497, %v3577
  %v3589 = vld [vmem:[%s18 + $0x10] sm:$0xf]
  %v3590 = vld [vmem:[%s18 + $0x14] sm:$0xf]
  %v3593 = vunpack.c.l.b16 %v3589
  %v3594 = vunpack.c.l.b16 %v3590
  %v3595 = vpack.c.b16 %v3594, %v3593
  %v3598 = vsel %vm3408, %v1699, 0
  %v3601 = vsel %vm3408, %v1700, 0
  %v3604 = vsel %vm3408, %v1701, 0
  %v3607 = vsel %vm3408, %v1702, 0
  %3609 = vmatprep.subr.bf16.mxu0 0
  %3610 = vmatpush1.bf16.msra.mxu0 %v3595
  %3611 = vmatprep.subr.bf16.mxu0 0
  %3612 = vmatpush1.bf16.msra.mxu0 0
  %3613 = vmatprep.subr.bf16.mxu0 0
  %3614 = vmatpush1.bf16.msra.mxu0 0
  %3615 = vmatprep.subr.bf16.mxu0 0
  %3616 = vmatpush1.bf16.msra.mxu0 0
  %3617 = vmatprep.subr.bf16.mxu0 0
  %3618 = vmatpush1.bf16.msra.mxu0 0
  %3619 = vmatprep.subr.bf16.mxu0 0
  %3620 = vmatpush1.bf16.msra.mxu0 0
  %3621 = vmatprep.subr.bf16.mxu0 0
  %3622 = vmatpush1.bf16.msra.mxu0 0
  %3623 = vmatprep.subr.bf16.mxu0 0
  %3624 = vmatpush1.bf16.msra.mxu0 0
  %3625 = vmatprep.subr.bf16.mxu0 0
  %3626 = vmatpush1.bf16.msra.mxu0 0
  %3627 = vmatprep.subr.bf16.mxu0 0
  %3628 = vmatpush1.bf16.msra.mxu0 0
  %3629 = vmatprep.subr.bf16.mxu0 0
  %3630 = vmatpush1.bf16.msra.mxu0 0
  %3631 = vmatprep.subr.bf16.mxu0 0
  %3632 = vmatpush1.bf16.msra.mxu0 0
  %3633 = vmatprep.subr.bf16.mxu0 0
  %3634 = vmatpush1.bf16.msra.mxu0 0
  %3635 = vmatprep.subr.bf16.mxu0 0
  %3636 = vmatpush1.bf16.msra.mxu0 0
  %3637 = vmatprep.subr.bf16.mxu0 0
  %3638 = vmatpush1.bf16.msra.mxu0 0
  %3639 = vmatprep.subr.bf16.mxu0 0
  %3640 = vmatpush1.bf16.msra.mxu0 0
  %3641 = vmatprep.mubr.bf16.mxu0 0
  %3642 = vmatmul.mubr.bf16.gmra.mrb[0].mxu0 %v3598
  %v3643 = vpop.f32.mrb[0].mxu0
  %v3644 = vadd.f32 0.0, %v3643
  %v3645 = vpop.f32.mrb[0].mxu0
  %v3646 = vpop.f32.mrb[0].mxu0
  %v3647 = vadd.f32 0.0, %v3646
  %v3648 = vpop.f32.mrb[0].mxu0
  %3649 = vmatprep.mubr.bf16.mxu0 0
  %3650 = vmatmul.mubr.bf16.gmra.mrb[0].mxu0 %v3601
  %v3651 = vpop.f32.mrb[0].mxu0
  %v3652 = vadd.f32 0.0, %v3651
  %v3653 = vpop.f32.mrb[0].mxu0
  %v3654 = vpop.f32.mrb[0].mxu0
  %v3655 = vadd.f32 0.0, %v3654
  %v3656 = vpop.f32.mrb[0].mxu0
  %3657 = vmatprep.mubr.bf16.mxu0 0
  %3658 = vmatmul.mubr.bf16.gmra.mrb[0].mxu0 %v3604
  %v3659 = vpop.f32.mrb[0].mxu0
  %v3660 = vadd.f32 0.0, %v3659
  %v3661 = vpop.f32.mrb[0].mxu0
  %v3662 = vpop.f32.mrb[0].mxu0
  %v3663 = vadd.f32 0.0, %v3662
  %v3664 = vpop.f32.mrb[0].mxu0
  %3665 = vmatprep.mubr.bf16.mxu0 0
  %3666 = vmatmul.mubr.bf16.gmra.mrb[0].mxu0 %v3607
  %v3667 = vpop.f32.mrb[0].mxu0
  %v3668 = vadd.f32 0.0, %v3667
  %v3669 = vpop.f32.mrb[0].mxu0
  %v3670 = vpop.f32.mrb[0].mxu0
  %v3671 = vpop.f32.mrb[0].mxu0
  %3672 = vdwg.mxu0
  %v3673 = vadd.f32 %v3582, %v3644
  %v3674 = vadd.f32 %v3583, %v3647
  %v3675 = vadd.f32 %v3584, %v3652
  %v3676 = vadd.f32 %v3585, %v3655
  %v3677 = vadd.f32 %v3586, %v3660
  %v3678 = vadd.f32 %v3587, %v3663
  %v3679 = vadd.f32 %v3588, %v3668
  %v3680 = vld [vmem:[%s18 + $0x18] sm:$0xf]
  %v3681 = vld [vmem:[%s18 + $0x1c] sm:$0xf]
  %v3684 = vunpack.c.l.b16 %v3680
  %v3685 = vunpack.c.l.b16 %v3681
  %v3686 = vpack.c.b16 %v3685, %v3684
  %v3689 = vsel %vm3408, %v2031, 0
  %v3692 = vsel %vm3408, %v2032, 0
  %v3695 = vsel %vm3408, %v2033, 0
  %v3698 = vsel %vm3408, %v2034, 0
  %3700 = vmatprep.subr.bf16.mxu0 0
  %3701 = vmatpush1.bf16.msra.mxu0 %v3686
  %3702 = vmatprep.subr.bf16.mxu0 0
  %3703 = vmatpush1.bf16.msra.mxu0 0
  %3704 = vmatprep.subr.bf16.mxu0 0
  %3705 = vmatpush1.bf16.msra.mxu0 0
  %3706 = vmatprep.subr.bf16.mxu0 0
  %3707 = vmatpush1.bf16.msra.mxu0 0
  %3708 = vmatprep.subr.bf16.mxu0 0
  %3709 = vmatpush1.bf16.msra.mxu0 0
  %3710 = vmatprep.subr.bf16.mxu0 0
  %3711 = vmatpush1.bf16.msra.mxu0 0
  %3712 = vmatprep.subr.bf16.mxu0 0
  %3713 = vmatpush1.bf16.msra.mxu0 0
  %3714 = vmatprep.subr.bf16.mxu0 0
  %3715 = vmatpush1.bf16.msra.mxu0 0
  %3716 = vmatprep.subr.bf16.mxu0 0
  %3717 = vmatpush1.bf16.msra.mxu0 0
  %3718 = vmatprep.subr.bf16.mxu0 0
  %3719 = vmatpush1.bf16.msra.mxu0 0
  %3720 = vmatprep.subr.bf16.mxu0 0
  %3721 = vmatpush1.bf16.msra.mxu0 0
  %3722 = vmatprep.subr.bf16.mxu0 0
  %3723 = vmatpush1.bf16.msra.mxu0 0
  %3724 = vmatprep.subr.bf16.mxu0 0
  %3725 = vmatpush1.bf16.msra.mxu0 0
  %3726 = vmatprep.subr.bf16.mxu0 0
  %3727 = vmatpush1.bf16.msra.mxu0 0
  %3728 = vmatprep.subr.bf16.mxu0 0
  %3729 = vmatpush1.bf16.msra.mxu0 0
  %3730 = vmatprep.subr.bf16.mxu0 0
  %3731 = vmatpush1.bf16.msra.mxu0 0
  %3732 = vmatprep.mubr.bf16.mxu0 0
  %3733 = vmatmul.mubr.bf16.gmra.mrb[0].mxu0 %v3689
  %v3734 = vpop.f32.mrb[0].mxu0
  %v3735 = vadd.f32 0.0, %v3734
  %v3736 = vpop.f32.mrb[0].mxu0
  %v3737 = vpop.f32.mrb[0].mxu0
  %v3738 = vadd.f32 0.0, %v3737
  %v3739 = vpop.f32.mrb[0].mxu0
  %3740 = vmatprep.mubr.bf16.mxu0 0
  %3741 = vmatmul.mubr.bf16.gmra.mrb[0].mxu0 %v3692
  %v3742 = vpop.f32.mrb[0].mxu0
  %v3743 = vadd.f32 0.0, %v3742
  %v3744 = vpop.f32.mrb[0].mxu0
  %v3745 = vpop.f32.mrb[0].mxu0
  %v3746 = vadd.f32 0.0, %v3745
  %v3747 = vpop.f32.mrb[0].mxu0
  %3748 = vmatprep.mubr.bf16.mxu0 0
  %3749 = vmatmul.mubr.bf16.gmra.mrb[0].mxu0 %v3695
  %v3750 = vpop.f32.mrb[0].mxu0
  %v3751 = vadd.f32 0.0, %v3750
  %v3752 = vpop.f32.mrb[0].mxu0
  %v3753 = vpop.f32.mrb[0].mxu0
  %v3754 = vadd.f32 0.0, %v3753
  %v3755 = vpop.f32.mrb[0].mxu0
  %3756 = vmatprep.mubr.bf16.mxu0 0
  %3757 = vmatmul.mubr.bf16.gmra.mrb[0].mxu0 %v3698
  %v3758 = vpop.f32.mrb[0].mxu0
  %v3759 = vadd.f32 0.0, %v3758
  %v3760 = vpop.f32.mrb[0].mxu0
  %v3761 = vpop.f32.mrb[0].mxu0
  %v3762 = vpop.f32.mrb[0].mxu0
  %3763 = vdwg.mxu0
  %v3764 = vadd.f32 %v3673, %v3735
  %v3765 = vadd.f32 %v3674, %v3738
  %v3766 = vadd.f32 %v3675, %v3743
  %v3767 = vadd.f32 %v3676, %v3746
  %v3768 = vadd.f32 %v3677, %v3751
  %v3769 = vadd.f32 %v3678, %v3754
  %v3770 = vadd.f32 %v3679, %v3759
  %v3771 = vmax.f32 %v3764, 0.0
  %v3772 = vmax.f32 %v3765, 0.0
  %v3773 = vmax.f32 %v3766, 0.0
  %v3774 = vmax.f32 %v3767, 0.0
  %v3775 = vmax.f32 %v3768, 0.0
  %v3776 = vmax.f32 %v3769, 0.0
  %v3777 = vmax.f32 %v3770, 0.0
  %3778 = vmatprep.subr.bf16.mxu0 0
  %3779 = vmatpush1.bf16.msra.mxu0 %v3406
  %3780 = vmatprep.subr.bf16.mxu0 0
  %3781 = vmatpush1.bf16.msra.mxu0 0
  %3782 = vmatprep.subr.bf16.mxu0 0
  %3783 = vmatpush1.bf16.msra.mxu0 0
  %3784 = vmatprep.subr.bf16.mxu0 0
  %3785 = vmatpush1.bf16.msra.mxu0 0
  %3786 = vmatprep.subr.bf16.mxu0 0
  %3787 = vmatpush1.bf16.msra.mxu0 0
  %3788 = vmatprep.subr.bf16.mxu0 0
  %3789 = vmatpush1.bf16.msra.mxu0 0
  %3790 = vmatprep.subr.bf16.mxu0 0
  %3791 = vmatpush1.bf16.msra.mxu0 0
  %3792 = vmatprep.subr.bf16.mxu0 0
  %3793 = vmatpush1.bf16.msra.mxu0 0
  %3794 = vmatprep.subr.bf16.mxu0 0
  %3795 = vmatpush1.bf16.msra.mxu0 0
  %3796 = vmatprep.subr.bf16.mxu0 0
  %3797 = vmatpush1.bf16.msra.mxu0 0
  %3798 = vmatprep.subr.bf16.mxu0 0
  %3799 = vmatpush1.bf16.msra.mxu0 0
  %3800 = vmatprep.subr.bf16.mxu0 0
  %3801 = vmatpush1.bf16.msra.mxu0 0
  %3802 = vmatprep.subr.bf16.mxu0 0
  %3803 = vmatpush1.bf16.msra.mxu0 0
  %3804 = vmatprep.subr.bf16.mxu0 0
  %3805 = vmatpush1.bf16.msra.mxu0 0
  %3806 = vmatprep.subr.bf16.mxu0 0
  %3807 = vmatpush1.bf16.msra.mxu0 0
  %3808 = vmatprep.subr.bf16.mxu0 0
  %3809 = vmatpush1.bf16.msra.mxu0 0
  %3810 = vmatprep.mubr.bf16.mxu0 0
  %3811 = vmatmul.mubr.bf16.gmra.mrb[0].mxu0 %v3507
  %v3812 = vpop.f32.mrb[0].mxu0
  %v3813 = vadd.f32 0.0, %v3812
  %v3814 = vpop.f32.mrb[0].mxu0
  %v3815 = vpop.f32.mrb[0].mxu0
  %v3816 = vadd.f32 0.0, %v3815
  %v3817 = vpop.f32.mrb[0].mxu0
  %3818 = vmatprep.mubr.bf16.mxu0 0
  %3819 = vmatmul.mubr.bf16.gmra.mrb[0].mxu0 %v3510
  %v3820 = vpop.f32.mrb[0].mxu0
  %v3821 = vadd.f32 0.0, %v3820
  %v3822 = vpop.f32.mrb[0].mxu0
  %v3823 = vpop.f32.mrb[0].mxu0
  %v3824 = vadd.f32 0.0, %v3823
  %v3825 = vpop.f32.mrb[0].mxu0
  %3826 = vmatprep.mubr.bf16.mxu0 0
  %3827 = vmatmul.mubr.bf16.gmra.mrb[0].mxu0 %v3513
  %v3828 = vpop.f32.mrb[0].mxu0
  %v3829 = vadd.f32 0.0, %v3828
  %v3830 = vpop.f32.mrb[0].mxu0
  %v3831 = vpop.f32.mrb[0].mxu0
  %v3832 = vadd.f32 0.0, %v3831
  %v3833 = vpop.f32.mrb[0].mxu0
  %3834 = vmatprep.mubr.bf16.mxu0 0
  %3835 = vmatmul.mubr.bf16.gmra.mrb[0].mxu0 %v3516
  %v3836 = vpop.f32.mrb[0].mxu0
  %v3837 = vadd.f32 0.0, %v3836
  %v3838 = vpop.f32.mrb[0].mxu0
  %v3839 = vpop.f32.mrb[0].mxu0
  %v3840 = vpop.f32.mrb[0].mxu0
  %3841 = vdwg.mxu0
  %v3842 = vadd.f32 %v3489, %v3813
  %v3843 = vadd.f32 %v3489, %v3816
  %v3844 = vadd.f32 %v3489, %v3821
  %v3845 = vadd.f32 %v3489, %v3824
  %v3846 = vadd.f32 %v3489, %v3829
  %v3847 = vadd.f32 %v3489, %v3832
  %v3848 = vadd.f32 %v3489, %v3837
  %v3850 = vsel %vm3408, %v1330, 0
  %v3853 = vsel %vm3408, %v1331, 0
  %v3856 = vsel %vm3408, %v1332, 0
  %v3859 = vsel %vm3408, %v1333, 0
  %3861 = vmatprep.subr.bf16.mxu0 0
  %3862 = vmatpush1.bf16.msra.mxu0 %v3504
  %3863 = vmatprep.subr.bf16.mxu0 0
  %3864 = vmatpush1.bf16.msra.mxu0 0
  %3865 = vmatprep.subr.bf16.mxu0 0
  %3866 = vmatpush1.bf16.msra.mxu0 0
  %3867 = vmatprep.subr.bf16.mxu0 0
  %3868 = vmatpush1.bf16.msra.mxu0 0
  %3869 = vmatprep.subr.bf16.mxu0 0
  %3870 = vmatpush1.bf16.msra.mxu0 0
  %3871 = vmatprep.subr.bf16.mxu0 0
  %3872 = vmatpush1.bf16.msra.mxu0 0
  %3873 = vmatprep.subr.bf16.mxu0 0
  %3874 = vmatpush1.bf16.msra.mxu0 0
  %3875 = vmatprep.subr.bf16.mxu0 0
  %3876 = vmatpush1.bf16.msra.mxu0 0
  %3877 = vmatprep.subr.bf16.mxu0 0
  %3878 = vmatpush1.bf16.msra.mxu0 0
  %3879 = vmatprep.subr.bf16.mxu0 0
  %3880 = vmatpush1.bf16.msra.mxu0 0
  %3881 = vmatprep.subr.bf16.mxu0 0
  %3882 = vmatpush1.bf16.msra.mxu0 0
  %3883 = vmatprep.subr.bf16.mxu0 0
  %3884 = vmatpush1.bf16.msra.mxu0 0
  %3885 = vmatprep.subr.bf16.mxu0 0
  %3886 = vmatpush1.bf16.msra.mxu0 0
  %3887 = vmatprep.subr.bf16.mxu0 0
  %3888 = vmatpush1.bf16.msra.mxu0 0
  %3889 = vmatprep.subr.bf16.mxu0 0
  %3890 = vmatpush1.bf16.msra.mxu0 0
  %3891 = vmatprep.subr.bf16.mxu0 0
  %3892 = vmatpush1.bf16.msra.mxu0 0
  %3893 = vmatprep.mubr.bf16.mxu0 0
  %3894 = vmatmul.mubr.bf16.gmra.mrb[0].mxu0 %v3850
  %v3895 = vpop.f32.mrb[0].mxu0
  %v3896 = vadd.f32 0.0, %v3895
  %v3897 = vpop.f32.mrb[0].mxu0
  %v3898 = vpop.f32.mrb[0].mxu0
  %v3899 = vadd.f32 0.0, %v3898
  %v3900 = vpop.f32.mrb[0].mxu0
  %3901 = vmatprep.mubr.bf16.mxu0 0
  %3902 = vmatmul.mubr.bf16.gmra.mrb[0].mxu0 %v3853
  %v3903 = vpop.f32.mrb[0].mxu0
  %v3904 = vadd.f32 0.0, %v3903
  %v3905 = vpop.f32.mrb[0].mxu0
  %v3906 = vpop.f32.mrb[0].mxu0
  %v3907 = vadd.f32 0.0, %v3906
  %v3908 = vpop.f32.mrb[0].mxu0
  %3909 = vmatprep.mubr.bf16.mxu0 0
  %3910 = vmatmul.mubr.bf16.gmra.mrb[0].mxu0 %v3856
  %v3911 = vpop.f32.mrb[0].mxu0
  %v3912 = vadd.f32 0.0, %v3911
  %v3913 = vpop.f32.mrb[0].mxu0
  %v3914 = vpop.f32.mrb[0].mxu0
  %v3915 = vadd.f32 0.0, %v3914
  %v3916 = vpop.f32.mrb[0].mxu0
  %3917 = vmatprep.mubr.bf16.mxu0 0
  %3918 = vmatmul.mubr.bf16.gmra.mrb[0].mxu0 %v3859
  %v3919 = vpop.f32.mrb[0].mxu0
  %v3920 = vadd.f32 0.0, %v3919
  %v3921 = vpop.f32.mrb[0].mxu0
  %v3922 = vpop.f32.mrb[0].mxu0
  %v3923 = vpop.f32.mrb[0].mxu0
  %3924 = vdwg.mxu0
  %v3925 = vadd.f32 %v3842, %v3896
  %v3926 = vadd.f32 %v3843, %v3899
  %v3927 = vadd.f32 %v3844, %v3904
  %v3928 = vadd.f32 %v3845, %v3907
  %v3929 = vadd.f32 %v3846, %v3912
  %v3930 = vadd.f32 %v3847, %v3915
  %v3931 = vadd.f32 %v3848, %v3920
  %3932 = vmatprep.subr.bf16.mxu0 0
  %3933 = vmatpush1.bf16.msra.mxu0 %v3595
  %3934 = vmatprep.subr.bf16.mxu0 0
  %3935 = vmatpush1.bf16.msra.mxu0 0
  %3936 = vmatprep.subr.bf16.mxu0 0
  %3937 = vmatpush1.bf16.msra.mxu0 0
  %3938 = vmatprep.subr.bf16.mxu0 0
  %3939 = vmatpush1.bf16.msra.mxu0 0
  %3940 = vmatprep.subr.bf16.mxu0 0
  %3941 = vmatpush1.bf16.msra.mxu0 0
  %3942 = vmatprep.subr.bf16.mxu0 0
  %3943 = vmatpush1.bf16.msra.mxu0 0
  %3944 = vmatprep.subr.bf16.mxu0 0
  %3945 = vmatpush1.bf16.msra.mxu0 0
  %3946 = vmatprep.subr.bf16.mxu0 0
  %3947 = vmatpush1.bf16.msra.mxu0 0
  %3948 = vmatprep.subr.bf16.mxu0 0
  %3949 = vmatpush1.bf16.msra.mxu0 0
  %3950 = vmatprep.subr.bf16.mxu0 0
  %3951 = vmatpush1.bf16.msra.mxu0 0
  %3952 = vmatprep.subr.bf16.mxu0 0
  %3953 = vmatpush1.bf16.msra.mxu0 0
  %3954 = vmatprep.subr.bf16.mxu0 0
  %3955 = vmatpush1.bf16.msra.mxu0 0
  %3956 = vmatprep.subr.bf16.mxu0 0
  %3957 = vmatpush1.bf16.msra.mxu0 0
  %3958 = vmatprep.subr.bf16.mxu0 0
  %3959 = vmatpush1.bf16.msra.mxu0 0
  %3960 = vmatprep.subr.bf16.mxu0 0
  %3961 = vmatpush1.bf16.msra.mxu0 0
  %3962 = vmatprep.subr.bf16.mxu0 0
  %3963 = vmatpush1.bf16.msra.mxu0 0
  %3964 = vmatprep.mubr.bf16.mxu0 0
  %3965 = vmatmul.mubr.bf16.gmra.mrb[0].mxu0 %v3689
  %v3966 = vpop.f32.mrb[0].mxu0
  %v3967 = vadd.f32 0.0, %v3966
  %v3968 = vpop.f32.mrb[0].mxu0
  %v3969 = vpop.f32.mrb[0].mxu0
  %v3970 = vadd.f32 0.0, %v3969
  %v3971 = vpop.f32.mrb[0].mxu0
  %3972 = vmatprep.mubr.bf16.mxu0 0
  %3973 = vmatmul.mubr.bf16.gmra.mrb[0].mxu0 %v3692
  %v3974 = vpop.f32.mrb[0].mxu0
  %v3975 = vadd.f32 0.0, %v3974
  %v3976 = vpop.f32.mrb[0].mxu0
  %v3977 = vpop.f32.mrb[0].mxu0
  %v3978 = vadd.f32 0.0, %v3977
  %v3979 = vpop.f32.mrb[0].mxu0
  %3980 = vmatprep.mubr.bf16.mxu0 0
  %3981 = vmatmul.mubr.bf16.gmra.mrb[0].mxu0 %v3695
  %v3982 = vpop.f32.mrb[0].mxu0
  %v3983 = vadd.f32 0.0, %v3982
  %v3984 = vpop.f32.mrb[0].mxu0
  %v3985 = vpop.f32.mrb[0].mxu0
  %v3986 = vadd.f32 0.0, %v3985
  %v3987 = vpop.f32.mrb[0].mxu0
  %3988 = vmatprep.mubr.bf16.mxu0 0
  %3989 = vmatmul.mubr.bf16.gmra.mrb[0].mxu0 %v3698
  %v3990 = vpop.f32.mrb[0].mxu0
  %v3991 = vadd.f32 0.0, %v3990
  %v3992 = vpop.f32.mrb[0].mxu0
  %v3993 = vpop.f32.mrb[0].mxu0
  %v3994 = vpop.f32.mrb[0].mxu0
  %3995 = vdwg.mxu0
  %v3996 = vadd.f32 %v3925, %v3967
  %v3997 = vadd.f32 %v3926, %v3970
  %v3998 = vadd.f32 %v3927, %v3975
  %v3999 = vadd.f32 %v3928, %v3978
  %v4000 = vadd.f32 %v3929, %v3983
  %v4001 = vadd.f32 %v3930, %v3986
  %v4002 = vadd.f32 %v3931, %v3991
  %v4004 = vsel %vm3408, %v2363, 0
  %v4007 = vsel %vm3408, %v2364, 0
  %v4010 = vsel %vm3408, %v2365, 0
  %v4013 = vsel %vm3408, %v2366, 0
  %4015 = vmatprep.subr.bf16.mxu0 0
  %4016 = vmatpush1.bf16.msra.mxu0 %v3686
  %4017 = vmatprep.subr.bf16.mxu0 0
  %4018 = vmatpush1.bf16.msra.mxu0 0
  %4019 = vmatprep.subr.bf16.mxu0 0
  %4020 = vmatpush1.bf16.msra.mxu0 0
  %4021 = vmatprep.subr.bf16.mxu0 0
  %4022 = vmatpush1.bf16.msra.mxu0 0
  %4023 = vmatprep.subr.bf16.mxu0 0
  %4024 = vmatpush1.bf16.msra.mxu0 0
  %4025 = vmatprep.subr.bf16.mxu0 0
  %4026 = vmatpush1.bf16.msra.mxu0 0
  %4027 = vmatprep.subr.bf16.mxu0 0
  %4028 = vmatpush1.bf16.msra.mxu0 0
  %4029 = vmatprep.subr.bf16.mxu0 0
  %4030 = vmatpush1.bf16.msra.mxu0 0
  %4031 = vmatprep.subr.bf16.mxu0 0
  %4032 = vmatpush1.bf16.msra.mxu0 0
  %4033 = vmatprep.subr.bf16.mxu0 0
  %4034 = vmatpush1.bf16.msra.mxu0 0
  %4035 = vmatprep.subr.bf16.mxu0 0
  %4036 = vmatpush1.bf16.msra.mxu0 0
  %4037 = vmatprep.subr.bf16.mxu0 0
  %4038 = vmatpush1.bf16.msra.mxu0 0
  %4039 = vmatprep.subr.bf16.mxu0 0
  %4040 = vmatpush1.bf16.msra.mxu0 0
  %4041 = vmatprep.subr.bf16.mxu0 0
  %4042 = vmatpush1.bf16.msra.mxu0 0
  %4043 = vmatprep.subr.bf16.mxu0 0
  %4044 = vmatpush1.bf16.msra.mxu0 0
  %4045 = vmatprep.subr.bf16.mxu0 0
  %4046 = vmatpush1.bf16.msra.mxu0 0
  %4047 = vmatprep.mubr.bf16.mxu0 0
  %4048 = vmatmul.mubr.bf16.gmra.mrb[0].mxu0 %v4004
  %v4049 = vpop.f32.mrb[0].mxu0
  %v4050 = vadd.f32 0.0, %v4049
  %v4051 = vpop.f32.mrb[0].mxu0
  %v4052 = vpop.f32.mrb[0].mxu0
  %v4053 = vadd.f32 0.0, %v4052
  %v4054 = vpop.f32.mrb[0].mxu0
  %4055 = vmatprep.mubr.bf16.mxu0 0
  %4056 = vmatmul.mubr.bf16.gmra.mrb[0].mxu0 %v4007
  %v4057 = vpop.f32.mrb[0].mxu0
  %v4058 = vadd.f32 0.0, %v4057
  %v4059 = vpop.f32.mrb[0].mxu0
  %v4060 = vpop.f32.mrb[0].mxu0
  %v4061 = vadd.f32 0.0, %v4060
  %v4062 = vpop.f32.mrb[0].mxu0
  %4063 = vmatprep.mubr.bf16.mxu0 0
  %4064 = vmatmul.mubr.bf16.gmra.mrb[0].mxu0 %v4010
  %v4065 = vpop.f32.mrb[0].mxu0
  %v4066 = vadd.f32 0.0, %v4065
  %v4067 = vpop.f32.mrb[0].mxu0
  %v4068 = vpop.f32.mrb[0].mxu0
  %v4069 = vadd.f32 0.0, %v4068
  %v4070 = vpop.f32.mrb[0].mxu0
  %4071 = vmatprep.mubr.bf16.mxu0 0
  %4072 = vmatmul.mubr.bf16.gmra.mrb[0].mxu0 %v4013
  %v4073 = vpop.f32.mrb[0].mxu0
  %v4074 = vadd.f32 0.0, %v4073
  %v4075 = vpop.f32.mrb[0].mxu0
  %v4076 = vpop.f32.mrb[0].mxu0
  %v4077 = vpop.f32.mrb[0].mxu0
  %4078 = vdwg.mxu0
  %v4079 = vadd.f32 %v3996, %v4050
  %v4080 = vadd.f32 %v3997, %v4053
  %v4081 = vadd.f32 %v3998, %v4058
  %v4082 = vadd.f32 %v3999, %v4061
  %v4083 = vadd.f32 %v4000, %v4066
  %v4084 = vadd.f32 %v4001, %v4069
  %v4085 = vadd.f32 %v4002, %v4074
  %v4086 = vmax.f32 %v4079, 0.0
  %v4087 = vmax.f32 %v4080, 0.0
  %v4088 = vmax.f32 %v4081, 0.0
  %v4089 = vmax.f32 %v4082, 0.0
  %v4090 = vmax.f32 %v4083, 0.0
  %v4091 = vmax.f32 %v4084, 0.0
  %v4092 = vmax.f32 %v4085, 0.0
  %4093 = vmatprep.subr.bf16.mxu0 0
  %4094 = vmatpush1.bf16.msra.mxu0 %v3406
  %4095 = vmatprep.subr.bf16.mxu0 0
  %4096 = vmatpush1.bf16.msra.mxu0 0
  %4097 = vmatprep.subr.bf16.mxu0 0
  %4098 = vmatpush1.bf16.msra.mxu0 0
  %4099 = vmatprep.subr.bf16.mxu0 0
  %4100 = vmatpush1.bf16.msra.mxu0 0
  %4101 = vmatprep.subr.bf16.mxu0 0
  %4102 = vmatpush1.bf16.msra.mxu0 0
  %4103 = vmatprep.subr.bf16.mxu0 0
  %4104 = vmatpush1.bf16.msra.mxu0 0
  %4105 = vmatprep.subr.bf16.mxu0 0
  %4106 = vmatpush1.bf16.msra.mxu0 0
  %4107 = vmatprep.subr.bf16.mxu0 0
  %4108 = vmatpush1.bf16.msra.mxu0 0
  %4109 = vmatprep.subr.bf16.mxu0 0
  %4110 = vmatpush1.bf16.msra.mxu0 0
  %4111 = vmatprep.subr.bf16.mxu0 0
  %4112 = vmatpush1.bf16.msra.mxu0 0
  %4113 = vmatprep.subr.bf16.mxu0 0
  %4114 = vmatpush1.bf16.msra.mxu0 0
  %4115 = vmatprep.subr.bf16.mxu0 0
  %4116 = vmatpush1.bf16.msra.mxu0 0
  %4117 = vmatprep.subr.bf16.mxu0 0
  %4118 = vmatpush1.bf16.msra.mxu0 0
  %4119 = vmatprep.subr.bf16.mxu0 0
  %4120 = vmatpush1.bf16.msra.mxu0 0
  %4121 = vmatprep.subr.bf16.mxu0 0
  %4122 = vmatpush1.bf16.msra.mxu0 0
  %4123 = vmatprep.subr.bf16.mxu0 0
  %4124 = vmatpush1.bf16.msra.mxu0 0
  %4125 = vmatprep.mubr.bf16.mxu0 0
  %4126 = vmatmul.mubr.bf16.gmra.mrb[0].mxu0 %v3598
  %v4127 = vpop.f32.mrb[0].mxu0
  %v4128 = vadd.f32 0.0, %v4127
  %v4129 = vpop.f32.mrb[0].mxu0
  %v4130 = vpop.f32.mrb[0].mxu0
  %v4131 = vadd.f32 0.0, %v4130
  %v4132 = vpop.f32.mrb[0].mxu0
  %4133 = vmatprep.mubr.bf16.mxu0 0
  %4134 = vmatmul.mubr.bf16.gmra.mrb[0].mxu0 %v3601
  %v4135 = vpop.f32.mrb[0].mxu0
  %v4136 = vadd.f32 0.0, %v4135
  %v4137 = vpop.f32.mrb[0].mxu0
  %v4138 = vpop.f32.mrb[0].mxu0
  %v4139 = vadd.f32 0.0, %v4138
  %v4140 = vpop.f32.mrb[0].mxu0
  %4141 = vmatprep.mubr.bf16.mxu0 0
  %4142 = vmatmul.mubr.bf16.gmra.mrb[0].mxu0 %v3604
  %v4143 = vpop.f32.mrb[0].mxu0
  %v4144 = vadd.f32 0.0, %v4143
  %v4145 = vpop.f32.mrb[0].mxu0
  %v4146 = vpop.f32.mrb[0].mxu0
  %v4147 = vadd.f32 0.0, %v4146
  %v4148 = vpop.f32.mrb[0].mxu0
  %4149 = vmatprep.mubr.bf16.mxu0 0
  %4150 = vmatmul.mubr.bf16.gmra.mrb[0].mxu0 %v3607
  %v4151 = vpop.f32.mrb[0].mxu0
  %v4152 = vadd.f32 0.0, %v4151
  %v4153 = vpop.f32.mrb[0].mxu0
  %v4154 = vpop.f32.mrb[0].mxu0
  %v4155 = vpop.f32.mrb[0].mxu0
  %4156 = vdwg.mxu0
  %v4157 = vadd.f32 %v3489, %v4128
  %v4158 = vadd.f32 %v3489, %v4131
  %v4159 = vadd.f32 %v3489, %v4136
  %v4160 = vadd.f32 %v3489, %v4139
  %v4161 = vadd.f32 %v3489, %v4144
  %v4162 = vadd.f32 %v3489, %v4147
  %v4163 = vadd.f32 %v3489, %v4152
  %4164 = vmatprep.subr.bf16.mxu0 0
  %4165 = vmatpush1.bf16.msra.mxu0 %v3504
  %4166 = vmatprep.subr.bf16.mxu0 0
  %4167 = vmatpush1.bf16.msra.mxu0 0
  %4168 = vmatprep.subr.bf16.mxu0 0
  %4169 = vmatpush1.bf16.msra.mxu0 0
  %4170 = vmatprep.subr.bf16.mxu0 0
  %4171 = vmatpush1.bf16.msra.mxu0 0
  %4172 = vmatprep.subr.bf16.mxu0 0
  %4173 = vmatpush1.bf16.msra.mxu0 0
  %4174 = vmatprep.subr.bf16.mxu0 0
  %4175 = vmatpush1.bf16.msra.mxu0 0
  %4176 = vmatprep.subr.bf16.mxu0 0
  %4177 = vmatpush1.bf16.msra.mxu0 0
  %4178 = vmatprep.subr.bf16.mxu0 0
  %4179 = vmatpush1.bf16.msra.mxu0 0
  %4180 = vmatprep.subr.bf16.mxu0 0
  %4181 = vmatpush1.bf16.msra.mxu0 0
  %4182 = vmatprep.subr.bf16.mxu0 0
  %4183 = vmatpush1.bf16.msra.mxu0 0
  %4184 = vmatprep.subr.bf16.mxu0 0
  %4185 = vmatpush1.bf16.msra.mxu0 0
  %4186 = vmatprep.subr.bf16.mxu0 0
  %4187 = vmatpush1.bf16.msra.mxu0 0
  %4188 = vmatprep.subr.bf16.mxu0 0
  %4189 = vmatpush1.bf16.msra.mxu0 0
  %4190 = vmatprep.subr.bf16.mxu0 0
  %4191 = vmatpush1.bf16.msra.mxu0 0
  %4192 = vmatprep.subr.bf16.mxu0 0
  %4193 = vmatpush1.bf16.msra.mxu0 0
  %4194 = vmatprep.subr.bf16.mxu0 0
  %4195 = vmatpush1.bf16.msra.mxu0 0
  %4196 = vmatprep.mubr.bf16.mxu0 0
  %4197 = vmatmul.mubr.bf16.gmra.mrb[0].mxu0 %v3689
  %v4198 = vpop.f32.mrb[0].mxu0
  %v4199 = vadd.f32 0.0, %v4198
  %v4200 = vpop.f32.mrb[0].mxu0
  %v4201 = vpop.f32.mrb[0].mxu0
  %v4202 = vadd.f32 0.0, %v4201
  %v4203 = vpop.f32.mrb[0].mxu0
  %4204 = vmatprep.mubr.bf16.mxu0 0
  %4205 = vmatmul.mubr.bf16.gmra.mrb[0].mxu0 %v3692
  %v4206 = vpop.f32.mrb[0].mxu0
  %v4207 = vadd.f32 0.0, %v4206
  %v4208 = vpop.f32.mrb[0].mxu0
  %v4209 = vpop.f32.mrb[0].mxu0
  %v4210 = vadd.f32 0.0, %v4209
  %v4211 = vpop.f32.mrb[0].mxu0
  %4212 = vmatprep.mubr.bf16.mxu0 0
  %4213 = vmatmul.mubr.bf16.gmra.mrb[0].mxu0 %v3695
  %v4214 = vpop.f32.mrb[0].mxu0
  %v4215 = vadd.f32 0.0, %v4214
  %v4216 = vpop.f32.mrb[0].mxu0
  %v4217 = vpop.f32.mrb[0].mxu0
  %v4218 = vadd.f32 0.0, %v4217
  %v4219 = vpop.f32.mrb[0].mxu0
  %4220 = vmatprep.mubr.bf16.mxu0 0
  %4221 = vmatmul.mubr.bf16.gmra.mrb[0].mxu0 %v3698
  %v4222 = vpop.f32.mrb[0].mxu0
  %v4223 = vadd.f32 0.0, %v4222
  %v4224 = vpop.f32.mrb[0].mxu0
  %v4225 = vpop.f32.mrb[0].mxu0
  %v4226 = vpop.f32.mrb[0].mxu0
  %4227 = vdwg.mxu0
  %v4228 = vadd.f32 %v4157, %v4199
  %v4229 = vadd.f32 %v4158, %v4202
  %v4230 = vadd.f32 %v4159, %v4207
  %v4231 = vadd.f32 %v4160, %v4210
  %v4232 = vadd.f32 %v4161, %v4215
  %v4233 = vadd.f32 %v4162, %v4218
  %v4234 = vadd.f32 %v4163, %v4223
  %v4236 = vsel %vm3408, %v2732, 0
  %v4239 = vsel %vm3408, %v2733, 0
  %v4242 = vsel %vm3408, %v2734, 0
  %v4245 = vsel %vm3408, %v2735, 0
  %4247 = vmatprep.subr.bf16.mxu0 0
  %4248 = vmatpush1.bf16.msra.mxu0 %v3595
  %4249 = vmatprep.subr.bf16.mxu0 0
  %4250 = vmatpush1.bf16.msra.mxu0 0
  %4251 = vmatprep.subr.bf16.mxu0 0
  %4252 = vmatpush1.bf16.msra.mxu0 0
  %4253 = vmatprep.subr.bf16.mxu0 0
  %4254 = vmatpush1.bf16.msra.mxu0 0
  %4255 = vmatprep.subr.bf16.mxu0 0
  %4256 = vmatpush1.bf16.msra.mxu0 0
  %4257 = vmatprep.subr.bf16.mxu0 0
  %4258 = vmatpush1.bf16.msra.mxu0 0
  %4259 = vmatprep.subr.bf16.mxu0 0
  %4260 = vmatpush1.bf16.msra.mxu0 0
  %4261 = vmatprep.subr.bf16.mxu0 0
  %4262 = vmatpush1.bf16.msra.mxu0 0
  %4263 = vmatprep.subr.bf16.mxu0 0
  %4264 = vmatpush1.bf16.msra.mxu0 0
  %4265 = vmatprep.subr.bf16.mxu0 0
  %4266 = vmatpush1.bf16.msra.mxu0 0
  %4267 = vmatprep.subr.bf16.mxu0 0
  %4268 = vmatpush1.bf16.msra.mxu0 0
  %4269 = vmatprep.subr.bf16.mxu0 0
  %4270 = vmatpush1.bf16.msra.mxu0 0
  %4271 = vmatprep.subr.bf16.mxu0 0
  %4272 = vmatpush1.bf16.msra.mxu0 0
  %4273 = vmatprep.subr.bf16.mxu0 0
  %4274 = vmatpush1.bf16.msra.mxu0 0
  %4275 = vmatprep.subr.bf16.mxu0 0
  %4276 = vmatpush1.bf16.msra.mxu0 0
  %4277 = vmatprep.subr.bf16.mxu0 0
  %4278 = vmatpush1.bf16.msra.mxu0 0
  %4279 = vmatprep.mubr.bf16.mxu0 0
  %4280 = vmatmul.mubr.bf16.gmra.mrb[0].mxu0 %v4236
  %v4281 = vpop.f32.mrb[0].mxu0
  %v4282 = vadd.f32 0.0, %v4281
  %v4283 = vpop.f32.mrb[0].mxu0
  %v4284 = vpop.f32.mrb[0].mxu0
  %v4285 = vadd.f32 0.0, %v4284
  %v4286 = vpop.f32.mrb[0].mxu0
  %4287 = vmatprep.mubr.bf16.mxu0 0
  %4288 = vmatmul.mubr.bf16.gmra.mrb[0].mxu0 %v4239
  %v4289 = vpop.f32.mrb[0].mxu0
  %v4290 = vadd.f32 0.0, %v4289
  %v4291 = vpop.f32.mrb[0].mxu0
  %v4292 = vpop.f32.mrb[0].mxu0
  %v4293 = vadd.f32 0.0, %v4292
  %v4294 = vpop.f32.mrb[0].mxu0
  %4295 = vmatprep.mubr.bf16.mxu0 0
  %4296 = vmatmul.mubr.bf16.gmra.mrb[0].mxu0 %v4242
  %v4297 = vpop.f32.mrb[0].mxu0
  %v4298 = vadd.f32 0.0, %v4297
  %v4299 = vpop.f32.mrb[0].mxu0
  %v4300 = vpop.f32.mrb[0].mxu0
  %v4301 = vadd.f32 0.0, %v4300
  %v4302 = vpop.f32.mrb[0].mxu0
  %4303 = vmatprep.mubr.bf16.mxu0 0
  %4304 = vmatmul.mubr.bf16.gmra.mrb[0].mxu0 %v4245
  %v4305 = vpop.f32.mrb[0].mxu0
  %v4306 = vadd.f32 0.0, %v4305
  %v4307 = vpop.f32.mrb[0].mxu0
  %v4308 = vpop.f32.mrb[0].mxu0
  %v4309 = vpop.f32.mrb[0].mxu0
  %4310 = vdwg.mxu0
  %v4311 = vadd.f32 %v4228, %v4282
  %v4312 = vadd.f32 %v4229, %v4285
  %v4313 = vadd.f32 %v4230, %v4290
  %v4314 = vadd.f32 %v4231, %v4293
  %v4315 = vadd.f32 %v4232, %v4298
  %v4316 = vadd.f32 %v4233, %v4301
  %v4317 = vadd.f32 %v4234, %v4306
  %v4319 = vsel %vm3408, %v3064, 0
  %v4322 = vsel %vm3408, %v3065, 0
  %v4325 = vsel %vm3408, %v3066, 0
  %v4328 = vsel %vm3408, %v3067, 0
  %4330 = vmatprep.subr.bf16.mxu0 0
  %4331 = vmatpush1.bf16.msra.mxu0 %v3686
  %4332 = vmatprep.subr.bf16.mxu0 0
  %4333 = vmatpush1.bf16.msra.mxu0 0
  %4334 = vmatprep.subr.bf16.mxu0 0
  %4335 = vmatpush1.bf16.msra.mxu0 0
  %4336 = vmatprep.subr.bf16.mxu0 0
  %4337 = vmatpush1.bf16.msra.mxu0 0
  %4338 = vmatprep.subr.bf16.mxu0 0
  %4339 = vmatpush1.bf16.msra.mxu0 0
  %4340 = vmatprep.subr.bf16.mxu0 0
  %4341 = vmatpush1.bf16.msra.mxu0 0
  %4342 = vmatprep.subr.bf16.mxu0 0
  %4343 = vmatpush1.bf16.msra.mxu0 0
  %4344 = vmatprep.subr.bf16.mxu0 0
  %4345 = vmatpush1.bf16.msra.mxu0 0
  %4346 = vmatprep.subr.bf16.mxu0 0
  %4347 = vmatpush1.bf16.msra.mxu0 0
  %4348 = vmatprep.subr.bf16.mxu0 0
  %4349 = vmatpush1.bf16.msra.mxu0 0
  %4350 = vmatprep.subr.bf16.mxu0 0
  %4351 = vmatpush1.bf16.msra.mxu0 0
  %4352 = vmatprep.subr.bf16.mxu0 0
  %4353 = vmatpush1.bf16.msra.mxu0 0
  %4354 = vmatprep.subr.bf16.mxu0 0
  %4355 = vmatpush1.bf16.msra.mxu0 0
  %4356 = vmatprep.subr.bf16.mxu0 0
  %4357 = vmatpush1.bf16.msra.mxu0 0
  %4358 = vmatprep.subr.bf16.mxu0 0
  %4359 = vmatpush1.bf16.msra.mxu0 0
  %4360 = vmatprep.subr.bf16.mxu0 0
  %4361 = vmatpush1.bf16.msra.mxu0 0
  %4362 = vmatprep.mubr.bf16.mxu0 0
  %4363 = vmatmul.mubr.bf16.gmra.mrb[0].mxu0 %v4319
  %v4364 = vpop.f32.mrb[0].mxu0
  %v4365 = vadd.f32 0.0, %v4364
  %v4366 = vpop.f32.mrb[0].mxu0
  %v4367 = vpop.f32.mrb[0].mxu0
  %v4368 = vadd.f32 0.0, %v4367
  %v4369 = vpop.f32.mrb[0].mxu0
  %4370 = vmatprep.mubr.bf16.mxu0 0
  %4371 = vmatmul.mubr.bf16.gmra.mrb[0].mxu0 %v4322
  %v4372 = vpop.f32.mrb[0].mxu0
  %v4373 = vadd.f32 0.0, %v4372
  %v4374 = vpop.f32.mrb[0].mxu0
  %v4375 = vpop.f32.mrb[0].mxu0
  %v4376 = vadd.f32 0.0, %v4375
  %v4377 = vpop.f32.mrb[0].mxu0
  %4378 = vmatprep.mubr.bf16.mxu0 0
  %4379 = vmatmul.mubr.bf16.gmra.mrb[0].mxu0 %v4325
  %v4380 = vpop.f32.mrb[0].mxu0
  %v4381 = vadd.f32 0.0, %v4380
  %v4382 = vpop.f32.mrb[0].mxu0
  %v4383 = vpop.f32.mrb[0].mxu0
  %v4384 = vadd.f32 0.0, %v4383
  %v4385 = vpop.f32.mrb[0].mxu0
  %4386 = vmatprep.mubr.bf16.mxu0 0
  %4387 = vmatmul.mubr.bf16.gmra.mrb[0].mxu0 %v4328
  %v4388 = vpop.f32.mrb[0].mxu0
  %v4389 = vadd.f32 0.0, %v4388
  %v4390 = vpop.f32.mrb[0].mxu0
  %v4391 = vpop.f32.mrb[0].mxu0
  %v4392 = vpop.f32.mrb[0].mxu0
  %4393 = vdwg.mxu0
  %v4394 = vadd.f32 %v4311, %v4365
  %v4395 = vadd.f32 %v4312, %v4368
  %v4396 = vadd.f32 %v4313, %v4373
  %v4397 = vadd.f32 %v4314, %v4376
  %v4398 = vadd.f32 %v4315, %v4381
  %v4399 = vadd.f32 %v4316, %v4384
  %v4400 = vadd.f32 %v4317, %v4389
  %v4401 = vmax.f32 %v4394, 0.0
  %v4402 = vmax.f32 %v4395, 0.0
  %v4403 = vmax.f32 %v4396, 0.0
  %v4404 = vmax.f32 %v4397, 0.0
  %v4405 = vmax.f32 %v4398, 0.0
  %v4406 = vmax.f32 %v4399, 0.0
  %v4407 = vmax.f32 %v4400, 0.0
  %4408 = vmatprep.subr.bf16.mxu0 0
  %4409 = vmatpush1.bf16.msra.mxu0 %v3406
  %4410 = vmatprep.subr.bf16.mxu0 0
  %4411 = vmatpush1.bf16.msra.mxu0 0
  %4412 = vmatprep.subr.bf16.mxu0 0
  %4413 = vmatpush1.bf16.msra.mxu0 0
  %4414 = vmatprep.subr.bf16.mxu0 0
  %4415 = vmatpush1.bf16.msra.mxu0 0
  %4416 = vmatprep.subr.bf16.mxu0 0
  %4417 = vmatpush1.bf16.msra.mxu0 0
  %4418 = vmatprep.subr.bf16.mxu0 0
  %4419 = vmatpush1.bf16.msra.mxu0 0
  %4420 = vmatprep.subr.bf16.mxu0 0
  %4421 = vmatpush1.bf16.msra.mxu0 0
  %4422 = vmatprep.subr.bf16.mxu0 0
  %4423 = vmatpush1.bf16.msra.mxu0 0
  %4424 = vmatprep.subr.bf16.mxu0 0
  %4425 = vmatpush1.bf16.msra.mxu0 0
  %4426 = vmatprep.subr.bf16.mxu0 0
  %4427 = vmatpush1.bf16.msra.mxu0 0
  %4428 = vmatprep.subr.bf16.mxu0 0
  %4429 = vmatpush1.bf16.msra.mxu0 0
  %4430 = vmatprep.subr.bf16.mxu0 0
  %4431 = vmatpush1.bf16.msra.mxu0 0
  %4432 = vmatprep.subr.bf16.mxu0 0
  %4433 = vmatpush1.bf16.msra.mxu0 0
  %4434 = vmatprep.subr.bf16.mxu0 0
  %4435 = vmatpush1.bf16.msra.mxu0 0
  %4436 = vmatprep.subr.bf16.mxu0 0
  %4437 = vmatpush1.bf16.msra.mxu0 0
  %4438 = vmatprep.subr.bf16.mxu0 0
  %4439 = vmatpush1.bf16.msra.mxu0 0
  %4440 = vmatprep.mubr.bf16.mxu0 0
  %4441 = vmatmul.mubr.bf16.gmra.mrb[0].mxu0 %v3689
  %v4442 = vpop.f32.mrb[0].mxu0
  %v4443 = vadd.f32 0.0, %v4442
  %v4444 = vpop.f32.mrb[0].mxu0
  %v4445 = vpop.f32.mrb[0].mxu0
  %v4446 = vadd.f32 0.0, %v4445
  %v4447 = vpop.f32.mrb[0].mxu0
  %4448 = vmatprep.mubr.bf16.mxu0 0
  %4449 = vmatmul.mubr.bf16.gmra.mrb[0].mxu0 %v3692
  %v4450 = vpop.f32.mrb[0].mxu0
  %v4451 = vadd.f32 0.0, %v4450
  %v4452 = vpop.f32.mrb[0].mxu0
  %v4453 = vpop.f32.mrb[0].mxu0
  %v4454 = vadd.f32 0.0, %v4453
  %v4455 = vpop.f32.mrb[0].mxu0
  %4456 = vmatprep.mubr.bf16.mxu0 0
  %4457 = vmatmul.mubr.bf16.gmra.mrb[0].mxu0 %v3695
  %v4458 = vpop.f32.mrb[0].mxu0
  %v4459 = vadd.f32 0.0, %v4458
  %v4460 = vpop.f32.mrb[0].mxu0
  %v4461 = vpop.f32.mrb[0].mxu0
  %v4462 = vadd.f32 0.0, %v4461
  %v4463 = vpop.f32.mrb[0].mxu0
  %4464 = vmatprep.mubr.bf16.mxu0 0
  %4465 = vmatmul.mubr.bf16.gmra.mrb[0].mxu0 %v3698
  %v4466 = vpop.f32.mrb[0].mxu0
  %v4467 = vadd.f32 0.0, %v4466
  %v4468 = vpop.f32.mrb[0].mxu0
  %v4469 = vpop.f32.mrb[0].mxu0
  %v4470 = vpop.f32.mrb[0].mxu0
  %4471 = vdwg.mxu0
  %v4472 = vadd.f32 %v3489, %v4443
  %v4473 = vadd.f32 %v3489, %v4446
  %v4474 = vadd.f32 %v3489, %v4451
  %v4475 = vadd.f32 %v3489, %v4454
  %v4476 = vadd.f32 %v3489, %v4459
  %v4477 = vadd.f32 %v3489, %v4462
  %v4478 = vadd.f32 %v3489, %v4467
  %4479 = vmatprep.subr.bf16.mxu0 0
  %4480 = vmatpush1.bf16.msra.mxu0 %v3504
  %4481 = vmatprep.subr.bf16.mxu0 0
  %4482 = vmatpush1.bf16.msra.mxu0 0
  %4483 = vmatprep.subr.bf16.mxu0 0
  %4484 = vmatpush1.bf16.msra.mxu0 0
  %4485 = vmatprep.subr.bf16.mxu0 0
  %4486 = vmatpush1.bf16.msra.mxu0 0
  %4487 = vmatprep.subr.bf16.mxu0 0
  %4488 = vmatpush1.bf16.msra.mxu0 0
  %4489 = vmatprep.subr.bf16.mxu0 0
  %4490 = vmatpush1.bf16.msra.mxu0 0
  %4491 = vmatprep.subr.bf16.mxu0 0
  %4492 = vmatpush1.bf16.msra.mxu0 0
  %4493 = vmatprep.subr.bf16.mxu0 0
  %4494 = vmatpush1.bf16.msra.mxu0 0
  %4495 = vmatprep.subr.bf16.mxu0 0
  %4496 = vmatpush1.bf16.msra.mxu0 0
  %4497 = vmatprep.subr.bf16.mxu0 0
  %4498 = vmatpush1.bf16.msra.mxu0 0
  %4499 = vmatprep.subr.bf16.mxu0 0
  %4500 = vmatpush1.bf16.msra.mxu0 0
  %4501 = vmatprep.subr.bf16.mxu0 0
  %4502 = vmatpush1.bf16.msra.mxu0 0
  %4503 = vmatprep.subr.bf16.mxu0 0
  %4504 = vmatpush1.bf16.msra.mxu0 0
  %4505 = vmatprep.subr.bf16.mxu0 0
  %4506 = vmatpush1.bf16.msra.mxu0 0
  %4507 = vmatprep.subr.bf16.mxu0 0
  %4508 = vmatpush1.bf16.msra.mxu0 0
  %4509 = vmatprep.subr.bf16.mxu0 0
  %4510 = vmatpush1.bf16.msra.mxu0 0
  %4511 = vmatprep.mubr.bf16.mxu0 0
  %4512 = vmatmul.mubr.bf16.gmra.mrb[0].mxu0 %v4004
  %v4513 = vpop.f32.mrb[0].mxu0
  %v4514 = vadd.f32 0.0, %v4513
  %v4515 = vpop.f32.mrb[0].mxu0
  %v4516 = vpop.f32.mrb[0].mxu0
  %v4517 = vadd.f32 0.0, %v4516
  %v4518 = vpop.f32.mrb[0].mxu0
  %4519 = vmatprep.mubr.bf16.mxu0 0
  %4520 = vmatmul.mubr.bf16.gmra.mrb[0].mxu0 %v4007
  %v4521 = vpop.f32.mrb[0].mxu0
  %v4522 = vadd.f32 0.0, %v4521
  %v4523 = vpop.f32.mrb[0].mxu0
  %v4524 = vpop.f32.mrb[0].mxu0
  %v4525 = vadd.f32 0.0, %v4524
  %v4526 = vpop.f32.mrb[0].mxu0
  %4527 = vmatprep.mubr.bf16.mxu0 0
  %4528 = vmatmul.mubr.bf16.gmra.mrb[0].mxu0 %v4010
  %v4529 = vpop.f32.mrb[0].mxu0
  %v4530 = vadd.f32 0.0, %v4529
  %v4531 = vpop.f32.mrb[0].mxu0
  %v4532 = vpop.f32.mrb[0].mxu0
  %v4533 = vadd.f32 0.0, %v4532
  %v4534 = vpop.f32.mrb[0].mxu0
  %4535 = vmatprep.mubr.bf16.mxu0 0
  %4536 = vmatmul.mubr.bf16.gmra.mrb[0].mxu0 %v4013
  %v4537 = vpop.f32.mrb[0].mxu0
  %v4538 = vadd.f32 0.0, %v4537
  %v4539 = vpop.f32.mrb[0].mxu0
  %v4540 = vpop.f32.mrb[0].mxu0
  %v4541 = vpop.f32.mrb[0].mxu0
  %4542 = vdwg.mxu0
  %v4543 = vadd.f32 %v4472, %v4514
  %v4544 = vadd.f32 %v4473, %v4517
  %v4545 = vadd.f32 %v4474, %v4522
  %v4546 = vadd.f32 %v4475, %v4525
  %v4547 = vadd.f32 %v4476, %v4530
  %v4548 = vadd.f32 %v4477, %v4533
  %v4549 = vadd.f32 %v4478, %v4538
  %4550 = vmatprep.subr.bf16.mxu0 0
  %4551 = vmatpush1.bf16.msra.mxu0 %v3595
  %4552 = vmatprep.subr.bf16.mxu0 0
  %4553 = vmatpush1.bf16.msra.mxu0 0
  %4554 = vmatprep.subr.bf16.mxu0 0
  %4555 = vmatpush1.bf16.msra.mxu0 0
  %4556 = vmatprep.subr.bf16.mxu0 0
  %4557 = vmatpush1.bf16.msra.mxu0 0
  %4558 = vmatprep.subr.bf16.mxu0 0
  %4559 = vmatpush1.bf16.msra.mxu0 0
  %4560 = vmatprep.subr.bf16.mxu0 0
  %4561 = vmatpush1.bf16.msra.mxu0 0
  %4562 = vmatprep.subr.bf16.mxu0 0
  %4563 = vmatpush1.bf16.msra.mxu0 0
  %4564 = vmatprep.subr.bf16.mxu0 0
  %4565 = vmatpush1.bf16.msra.mxu0 0
  %4566 = vmatprep.subr.bf16.mxu0 0
  %4567 = vmatpush1.bf16.msra.mxu0 0
  %4568 = vmatprep.subr.bf16.mxu0 0
  %4569 = vmatpush1.bf16.msra.mxu0 0
  %4570 = vmatprep.subr.bf16.mxu0 0
  %4571 = vmatpush1.bf16.msra.mxu0 0
  %4572 = vmatprep.subr.bf16.mxu0 0
  %4573 = vmatpush1.bf16.msra.mxu0 0
  %4574 = vmatprep.subr.bf16.mxu0 0
  %4575 = vmatpush1.bf16.msra.mxu0 0
  %4576 = vmatprep.subr.bf16.mxu0 0
  %4577 = vmatpush1.bf16.msra.mxu0 0
  %4578 = vmatprep.subr.bf16.mxu0 0
  %4579 = vmatpush1.bf16.msra.mxu0 0
  %4580 = vmatprep.subr.bf16.mxu0 0
  %4581 = vmatpush1.bf16.msra.mxu0 0
  %4582 = vmatprep.mubr.bf16.mxu0 0
  %4583 = vmatmul.mubr.bf16.gmra.mrb[0].mxu0 %v4319
  %v4584 = vpop.f32.mrb[0].mxu0
  %v4585 = vadd.f32 0.0, %v4584
  %v4586 = vpop.f32.mrb[0].mxu0
  %v4587 = vpop.f32.mrb[0].mxu0
  %v4588 = vadd.f32 0.0, %v4587
  %v4589 = vpop.f32.mrb[0].mxu0
  %4590 = vmatprep.mubr.bf16.mxu0 0
  %4591 = vmatmul.mubr.bf16.gmra.mrb[0].mxu0 %v4322
  %v4592 = vpop.f32.mrb[0].mxu0
  %v4593 = vadd.f32 0.0, %v4592
  %v4594 = vpop.f32.mrb[0].mxu0
  %v4595 = vpop.f32.mrb[0].mxu0
  %v4596 = vadd.f32 0.0, %v4595
  %v4597 = vpop.f32.mrb[0].mxu0
  %4598 = vmatprep.mubr.bf16.mxu0 0
  %4599 = vmatmul.mubr.bf16.gmra.mrb[0].mxu0 %v4325
  %v4600 = vpop.f32.mrb[0].mxu0
  %v4601 = vadd.f32 0.0, %v4600
  %v4602 = vpop.f32.mrb[0].mxu0
  %v4603 = vpop.f32.mrb[0].mxu0
  %v4604 = vadd.f32 0.0, %v4603
  %v4605 = vpop.f32.mrb[0].mxu0
  %4606 = vmatprep.mubr.bf16.mxu0 0
  %4607 = vmatmul.mubr.bf16.gmra.mrb[0].mxu0 %v4328
  %v4608 = vpop.f32.mrb[0].mxu0
  %v4609 = vadd.f32 0.0, %v4608
  %v4610 = vpop.f32.mrb[0].mxu0
  %v4611 = vpop.f32.mrb[0].mxu0
  %v4612 = vpop.f32.mrb[0].mxu0
  %4613 = vdwg.mxu0
  %v4614 = vadd.f32 %v4543, %v4585
  %v4615 = vadd.f32 %v4544, %v4588
  %v4616 = vadd.f32 %v4545, %v4593
  %v4617 = vadd.f32 %v4546, %v4596
  %v4618 = vadd.f32 %v4547, %v4601
  %v4619 = vadd.f32 %v4548, %v4604
  %v4620 = vadd.f32 %v4549, %v4609
  %v4622 = vsel %vm3408, %v3396, 0
  %v4625 = vsel %vm3408, %v3397, 0
  %v4628 = vsel %vm3408, %v3398, 0
  %v4631 = vsel %vm3408, %v3399, 0
  %4633 = vmatprep.subr.bf16.mxu0 0
  %4634 = vmatpush1.bf16.msra.mxu0 %v3686
  %4635 = vmatprep.subr.bf16.mxu0 0
  %4636 = vmatpush1.bf16.msra.mxu0 0
  %4637 = vmatprep.subr.bf16.mxu0 0
  %4638 = vmatpush1.bf16.msra.mxu0 0
  %4639 = vmatprep.subr.bf16.mxu0 0
  %4640 = vmatpush1.bf16.msra.mxu0 0
  %4641 = vmatprep.subr.bf16.mxu0 0
  %4642 = vmatpush1.bf16.msra.mxu0 0
  %4643 = vmatprep.subr.bf16.mxu0 0
  %4644 = vmatpush1.bf16.msra.mxu0 0
  %4645 = vmatprep.subr.bf16.mxu0 0
  %4646 = vmatpush1.bf16.msra.mxu0 0
  %4647 = vmatprep.subr.bf16.mxu0 0
  %4648 = vmatpush1.bf16.msra.mxu0 0
  %4649 = vmatprep.subr.bf16.mxu0 0
  %4650 = vmatpush1.bf16.msra.mxu0 0
  %4651 = vmatprep.subr.bf16.mxu0 0
  %4652 = vmatpush1.bf16.msra.mxu0 0
  %4653 = vmatprep.subr.bf16.mxu0 0
  %4654 = vmatpush1.bf16.msra.mxu0 0
  %4655 = vmatprep.subr.bf16.mxu0 0
  %4656 = vmatpush1.bf16.msra.mxu0 0
  %4657 = vmatprep.subr.bf16.mxu0 0
  %4658 = vmatpush1.bf16.msra.mxu0 0
  %4659 = vmatprep.subr.bf16.mxu0 0
  %4660 = vmatpush1.bf16.msra.mxu0 0
  %4661 = vmatprep.subr.bf16.mxu0 0
  %4662 = vmatpush1.bf16.msra.mxu0 0
  %4663 = vmatprep.subr.bf16.mxu0 0
  %4664 = vmatpush1.bf16.msra.mxu0 0
  %4665 = vmatprep.mubr.bf16.mxu0 0
  %4666 = vmatmul.mubr.bf16.gmra.mrb[0].mxu0 %v4622
  %v4667 = vpop.f32.mrb[0].mxu0
  %v4668 = vadd.f32 0.0, %v4667
  %v4669 = vpop.f32.mrb[0].mxu0
  %v4670 = vpop.f32.mrb[0].mxu0
  %v4671 = vadd.f32 0.0, %v4670
  %v4672 = vpop.f32.mrb[0].mxu0
  %4673 = vmatprep.mubr.bf16.mxu0 0
  %4674 = vmatmul.mubr.bf16.gmra.mrb[0].mxu0 %v4625
  %v4675 = vpop.f32.mrb[0].mxu0
  %v4676 = vadd.f32 0.0, %v4675
  %v4677 = vpop.f32.mrb[0].mxu0
  %v4678 = vpop.f32.mrb[0].mxu0
  %v4679 = vadd.f32 0.0, %v4678
  %v4680 = vpop.f32.mrb[0].mxu0
  %4681 = vmatprep.mubr.bf16.mxu0 0
  %4682 = vmatmul.mubr.bf16.gmra.mrb[0].mxu0 %v4628
  %v4683 = vpop.f32.mrb[0].mxu0
  %v4684 = vadd.f32 0.0, %v4683
  %v4685 = vpop.f32.mrb[0].mxu0
  %v4686 = vpop.f32.mrb[0].mxu0
  %v4687 = vadd.f32 0.0, %v4686
  %v4688 = vpop.f32.mrb[0].mxu0
  %4689 = vmatprep.mubr.bf16.mxu0 0
  %4690 = vmatmul.mubr.bf16.gmra.mrb[0].mxu0 %v4631
  %v4691 = vpop.f32.mrb[0].mxu0
  %v4692 = vadd.f32 0.0, %v4691
  %v4693 = vpop.f32.mrb[0].mxu0
  %v4694 = vpop.f32.mrb[0].mxu0
  %v4695 = vpop.f32.mrb[0].mxu0
  %4696 = vdwg.mxu0
  %v4697 = vadd.f32 %v4614, %v4668
  %v4698 = vadd.f32 %v4615, %v4671
  %v4699 = vadd.f32 %v4616, %v4676
  %v4700 = vadd.f32 %v4617, %v4679
  %v4701 = vadd.f32 %v4618, %v4684
  %v4702 = vadd.f32 %v4619, %v4687
  %v4703 = vadd.f32 %v4620, %v4692
  %v4704 = vmax.f32 %v4697, 0.0
  %v4705 = vmax.f32 %v4698, 0.0
  %v4706 = vmax.f32 %v4699, 0.0
  %v4707 = vmax.f32 %v4700, 0.0
  %v4708 = vmax.f32 %v4701, 0.0
  %v4709 = vmax.f32 %v4702, 0.0
  %v4710 = vmax.f32 %v4703, 0.0
  %v4711 = vmax.f32 %v3771, %v4086
  %v4712 = vmax.f32 %v3772, %v4087
  %v4713 = vmax.f32 %v3773, %v4088
  %v4714 = vmax.f32 %v3774, %v4089
  %v4715 = vmax.f32 %v3775, %v4090
  %v4716 = vmax.f32 %v3776, %v4091
  %v4717 = vmax.f32 %v3777, %v4092
  %v4718 = vmax.f32 %v4401, %v4704
  %v4719 = vmax.f32 %v4402, %v4705
  %v4720 = vmax.f32 %v4403, %v4706
  %v4721 = vmax.f32 %v4404, %v4707
  %v4722 = vmax.f32 %v4405, %v4708
  %v4723 = vmax.f32 %v4406, %v4709
  %v4724 = vmax.f32 %v4407, %v4710
  %v4725 = vmax.f32 %v4711, %v4718
  %v4726 = vmax.f32 %v4712, %v4719
  %v4727 = vmax.f32 %v4713, %v4720
  %v4728 = vmax.f32 %v4714, %v4721
  %v4729 = vmax.f32 %v4715, %v4722
  %v4730 = vmax.f32 %v4716, %v4723
  %v4731 = vmax.f32 %v4717, %v4724
  %v4732 = vpack.c.bf16 %v4726, %v4725
  %v4733 = vpack.c.bf16 %v4728, %v4727
  %v4734 = vpack.c.bf16 %v4730, %v4729
  %v4735 = vpack.c.bf16 %v4731, %v4731
  %v4736 = vld [vmem:[%s20] sm:$0xf]
  %v4738 = vlaneseq
  %v4739 = vshrl.u32 %v4738, 7
  %v4740 = vsub.s32 0, %v4739
  %v4741 = vrot.slane %v80, %v4740
  %vm4743 = vcmask 64512
  %v4745 = vsel %vm4743, %v4732, 0
  %v4748 = vsel %vm4743, %v4733, 0
  %v4751 = vsel %vm4743, %v4734, 0
  %v4754 = vsel %vm4743, %v4735, 0
  %vm4756 = vcmask 1043456
  %v4758 = vsel %vm4756, %v4736, 0
  %4760 = vmatprep.subr.bf16.mxu0 0
  %4761 = vmatpush1.bf16.msra.mxu0 %v4758
  %4762 = vmatprep.subr.bf16.mxu0 0
  %4763 = vmatpush1.bf16.msra.mxu0 0
  %4764 = vmatprep.subr.bf16.mxu0 0
  %4765 = vmatpush1.bf16.msra.mxu0 0
  %4766 = vmatprep.subr.bf16.mxu0 0
  %4767 = vmatpush1.bf16.msra.mxu0 0
  %4768 = vmatprep.subr.bf16.mxu0 0
  %4769 = vmatpush1.bf16.msra.mxu0 0
  %4770 = vmatprep.subr.bf16.mxu0 0
  %4771 = vmatpush1.bf16.msra.mxu0 0
  %4772 = vmatprep.subr.bf16.mxu0 0
  %4773 = vmatpush1.bf16.msra.mxu0 0
  %4774 = vmatprep.subr.bf16.mxu0 0
  %4775 = vmatpush1.bf16.msra.mxu0 0
  %4776 = vmatprep.subr.bf16.mxu0 0
  %4777 = vmatpush1.bf16.msra.mxu0 0
  %4778 = vmatprep.subr.bf16.mxu0 0
  %4779 = vmatpush1.bf16.msra.mxu0 0
  %4780 = vmatprep.subr.bf16.mxu0 0
  %4781 = vmatpush1.bf16.msra.mxu0 0
  %4782 = vmatprep.subr.bf16.mxu0 0
  %4783 = vmatpush1.bf16.msra.mxu0 0
  %4784 = vmatprep.subr.bf16.mxu0 0
  %4785 = vmatpush1.bf16.msra.mxu0 0
  %4786 = vmatprep.subr.bf16.mxu0 0
  %4787 = vmatpush1.bf16.msra.mxu0 0
  %4788 = vmatprep.subr.bf16.mxu0 0
  %4789 = vmatpush1.bf16.msra.mxu0 0
  %4790 = vmatprep.subr.bf16.mxu0 0
  %4791 = vmatpush1.bf16.msra.mxu0 0
  %4792 = vmatprep.mubr.bf16.mxu0 0
  %4793 = vmatmul.mubr.bf16.gmra.mrb[0].mxu0 %v4745
  %v4794 = vpop.f32.mrb[0].mxu0
  %v4795 = vadd.f32 %v4741, %v4794
  %v4796 = vpop.f32.mrb[0].mxu0
  %v4797 = vpop.f32.mrb[0].mxu0
  %v4798 = vadd.f32 %v4741, %v4797
  %v4799 = vpop.f32.mrb[0].mxu0
  %4800 = vmatprep.mubr.bf16.mxu0 0
  %4801 = vmatmul.mubr.bf16.gmra.mrb[0].mxu0 %v4748
  %v4802 = vpop.f32.mrb[0].mxu0
  %v4803 = vadd.f32 %v4741, %v4802
  %v4804 = vpop.f32.mrb[0].mxu0
  %v4805 = vpop.f32.mrb[0].mxu0
  %v4806 = vadd.f32 %v4741, %v4805
  %v4807 = vpop.f32.mrb[0].mxu0
  %4808 = vmatprep.mubr.bf16.mxu0 0
  %4809 = vmatmul.mubr.bf16.gmra.mrb[0].mxu0 %v4751
  %v4810 = vpop.f32.mrb[0].mxu0
  %v4811 = vadd.f32 %v4741, %v4810
  %v4812 = vpop.f32.mrb[0].mxu0
  %v4813 = vpop.f32.mrb[0].mxu0
  %v4814 = vadd.f32 %v4741, %v4813
  %v4815 = vpop.f32.mrb[0].mxu0
  %4816 = vmatprep.mubr.bf16.mxu0 0
  %4817 = vmatmul.mubr.bf16.gmra.mrb[0].mxu0 %v4754
  %v4818 = vpop.f32.mrb[0].mxu0
  %v4819 = vadd.f32 %v4741, %v4818
  %v4820 = vpop.f32.mrb[0].mxu0
  %v4821 = vpop.f32.mrb[0].mxu0
  %v4822 = vpop.f32.mrb[0].mxu0
  %4823 = vdwg.mxu0
  %v4824 = vmax.f32 %v4795, 0.0
  %v4825 = vmax.f32 %v4798, 0.0
  %v4826 = vmax.f32 %v4803, 0.0
  %v4827 = vmax.f32 %v4806, 0.0
  %v4828 = vmax.f32 %v4811, 0.0
  %v4829 = vmax.f32 %v4814, 0.0
  %v4830 = vmax.f32 %v4819, 0.0
  %v4831 = vpack.c.bf16 %v4825, %v4824
  %v4832 = vpack.c.bf16 %v4827, %v4826
  %v4833 = vpack.c.bf16 %v4829, %v4828
  %v4834 = vpack.c.bf16 %v4830, %v4830
  %v4835 = vld [vmem:[%s22] sm:$0xf]
  %v4837 = vlaneseq
  %v4838 = vshrl.u32 %v4837, 7
  %v4839 = vsub.s32 0, %v4838
  %v4840 = vrot.slane %v81, %v4839
  %v4843 = vsel %vm4743, %v4831, 0
  %v4846 = vsel %vm4743, %v4832, 0
  %v4849 = vsel %vm4743, %v4833, 0
  %v4852 = vsel %vm4743, %v4834, 0
  %v4855 = vsel %vm4756, %v4835, 0
  %4857 = vmatprep.subr.bf16.mxu0 0
  %4858 = vmatpush1.bf16.msra.mxu0 %v4855
  %4859 = vmatprep.subr.bf16.mxu0 0
  %4860 = vmatpush1.bf16.msra.mxu0 0
  %4861 = vmatprep.subr.bf16.mxu0 0
  %4862 = vmatpush1.bf16.msra.mxu0 0
  %4863 = vmatprep.subr.bf16.mxu0 0
  %4864 = vmatpush1.bf16.msra.mxu0 0
  %4865 = vmatprep.subr.bf16.mxu0 0
  %4866 = vmatpush1.bf16.msra.mxu0 0
  %4867 = vmatprep.subr.bf16.mxu0 0
  %4868 = vmatpush1.bf16.msra.mxu0 0
  %4869 = vmatprep.subr.bf16.mxu0 0
  %4870 = vmatpush1.bf16.msra.mxu0 0
  %4871 = vmatprep.subr.bf16.mxu0 0
  %4872 = vmatpush1.bf16.msra.mxu0 0
  %4873 = vmatprep.subr.bf16.mxu0 0
  %4874 = vmatpush1.bf16.msra.mxu0 0
  %4875 = vmatprep.subr.bf16.mxu0 0
  %4876 = vmatpush1.bf16.msra.mxu0 0
  %4877 = vmatprep.subr.bf16.mxu0 0
  %4878 = vmatpush1.bf16.msra.mxu0 0
  %4879 = vmatprep.subr.bf16.mxu0 0
  %4880 = vmatpush1.bf16.msra.mxu0 0
  %4881 = vmatprep.subr.bf16.mxu0 0
  %4882 = vmatpush1.bf16.msra.mxu0 0
  %4883 = vmatprep.subr.bf16.mxu0 0
  %4884 = vmatpush1.bf16.msra.mxu0 0
  %4885 = vmatprep.subr.bf16.mxu0 0
  %4886 = vmatpush1.bf16.msra.mxu0 0
  %4887 = vmatprep.subr.bf16.mxu0 0
  %4888 = vmatpush1.bf16.msra.mxu0 0
  %4889 = vmatprep.mubr.bf16.mxu0 0
  %4890 = vmatmul.mubr.bf16.gmra.mrb[0].mxu0 %v4843
  %v4891 = vpop.f32.mrb[0].mxu0
  %v4892 = vadd.f32 %v4840, %v4891
  %v4893 = vpop.f32.mrb[0].mxu0
  %v4894 = vpop.f32.mrb[0].mxu0
  %v4895 = vadd.f32 %v4840, %v4894
  %v4896 = vpop.f32.mrb[0].mxu0
  %4897 = vmatprep.mubr.bf16.mxu0 0
  %4898 = vmatmul.mubr.bf16.gmra.mrb[0].mxu0 %v4846
  %v4899 = vpop.f32.mrb[0].mxu0
  %v4900 = vadd.f32 %v4840, %v4899
  %v4901 = vpop.f32.mrb[0].mxu0
  %v4902 = vpop.f32.mrb[0].mxu0
  %v4903 = vadd.f32 %v4840, %v4902
  %v4904 = vpop.f32.mrb[0].mxu0
  %4905 = vmatprep.mubr.bf16.mxu0 0
  %4906 = vmatmul.mubr.bf16.gmra.mrb[0].mxu0 %v4849
  %v4907 = vpop.f32.mrb[0].mxu0
  %v4908 = vadd.f32 %v4840, %v4907
  %v4909 = vpop.f32.mrb[0].mxu0
  %v4910 = vpop.f32.mrb[0].mxu0
  %v4911 = vadd.f32 %v4840, %v4910
  %v4912 = vpop.f32.mrb[0].mxu0
  %4913 = vmatprep.mubr.bf16.mxu0 0
  %4914 = vmatmul.mubr.bf16.gmra.mrb[0].mxu0 %v4852
  %v4915 = vpop.f32.mrb[0].mxu0
  %v4916 = vadd.f32 %v4840, %v4915
  %v4917 = vpop.f32.mrb[0].mxu0
  %v4918 = vpop.f32.mrb[0].mxu0
  %v4919 = vpop.f32.mrb[0].mxu0
  %4920 = vdwg.mxu0
  %v4921 = vmax.f32 %v4892, 0.0
  %v4922 = vmax.f32 %v4895, 0.0
  %v4923 = vmax.f32 %v4900, 0.0
  %v4924 = vmax.f32 %v4903, 0.0
  %v4925 = vmax.f32 %v4908, 0.0
  %v4926 = vmax.f32 %v4911, 0.0
  %v4927 = vmax.f32 %v4916, 0.0
  %v4928 = vpack.c.bf16 %v4922, %v4921
  %v4929 = vpack.c.bf16 %v4924, %v4923
  %v4930 = vpack.c.bf16 %v4926, %v4925
  %v4931 = vpack.c.bf16 %v4927, %v4927
  %v4936 = vunpack.c.l.b16 %v4928
  %v4937 = vunpack.c.h.b16 %v4928
  %v4938 = vunpack.c.l.b16 %v4929
  %v4939 = vunpack.c.h.b16 %v4929
  %v4940 = vunpack.c.l.b16 %v4930
  %v4941 = vunpack.c.h.b16 %v4930
  %v4942 = vunpack.c.l.b16 %v4931
  %v4943 = vpack.c.b16 %v4936, %v4936
  %v4944 = vpack.c.b16 %v4937, %v4937
  %v4945 = vpack.c.b16 %v4938, %v4938
  %v4946 = vpack.c.b16 %v4939, %v4939
  %v4947 = vpack.c.b16 %v4940, %v4940
  %v4948 = vpack.c.b16 %v4941, %v4941
  %v4949 = vpack.c.b16 %v4942, %v4942
  %vm4957 = vcmask 27648
  %4958 = vst.msk [vmem:[%s24] sm:$0xf] %vm4957, %v4943
  %4959 = vst.msk [vmem:[%s24 + $0x4] sm:$0xf] %vm4957, %v4944
  %4960 = vst.msk [vmem:[%s24 + $0x8] sm:$0xf] %vm4957, %v4945
  %4961 = vst.msk [vmem:[%s24 + $0xc] sm:$0xf] %vm4957, %v4946
  %4962 = vst.msk [vmem:[%s24 + $0x10] sm:$0xf] %vm4957, %v4947
  %4963 = vst.msk [vmem:[%s24 + $0x14] sm:$0xf] %vm4957, %v4948
  %vm4964 = vcmask 24576
  %4965 = vst.msk [vmem:[%s24 + $0x18] sm:$0x1] %vm4964, %v4949
  // Predicated region
  $region98: #{state_tracker_forward.6} parent=0 // pred_check
    _
  $region99: #{state_tracker_forward.6} parent=0 // pred_check_branch
    %4967 = sbr.rel (0) target = $region101
  $region100: #{state_tracker_forward.6} parent=0 // pred_region
    _
  $region101: #{state_tracker_forward.6} parent=0 // pred_fallthru
    _
  // Predicated region
  $region102: #{state_tracker_forward.6} parent=0 // pred_check
    _
  $region103: #{state_tracker_forward.6} parent=0 // pred_check_branch
    %4969 = sbr.rel (0) target = $region105
  $region104: #{state_tracker_forward.6} parent=0 // pred_region
    _
  $region105: #{state_tracker_forward.6} parent=0 // pred_fallthru
    _

</llo_original>
